<compile_context>
chip_gen: v6e
topology: v6e:2x2x1
jax: 0.10.0
libtpu: 0.0.40
codegen_flags: <defaults>
</compile_context>

<pallas_src>
import math
import jax
import jax.numpy as jnp
from jax.experimental import pallas as pl
from jax.experimental.pallas import tpu as pltpu


# ----------------------------------------------------------------------------
# Fused kernel: TSAEncoderV2 + EdgeToNodeConv + leaky_relu + Linear
# Single grid step; everything resident in VMEM at these sizes.
# ----------------------------------------------------------------------------
def edge_gcn_v3_kernel(et_ref, ea_ref, dst_ref, hmat_ref,
                       wq_ref, wk_ref, wv_ref, wa_ref, atta_ref,
                       wetn_ref, wlin_ref, out_ref):
    E, T, _ = et_ref.shape
    H = wq_ref.shape[1]
    N = hmat_ref.shape[0]

    et = et_ref[...]                     # [E, T, Fet]  bf16
    ea = ea_ref[...]                     # [E, Fea]     bf16
    dst = dst_ref[...]                   # [E, 1]       int32

    # --- temporal self-attention over the time axis, per edge ---
    # Three separate projections (see header note on the fused-QKV lane slices).
    q = jnp.einsum('etf,fh->eth', et, wq_ref[...],
                   preferred_element_type=jnp.float32)        # [E, T, H] f32
    k = jnp.einsum('etf,fh->eth', et, wk_ref[...],
                   preferred_element_type=jnp.float32)        # [E, T, H] f32
    v = jnp.einsum('etf,fh->eth', et, wv_ref[...],
                   preferred_element_type=jnp.float32)        # [E, T, H] f32

    scale = 1.0 / math.sqrt(float(H))
    logits = jnp.einsum('eth,esh->ets',
                        q.astype(jnp.bfloat16), k.astype(jnp.bfloat16),
                        preferred_element_type=jnp.float32) * scale   # [E,T,T]
    m = jnp.max(logits, axis=-1, keepdims=True)
    p = jnp.exp(logits - m)
    attn = p * pl.reciprocal(jnp.sum(p, axis=-1, keepdims=True),
                             approx=True)                     # [E, T, T]

    # fold the time-mean into the attention weights (valid by linearity):
    # h_t = sum_s mean_t(attn[e,t,s]) * v[e,s,:]
    w = jnp.mean(attn, axis=1)                                # [E, T]
    h_t = jnp.sum(w[:, :, None] * v, axis=1)                  # [E, H] f32

    # --- GAT-style attention over edge attributes, softmax grouped by dst ---
    h_a = jnp.dot(ea, wa_ref[...],
                  preferred_element_type=jnp.float32)         # [E, H] f32
    # VPU multiply + lane reduce (no N=1 MXU matvec); atta is [1, H] f32.
    s = jnp.sum(h_a * atta_ref[...], axis=1, keepdims=True)   # [E, 1]
    s = jnp.where(s >= 0.0, s, 0.2 * s)                       # leaky_relu(0.2)

    # one-hot mask built in-kernel from the int32 dst vector; all segment
    # softmax statistics stay f32 (-1e30 sentinel overflows in bf16).
    node_ids = jax.lax.broadcasted_iota(jnp.int32, (E, N), 1)
    mask = dst == node_ids                                    # [E, N] bool

    neg_inf = jnp.float32(-1e30)
    masked = jnp.where(mask, s, neg_inf)                      # [E, N]
    seg_max = jnp.max(masked, axis=0, keepdims=True)          # [1, N]
    per_edge_max = jnp.max(jnp.where(mask, seg_max, neg_inf),
                           axis=1, keepdims=True)             # [E, 1]
    e_val = jnp.exp(s - per_edge_max)                         # [E, 1]
    seg_sum = jnp.sum(jnp.where(mask, e_val, 0.0),
                      axis=0, keepdims=True)                  # [1, N]
    denom = jnp.sum(jnp.where(mask, seg_sum, 0.0),
                    axis=1, keepdims=True)                    # [E, 1]
    alpha = e_val * pl.reciprocal(denom, approx=True)         # softmax per dst
    h_a_att = alpha * h_a                                     # [E, H]

    x = jnp.tanh(h_t + h_a_att)                               # [E, H] f32

    # --- EdgeToNodeConv (reassociated) + leaky_relu(0.2) + Linear(no bias) ---
    # (Hmat @ x) @ W_etn == Hmat @ (x @ W_etn); leaky_relu comes after both.
    hx = jnp.dot(hmat_ref[...], x.astype(jnp.bfloat16),
                 preferred_element_type=jnp.float32)          # [N, H]
    n = jnp.dot(hx.astype(jnp.bfloat16), wetn_ref[...],
                preferred_element_type=jnp.float32)           # [N, H]
    n = jnp.where(n >= 0.0, n, 0.2 * n)                       # leaky_relu(0.2)
    out_ref[...] = jnp.dot(n.astype(jnp.bfloat16), wlin_ref[...],
                           preferred_element_type=jnp.float32)  # [N, 128] lane-dense


# ----------------------------------------------------------------------------
# Wrapper
# ----------------------------------------------------------------------------
def edge_gcn_v3_forward(et, ea, Hmat, edge_index, params):
    E, T, _ = et.shape
    N = Hmat.shape[0]
    H = params['W_etn'].shape[0]
    out_size = params['W_lin'].shape[1]

    LANE = 128
    out_pad = ((out_size + LANE - 1) // LANE) * LANE

    bf16 = jnp.bfloat16
    # bf16 MXU operands (Hmat is 0/1, exactly representable); f32 accumulation
    # happens in-kernel via preferred_element_type.
    et_b = et.astype(bf16)
    ea_b = ea.astype(bf16)
    hmat_b = Hmat.astype(bf16)
    wq = params['Wq'].astype(bf16)
    wk = params['Wk'].astype(bf16)
    wv = params['Wv'].astype(bf16)
    wa = params['Wa'].astype(bf16)
    wetn = params['W_etn'].astype(bf16)
    # attention vector stays f32 (used on the VPU), presented as [1, H]
    atta_t = params['att_a'].reshape(1, H).astype(jnp.float32)
    # lane-dense output: zero-pad the final projection to 128 output lanes
    wlin_pad = jnp.zeros((H, out_pad), jnp.float32)
    wlin_pad = wlin_pad.at[:, :out_size].set(params['W_lin']).astype(bf16)

    # destination node per edge as a tiny [E, 1] int32 vector
    dst = edge_index[1].astype(jnp.int32).reshape(E, 1)

    full = lambda shape: pl.BlockSpec(shape, lambda i: (0,) * len(shape))

    out = pl.pallas_call(
        edge_gcn_v3_kernel,
        out_shape=jax.ShapeDtypeStruct((N, out_pad), jnp.float32),
        grid=(1,),
        in_specs=[
            full(et_b.shape),
            full(ea_b.shape),
            full(dst.shape),
            full(hmat_b.shape),
            full(wq.shape),
            full(wk.shape),
            full(wv.shape),
            full(wa.shape),
            full(atta_t.shape),
            full(wetn.shape),
            full(wlin_pad.shape),
        ],
        out_specs=full((N, out_pad)),
        compiler_params=pltpu.CompilerParams(
            dimension_semantics=("arbitrary",)),
    )(et_b, ea_b, dst, hmat_b, wq, wk, wv, wa, atta_t, wetn, wlin_pad)

    return out[:, :out_size]


# ----------------------------------------------------------------------------
# Deterministic parameter init (glorot uniform)
# ----------------------------------------------------------------------------
def glorot(key, shape):
    fan_in, fan_out = shape[0], shape[1]
    lim = math.sqrt(6.0 / (fan_in + fan_out))
    return jax.random.uniform(key, shape, jnp.float32, minval=-lim, maxval=lim)


def init_params(key, et_size, ea_size, hidden_size, out_size):
    ks = jax.random.split(key, 7)
    return {
        'Wq': glorot(ks[0], (et_size, hidden_size)),
        'Wk': glorot(ks[1], (et_size, hidden_size)),
        'Wv': glorot(ks[2], (et_size, hidden_size)),
        'Wa': glorot(ks[3], (ea_size, hidden_size)),
        'att_a': glorot(ks[4], (hidden_size, 1)),
        'W_etn': glorot(ks[5], (hidden_size, hidden_size)),
        'W_lin': glorot(ks[6], (hidden_size, out_size)),
    }


if __name__ == "__main__":
    E, N, T = 64, 16, 8
    et_size, ea_size, hidden_size, out_size = 8, 6, 32, 16

    key = jax.random.PRNGKey(0)
    k_et, k_ea, k_src, k_dst, k_par = jax.random.split(key, 5)

    et = jax.random.normal(k_et, (E, T, et_size), jnp.float32)
    ea = jax.random.normal(k_ea, (E, ea_size), jnp.float32)
    src = jax.random.randint(k_src, (E,), 0, N, jnp.int32)
    dst = jax.random.randint(k_dst, (E,), 0, N, jnp.int32)
    edge_index = jnp.stack([src, dst], axis=0)                        # [2, E]

    # Node-edge incidence matrix H[n, e] = 1 if node n touches edge e.
    Hmat = (jax.nn.one_hot(src, N, dtype=jnp.float32).T
            + jax.nn.one_hot(dst, N, dtype=jnp.float32).T)
    Hmat = jnp.clip(Hmat, 0.0, 1.0)                                   # [N, E]

    params = init_params(k_par, et_size, ea_size, hidden_size, out_size)

    out = edge_gcn_v3_forward(et, ea, Hmat, edge_index, params)
    out = jax.block_until_ready(out)
    assert out.shape == (N, out_size)
    assert bool(jnp.all(jnp.isfinite(out)))
    print("KERNEL_OK")
</pallas_src>

<mosaic_0001>
module attributes {stable_mosaic.version = 11 : i64} {
  func.func @edge_gcn_v3_kernel(%arg0: i32, %arg1: memref<64x8x8xbf16, #tpu.memory_space<vmem>>, %arg2: memref<64x6xbf16, #tpu.memory_space<vmem>>, %arg3: memref<64x1xi32, #tpu.memory_space<vmem>>, %arg4: memref<16x64xbf16, #tpu.memory_space<vmem>>, %arg5: memref<8x32xbf16, #tpu.memory_space<vmem>>, %arg6: memref<8x32xbf16, #tpu.memory_space<vmem>>, %arg7: memref<8x32xbf16, #tpu.memory_space<vmem>>, %arg8: memref<6x32xbf16, #tpu.memory_space<vmem>>, %arg9: memref<1x32xf32, #tpu.memory_space<vmem>>, %arg10: memref<32x32xbf16, #tpu.memory_space<vmem>>, %arg11: memref<32x128xbf16, #tpu.memory_space<vmem>>, %arg12: memref<16x128xf32, #tpu.memory_space<vmem>>) attributes {dimension_semantics = [#tpu.dimension_semantics<arbitrary>], iteration_bounds = array<i64: 1>, scalar_prefetch = 0 : i64, scratch_operands = 0 : i64, tpu.core_type = #tpu.core_type<tc>, window_params = [{pipeline_mode = #tpu.pipeline_mode<synchronous>, transform_indices = @transform_0, window_bounds = array<i64: 64, 8, 8>}, {pipeline_mode = #tpu.pipeline_mode<synchronous>, transform_indices = @transform_1, window_bounds = array<i64: 64, 6>}, {pipeline_mode = #tpu.pipeline_mode<synchronous>, transform_indices = @transform_2, window_bounds = array<i64: 64, 1>}, {pipeline_mode = #tpu.pipeline_mode<synchronous>, transform_indices = @transform_3, window_bounds = array<i64: 16, 64>}, {pipeline_mode = #tpu.pipeline_mode<synchronous>, transform_indices = @transform_4, window_bounds = array<i64: 8, 32>}, {pipeline_mode = #tpu.pipeline_mode<synchronous>, transform_indices = @transform_5, window_bounds = array<i64: 8, 32>}, {pipeline_mode = #tpu.pipeline_mode<synchronous>, transform_indices = @transform_6, window_bounds = array<i64: 8, 32>}, {pipeline_mode = #tpu.pipeline_mode<synchronous>, transform_indices = @transform_7, window_bounds = array<i64: 6, 32>}, {pipeline_mode = #tpu.pipeline_mode<synchronous>, transform_indices = @transform_8, window_bounds = array<i64: 1, 32>}, {pipeline_mode = #tpu.pipeline_mode<synchronous>, transform_indices = @transform_9, window_bounds = array<i64: 32, 32>}, {pipeline_mode = #tpu.pipeline_mode<synchronous>, transform_indices = @transform_10, window_bounds = array<i64: 32, 128>}, {pipeline_mode = #tpu.pipeline_mode<synchronous>, transform_indices = @transform_11, window_bounds = array<i64: 16, 128>}]} {
    %c0 = arith.constant 0 : index
    %c0_0 = arith.constant 0 : index
    %c0_1 = arith.constant 0 : index
    %0 = vector.load %arg1[%c0, %c0_0, %c0_1] : memref<64x8x8xbf16, #tpu.memory_space<vmem>>, vector<64x8x8xbf16>
    %c0_2 = arith.constant 0 : index
    %c0_3 = arith.constant 0 : index
    %1 = vector.load %arg2[%c0_2, %c0_3] : memref<64x6xbf16, #tpu.memory_space<vmem>>, vector<64x6xbf16>
    %c0_4 = arith.constant 0 : index
    %c0_5 = arith.constant 0 : index
    %2 = vector.load %arg3[%c0_4, %c0_5] : memref<64x1xi32, #tpu.memory_space<vmem>>, vector<64x1xi32>
    %c0_6 = arith.constant 0 : index
    %c0_7 = arith.constant 0 : index
    %3 = vector.load %arg5[%c0_6, %c0_7] : memref<8x32xbf16, #tpu.memory_space<vmem>>, vector<8x32xbf16>
    "tpu.trace_start"() <{level = 10 : i32, message = "etf,fh->eth"}> : () -> ()
    %cst = arith.constant dense<0.000000e+00> : vector<64x8x32xf32>
    %4 = tpu.matmul %0, %3, %cst {dimension_numbers = #tpu.dot_dimension_numbers<[2], [0], [0, 1], [1], [0, 0, 0, 1, 1, 1], [], []>} : vector<64x8x8xbf16>, vector<8x32xbf16>, vector<64x8x32xf32> -> vector<64x8x32xf32>
    "tpu.trace_stop"() : () -> ()
    %c0_8 = arith.constant 0 : index
    %c0_9 = arith.constant 0 : index
    %5 = vector.load %arg6[%c0_8, %c0_9] : memref<8x32xbf16, #tpu.memory_space<vmem>>, vector<8x32xbf16>
    "tpu.trace_start"() <{level = 10 : i32, message = "etf,fh->eth"}> : () -> ()
    %cst_10 = arith.constant dense<0.000000e+00> : vector<64x8x32xf32>
    %6 = tpu.matmul %0, %5, %cst_10 {dimension_numbers = #tpu.dot_dimension_numbers<[2], [0], [0, 1], [1], [0, 0, 0, 1, 1, 1], [], []>} : vector<64x8x8xbf16>, vector<8x32xbf16>, vector<64x8x32xf32> -> vector<64x8x32xf32>
    "tpu.trace_stop"() : () -> ()
    %c0_11 = arith.constant 0 : index
    %c0_12 = arith.constant 0 : index
    %7 = vector.load %arg7[%c0_11, %c0_12] : memref<8x32xbf16, #tpu.memory_space<vmem>>, vector<8x32xbf16>
    "tpu.trace_start"() <{level = 10 : i32, message = "etf,fh->eth"}> : () -> ()
    %cst_13 = arith.constant dense<0.000000e+00> : vector<64x8x32xf32>
    %8 = tpu.matmul %0, %7, %cst_13 {dimension_numbers = #tpu.dot_dimension_numbers<[2], [0], [0, 1], [1], [0, 0, 0, 1, 1, 1], [], []>} : vector<64x8x8xbf16>, vector<8x32xbf16>, vector<64x8x32xf32> -> vector<64x8x32xf32>
    "tpu.trace_stop"() : () -> ()
    %9 = arith.truncf %4 : vector<64x8x32xf32> to vector<64x8x32xbf16>
    %10 = arith.truncf %6 : vector<64x8x32xf32> to vector<64x8x32xbf16>
    "tpu.trace_start"() <{level = 10 : i32, message = "eth,esh->ets"}> : () -> ()
    %cst_14 = arith.constant dense<0.000000e+00> : vector<64x8x8xf32>
    %11 = tpu.matmul %9, %10, %cst_14 {dimension_numbers = #tpu.dot_dimension_numbers<[2], [2], [1], [1], [0, 0, 0, 1, 1, 1], [0], [0]>} : vector<64x8x32xbf16>, vector<64x8x32xbf16>, vector<64x8x8xf32> -> vector<64x8x8xf32>
    "tpu.trace_stop"() : () -> ()
    %cst_15 = arith.constant 0.176776692 : f32
    %12 = vector.broadcast %cst_15 : f32 to vector<64x8x8xf32>
    %13 = arith.mulf %11, %12 : vector<64x8x8xf32>
    %cst_16 = arith.constant dense<0xFF800000> : vector<64x8xf32>
    %14 = vector.multi_reduction <maximumf>, %13, %cst_16 [2] : vector<64x8x8xf32> to vector<64x8xf32>
    %15 = vector.shape_cast %14 : vector<64x8xf32> to vector<64x8x1xf32>
    %16 = vector.broadcast %15 : vector<64x8x1xf32> to vector<64x8x8xf32>
    %17 = arith.subf %13, %16 : vector<64x8x8xf32>
    %18 = math.exp %17 : vector<64x8x8xf32>
    %cst_17 = arith.constant dense<0.000000e+00> : vector<64x8xf32>
    %19 = vector.multi_reduction <add>, %18, %cst_17 [2] : vector<64x8x8xf32> to vector<64x8xf32>
    %20 = vector.shape_cast %19 : vector<64x8xf32> to vector<64x8x1xf32>
    %21 = tpu.reciprocal %20 {approx = true} : vector<64x8x1xf32> -> vector<64x8x1xf32>
    %22 = vector.broadcast %21 : vector<64x8x1xf32> to vector<64x8x8xf32>
    %23 = arith.mulf %18, %22 : vector<64x8x8xf32>
    %cst_18 = arith.constant dense<0.000000e+00> : vector<64x8xf32>
    %24 = vector.multi_reduction <add>, %23, %cst_18 [1] : vector<64x8x8xf32> to vector<64x8xf32>
    %cst_19 = arith.constant 8.000000e+00 : f32
    %25 = vector.broadcast %cst_19 : f32 to vector<64x8xf32>
    %26 = arith.divf %24, %25 : vector<64x8xf32>
    %27 = vector.shape_cast %26 : vector<64x8xf32> to vector<64x8x1xf32>
    %28 = vector.broadcast %27 : vector<64x8x1xf32> to vector<64x8x32xf32>
    %29 = arith.mulf %28, %8 : vector<64x8x32xf32>
    %cst_20 = arith.constant dense<0.000000e+00> : vector<64x32xf32>
    %30 = vector.multi_reduction <add>, %29, %cst_20 [1] : vector<64x8x32xf32> to vector<64x32xf32>
    %c0_21 = arith.constant 0 : index
    %c0_22 = arith.constant 0 : index
    %31 = vector.load %arg8[%c0_21, %c0_22] : memref<6x32xbf16, #tpu.memory_space<vmem>>, vector<6x32xbf16>
    %cst_23 = arith.constant dense<0.000000e+00> : vector<64x32xf32>
    %32 = tpu.matmul %1, %31, %cst_23 {dimension_numbers = #tpu.dot_dimension_numbers<[1], [0], [0], [1], [0, 0, 1, 1], [], []>} : vector<64x6xbf16>, vector<6x32xbf16>, vector<64x32xf32> -> vector<64x32xf32>
    %c0_24 = arith.constant 0 : index
    %c0_25 = arith.constant 0 : index
    %33 = vector.load %arg9[%c0_24, %c0_25] : memref<1x32xf32, #tpu.memory_space<vmem>>, vector<1x32xf32>
    %34 = vector.broadcast %33 : vector<1x32xf32> to vector<64x32xf32>
    %35 = arith.mulf %32, %34 : vector<64x32xf32>
    %cst_26 = arith.constant dense<0.000000e+00> : vector<64xf32>
    %36 = vector.multi_reduction <add>, %35, %cst_26 [1] : vector<64x32xf32> to vector<64xf32>
    %37 = vector.shape_cast %36 : vector<64xf32> to vector<64x1xf32>
    %cst_27 = arith.constant 0.000000e+00 : f32
    %38 = vector.broadcast %cst_27 : f32 to vector<64x1xf32>
    %39 = arith.cmpf oge, %37, %38 : vector<64x1xf32>
    %cst_28 = arith.constant 2.000000e-01 : f32
    %40 = vector.broadcast %cst_28 : f32 to vector<64x1xf32>
    %41 = arith.mulf %40, %37 : vector<64x1xf32>
    %42 = arith.select %39, %37, %41 : vector<64x1xi1>, vector<64x1xf32>
    %43 = tpu.iota {dimensions = array<i32: 1>} : vector<64x16xi32>
    %44 = vector.broadcast %2 : vector<64x1xi32> to vector<64x16xi32>
    %45 = arith.cmpi eq, %44, %43 : vector<64x16xi32>
    %cst_29 = arith.constant -1.000000e+30 : f32
    %46 = vector.shape_cast %42 : vector<64x1xf32> to vector<64x1xf32>
    %47 = vector.broadcast %46 : vector<64x1xf32> to vector<64x16xf32>
    %48 = vector.broadcast %cst_29 : f32 to vector<64x16xf32>
    %49 = arith.select %45, %47, %48 : vector<64x16xi1>, vector<64x16xf32>
    %cst_30 = arith.constant dense<0xFF800000> : vector<16xf32>
    %50 = vector.multi_reduction <maximumf>, %49, %cst_30 [0] : vector<64x16xf32> to vector<16xf32>
    %51 = vector.shape_cast %50 : vector<16xf32> to vector<1x16xf32>
    %cst_31 = arith.constant -1.000000e+30 : f32
    %52 = vector.shape_cast %51 : vector<1x16xf32> to vector<1x16xf32>
    %53 = vector.broadcast %52 : vector<1x16xf32> to vector<64x16xf32>
    %54 = vector.broadcast %cst_31 : f32 to vector<64x16xf32>
    %55 = arith.select %45, %53, %54 : vector<64x16xi1>, vector<64x16xf32>
    %cst_32 = arith.constant dense<0xFF800000> : vector<64xf32>
    %56 = vector.multi_reduction <maximumf>, %55, %cst_32 [1] : vector<64x16xf32> to vector<64xf32>
    %57 = vector.shape_cast %56 : vector<64xf32> to vector<64x1xf32>
    %58 = arith.subf %42, %57 : vector<64x1xf32>
    %59 = math.exp %58 : vector<64x1xf32>
    %cst_33 = arith.constant 0.000000e+00 : f32
    %60 = vector.shape_cast %59 : vector<64x1xf32> to vector<64x1xf32>
    %61 = vector.broadcast %60 : vector<64x1xf32> to vector<64x16xf32>
    %62 = vector.broadcast %cst_33 : f32 to vector<64x16xf32>
    %63 = arith.select %45, %61, %62 : vector<64x16xi1>, vector<64x16xf32>
    %cst_34 = arith.constant dense<0.000000e+00> : vector<16xf32>
    %64 = vector.multi_reduction <add>, %63, %cst_34 [0] : vector<64x16xf32> to vector<16xf32>
    %65 = vector.shape_cast %64 : vector<16xf32> to vector<1x16xf32>
    %cst_35 = arith.constant 0.000000e+00 : f32
    %66 = vector.shape_cast %65 : vector<1x16xf32> to vector<1x16xf32>
    %67 = vector.broadcast %66 : vector<1x16xf32> to vector<64x16xf32>
    %68 = vector.broadcast %cst_35 : f32 to vector<64x16xf32>
    %69 = arith.select %45, %67, %68 : vector<64x16xi1>, vector<64x16xf32>
    %cst_36 = arith.constant dense<0.000000e+00> : vector<64xf32>
    %70 = vector.multi_reduction <add>, %69, %cst_36 [1] : vector<64x16xf32> to vector<64xf32>
    %71 = vector.shape_cast %70 : vector<64xf32> to vector<64x1xf32>
    %72 = tpu.reciprocal %71 {approx = true} : vector<64x1xf32> -> vector<64x1xf32>
    %73 = arith.mulf %59, %72 : vector<64x1xf32>
    %74 = vector.broadcast %73 : vector<64x1xf32> to vector<64x32xf32>
    %75 = arith.mulf %74, %32 : vector<64x32xf32>
    %76 = arith.addf %30, %75 : vector<64x32xf32>
    %77 = math.tanh %76 : vector<64x32xf32>
    %c0_37 = arith.constant 0 : index
    %c0_38 = arith.constant 0 : index
    %78 = vector.load %arg4[%c0_37, %c0_38] : memref<16x64xbf16, #tpu.memory_space<vmem>>, vector<16x64xbf16>
    %79 = arith.truncf %77 : vector<64x32xf32> to vector<64x32xbf16>
    %cst_39 = arith.constant dense<0.000000e+00> : vector<16x32xf32>
    %80 = tpu.matmul %78, %79, %cst_39 {dimension_numbers = #tpu.dot_dimension_numbers<[1], [0], [0], [1], [0, 0, 1, 1], [], []>} : vector<16x64xbf16>, vector<64x32xbf16>, vector<16x32xf32> -> vector<16x32xf32>
    %81 = arith.truncf %80 : vector<16x32xf32> to vector<16x32xbf16>
    %c0_40 = arith.constant 0 : index
    %c0_41 = arith.constant 0 : index
    %82 = vector.load %arg10[%c0_40, %c0_41] : memref<32x32xbf16, #tpu.memory_space<vmem>>, vector<32x32xbf16>
    %cst_42 = arith.constant dense<0.000000e+00> : vector<16x32xf32>
    %83 = tpu.matmul %81, %82, %cst_42 {dimension_numbers = #tpu.dot_dimension_numbers<[1], [0], [0], [1], [0, 0, 1, 1], [], []>} : vector<16x32xbf16>, vector<32x32xbf16>, vector<16x32xf32> -> vector<16x32xf32>
    %cst_43 = arith.constant 0.000000e+00 : f32
    %84 = vector.broadcast %cst_43 : f32 to vector<16x32xf32>
    %85 = arith.cmpf oge, %83, %84 : vector<16x32xf32>
    %cst_44 = arith.constant 2.000000e-01 : f32
    %86 = vector.broadcast %cst_44 : f32 to vector<16x32xf32>
    %87 = arith.mulf %86, %83 : vector<16x32xf32>
    %88 = arith.select %85, %83, %87 : vector<16x32xi1>, vector<16x32xf32>
    %89 = arith.truncf %88 : vector<16x32xf32> to vector<16x32xbf16>
    %c0_45 = arith.constant 0 : index
    %c0_46 = arith.constant 0 : index
    %90 = vector.load %arg11[%c0_45, %c0_46] : memref<32x128xbf16, #tpu.memory_space<vmem>>, vector<32x128xbf16>
    %cst_47 = arith.constant dense<0.000000e+00> : vector<16x128xf32>
    %91 = tpu.matmul %89, %90, %cst_47 {dimension_numbers = #tpu.dot_dimension_numbers<[1], [0], [0], [1], [0, 0, 1, 1], [], []>} : vector<16x32xbf16>, vector<32x128xbf16>, vector<16x128xf32> -> vector<16x128xf32>
    %c0_48 = arith.constant 0 : index
    %c0_49 = arith.constant 0 : index
    %92 = vector.load %arg12[%c0_48, %c0_49] : memref<16x128xf32, #tpu.memory_space<vmem>>, vector<16x128xf32>
    tpu.vector_store %arg12[%c0_48, %c0_49], %91 {strides = array<i32>} : memref<16x128xf32, #tpu.memory_space<vmem>>, vector<16x128xf32>,
    return
  }
  func.func @transform_0(%arg0: i32) -> (i32, i32, i32) {
    %c0_i32 = arith.constant 0 : i32
    %c0_i32_0 = arith.constant 0 : i32
    %c0_i32_1 = arith.constant 0 : i32
    %c0_i32_2 = arith.constant 0 : i32
    return %c0_i32, %c0_i32_0, %c0_i32_1 : i32, i32, i32
  }
  func.func @transform_1(%arg0: i32) -> (i32, i32) {
    %c0_i32 = arith.constant 0 : i32
    %c0_i32_0 = arith.constant 0 : i32
    %c0_i32_1 = arith.constant 0 : i32
    return %c0_i32, %c0_i32_0 : i32, i32
  }
  func.func @transform_2(%arg0: i32) -> (i32, i32) {
    %c0_i32 = arith.constant 0 : i32
    %c0_i32_0 = arith.constant 0 : i32
    %c0_i32_1 = arith.constant 0 : i32
    return %c0_i32, %c0_i32_0 : i32, i32
  }
  func.func @transform_3(%arg0: i32) -> (i32, i32) {
    %c0_i32 = arith.constant 0 : i32
    %c0_i32_0 = arith.constant 0 : i32
    %c0_i32_1 = arith.constant 0 : i32
    return %c0_i32, %c0_i32_0 : i32, i32
  }
  func.func @transform_4(%arg0: i32) -> (i32, i32) {
    %c0_i32 = arith.constant 0 : i32
    %c0_i32_0 = arith.constant 0 : i32
    %c0_i32_1 = arith.constant 0 : i32
    return %c0_i32, %c0_i32_0 : i32, i32
  }
  func.func @transform_5(%arg0: i32) -> (i32, i32) {
    %c0_i32 = arith.constant 0 : i32
    %c0_i32_0 = arith.constant 0 : i32
    %c0_i32_1 = arith.constant 0 : i32
    return %c0_i32, %c0_i32_0 : i32, i32
  }
  func.func @transform_6(%arg0: i32) -> (i32, i32) {
    %c0_i32 = arith.constant 0 : i32
    %c0_i32_0 = arith.constant 0 : i32
    %c0_i32_1 = arith.constant 0 : i32
    return %c0_i32, %c0_i32_0 : i32, i32
  }
  func.func @transform_7(%arg0: i32) -> (i32, i32) {
    %c0_i32 = arith.constant 0 : i32
    %c0_i32_0 = arith.constant 0 : i32
    %c0_i32_1 = arith.constant 0 : i32
    return %c0_i32, %c0_i32_0 : i32, i32
  }
  func.func @transform_8(%arg0: i32) -> (i32, i32) {
    %c0_i32 = arith.constant 0 : i32
    %c0_i32_0 = arith.constant 0 : i32
    %c0_i32_1 = arith.constant 0 : i32
    return %c0_i32, %c0_i32_0 : i32, i32
  }
  func.func @transform_9(%arg0: i32) -> (i32, i32) {
    %c0_i32 = arith.constant 0 : i32
    %c0_i32_0 = arith.constant 0 : i32
    %c0_i32_1 = arith.constant 0 : i32
    return %c0_i32, %c0_i32_0 : i32, i32
  }
  func.func @transform_10(%arg0: i32) -> (i32, i32) {
    %c0_i32 = arith.constant 0 : i32
    %c0_i32_0 = arith.constant 0 : i32
    %c0_i32_1 = arith.constant 0 : i32
    return %c0_i32, %c0_i32_0 : i32, i32
  }
  func.func @transform_11(%arg0: i32) -> (i32, i32) {
    %c0_i32 = arith.constant 0 : i32
    %c0_i32_0 = arith.constant 0 : i32
    %c0_i32_1 = arith.constant 0 : i32
    return %c0_i32, %c0_i32_0 : i32, i32
  }
}

</mosaic_0001>

<llo_original>
// kernel: tpu_custom_call.1
$region0: #{tpu_custom_call.1}
  #allocation0 [shape = 'u32[]', space=smem, size = 0x4, offset = 0x4, fixed_abs, tag = 'smem constant byte address 0x4 - core index']
  #allocation1 [shape = 'u32[144,128]{1,0:T(1,128)}', space=vmem, size = 0x12000, scoped, tag = 'internal scratch']
  %s0 = inlined_call_operand.vmem [shape: bf16[64,8,8], index: 0, kind: input, shape index: {}]
  %s1 = inlined_call_operand.vmem [shape: bf16[64,6], index: 1, kind: input, shape index: {}]
  %s2 = inlined_call_operand.vmem [shape: s32[64,1], index: 2, kind: input, shape index: {}]
  %s3 = inlined_call_operand.vmem [shape: bf16[16,64], index: 3, kind: input, shape index: {}]
  %s4 = inlined_call_operand.vmem [shape: bf16[8,32], index: 4, kind: input, shape index: {}]
  %s5 = inlined_call_operand.vmem [shape: bf16[8,32], index: 5, kind: input, shape index: {}]
  %s6 = inlined_call_operand.vmem [shape: bf16[8,32], index: 6, kind: input, shape index: {}]
  %s7 = inlined_call_operand.vmem [shape: bf16[6,32], index: 7, kind: input, shape index: {}]
  %s8 = inlined_call_operand.vmem [shape: f32[1,32], index: 8, kind: input, shape index: {}]
  %s9 = inlined_call_operand.vmem [shape: bf16[32,32], index: 9, kind: input, shape index: {}]
  %s10 = inlined_call_operand.vmem [shape: bf16[32,128], index: 10, kind: input, shape index: {}]
  %s11 = inlined_call_operand.hbm [shape: f32[16,128], index: 11, kind: output, shape index: {}]
  %s12 = sld [smem:[#allocation0]]
  $region54: #{tpu_custom_call.1} parent=0
    _
  %s14 = ssub.s32 1, %s12
  %s15 = scalar_select 0, %s14, %s12
  $region1: #{tpu_custom_call.1} parent=0
    #allocation2 [shape = 'u8[8192]{0}', space=vmem, size = 0x2000, scoped, tag = 'output window, operand 0, single buffered']
    #allocation3 [shape = 's32[1]{0}', space=sflag, size = 0x4, scoped, tag = 'scoped memory for tpu_custom_call.1']
    %16 = vsyncpa [#allocation3], 0
    // Predicated region
    $region2: #{tpu_custom_call.1} parent=1 // pred_check
      _
    $region3: #{tpu_custom_call.1} parent=1 // pred_check_branch
      %18 = sbr.rel (0) target = $region5
    $region4: #{tpu_custom_call.1} parent=1 // pred_region
      _
    $region5: #{tpu_custom_call.1} parent=1 // pred_fallthru
      _
    // Predicated region
    $region6: #{tpu_custom_call.1} parent=1 // pred_check
      _
    $region7: #{tpu_custom_call.1} parent=1 // pred_check_branch
      %20 = sbr.rel (0) target = $region9
    $region8: #{tpu_custom_call.1} parent=1 // pred_region
      _
    $region9: #{tpu_custom_call.1} parent=1 // pred_fallthru
      _
    // Predicated region
    $region10: #{tpu_custom_call.1} parent=1 // pred_check
      _
    $region11: #{tpu_custom_call.1} parent=1 // pred_check_branch
      %22 = sbr.rel (0) target = $region13
    $region12: #{tpu_custom_call.1} parent=1 // pred_region
      _
    $region13: #{tpu_custom_call.1} parent=1 // pred_fallthru
      _
    // Predicated region
    $region14: #{tpu_custom_call.1} parent=1 // pred_check
      _
    $region15: #{tpu_custom_call.1} parent=1 // pred_check_branch
      %24 = sbr.rel (0) target = $region17
    $region16: #{tpu_custom_call.1} parent=1 // pred_region
      _
    $region17: #{tpu_custom_call.1} parent=1 // pred_fallthru
      _
    // Predicated region
    $region18: #{tpu_custom_call.1} parent=1 // pred_check
      _
    $region19: #{tpu_custom_call.1} parent=1 // pred_check_branch
      %26 = sbr.rel (0) target = $region21
    $region20: #{tpu_custom_call.1} parent=1 // pred_region
      _
    $region21: #{tpu_custom_call.1} parent=1 // pred_fallthru
      _
    // Predicated region
    $region22: #{tpu_custom_call.1} parent=1 // pred_check
      _
    $region23: #{tpu_custom_call.1} parent=1 // pred_check_branch
      %28 = sbr.rel (0) target = $region25
    $region24: #{tpu_custom_call.1} parent=1 // pred_region
      _
    $region25: #{tpu_custom_call.1} parent=1 // pred_fallthru
      _
    // Predicated region
    $region26: #{tpu_custom_call.1} parent=1 // pred_check
      _
    $region27: #{tpu_custom_call.1} parent=1 // pred_check_branch
      %30 = sbr.rel (0) target = $region29
    $region28: #{tpu_custom_call.1} parent=1 // pred_region
      _
    $region29: #{tpu_custom_call.1} parent=1 // pred_fallthru
      _
    // Predicated region
    $region30: #{tpu_custom_call.1} parent=1 // pred_check
      _
    $region31: #{tpu_custom_call.1} parent=1 // pred_check_branch
      %32 = sbr.rel (0) target = $region33
    $region32: #{tpu_custom_call.1} parent=1 // pred_region
      _
    $region33: #{tpu_custom_call.1} parent=1 // pred_fallthru
      _
    // Predicated region
    $region34: #{tpu_custom_call.1} parent=1 // pred_check
      _
    $region35: #{tpu_custom_call.1} parent=1 // pred_check_branch
      %34 = sbr.rel (0) target = $region37
    $region36: #{tpu_custom_call.1} parent=1 // pred_region
      _
    $region37: #{tpu_custom_call.1} parent=1 // pred_fallthru
      _
    // Predicated region
    $region38: #{tpu_custom_call.1} parent=1 // pred_check
      _
    $region39: #{tpu_custom_call.1} parent=1 // pred_check_branch
      %36 = sbr.rel (0) target = $region41
    $region40: #{tpu_custom_call.1} parent=1 // pred_region
      _
    $region41: #{tpu_custom_call.1} parent=1 // pred_fallthru
      _
    // Predicated region
    $region42: #{tpu_custom_call.1} parent=1 // pred_check
      _
    $region43: #{tpu_custom_call.1} parent=1 // pred_check_branch
      %38 = sbr.rel (0) target = $region45
    $region44: #{tpu_custom_call.1} parent=1 // pred_region
      _
    $region45: #{tpu_custom_call.1} parent=1 // pred_fallthru
      _
    %v40 = vld [vmem:[%s0] sm:$0xf]
    %v41 = vld [vmem:[%s0 + $0x4] sm:$0xf]
    %v42 = vld [vmem:[%s0 + $0x8] sm:$0xf]
    %v43 = vld [vmem:[%s0 + $0xc] sm:$0xf]
    %v44 = vld [vmem:[%s0 + $0x10] sm:$0xf]
    %v45 = vld [vmem:[%s0 + $0x14] sm:$0xf]
    %v46 = vld [vmem:[%s0 + $0x18] sm:$0xf]
    %v47 = vld [vmem:[%s0 + $0x1c] sm:$0xf]
    %v48 = vld [vmem:[%s0 + $0x20] sm:$0xf]
    %v49 = vld [vmem:[%s0 + $0x24] sm:$0xf]
    %v50 = vld [vmem:[%s0 + $0x28] sm:$0xf]
    %v51 = vld [vmem:[%s0 + $0x2c] sm:$0xf]
    %v52 = vld [vmem:[%s0 + $0x30] sm:$0xf]
    %v53 = vld [vmem:[%s0 + $0x34] sm:$0xf]
    %v54 = vld [vmem:[%s0 + $0x38] sm:$0xf]
    %v55 = vld [vmem:[%s0 + $0x3c] sm:$0xf]
    %v56 = vld [vmem:[%s0 + $0x40] sm:$0xf]
    %v57 = vld [vmem:[%s0 + $0x44] sm:$0xf]
    %v58 = vld [vmem:[%s0 + $0x48] sm:$0xf]
    %v59 = vld [vmem:[%s0 + $0x4c] sm:$0xf]
    %v60 = vld [vmem:[%s0 + $0x50] sm:$0xf]
    %v61 = vld [vmem:[%s0 + $0x54] sm:$0xf]
    %v62 = vld [vmem:[%s0 + $0x58] sm:$0xf]
    %v63 = vld [vmem:[%s0 + $0x5c] sm:$0xf]
    %v64 = vld [vmem:[%s0 + $0x60] sm:$0xf]
    %v65 = vld [vmem:[%s0 + $0x64] sm:$0xf]
    %v66 = vld [vmem:[%s0 + $0x68] sm:$0xf]
    %v67 = vld [vmem:[%s0 + $0x6c] sm:$0xf]
    %v68 = vld [vmem:[%s0 + $0x70] sm:$0xf]
    %v69 = vld [vmem:[%s0 + $0x74] sm:$0xf]
    %v70 = vld [vmem:[%s0 + $0x78] sm:$0xf]
    %v71 = vld [vmem:[%s0 + $0x7c] sm:$0xf]
    %v72 = vld [vmem:[%s0 + $0x80] sm:$0xf]
    %v73 = vld [vmem:[%s0 + $0x84] sm:$0xf]
    %v74 = vld [vmem:[%s0 + $0x88] sm:$0xf]
    %v75 = vld [vmem:[%s0 + $0x8c] sm:$0xf]
    %v76 = vld [vmem:[%s0 + $0x90] sm:$0xf]
    %v77 = vld [vmem:[%s0 + $0x94] sm:$0xf]
    %v78 = vld [vmem:[%s0 + $0x98] sm:$0xf]
    %v79 = vld [vmem:[%s0 + $0x9c] sm:$0xf]
    %v80 = vld [vmem:[%s0 + $0xa0] sm:$0xf]
    %v81 = vld [vmem:[%s0 + $0xa4] sm:$0xf]
    %v82 = vld [vmem:[%s0 + $0xa8] sm:$0xf]
    %v83 = vld [vmem:[%s0 + $0xac] sm:$0xf]
    %v84 = vld [vmem:[%s0 + $0xb0] sm:$0xf]
    %v85 = vld [vmem:[%s0 + $0xb4] sm:$0xf]
    %v86 = vld [vmem:[%s0 + $0xb8] sm:$0xf]
    %v87 = vld [vmem:[%s0 + $0xbc] sm:$0xf]
    %v88 = vld [vmem:[%s0 + $0xc0] sm:$0xf]
    %v89 = vld [vmem:[%s0 + $0xc4] sm:$0xf]
    %v90 = vld [vmem:[%s0 + $0xc8] sm:$0xf]
    %v91 = vld [vmem:[%s0 + $0xcc] sm:$0xf]
    %v92 = vld [vmem:[%s0 + $0xd0] sm:$0xf]
    %v93 = vld [vmem:[%s0 + $0xd4] sm:$0xf]
    %v94 = vld [vmem:[%s0 + $0xd8] sm:$0xf]
    %v95 = vld [vmem:[%s0 + $0xdc] sm:$0xf]
    %v96 = vld [vmem:[%s0 + $0xe0] sm:$0xf]
    %v97 = vld [vmem:[%s0 + $0xe4] sm:$0xf]
    %v98 = vld [vmem:[%s0 + $0xe8] sm:$0xf]
    %v99 = vld [vmem:[%s0 + $0xec] sm:$0xf]
    %v100 = vld [vmem:[%s0 + $0xf0] sm:$0xf]
    %v101 = vld [vmem:[%s0 + $0xf4] sm:$0xf]
    %v102 = vld [vmem:[%s0 + $0xf8] sm:$0xf]
    %v103 = vld [vmem:[%s0 + $0xfc] sm:$0xf]
    %v104 = vld [vmem:[%s1] sm:$0xf]
    %v105 = vld [vmem:[%s1 + $0x4] sm:$0xf]
    %v106 = vld [vmem:[%s1 + $0x8] sm:$0xf]
    %v107 = vld [vmem:[%s1 + $0xc] sm:$0xf]
    %v108 = vld [vmem:[%s1 + $0x10] sm:$0xf]
    %v109 = vld [vmem:[%s1 + $0x14] sm:$0xf]
    %v110 = vld [vmem:[%s1 + $0x18] sm:$0xf]
    %v111 = vld [vmem:[%s1 + $0x1c] sm:$0xf]
    %v112 = vld [vmem:[%s2] sm:$0xff]
    %v113 = vld [vmem:[%s2 + $0x8] sm:$0xff]
    %v114 = vld [vmem:[%s2 + $0x10] sm:$0xff]
    %v115 = vld [vmem:[%s2 + $0x18] sm:$0xff]
    %v116 = vld [vmem:[%s2 + $0x20] sm:$0xff]
    %v117 = vld [vmem:[%s2 + $0x28] sm:$0xff]
    %v118 = vld [vmem:[%s2 + $0x30] sm:$0xff]
    %v119 = vld [vmem:[%s2 + $0x38] sm:$0xff]
    %v120 = vld [vmem:[%s4] sm:$0xf]
    %v185 = vunpack.c.l.b16 %v40
    %v186 = vunpack.c.l.b16 %v41
    %v187 = vunpack.c.l.b16 %v42
    %v188 = vunpack.c.l.b16 %v43
    %v189 = vunpack.c.l.b16 %v44
    %v190 = vunpack.c.l.b16 %v45
    %v191 = vunpack.c.l.b16 %v46
    %v192 = vunpack.c.l.b16 %v47
    %v193 = vunpack.c.l.b16 %v48
    %v194 = vunpack.c.l.b16 %v49
    %v195 = vunpack.c.l.b16 %v50
    %v196 = vunpack.c.l.b16 %v51
    %v197 = vunpack.c.l.b16 %v52
    %v198 = vunpack.c.l.b16 %v53
    %v199 = vunpack.c.l.b16 %v54
    %v200 = vunpack.c.l.b16 %v55
    %v201 = vunpack.c.l.b16 %v56
    %v202 = vunpack.c.l.b16 %v57
    %v203 = vunpack.c.l.b16 %v58
    %v204 = vunpack.c.l.b16 %v59
    %v205 = vunpack.c.l.b16 %v60
    %v206 = vunpack.c.l.b16 %v61
    %v207 = vunpack.c.l.b16 %v62
    %v208 = vunpack.c.l.b16 %v63
    %v209 = vunpack.c.l.b16 %v64
    %v210 = vunpack.c.l.b16 %v65
    %v211 = vunpack.c.l.b16 %v66
    %v212 = vunpack.c.l.b16 %v67
    %v213 = vunpack.c.l.b16 %v68
    %v214 = vunpack.c.l.b16 %v69
    %v215 = vunpack.c.l.b16 %v70
    %v216 = vunpack.c.l.b16 %v71
    %v217 = vunpack.c.l.b16 %v72
    %v218 = vunpack.c.l.b16 %v73
    %v219 = vunpack.c.l.b16 %v74
    %v220 = vunpack.c.l.b16 %v75
    %v221 = vunpack.c.l.b16 %v76
    %v222 = vunpack.c.l.b16 %v77
    %v223 = vunpack.c.l.b16 %v78
    %v224 = vunpack.c.l.b16 %v79
    %v225 = vunpack.c.l.b16 %v80
    %v226 = vunpack.c.l.b16 %v81
    %v227 = vunpack.c.l.b16 %v82
    %v228 = vunpack.c.l.b16 %v83
    %v229 = vunpack.c.l.b16 %v84
    %v230 = vunpack.c.l.b16 %v85
    %v231 = vunpack.c.l.b16 %v86
    %v232 = vunpack.c.l.b16 %v87
    %v233 = vunpack.c.l.b16 %v88
    %v234 = vunpack.c.l.b16 %v89
    %v235 = vunpack.c.l.b16 %v90
    %v236 = vunpack.c.l.b16 %v91
    %v237 = vunpack.c.l.b16 %v92
    %v238 = vunpack.c.l.b16 %v93
    %v239 = vunpack.c.l.b16 %v94
    %v240 = vunpack.c.l.b16 %v95
    %v241 = vunpack.c.l.b16 %v96
    %v242 = vunpack.c.l.b16 %v97
    %v243 = vunpack.c.l.b16 %v98
    %v244 = vunpack.c.l.b16 %v99
    %v245 = vunpack.c.l.b16 %v100
    %v246 = vunpack.c.l.b16 %v101
    %v247 = vunpack.c.l.b16 %v102
    %v248 = vunpack.c.l.b16 %v103
    %v249 = vpack.c.b16 %v186, %v185
    %v250 = vpack.c.b16 %v188, %v187
    %v251 = vpack.c.b16 %v190, %v189
    %v252 = vpack.c.b16 %v192, %v191
    %v253 = vpack.c.b16 %v194, %v193
    %v254 = vpack.c.b16 %v196, %v195
    %v255 = vpack.c.b16 %v198, %v197
    %v256 = vpack.c.b16 %v200, %v199
    %v257 = vpack.c.b16 %v202, %v201
    %v258 = vpack.c.b16 %v204, %v203
    %v259 = vpack.c.b16 %v206, %v205
    %v260 = vpack.c.b16 %v208, %v207
    %v261 = vpack.c.b16 %v210, %v209
    %v262 = vpack.c.b16 %v212, %v211
    %v263 = vpack.c.b16 %v214, %v213
    %v264 = vpack.c.b16 %v216, %v215
    %v265 = vpack.c.b16 %v218, %v217
    %v266 = vpack.c.b16 %v220, %v219
    %v267 = vpack.c.b16 %v222, %v221
    %v268 = vpack.c.b16 %v224, %v223
    %v269 = vpack.c.b16 %v226, %v225
    %v270 = vpack.c.b16 %v228, %v227
    %v271 = vpack.c.b16 %v230, %v229
    %v272 = vpack.c.b16 %v232, %v231
    %v273 = vpack.c.b16 %v234, %v233
    %v274 = vpack.c.b16 %v236, %v235
    %v275 = vpack.c.b16 %v238, %v237
    %v276 = vpack.c.b16 %v240, %v239
    %v277 = vpack.c.b16 %v242, %v241
    %v278 = vpack.c.b16 %v244, %v243
    %v279 = vpack.c.b16 %v246, %v245
    %v280 = vpack.c.b16 %v248, %v247
    %vm281 = vcmask 64512
    %v283 = vsel %vm281, %v249, 0
    %v286 = vsel %vm281, %v250, 0
    %v289 = vsel %vm281, %v251, 0
    %v292 = vsel %vm281, %v252, 0
    %v295 = vsel %vm281, %v253, 0
    %v298 = vsel %vm281, %v254, 0
    %v301 = vsel %vm281, %v255, 0
    %v304 = vsel %vm281, %v256, 0
    %v307 = vsel %vm281, %v257, 0
    %v310 = vsel %vm281, %v258, 0
    %v313 = vsel %vm281, %v259, 0
    %v316 = vsel %vm281, %v260, 0
    %v319 = vsel %vm281, %v261, 0
    %v322 = vsel %vm281, %v262, 0
    %v325 = vsel %vm281, %v263, 0
    %v328 = vsel %vm281, %v264, 0
    %v331 = vsel %vm281, %v265, 0
    %v334 = vsel %vm281, %v266, 0
    %v337 = vsel %vm281, %v267, 0
    %v340 = vsel %vm281, %v268, 0
    %v343 = vsel %vm281, %v269, 0
    %v346 = vsel %vm281, %v270, 0
    %v349 = vsel %vm281, %v271, 0
    %v352 = vsel %vm281, %v272, 0
    %v355 = vsel %vm281, %v273, 0
    %v358 = vsel %vm281, %v274, 0
    %v361 = vsel %vm281, %v275, 0
    %v364 = vsel %vm281, %v276, 0
    %v367 = vsel %vm281, %v277, 0
    %v370 = vsel %vm281, %v278, 0
    %v373 = vsel %vm281, %v279, 0
    %v376 = vsel %vm281, %v280, 0
    %vm378 = vcmask 1043456
    %v380 = vsel %vm378, %v120, 0
    %382 = vmatprep.subr.bf16.mxu0 0
    %383 = vmatpush1.bf16.msra.mxu0 0
    %384 = vmatprep.subr.bf16.mxu0 0
    %385 = vmatpush1.bf16.msra.mxu0 0
    %386 = vmatprep.subr.bf16.mxu0 0
    %387 = vmatpush1.bf16.msra.mxu0 0
    %388 = vmatprep.subr.bf16.mxu0 0
    %389 = vmatpush1.bf16.msra.mxu0 0
    %390 = vmatprep.subr.bf16.mxu0 0
    %391 = vmatpush1.bf16.msra.mxu0 0
    %392 = vmatprep.subr.bf16.mxu0 0
    %393 = vmatpush1.bf16.msra.mxu0 0
    %394 = vmatprep.subr.bf16.mxu0 0
    %395 = vmatpush1.bf16.msra.mxu0 0
    %396 = vmatprep.subr.bf16.mxu0 0
    %397 = vmatpush1.bf16.msra.mxu0 %v380
    %398 = vmatprep.subr.bf16.mxu0 0
    %399 = vmatpush2.bf16.msra.mxu0 0
    %400 = vmatprep.subr.bf16.mxu0 0
    %401 = vmatpush2.bf16.msra.mxu0 0
    %402 = vmatprep.subr.bf16.mxu0 0
    %403 = vmatpush2.bf16.msra.mxu0 0
    %404 = vmatprep.subr.bf16.mxu0 0
    %405 = vmatpush2.bf16.msra.mxu0 0
    %406 = vmatprep.subr.bf16.mxu0 0
    %407 = vmatpush2.bf16.msra.mxu0 0
    %408 = vmatprep.subr.bf16.mxu0 0
    %409 = vmatpush2.bf16.msra.mxu0 0
    %410 = vmatprep.subr.bf16.mxu0 0
    %411 = vmatpush2.bf16.msra.mxu0 0
    %412 = vmatprep.subr.bf16.mxu0 0
    %413 = vmatpush2.bf16.msra.mxu0 0
    %414 = vmatprep.mubr.bf16.mxu0 0
    %415 = vmatmul.mubr.bf16.gmra.mxu0 %v283
    %v416 = vpop.f32.mrf.mxu0
    %v417 = vadd.f32 0.0, %v416
    %v418 = vpop.f32.mrf.mxu0
    %v419 = vpop.f32.mrf.mxu0
    %v420 = vadd.f32 0.0, %v419
    %v421 = vpop.f32.mrf.mxu0
    %422 = vmatprep.mubr.bf16.mxu0 0
    %423 = vmatmul.mubr.bf16.gmra.mxu0 %v286
    %v424 = vpop.f32.mrf.mxu0
    %v425 = vadd.f32 0.0, %v424
    %v426 = vpop.f32.mrf.mxu0
    %v427 = vpop.f32.mrf.mxu0
    %v428 = vadd.f32 0.0, %v427
    %v429 = vpop.f32.mrf.mxu0
    %430 = vmatprep.mubr.bf16.mxu0 0
    %431 = vmatmul.mubr.bf16.gmra.mxu0 %v289
    %v432 = vpop.f32.mrf.mxu0
    %v433 = vadd.f32 0.0, %v432
    %v434 = vpop.f32.mrf.mxu0
    %v435 = vpop.f32.mrf.mxu0
    %v436 = vadd.f32 0.0, %v435
    %v437 = vpop.f32.mrf.mxu0
    %438 = vmatprep.mubr.bf16.mxu0 0
    %439 = vmatmul.mubr.bf16.gmra.mxu0 %v292
    %v440 = vpop.f32.mrf.mxu0
    %v441 = vadd.f32 0.0, %v440
    %v442 = vpop.f32.mrf.mxu0
    %v443 = vpop.f32.mrf.mxu0
    %v444 = vadd.f32 0.0, %v443
    %v445 = vpop.f32.mrf.mxu0
    %446 = vmatprep.mubr.bf16.mxu0 0
    %447 = vmatmul.mubr.bf16.gmra.mxu0 %v295
    %v448 = vpop.f32.mrf.mxu0
    %v449 = vadd.f32 0.0, %v448
    %v450 = vpop.f32.mrf.mxu0
    %v451 = vpop.f32.mrf.mxu0
    %v452 = vadd.f32 0.0, %v451
    %v453 = vpop.f32.mrf.mxu0
    %454 = vmatprep.mubr.bf16.mxu0 0
    %455 = vmatmul.mubr.bf16.gmra.mxu0 %v298
    %v456 = vpop.f32.mrf.mxu0
    %v457 = vadd.f32 0.0, %v456
    %v458 = vpop.f32.mrf.mxu0
    %v459 = vpop.f32.mrf.mxu0
    %v460 = vadd.f32 0.0, %v459
    %v461 = vpop.f32.mrf.mxu0
    %462 = vmatprep.mubr.bf16.mxu0 0
    %463 = vmatmul.mubr.bf16.gmra.mxu0 %v301
    %v464 = vpop.f32.mrf.mxu0
    %v465 = vadd.f32 0.0, %v464
    %v466 = vpop.f32.mrf.mxu0
    %v467 = vpop.f32.mrf.mxu0
    %v468 = vadd.f32 0.0, %v467
    %v469 = vpop.f32.mrf.mxu0
    %470 = vmatprep.mubr.bf16.mxu0 0
    %471 = vmatmul.mubr.bf16.gmra.mxu0 %v304
    %v472 = vpop.f32.mrf.mxu0
    %v473 = vadd.f32 0.0, %v472
    %v474 = vpop.f32.mrf.mxu0
    %v475 = vpop.f32.mrf.mxu0
    %v476 = vadd.f32 0.0, %v475
    %v477 = vpop.f32.mrf.mxu0
    %478 = vmatprep.mubr.bf16.mxu0 0
    %479 = vmatmul.mubr.bf16.gmra.mxu0 %v307
    %v480 = vpop.f32.mrf.mxu0
    %v481 = vadd.f32 0.0, %v480
    %v482 = vpop.f32.mrf.mxu0
    %v483 = vpop.f32.mrf.mxu0
    %v484 = vadd.f32 0.0, %v483
    %v485 = vpop.f32.mrf.mxu0
    %486 = vmatprep.mubr.bf16.mxu0 0
    %487 = vmatmul.mubr.bf16.gmra.mxu0 %v310
    %v488 = vpop.f32.mrf.mxu0
    %v489 = vadd.f32 0.0, %v488
    %v490 = vpop.f32.mrf.mxu0
    %v491 = vpop.f32.mrf.mxu0
    %v492 = vadd.f32 0.0, %v491
    %v493 = vpop.f32.mrf.mxu0
    %494 = vmatprep.mubr.bf16.mxu0 0
    %495 = vmatmul.mubr.bf16.gmra.mxu0 %v313
    %v496 = vpop.f32.mrf.mxu0
    %v497 = vadd.f32 0.0, %v496
    %v498 = vpop.f32.mrf.mxu0
    %v499 = vpop.f32.mrf.mxu0
    %v500 = vadd.f32 0.0, %v499
    %v501 = vpop.f32.mrf.mxu0
    %502 = vmatprep.mubr.bf16.mxu0 0
    %503 = vmatmul.mubr.bf16.gmra.mxu0 %v316
    %v504 = vpop.f32.mrf.mxu0
    %v505 = vadd.f32 0.0, %v504
    %v506 = vpop.f32.mrf.mxu0
    %v507 = vpop.f32.mrf.mxu0
    %v508 = vadd.f32 0.0, %v507
    %v509 = vpop.f32.mrf.mxu0
    %510 = vmatprep.mubr.bf16.mxu0 0
    %511 = vmatmul.mubr.bf16.gmra.mxu0 %v319
    %v512 = vpop.f32.mrf.mxu0
    %v513 = vadd.f32 0.0, %v512
    %v514 = vpop.f32.mrf.mxu0
    %v515 = vpop.f32.mrf.mxu0
    %v516 = vadd.f32 0.0, %v515
    %v517 = vpop.f32.mrf.mxu0
    %518 = vmatprep.mubr.bf16.mxu0 0
    %519 = vmatmul.mubr.bf16.gmra.mxu0 %v322
    %v520 = vpop.f32.mrf.mxu0
    %v521 = vadd.f32 0.0, %v520
    %v522 = vpop.f32.mrf.mxu0
    %v523 = vpop.f32.mrf.mxu0
    %v524 = vadd.f32 0.0, %v523
    %v525 = vpop.f32.mrf.mxu0
    %526 = vmatprep.mubr.bf16.mxu0 0
    %527 = vmatmul.mubr.bf16.gmra.mxu0 %v325
    %v528 = vpop.f32.mrf.mxu0
    %v529 = vadd.f32 0.0, %v528
    %v530 = vpop.f32.mrf.mxu0
    %v531 = vpop.f32.mrf.mxu0
    %v532 = vadd.f32 0.0, %v531
    %v533 = vpop.f32.mrf.mxu0
    %534 = vmatprep.mubr.bf16.mxu0 0
    %535 = vmatmul.mubr.bf16.gmra.mxu0 %v328
    %v536 = vpop.f32.mrf.mxu0
    %v537 = vadd.f32 0.0, %v536
    %v538 = vpop.f32.mrf.mxu0
    %v539 = vpop.f32.mrf.mxu0
    %v540 = vadd.f32 0.0, %v539
    %v541 = vpop.f32.mrf.mxu0
    %542 = vmatprep.mubr.bf16.mxu0 0
    %543 = vmatmul.mubr.bf16.gmra.mxu0 %v331
    %v544 = vpop.f32.mrf.mxu0
    %v545 = vadd.f32 0.0, %v544
    %v546 = vpop.f32.mrf.mxu0
    %v547 = vpop.f32.mrf.mxu0
    %v548 = vadd.f32 0.0, %v547
    %v549 = vpop.f32.mrf.mxu0
    %550 = vmatprep.mubr.bf16.mxu0 0
    %551 = vmatmul.mubr.bf16.gmra.mxu0 %v334
    %v552 = vpop.f32.mrf.mxu0
    %v553 = vadd.f32 0.0, %v552
    %v554 = vpop.f32.mrf.mxu0
    %v555 = vpop.f32.mrf.mxu0
    %v556 = vadd.f32 0.0, %v555
    %v557 = vpop.f32.mrf.mxu0
    %558 = vmatprep.mubr.bf16.mxu0 0
    %559 = vmatmul.mubr.bf16.gmra.mxu0 %v337
    %v560 = vpop.f32.mrf.mxu0
    %v561 = vadd.f32 0.0, %v560
    %v562 = vpop.f32.mrf.mxu0
    %v563 = vpop.f32.mrf.mxu0
    %v564 = vadd.f32 0.0, %v563
    %v565 = vpop.f32.mrf.mxu0
    %566 = vmatprep.mubr.bf16.mxu0 0
    %567 = vmatmul.mubr.bf16.gmra.mxu0 %v340
    %v568 = vpop.f32.mrf.mxu0
    %v569 = vadd.f32 0.0, %v568
    %v570 = vpop.f32.mrf.mxu0
    %v571 = vpop.f32.mrf.mxu0
    %v572 = vadd.f32 0.0, %v571
    %v573 = vpop.f32.mrf.mxu0
    %574 = vmatprep.mubr.bf16.mxu0 0
    %575 = vmatmul.mubr.bf16.gmra.mxu0 %v343
    %v576 = vpop.f32.mrf.mxu0
    %v577 = vadd.f32 0.0, %v576
    %v578 = vpop.f32.mrf.mxu0
    %v579 = vpop.f32.mrf.mxu0
    %v580 = vadd.f32 0.0, %v579
    %v581 = vpop.f32.mrf.mxu0
    %582 = vmatprep.mubr.bf16.mxu0 0
    %583 = vmatmul.mubr.bf16.gmra.mxu0 %v346
    %v584 = vpop.f32.mrf.mxu0
    %v585 = vadd.f32 0.0, %v584
    %v586 = vpop.f32.mrf.mxu0
    %v587 = vpop.f32.mrf.mxu0
    %v588 = vadd.f32 0.0, %v587
    %v589 = vpop.f32.mrf.mxu0
    %590 = vmatprep.mubr.bf16.mxu0 0
    %591 = vmatmul.mubr.bf16.gmra.mxu0 %v349
    %v592 = vpop.f32.mrf.mxu0
    %v593 = vadd.f32 0.0, %v592
    %v594 = vpop.f32.mrf.mxu0
    %v595 = vpop.f32.mrf.mxu0
    %v596 = vadd.f32 0.0, %v595
    %v597 = vpop.f32.mrf.mxu0
    %598 = vmatprep.mubr.bf16.mxu0 0
    %599 = vmatmul.mubr.bf16.gmra.mxu0 %v352
    %v600 = vpop.f32.mrf.mxu0
    %v601 = vadd.f32 0.0, %v600
    %v602 = vpop.f32.mrf.mxu0
    %v603 = vpop.f32.mrf.mxu0
    %v604 = vadd.f32 0.0, %v603
    %v605 = vpop.f32.mrf.mxu0
    %606 = vmatprep.mubr.bf16.mxu0 0
    %607 = vmatmul.mubr.bf16.gmra.mxu0 %v355
    %v608 = vpop.f32.mrf.mxu0
    %v609 = vadd.f32 0.0, %v608
    %v610 = vpop.f32.mrf.mxu0
    %v611 = vpop.f32.mrf.mxu0
    %v612 = vadd.f32 0.0, %v611
    %v613 = vpop.f32.mrf.mxu0
    %614 = vmatprep.mubr.bf16.mxu0 0
    %615 = vmatmul.mubr.bf16.gmra.mxu0 %v358
    %v616 = vpop.f32.mrf.mxu0
    %v617 = vadd.f32 0.0, %v616
    %v618 = vpop.f32.mrf.mxu0
    %v619 = vpop.f32.mrf.mxu0
    %v620 = vadd.f32 0.0, %v619
    %v621 = vpop.f32.mrf.mxu0
    %622 = vmatprep.mubr.bf16.mxu0 0
    %623 = vmatmul.mubr.bf16.gmra.mxu0 %v361
    %v624 = vpop.f32.mrf.mxu0
    %v625 = vadd.f32 0.0, %v624
    %v626 = vpop.f32.mrf.mxu0
    %v627 = vpop.f32.mrf.mxu0
    %v628 = vadd.f32 0.0, %v627
    %v629 = vpop.f32.mrf.mxu0
    %630 = vmatprep.mubr.bf16.mxu0 0
    %631 = vmatmul.mubr.bf16.gmra.mxu0 %v364
    %v632 = vpop.f32.mrf.mxu0
    %v633 = vadd.f32 0.0, %v632
    %v634 = vpop.f32.mrf.mxu0
    %v635 = vpop.f32.mrf.mxu0
    %v636 = vadd.f32 0.0, %v635
    %v637 = vpop.f32.mrf.mxu0
    %638 = vmatprep.mubr.bf16.mxu0 0
    %639 = vmatmul.mubr.bf16.gmra.mxu0 %v367
    %v640 = vpop.f32.mrf.mxu0
    %v641 = vadd.f32 0.0, %v640
    %v642 = vpop.f32.mrf.mxu0
    %v643 = vpop.f32.mrf.mxu0
    %v644 = vadd.f32 0.0, %v643
    %v645 = vpop.f32.mrf.mxu0
    %646 = vmatprep.mubr.bf16.mxu0 0
    %647 = vmatmul.mubr.bf16.gmra.mxu0 %v370
    %v648 = vpop.f32.mrf.mxu0
    %v649 = vadd.f32 0.0, %v648
    %v650 = vpop.f32.mrf.mxu0
    %v651 = vpop.f32.mrf.mxu0
    %v652 = vadd.f32 0.0, %v651
    %v653 = vpop.f32.mrf.mxu0
    %654 = vmatprep.mubr.bf16.mxu0 0
    %655 = vmatmul.mubr.bf16.gmra.mxu0 %v373
    %v656 = vpop.f32.mrf.mxu0
    %v657 = vadd.f32 0.0, %v656
    %v658 = vpop.f32.mrf.mxu0
    %v659 = vpop.f32.mrf.mxu0
    %v660 = vadd.f32 0.0, %v659
    %v661 = vpop.f32.mrf.mxu0
    %662 = vmatprep.mubr.bf16.mxu0 0
    %663 = vmatmul.mubr.bf16.gmra.mxu0 %v376
    %v664 = vpop.f32.mrf.mxu0
    %v665 = vadd.f32 0.0, %v664
    %v666 = vpop.f32.mrf.mxu0
    %v667 = vpop.f32.mrf.mxu0
    %v668 = vadd.f32 0.0, %v667
    %v669 = vpop.f32.mrf.mxu0
    %670 = vdwg.mxu0
    %v671 = vld [vmem:[%s5] sm:$0xf]
    %v673 = vsel %vm378, %v671, 0
    %675 = vmatprep.subr.bf16.mxu0 0
    %676 = vmatpush1.bf16.msra.mxu0 0
    %677 = vmatprep.subr.bf16.mxu0 0
    %678 = vmatpush1.bf16.msra.mxu0 0
    %679 = vmatprep.subr.bf16.mxu0 0
    %680 = vmatpush1.bf16.msra.mxu0 0
    %681 = vmatprep.subr.bf16.mxu0 0
    %682 = vmatpush1.bf16.msra.mxu0 0
    %683 = vmatprep.subr.bf16.mxu0 0
    %684 = vmatpush1.bf16.msra.mxu0 0
    %685 = vmatprep.subr.bf16.mxu0 0
    %686 = vmatpush1.bf16.msra.mxu0 0
    %687 = vmatprep.subr.bf16.mxu0 0
    %688 = vmatpush1.bf16.msra.mxu0 0
    %689 = vmatprep.subr.bf16.mxu0 0
    %690 = vmatpush1.bf16.msra.mxu0 %v673
    %691 = vmatprep.subr.bf16.mxu0 0
    %692 = vmatpush2.bf16.msra.mxu0 0
    %693 = vmatprep.subr.bf16.mxu0 0
    %694 = vmatpush2.bf16.msra.mxu0 0
    %695 = vmatprep.subr.bf16.mxu0 0
    %696 = vmatpush2.bf16.msra.mxu0 0
    %697 = vmatprep.subr.bf16.mxu0 0
    %698 = vmatpush2.bf16.msra.mxu0 0
    %699 = vmatprep.subr.bf16.mxu0 0
    %700 = vmatpush2.bf16.msra.mxu0 0
    %701 = vmatprep.subr.bf16.mxu0 0
    %702 = vmatpush2.bf16.msra.mxu0 0
    %703 = vmatprep.subr.bf16.mxu0 0
    %704 = vmatpush2.bf16.msra.mxu0 0
    %705 = vmatprep.subr.bf16.mxu0 0
    %706 = vmatpush2.bf16.msra.mxu0 0
    %707 = vmatprep.mubr.bf16.mxu0 0
    %708 = vmatmul.mubr.bf16.gmra.mxu0 %v283
    %v709 = vpop.f32.mrf.mxu0
    %v710 = vadd.f32 0.0, %v709
    %v711 = vpop.f32.mrf.mxu0
    %v712 = vpop.f32.mrf.mxu0
    %v713 = vadd.f32 0.0, %v712
    %v714 = vpop.f32.mrf.mxu0
    %715 = vmatprep.mubr.bf16.mxu0 0
    %716 = vmatmul.mubr.bf16.gmra.mxu0 %v286
    %v717 = vpop.f32.mrf.mxu0
    %v718 = vadd.f32 0.0, %v717
    %v719 = vpop.f32.mrf.mxu0
    %v720 = vpop.f32.mrf.mxu0
    %v721 = vadd.f32 0.0, %v720
    %v722 = vpop.f32.mrf.mxu0
    %723 = vmatprep.mubr.bf16.mxu0 0
    %724 = vmatmul.mubr.bf16.gmra.mxu0 %v289
    %v725 = vpop.f32.mrf.mxu0
    %v726 = vadd.f32 0.0, %v725
    %v727 = vpop.f32.mrf.mxu0
    %v728 = vpop.f32.mrf.mxu0
    %v729 = vadd.f32 0.0, %v728
    %v730 = vpop.f32.mrf.mxu0
    %731 = vmatprep.mubr.bf16.mxu0 0
    %732 = vmatmul.mubr.bf16.gmra.mxu0 %v292
    %v733 = vpop.f32.mrf.mxu0
    %v734 = vadd.f32 0.0, %v733
    %v735 = vpop.f32.mrf.mxu0
    %v736 = vpop.f32.mrf.mxu0
    %v737 = vadd.f32 0.0, %v736
    %v738 = vpop.f32.mrf.mxu0
    %739 = vmatprep.mubr.bf16.mxu0 0
    %740 = vmatmul.mubr.bf16.gmra.mxu0 %v295
    %v741 = vpop.f32.mrf.mxu0
    %v742 = vadd.f32 0.0, %v741
    %v743 = vpop.f32.mrf.mxu0
    %v744 = vpop.f32.mrf.mxu0
    %v745 = vadd.f32 0.0, %v744
    %v746 = vpop.f32.mrf.mxu0
    %747 = vmatprep.mubr.bf16.mxu0 0
    %748 = vmatmul.mubr.bf16.gmra.mxu0 %v298
    %v749 = vpop.f32.mrf.mxu0
    %v750 = vadd.f32 0.0, %v749
    %v751 = vpop.f32.mrf.mxu0
    %v752 = vpop.f32.mrf.mxu0
    %v753 = vadd.f32 0.0, %v752
    %v754 = vpop.f32.mrf.mxu0
    %755 = vmatprep.mubr.bf16.mxu0 0
    %756 = vmatmul.mubr.bf16.gmra.mxu0 %v301
    %v757 = vpop.f32.mrf.mxu0
    %v758 = vadd.f32 0.0, %v757
    %v759 = vpop.f32.mrf.mxu0
    %v760 = vpop.f32.mrf.mxu0
    %v761 = vadd.f32 0.0, %v760
    %v762 = vpop.f32.mrf.mxu0
    %763 = vmatprep.mubr.bf16.mxu0 0
    %764 = vmatmul.mubr.bf16.gmra.mxu0 %v304
    %v765 = vpop.f32.mrf.mxu0
    %v766 = vadd.f32 0.0, %v765
    %v767 = vpop.f32.mrf.mxu0
    %v768 = vpop.f32.mrf.mxu0
    %v769 = vadd.f32 0.0, %v768
    %v770 = vpop.f32.mrf.mxu0
    %771 = vmatprep.mubr.bf16.mxu0 0
    %772 = vmatmul.mubr.bf16.gmra.mxu0 %v307
    %v773 = vpop.f32.mrf.mxu0
    %v774 = vadd.f32 0.0, %v773
    %v775 = vpop.f32.mrf.mxu0
    %v776 = vpop.f32.mrf.mxu0
    %v777 = vadd.f32 0.0, %v776
    %v778 = vpop.f32.mrf.mxu0
    %779 = vmatprep.mubr.bf16.mxu0 0
    %780 = vmatmul.mubr.bf16.gmra.mxu0 %v310
    %v781 = vpop.f32.mrf.mxu0
    %v782 = vadd.f32 0.0, %v781
    %v783 = vpop.f32.mrf.mxu0
    %v784 = vpop.f32.mrf.mxu0
    %v785 = vadd.f32 0.0, %v784
    %v786 = vpop.f32.mrf.mxu0
    %787 = vmatprep.mubr.bf16.mxu0 0
    %788 = vmatmul.mubr.bf16.gmra.mxu0 %v313
    %v789 = vpop.f32.mrf.mxu0
    %v790 = vadd.f32 0.0, %v789
    %v791 = vpop.f32.mrf.mxu0
    %v792 = vpop.f32.mrf.mxu0
    %v793 = vadd.f32 0.0, %v792
    %v794 = vpop.f32.mrf.mxu0
    %795 = vmatprep.mubr.bf16.mxu0 0
    %796 = vmatmul.mubr.bf16.gmra.mxu0 %v316
    %v797 = vpop.f32.mrf.mxu0
    %v798 = vadd.f32 0.0, %v797
    %v799 = vpop.f32.mrf.mxu0
    %v800 = vpop.f32.mrf.mxu0
    %v801 = vadd.f32 0.0, %v800
    %v802 = vpop.f32.mrf.mxu0
    %803 = vmatprep.mubr.bf16.mxu0 0
    %804 = vmatmul.mubr.bf16.gmra.mxu0 %v319
    %v805 = vpop.f32.mrf.mxu0
    %v806 = vadd.f32 0.0, %v805
    %v807 = vpop.f32.mrf.mxu0
    %v808 = vpop.f32.mrf.mxu0
    %v809 = vadd.f32 0.0, %v808
    %v810 = vpop.f32.mrf.mxu0
    %811 = vmatprep.mubr.bf16.mxu0 0
    %812 = vmatmul.mubr.bf16.gmra.mxu0 %v322
    %v813 = vpop.f32.mrf.mxu0
    %v814 = vadd.f32 0.0, %v813
    %v815 = vpop.f32.mrf.mxu0
    %v816 = vpop.f32.mrf.mxu0
    %v817 = vadd.f32 0.0, %v816
    %v818 = vpop.f32.mrf.mxu0
    %819 = vmatprep.mubr.bf16.mxu0 0
    %820 = vmatmul.mubr.bf16.gmra.mxu0 %v325
    %v821 = vpop.f32.mrf.mxu0
    %v822 = vadd.f32 0.0, %v821
    %v823 = vpop.f32.mrf.mxu0
    %v824 = vpop.f32.mrf.mxu0
    %v825 = vadd.f32 0.0, %v824
    %v826 = vpop.f32.mrf.mxu0
    %827 = vmatprep.mubr.bf16.mxu0 0
    %828 = vmatmul.mubr.bf16.gmra.mxu0 %v328
    %v829 = vpop.f32.mrf.mxu0
    %v830 = vadd.f32 0.0, %v829
    %v831 = vpop.f32.mrf.mxu0
    %v832 = vpop.f32.mrf.mxu0
    %v833 = vadd.f32 0.0, %v832
    %v834 = vpop.f32.mrf.mxu0
    %835 = vmatprep.mubr.bf16.mxu0 0
    %836 = vmatmul.mubr.bf16.gmra.mxu0 %v331
    %v837 = vpop.f32.mrf.mxu0
    %v838 = vadd.f32 0.0, %v837
    %v839 = vpop.f32.mrf.mxu0
    %v840 = vpop.f32.mrf.mxu0
    %v841 = vadd.f32 0.0, %v840
    %v842 = vpop.f32.mrf.mxu0
    %843 = vmatprep.mubr.bf16.mxu0 0
    %844 = vmatmul.mubr.bf16.gmra.mxu0 %v334
    %v845 = vpop.f32.mrf.mxu0
    %v846 = vadd.f32 0.0, %v845
    %v847 = vpop.f32.mrf.mxu0
    %v848 = vpop.f32.mrf.mxu0
    %v849 = vadd.f32 0.0, %v848
    %v850 = vpop.f32.mrf.mxu0
    %851 = vmatprep.mubr.bf16.mxu0 0
    %852 = vmatmul.mubr.bf16.gmra.mxu0 %v337
    %v853 = vpop.f32.mrf.mxu0
    %v854 = vadd.f32 0.0, %v853
    %v855 = vpop.f32.mrf.mxu0
    %v856 = vpop.f32.mrf.mxu0
    %v857 = vadd.f32 0.0, %v856
    %v858 = vpop.f32.mrf.mxu0
    %859 = vmatprep.mubr.bf16.mxu0 0
    %860 = vmatmul.mubr.bf16.gmra.mxu0 %v340
    %v861 = vpop.f32.mrf.mxu0
    %v862 = vadd.f32 0.0, %v861
    %v863 = vpop.f32.mrf.mxu0
    %v864 = vpop.f32.mrf.mxu0
    %v865 = vadd.f32 0.0, %v864
    %v866 = vpop.f32.mrf.mxu0
    %867 = vmatprep.mubr.bf16.mxu0 0
    %868 = vmatmul.mubr.bf16.gmra.mxu0 %v343
    %v869 = vpop.f32.mrf.mxu0
    %v870 = vadd.f32 0.0, %v869
    %v871 = vpop.f32.mrf.mxu0
    %v872 = vpop.f32.mrf.mxu0
    %v873 = vadd.f32 0.0, %v872
    %v874 = vpop.f32.mrf.mxu0
    %875 = vmatprep.mubr.bf16.mxu0 0
    %876 = vmatmul.mubr.bf16.gmra.mxu0 %v346
    %v877 = vpop.f32.mrf.mxu0
    %v878 = vadd.f32 0.0, %v877
    %v879 = vpop.f32.mrf.mxu0
    %v880 = vpop.f32.mrf.mxu0
    %v881 = vadd.f32 0.0, %v880
    %v882 = vpop.f32.mrf.mxu0
    %883 = vmatprep.mubr.bf16.mxu0 0
    %884 = vmatmul.mubr.bf16.gmra.mxu0 %v349
    %v885 = vpop.f32.mrf.mxu0
    %v886 = vadd.f32 0.0, %v885
    %v887 = vpop.f32.mrf.mxu0
    %v888 = vpop.f32.mrf.mxu0
    %v889 = vadd.f32 0.0, %v888
    %v890 = vpop.f32.mrf.mxu0
    %891 = vmatprep.mubr.bf16.mxu0 0
    %892 = vmatmul.mubr.bf16.gmra.mxu0 %v352
    %v893 = vpop.f32.mrf.mxu0
    %v894 = vadd.f32 0.0, %v893
    %v895 = vpop.f32.mrf.mxu0
    %v896 = vpop.f32.mrf.mxu0
    %v897 = vadd.f32 0.0, %v896
    %v898 = vpop.f32.mrf.mxu0
    %899 = vmatprep.mubr.bf16.mxu0 0
    %900 = vmatmul.mubr.bf16.gmra.mxu0 %v355
    %v901 = vpop.f32.mrf.mxu0
    %v902 = vadd.f32 0.0, %v901
    %v903 = vpop.f32.mrf.mxu0
    %v904 = vpop.f32.mrf.mxu0
    %v905 = vadd.f32 0.0, %v904
    %v906 = vpop.f32.mrf.mxu0
    %907 = vmatprep.mubr.bf16.mxu0 0
    %908 = vmatmul.mubr.bf16.gmra.mxu0 %v358
    %v909 = vpop.f32.mrf.mxu0
    %v910 = vadd.f32 0.0, %v909
    %v911 = vpop.f32.mrf.mxu0
    %v912 = vpop.f32.mrf.mxu0
    %v913 = vadd.f32 0.0, %v912
    %v914 = vpop.f32.mrf.mxu0
    %915 = vmatprep.mubr.bf16.mxu0 0
    %916 = vmatmul.mubr.bf16.gmra.mxu0 %v361
    %v917 = vpop.f32.mrf.mxu0
    %v918 = vadd.f32 0.0, %v917
    %v919 = vpop.f32.mrf.mxu0
    %v920 = vpop.f32.mrf.mxu0
    %v921 = vadd.f32 0.0, %v920
    %v922 = vpop.f32.mrf.mxu0
    %923 = vmatprep.mubr.bf16.mxu0 0
    %924 = vmatmul.mubr.bf16.gmra.mxu0 %v364
    %v925 = vpop.f32.mrf.mxu0
    %v926 = vadd.f32 0.0, %v925
    %v927 = vpop.f32.mrf.mxu0
    %v928 = vpop.f32.mrf.mxu0
    %v929 = vadd.f32 0.0, %v928
    %v930 = vpop.f32.mrf.mxu0
    %931 = vmatprep.mubr.bf16.mxu0 0
    %932 = vmatmul.mubr.bf16.gmra.mxu0 %v367
    %v933 = vpop.f32.mrf.mxu0
    %v934 = vadd.f32 0.0, %v933
    %v935 = vpop.f32.mrf.mxu0
    %v936 = vpop.f32.mrf.mxu0
    %v937 = vadd.f32 0.0, %v936
    %v938 = vpop.f32.mrf.mxu0
    %939 = vmatprep.mubr.bf16.mxu0 0
    %940 = vmatmul.mubr.bf16.gmra.mxu0 %v370
    %v941 = vpop.f32.mrf.mxu0
    %v942 = vadd.f32 0.0, %v941
    %v943 = vpop.f32.mrf.mxu0
    %v944 = vpop.f32.mrf.mxu0
    %v945 = vadd.f32 0.0, %v944
    %v946 = vpop.f32.mrf.mxu0
    %947 = vmatprep.mubr.bf16.mxu0 0
    %948 = vmatmul.mubr.bf16.gmra.mxu0 %v373
    %v949 = vpop.f32.mrf.mxu0
    %v950 = vadd.f32 0.0, %v949
    %v951 = vpop.f32.mrf.mxu0
    %v952 = vpop.f32.mrf.mxu0
    %v953 = vadd.f32 0.0, %v952
    %v954 = vpop.f32.mrf.mxu0
    %955 = vmatprep.mubr.bf16.mxu0 0
    %956 = vmatmul.mubr.bf16.gmra.mxu0 %v376
    %v957 = vpop.f32.mrf.mxu0
    %v958 = vadd.f32 0.0, %v957
    %v959 = vpop.f32.mrf.mxu0
    %v960 = vpop.f32.mrf.mxu0
    %v961 = vadd.f32 0.0, %v960
    %v962 = vpop.f32.mrf.mxu0
    %963 = vdwg.mxu0
    %v964 = vld [vmem:[%s6] sm:$0xf]
    %v966 = vsel %vm378, %v964, 0
    %968 = vmatprep.subr.bf16.mxu0 0
    %969 = vmatpush1.bf16.msra.mxu0 0
    %970 = vmatprep.subr.bf16.mxu0 0
    %971 = vmatpush1.bf16.msra.mxu0 0
    %972 = vmatprep.subr.bf16.mxu0 0
    %973 = vmatpush1.bf16.msra.mxu0 0
    %974 = vmatprep.subr.bf16.mxu0 0
    %975 = vmatpush1.bf16.msra.mxu0 0
    %976 = vmatprep.subr.bf16.mxu0 0
    %977 = vmatpush1.bf16.msra.mxu0 0
    %978 = vmatprep.subr.bf16.mxu0 0
    %979 = vmatpush1.bf16.msra.mxu0 0
    %980 = vmatprep.subr.bf16.mxu0 0
    %981 = vmatpush1.bf16.msra.mxu0 0
    %982 = vmatprep.subr.bf16.mxu0 0
    %983 = vmatpush1.bf16.msra.mxu0 %v966
    %984 = vmatprep.subr.bf16.mxu0 0
    %985 = vmatpush2.bf16.msra.mxu0 0
    %986 = vmatprep.subr.bf16.mxu0 0
    %987 = vmatpush2.bf16.msra.mxu0 0
    %988 = vmatprep.subr.bf16.mxu0 0
    %989 = vmatpush2.bf16.msra.mxu0 0
    %990 = vmatprep.subr.bf16.mxu0 0
    %991 = vmatpush2.bf16.msra.mxu0 0
    %992 = vmatprep.subr.bf16.mxu0 0
    %993 = vmatpush2.bf16.msra.mxu0 0
    %994 = vmatprep.subr.bf16.mxu0 0
    %995 = vmatpush2.bf16.msra.mxu0 0
    %996 = vmatprep.subr.bf16.mxu0 0
    %997 = vmatpush2.bf16.msra.mxu0 0
    %998 = vmatprep.subr.bf16.mxu0 0
    %999 = vmatpush2.bf16.msra.mxu0 0
    %1000 = vmatprep.mubr.bf16.mxu0 0
    %1001 = vmatmul.mubr.bf16.gmra.mxu0 %v283
    %v1002 = vpop.f32.mrf.mxu0
    %v1003 = vadd.f32 0.0, %v1002
    %v1004 = vpop.f32.mrf.mxu0
    %v1005 = vpop.f32.mrf.mxu0
    %v1006 = vadd.f32 0.0, %v1005
    %v1007 = vpop.f32.mrf.mxu0
    %1008 = vmatprep.mubr.bf16.mxu0 0
    %1009 = vmatmul.mubr.bf16.gmra.mxu0 %v286
    %v1010 = vpop.f32.mrf.mxu0
    %v1011 = vadd.f32 0.0, %v1010
    %v1012 = vpop.f32.mrf.mxu0
    %v1013 = vpop.f32.mrf.mxu0
    %v1014 = vadd.f32 0.0, %v1013
    %v1015 = vpop.f32.mrf.mxu0
    %1016 = vmatprep.mubr.bf16.mxu0 0
    %1017 = vmatmul.mubr.bf16.gmra.mxu0 %v289
    %v1018 = vpop.f32.mrf.mxu0
    %v1019 = vadd.f32 0.0, %v1018
    %v1020 = vpop.f32.mrf.mxu0
    %v1021 = vpop.f32.mrf.mxu0
    %v1022 = vadd.f32 0.0, %v1021
    %v1023 = vpop.f32.mrf.mxu0
    %1024 = vmatprep.mubr.bf16.mxu0 0
    %1025 = vmatmul.mubr.bf16.gmra.mxu0 %v292
    %v1026 = vpop.f32.mrf.mxu0
    %v1027 = vadd.f32 0.0, %v1026
    %v1028 = vpop.f32.mrf.mxu0
    %v1029 = vpop.f32.mrf.mxu0
    %v1030 = vadd.f32 0.0, %v1029
    %v1031 = vpop.f32.mrf.mxu0
    %1032 = vmatprep.mubr.bf16.mxu0 0
    %1033 = vmatmul.mubr.bf16.gmra.mxu0 %v295
    %v1034 = vpop.f32.mrf.mxu0
    %v1035 = vadd.f32 0.0, %v1034
    %v1036 = vpop.f32.mrf.mxu0
    %v1037 = vpop.f32.mrf.mxu0
    %v1038 = vadd.f32 0.0, %v1037
    %v1039 = vpop.f32.mrf.mxu0
    %1040 = vmatprep.mubr.bf16.mxu0 0
    %1041 = vmatmul.mubr.bf16.gmra.mxu0 %v298
    %v1042 = vpop.f32.mrf.mxu0
    %v1043 = vadd.f32 0.0, %v1042
    %v1044 = vpop.f32.mrf.mxu0
    %v1045 = vpop.f32.mrf.mxu0
    %v1046 = vadd.f32 0.0, %v1045
    %v1047 = vpop.f32.mrf.mxu0
    %1048 = vmatprep.mubr.bf16.mxu0 0
    %1049 = vmatmul.mubr.bf16.gmra.mxu0 %v301
    %v1050 = vpop.f32.mrf.mxu0
    %v1051 = vadd.f32 0.0, %v1050
    %v1052 = vpop.f32.mrf.mxu0
    %v1053 = vpop.f32.mrf.mxu0
    %v1054 = vadd.f32 0.0, %v1053
    %v1055 = vpop.f32.mrf.mxu0
    %1056 = vmatprep.mubr.bf16.mxu0 0
    %1057 = vmatmul.mubr.bf16.gmra.mxu0 %v304
    %v1058 = vpop.f32.mrf.mxu0
    %v1059 = vadd.f32 0.0, %v1058
    %v1060 = vpop.f32.mrf.mxu0
    %v1061 = vpop.f32.mrf.mxu0
    %v1062 = vadd.f32 0.0, %v1061
    %v1063 = vpop.f32.mrf.mxu0
    %1064 = vmatprep.mubr.bf16.mxu0 0
    %1065 = vmatmul.mubr.bf16.gmra.mxu0 %v307
    %v1066 = vpop.f32.mrf.mxu0
    %v1067 = vadd.f32 0.0, %v1066
    %v1068 = vpop.f32.mrf.mxu0
    %v1069 = vpop.f32.mrf.mxu0
    %v1070 = vadd.f32 0.0, %v1069
    %v1071 = vpop.f32.mrf.mxu0
    %1072 = vmatprep.mubr.bf16.mxu0 0
    %1073 = vmatmul.mubr.bf16.gmra.mxu0 %v310
    %v1074 = vpop.f32.mrf.mxu0
    %v1075 = vadd.f32 0.0, %v1074
    %v1076 = vpop.f32.mrf.mxu0
    %v1077 = vpop.f32.mrf.mxu0
    %v1078 = vadd.f32 0.0, %v1077
    %v1079 = vpop.f32.mrf.mxu0
    %1080 = vmatprep.mubr.bf16.mxu0 0
    %1081 = vmatmul.mubr.bf16.gmra.mxu0 %v313
    %v1082 = vpop.f32.mrf.mxu0
    %v1083 = vadd.f32 0.0, %v1082
    %v1084 = vpop.f32.mrf.mxu0
    %v1085 = vpop.f32.mrf.mxu0
    %v1086 = vadd.f32 0.0, %v1085
    %v1087 = vpop.f32.mrf.mxu0
    %1088 = vmatprep.mubr.bf16.mxu0 0
    %1089 = vmatmul.mubr.bf16.gmra.mxu0 %v316
    %v1090 = vpop.f32.mrf.mxu0
    %v1091 = vadd.f32 0.0, %v1090
    %v1092 = vpop.f32.mrf.mxu0
    %v1093 = vpop.f32.mrf.mxu0
    %v1094 = vadd.f32 0.0, %v1093
    %v1095 = vpop.f32.mrf.mxu0
    %1096 = vmatprep.mubr.bf16.mxu0 0
    %1097 = vmatmul.mubr.bf16.gmra.mxu0 %v319
    %v1098 = vpop.f32.mrf.mxu0
    %v1099 = vadd.f32 0.0, %v1098
    %v1100 = vpop.f32.mrf.mxu0
    %v1101 = vpop.f32.mrf.mxu0
    %v1102 = vadd.f32 0.0, %v1101
    %v1103 = vpop.f32.mrf.mxu0
    %1104 = vmatprep.mubr.bf16.mxu0 0
    %1105 = vmatmul.mubr.bf16.gmra.mxu0 %v322
    %v1106 = vpop.f32.mrf.mxu0
    %v1107 = vadd.f32 0.0, %v1106
    %v1108 = vpop.f32.mrf.mxu0
    %v1109 = vpop.f32.mrf.mxu0
    %v1110 = vadd.f32 0.0, %v1109
    %v1111 = vpop.f32.mrf.mxu0
    %1112 = vmatprep.mubr.bf16.mxu0 0
    %1113 = vmatmul.mubr.bf16.gmra.mxu0 %v325
    %v1114 = vpop.f32.mrf.mxu0
    %v1115 = vadd.f32 0.0, %v1114
    %v1116 = vpop.f32.mrf.mxu0
    %v1117 = vpop.f32.mrf.mxu0
    %v1118 = vadd.f32 0.0, %v1117
    %v1119 = vpop.f32.mrf.mxu0
    %1120 = vmatprep.mubr.bf16.mxu0 0
    %1121 = vmatmul.mubr.bf16.gmra.mxu0 %v328
    %v1122 = vpop.f32.mrf.mxu0
    %v1123 = vadd.f32 0.0, %v1122
    %v1124 = vpop.f32.mrf.mxu0
    %v1125 = vpop.f32.mrf.mxu0
    %v1126 = vadd.f32 0.0, %v1125
    %v1127 = vpop.f32.mrf.mxu0
    %1128 = vmatprep.mubr.bf16.mxu0 0
    %1129 = vmatmul.mubr.bf16.gmra.mxu0 %v331
    %v1130 = vpop.f32.mrf.mxu0
    %v1131 = vadd.f32 0.0, %v1130
    %v1132 = vpop.f32.mrf.mxu0
    %v1133 = vpop.f32.mrf.mxu0
    %v1134 = vadd.f32 0.0, %v1133
    %v1135 = vpop.f32.mrf.mxu0
    %1136 = vmatprep.mubr.bf16.mxu0 0
    %1137 = vmatmul.mubr.bf16.gmra.mxu0 %v334
    %v1138 = vpop.f32.mrf.mxu0
    %v1139 = vadd.f32 0.0, %v1138
    %v1140 = vpop.f32.mrf.mxu0
    %v1141 = vpop.f32.mrf.mxu0
    %v1142 = vadd.f32 0.0, %v1141
    %v1143 = vpop.f32.mrf.mxu0
    %1144 = vmatprep.mubr.bf16.mxu0 0
    %1145 = vmatmul.mubr.bf16.gmra.mxu0 %v337
    %v1146 = vpop.f32.mrf.mxu0
    %v1147 = vadd.f32 0.0, %v1146
    %v1148 = vpop.f32.mrf.mxu0
    %v1149 = vpop.f32.mrf.mxu0
    %v1150 = vadd.f32 0.0, %v1149
    %v1151 = vpop.f32.mrf.mxu0
    %1152 = vmatprep.mubr.bf16.mxu0 0
    %1153 = vmatmul.mubr.bf16.gmra.mxu0 %v340
    %v1154 = vpop.f32.mrf.mxu0
    %v1155 = vadd.f32 0.0, %v1154
    %v1156 = vpop.f32.mrf.mxu0
    %v1157 = vpop.f32.mrf.mxu0
    %v1158 = vadd.f32 0.0, %v1157
    %v1159 = vpop.f32.mrf.mxu0
    %1160 = vmatprep.mubr.bf16.mxu0 0
    %1161 = vmatmul.mubr.bf16.gmra.mxu0 %v343
    %v1162 = vpop.f32.mrf.mxu0
    %v1163 = vadd.f32 0.0, %v1162
    %v1164 = vpop.f32.mrf.mxu0
    %v1165 = vpop.f32.mrf.mxu0
    %v1166 = vadd.f32 0.0, %v1165
    %v1167 = vpop.f32.mrf.mxu0
    %1168 = vmatprep.mubr.bf16.mxu0 0
    %1169 = vmatmul.mubr.bf16.gmra.mxu0 %v346
    %v1170 = vpop.f32.mrf.mxu0
    %v1171 = vadd.f32 0.0, %v1170
    %v1172 = vpop.f32.mrf.mxu0
    %v1173 = vpop.f32.mrf.mxu0
    %v1174 = vadd.f32 0.0, %v1173
    %v1175 = vpop.f32.mrf.mxu0
    %1176 = vmatprep.mubr.bf16.mxu0 0
    %1177 = vmatmul.mubr.bf16.gmra.mxu0 %v349
    %v1178 = vpop.f32.mrf.mxu0
    %v1179 = vadd.f32 0.0, %v1178
    %v1180 = vpop.f32.mrf.mxu0
    %v1181 = vpop.f32.mrf.mxu0
    %v1182 = vadd.f32 0.0, %v1181
    %v1183 = vpop.f32.mrf.mxu0
    %1184 = vmatprep.mubr.bf16.mxu0 0
    %1185 = vmatmul.mubr.bf16.gmra.mxu0 %v352
    %v1186 = vpop.f32.mrf.mxu0
    %v1187 = vadd.f32 0.0, %v1186
    %v1188 = vpop.f32.mrf.mxu0
    %v1189 = vpop.f32.mrf.mxu0
    %v1190 = vadd.f32 0.0, %v1189
    %v1191 = vpop.f32.mrf.mxu0
    %1192 = vmatprep.mubr.bf16.mxu0 0
    %1193 = vmatmul.mubr.bf16.gmra.mxu0 %v355
    %v1194 = vpop.f32.mrf.mxu0
    %v1195 = vadd.f32 0.0, %v1194
    %v1196 = vpop.f32.mrf.mxu0
    %v1197 = vpop.f32.mrf.mxu0
    %v1198 = vadd.f32 0.0, %v1197
    %v1199 = vpop.f32.mrf.mxu0
    %1200 = vmatprep.mubr.bf16.mxu0 0
    %1201 = vmatmul.mubr.bf16.gmra.mxu0 %v358
    %v1202 = vpop.f32.mrf.mxu0
    %v1203 = vadd.f32 0.0, %v1202
    %v1204 = vpop.f32.mrf.mxu0
    %v1205 = vpop.f32.mrf.mxu0
    %v1206 = vadd.f32 0.0, %v1205
    %v1207 = vpop.f32.mrf.mxu0
    %1208 = vmatprep.mubr.bf16.mxu0 0
    %1209 = vmatmul.mubr.bf16.gmra.mxu0 %v361
    %v1210 = vpop.f32.mrf.mxu0
    %v1211 = vadd.f32 0.0, %v1210
    %v1212 = vpop.f32.mrf.mxu0
    %v1213 = vpop.f32.mrf.mxu0
    %v1214 = vadd.f32 0.0, %v1213
    %v1215 = vpop.f32.mrf.mxu0
    %1216 = vmatprep.mubr.bf16.mxu0 0
    %1217 = vmatmul.mubr.bf16.gmra.mxu0 %v364
    %v1218 = vpop.f32.mrf.mxu0
    %v1219 = vadd.f32 0.0, %v1218
    %v1220 = vpop.f32.mrf.mxu0
    %v1221 = vpop.f32.mrf.mxu0
    %v1222 = vadd.f32 0.0, %v1221
    %v1223 = vpop.f32.mrf.mxu0
    %1224 = vmatprep.mubr.bf16.mxu0 0
    %1225 = vmatmul.mubr.bf16.gmra.mxu0 %v367
    %v1226 = vpop.f32.mrf.mxu0
    %v1227 = vadd.f32 0.0, %v1226
    %v1228 = vpop.f32.mrf.mxu0
    %v1229 = vpop.f32.mrf.mxu0
    %v1230 = vadd.f32 0.0, %v1229
    %v1231 = vpop.f32.mrf.mxu0
    %1232 = vmatprep.mubr.bf16.mxu0 0
    %1233 = vmatmul.mubr.bf16.gmra.mxu0 %v370
    %v1234 = vpop.f32.mrf.mxu0
    %v1235 = vadd.f32 0.0, %v1234
    %v1236 = vpop.f32.mrf.mxu0
    %v1237 = vpop.f32.mrf.mxu0
    %v1238 = vadd.f32 0.0, %v1237
    %v1239 = vpop.f32.mrf.mxu0
    %1240 = vmatprep.mubr.bf16.mxu0 0
    %1241 = vmatmul.mubr.bf16.gmra.mxu0 %v373
    %v1242 = vpop.f32.mrf.mxu0
    %v1243 = vadd.f32 0.0, %v1242
    %v1244 = vpop.f32.mrf.mxu0
    %v1245 = vpop.f32.mrf.mxu0
    %v1246 = vadd.f32 0.0, %v1245
    %v1247 = vpop.f32.mrf.mxu0
    %1248 = vmatprep.mubr.bf16.mxu0 0
    %1249 = vmatmul.mubr.bf16.gmra.mxu0 %v376
    %v1250 = vpop.f32.mrf.mxu0
    %v1251 = vadd.f32 0.0, %v1250
    %v1252 = vpop.f32.mrf.mxu0
    %v1253 = vpop.f32.mrf.mxu0
    %v1254 = vadd.f32 0.0, %v1253
    %v1255 = vpop.f32.mrf.mxu0
    %1256 = vdwg.mxu0
    %v1257 = vpack.c.bf16 %v417, %v417
    %v1258 = vpack.c.bf16 %v420, %v420
    %v1259 = vpack.c.bf16 %v425, %v425
    %v1260 = vpack.c.bf16 %v428, %v428
    %v1261 = vpack.c.bf16 %v433, %v433
    %v1262 = vpack.c.bf16 %v436, %v436
    %v1263 = vpack.c.bf16 %v441, %v441
    %v1264 = vpack.c.bf16 %v444, %v444
    %v1265 = vpack.c.bf16 %v449, %v449
    %v1266 = vpack.c.bf16 %v452, %v452
    %v1267 = vpack.c.bf16 %v457, %v457
    %v1268 = vpack.c.bf16 %v460, %v460
    %v1269 = vpack.c.bf16 %v465, %v465
    %v1270 = vpack.c.bf16 %v468, %v468
    %v1271 = vpack.c.bf16 %v473, %v473
    %v1272 = vpack.c.bf16 %v476, %v476
    %v1273 = vpack.c.bf16 %v481, %v481
    %v1274 = vpack.c.bf16 %v484, %v484
    %v1275 = vpack.c.bf16 %v489, %v489
    %v1276 = vpack.c.bf16 %v492, %v492
    %v1277 = vpack.c.bf16 %v497, %v497
    %v1278 = vpack.c.bf16 %v500, %v500
    %v1279 = vpack.c.bf16 %v505, %v505
    %v1280 = vpack.c.bf16 %v508, %v508
    %v1281 = vpack.c.bf16 %v513, %v513
    %v1282 = vpack.c.bf16 %v516, %v516
    %v1283 = vpack.c.bf16 %v521, %v521
    %v1284 = vpack.c.bf16 %v524, %v524
    %v1285 = vpack.c.bf16 %v529, %v529
    %v1286 = vpack.c.bf16 %v532, %v532
    %v1287 = vpack.c.bf16 %v537, %v537
    %v1288 = vpack.c.bf16 %v540, %v540
    %v1289 = vpack.c.bf16 %v545, %v545
    %v1290 = vpack.c.bf16 %v548, %v548
    %v1291 = vpack.c.bf16 %v553, %v553
    %v1292 = vpack.c.bf16 %v556, %v556
    %v1293 = vpack.c.bf16 %v561, %v561
    %v1294 = vpack.c.bf16 %v564, %v564
    %v1295 = vpack.c.bf16 %v569, %v569
    %v1296 = vpack.c.bf16 %v572, %v572
    %v1297 = vpack.c.bf16 %v577, %v577
    %v1298 = vpack.c.bf16 %v580, %v580
    %v1299 = vpack.c.bf16 %v585, %v585
    %v1300 = vpack.c.bf16 %v588, %v588
    %v1301 = vpack.c.bf16 %v593, %v593
    %v1302 = vpack.c.bf16 %v596, %v596
    %v1303 = vpack.c.bf16 %v601, %v601
    %v1304 = vpack.c.bf16 %v604, %v604
    %v1305 = vpack.c.bf16 %v609, %v609
    %v1306 = vpack.c.bf16 %v612, %v612
    %v1307 = vpack.c.bf16 %v617, %v617
    %v1308 = vpack.c.bf16 %v620, %v620
    %v1309 = vpack.c.bf16 %v625, %v625
    %v1310 = vpack.c.bf16 %v628, %v628
    %v1311 = vpack.c.bf16 %v633, %v633
    %v1312 = vpack.c.bf16 %v636, %v636
    %v1313 = vpack.c.bf16 %v641, %v641
    %v1314 = vpack.c.bf16 %v644, %v644
    %v1315 = vpack.c.bf16 %v649, %v649
    %v1316 = vpack.c.bf16 %v652, %v652
    %v1317 = vpack.c.bf16 %v657, %v657
    %v1318 = vpack.c.bf16 %v660, %v660
    %v1319 = vpack.c.bf16 %v665, %v665
    %v1320 = vpack.c.bf16 %v668, %v668
    %v1321 = vpack.c.bf16 %v710, %v710
    %v1322 = vpack.c.bf16 %v713, %v713
    %v1323 = vpack.c.bf16 %v718, %v718
    %v1324 = vpack.c.bf16 %v721, %v721
    %v1325 = vpack.c.bf16 %v726, %v726
    %v1326 = vpack.c.bf16 %v729, %v729
    %v1327 = vpack.c.bf16 %v734, %v734
    %v1328 = vpack.c.bf16 %v737, %v737
    %v1329 = vpack.c.bf16 %v742, %v742
    %v1330 = vpack.c.bf16 %v745, %v745
    %v1331 = vpack.c.bf16 %v750, %v750
    %v1332 = vpack.c.bf16 %v753, %v753
    %v1333 = vpack.c.bf16 %v758, %v758
    %v1334 = vpack.c.bf16 %v761, %v761
    %v1335 = vpack.c.bf16 %v766, %v766
    %v1336 = vpack.c.bf16 %v769, %v769
    %v1337 = vpack.c.bf16 %v774, %v774
    %v1338 = vpack.c.bf16 %v777, %v777
    %v1339 = vpack.c.bf16 %v782, %v782
    %v1340 = vpack.c.bf16 %v785, %v785
    %v1341 = vpack.c.bf16 %v790, %v790
    %v1342 = vpack.c.bf16 %v793, %v793
    %v1343 = vpack.c.bf16 %v798, %v798
    %v1344 = vpack.c.bf16 %v801, %v801
    %v1345 = vpack.c.bf16 %v806, %v806
    %v1346 = vpack.c.bf16 %v809, %v809
    %v1347 = vpack.c.bf16 %v814, %v814
    %v1348 = vpack.c.bf16 %v817, %v817
    %v1349 = vpack.c.bf16 %v822, %v822
    %v1350 = vpack.c.bf16 %v825, %v825
    %v1351 = vpack.c.bf16 %v830, %v830
    %v1352 = vpack.c.bf16 %v833, %v833
    %v1353 = vpack.c.bf16 %v838, %v838
    %v1354 = vpack.c.bf16 %v841, %v841
    %v1355 = vpack.c.bf16 %v846, %v846
    %v1356 = vpack.c.bf16 %v849, %v849
    %v1357 = vpack.c.bf16 %v854, %v854
    %v1358 = vpack.c.bf16 %v857, %v857
    %v1359 = vpack.c.bf16 %v862, %v862
    %v1360 = vpack.c.bf16 %v865, %v865
    %v1361 = vpack.c.bf16 %v870, %v870
    %v1362 = vpack.c.bf16 %v873, %v873
    %v1363 = vpack.c.bf16 %v878, %v878
    %v1364 = vpack.c.bf16 %v881, %v881
    %v1365 = vpack.c.bf16 %v886, %v886
    %v1366 = vpack.c.bf16 %v889, %v889
    %v1367 = vpack.c.bf16 %v894, %v894
    %v1368 = vpack.c.bf16 %v897, %v897
    %v1369 = vpack.c.bf16 %v902, %v902
    %v1370 = vpack.c.bf16 %v905, %v905
    %v1371 = vpack.c.bf16 %v910, %v910
    %v1372 = vpack.c.bf16 %v913, %v913
    %v1373 = vpack.c.bf16 %v918, %v918
    %v1374 = vpack.c.bf16 %v921, %v921
    %v1375 = vpack.c.bf16 %v926, %v926
    %v1376 = vpack.c.bf16 %v929, %v929
    %v1377 = vpack.c.bf16 %v934, %v934
    %v1378 = vpack.c.bf16 %v937, %v937
    %v1379 = vpack.c.bf16 %v942, %v942
    %v1380 = vpack.c.bf16 %v945, %v945
    %v1381 = vpack.c.bf16 %v950, %v950
    %v1382 = vpack.c.bf16 %v953, %v953
    %v1383 = vpack.c.bf16 %v958, %v958
    %v1384 = vpack.c.bf16 %v961, %v961
    %vm1385 = vcmask 261120
    %v1387 = vsel %vm1385, %v1257, 0
    %v1390 = vsel %vm1385, %v1321, 0
    %1392 = vmatprep.subr.bf16.mxu0 0
    %1393 = vmatpush1.bf16.xpose.msra.mxu0 0
    %1394 = vmatprep.subr.bf16.mxu0 0
    %1395 = vmatpush1.bf16.xpose.msra.mxu0 0
    %1396 = vmatprep.subr.bf16.mxu0 0
    %1397 = vmatpush1.bf16.xpose.msra.mxu0 0
    %1398 = vmatprep.subr.bf16.mxu0 0
    %1399 = vmatpush1.bf16.xpose.msra.mxu0 0
    %1400 = vmatprep.subr.bf16.mxu0 0
    %1401 = vmatpush1.bf16.xpose.msra.mxu0 0
    %1402 = vmatprep.subr.bf16.mxu0 0
    %1403 = vmatpush1.bf16.xpose.msra.mxu0 0
    %1404 = vmatprep.subr.bf16.mxu0 0
    %1405 = vmatpush1.bf16.xpose.msra.mxu0 0
    %1406 = vmatprep.subr.bf16.mxu0 0
    %1407 = vmatpush1.bf16.xpose.msra.mxu0 %v1390
    %1408 = vmatprep.subr.bf16.mxu0 0
    %1409 = vmatpush2.bf16.xpose.msra.mxu0 0
    %1410 = vmatprep.subr.bf16.mxu0 0
    %1411 = vmatpush2.bf16.xpose.msra.mxu0 0
    %1412 = vmatprep.subr.bf16.mxu0 0
    %1413 = vmatpush2.bf16.xpose.msra.mxu0 0
    %1414 = vmatprep.subr.bf16.mxu0 0
    %1415 = vmatpush2.bf16.xpose.msra.mxu0 0
    %1416 = vmatprep.subr.bf16.mxu0 0
    %1417 = vmatpush2.bf16.xpose.msra.mxu0 0
    %1418 = vmatprep.subr.bf16.mxu0 0
    %1419 = vmatpush2.bf16.xpose.msra.mxu0 0
    %1420 = vmatprep.subr.bf16.mxu0 0
    %1421 = vmatpush2.bf16.xpose.msra.mxu0 0
    %1422 = vmatprep.subr.bf16.mxu0 0
    %1423 = vmatpush2.bf16.xpose.msra.mxu0 0
    %1424 = vmatprep.mubr.bf16.mxu0 0
    %1425 = vmatmul.mubr.bf16.gmra.mxu0 %v1387
    %v1426 = vpop.f32.mrf.mxu0
    %v1427 = vadd.f32 0.0, %v1426
    %v1428 = vpop.f32.mrf.mxu0
    %v1429 = vpop.f32.mrf.mxu0
    %v1430 = vpop.f32.mrf.mxu0
    %1431 = vdwg.mxu0
    %v1433 = vsel %vm1385, %v1258, 0
    %v1436 = vsel %vm1385, %v1322, 0
    %1438 = vmatprep.subr.bf16.mxu0 0
    %1439 = vmatpush1.bf16.xpose.msra.mxu0 0
    %1440 = vmatprep.subr.bf16.mxu0 0
    %1441 = vmatpush1.bf16.xpose.msra.mxu0 0
    %1442 = vmatprep.subr.bf16.mxu0 0
    %1443 = vmatpush1.bf16.xpose.msra.mxu0 0
    %1444 = vmatprep.subr.bf16.mxu0 0
    %1445 = vmatpush1.bf16.xpose.msra.mxu0 0
    %1446 = vmatprep.subr.bf16.mxu0 0
    %1447 = vmatpush1.bf16.xpose.msra.mxu0 0
    %1448 = vmatprep.subr.bf16.mxu0 0
    %1449 = vmatpush1.bf16.xpose.msra.mxu0 0
    %1450 = vmatprep.subr.bf16.mxu0 0
    %1451 = vmatpush1.bf16.xpose.msra.mxu0 0
    %1452 = vmatprep.subr.bf16.mxu0 0
    %1453 = vmatpush1.bf16.xpose.msra.mxu0 %v1436
    %1454 = vmatprep.subr.bf16.mxu0 0
    %1455 = vmatpush2.bf16.xpose.msra.mxu0 0
    %1456 = vmatprep.subr.bf16.mxu0 0
    %1457 = vmatpush2.bf16.xpose.msra.mxu0 0
    %1458 = vmatprep.subr.bf16.mxu0 0
    %1459 = vmatpush2.bf16.xpose.msra.mxu0 0
    %1460 = vmatprep.subr.bf16.mxu0 0
    %1461 = vmatpush2.bf16.xpose.msra.mxu0 0
    %1462 = vmatprep.subr.bf16.mxu0 0
    %1463 = vmatpush2.bf16.xpose.msra.mxu0 0
    %1464 = vmatprep.subr.bf16.mxu0 0
    %1465 = vmatpush2.bf16.xpose.msra.mxu0 0
    %1466 = vmatprep.subr.bf16.mxu0 0
    %1467 = vmatpush2.bf16.xpose.msra.mxu0 0
    %1468 = vmatprep.subr.bf16.mxu0 0
    %1469 = vmatpush2.bf16.xpose.msra.mxu0 0
    %1470 = vmatprep.mubr.bf16.mxu0 0
    %1471 = vmatmul.mubr.bf16.gmra.mxu0 %v1433
    %v1472 = vpop.f32.mrf.mxu0
    %v1473 = vadd.f32 0.0, %v1472
    %v1474 = vpop.f32.mrf.mxu0
    %v1475 = vpop.f32.mrf.mxu0
    %v1476 = vpop.f32.mrf.mxu0
    %1477 = vdwg.mxu0
    %v1479 = vsel %vm1385, %v1259, 0
    %v1482 = vsel %vm1385, %v1323, 0
    %1484 = vmatprep.subr.bf16.mxu0 0
    %1485 = vmatpush1.bf16.xpose.msra.mxu0 0
    %1486 = vmatprep.subr.bf16.mxu0 0
    %1487 = vmatpush1.bf16.xpose.msra.mxu0 0
    %1488 = vmatprep.subr.bf16.mxu0 0
    %1489 = vmatpush1.bf16.xpose.msra.mxu0 0
    %1490 = vmatprep.subr.bf16.mxu0 0
    %1491 = vmatpush1.bf16.xpose.msra.mxu0 0
    %1492 = vmatprep.subr.bf16.mxu0 0
    %1493 = vmatpush1.bf16.xpose.msra.mxu0 0
    %1494 = vmatprep.subr.bf16.mxu0 0
    %1495 = vmatpush1.bf16.xpose.msra.mxu0 0
    %1496 = vmatprep.subr.bf16.mxu0 0
    %1497 = vmatpush1.bf16.xpose.msra.mxu0 0
    %1498 = vmatprep.subr.bf16.mxu0 0
    %1499 = vmatpush1.bf16.xpose.msra.mxu0 %v1482
    %1500 = vmatprep.subr.bf16.mxu0 0
    %1501 = vmatpush2.bf16.xpose.msra.mxu0 0
    %1502 = vmatprep.subr.bf16.mxu0 0
    %1503 = vmatpush2.bf16.xpose.msra.mxu0 0
    %1504 = vmatprep.subr.bf16.mxu0 0
    %1505 = vmatpush2.bf16.xpose.msra.mxu0 0
    %1506 = vmatprep.subr.bf16.mxu0 0
    %1507 = vmatpush2.bf16.xpose.msra.mxu0 0
    %1508 = vmatprep.subr.bf16.mxu0 0
    %1509 = vmatpush2.bf16.xpose.msra.mxu0 0
    %1510 = vmatprep.subr.bf16.mxu0 0
    %1511 = vmatpush2.bf16.xpose.msra.mxu0 0
    %1512 = vmatprep.subr.bf16.mxu0 0
    %1513 = vmatpush2.bf16.xpose.msra.mxu0 0
    %1514 = vmatprep.subr.bf16.mxu0 0
    %1515 = vmatpush2.bf16.xpose.msra.mxu0 0
    %1516 = vmatprep.mubr.bf16.mxu0 0
    %1517 = vmatmul.mubr.bf16.gmra.mxu0 %v1479
    %v1518 = vpop.f32.mrf.mxu0
    %v1519 = vadd.f32 0.0, %v1518
    %v1520 = vpop.f32.mrf.mxu0
    %v1521 = vpop.f32.mrf.mxu0
    %v1522 = vpop.f32.mrf.mxu0
    %1523 = vdwg.mxu0
    %v1525 = vsel %vm1385, %v1260, 0
    %v1528 = vsel %vm1385, %v1324, 0
    %1530 = vmatprep.subr.bf16.mxu0 0
    %1531 = vmatpush1.bf16.xpose.msra.mxu0 0
    %1532 = vmatprep.subr.bf16.mxu0 0
    %1533 = vmatpush1.bf16.xpose.msra.mxu0 0
    %1534 = vmatprep.subr.bf16.mxu0 0
    %1535 = vmatpush1.bf16.xpose.msra.mxu0 0
    %1536 = vmatprep.subr.bf16.mxu0 0
    %1537 = vmatpush1.bf16.xpose.msra.mxu0 0
    %1538 = vmatprep.subr.bf16.mxu0 0
    %1539 = vmatpush1.bf16.xpose.msra.mxu0 0
    %1540 = vmatprep.subr.bf16.mxu0 0
    %1541 = vmatpush1.bf16.xpose.msra.mxu0 0
    %1542 = vmatprep.subr.bf16.mxu0 0
    %1543 = vmatpush1.bf16.xpose.msra.mxu0 0
    %1544 = vmatprep.subr.bf16.mxu0 0
    %1545 = vmatpush1.bf16.xpose.msra.mxu0 %v1528
    %1546 = vmatprep.subr.bf16.mxu0 0
    %1547 = vmatpush2.bf16.xpose.msra.mxu0 0
    %1548 = vmatprep.subr.bf16.mxu0 0
    %1549 = vmatpush2.bf16.xpose.msra.mxu0 0
    %1550 = vmatprep.subr.bf16.mxu0 0
    %1551 = vmatpush2.bf16.xpose.msra.mxu0 0
    %1552 = vmatprep.subr.bf16.mxu0 0
    %1553 = vmatpush2.bf16.xpose.msra.mxu0 0
    %1554 = vmatprep.subr.bf16.mxu0 0
    %1555 = vmatpush2.bf16.xpose.msra.mxu0 0
    %1556 = vmatprep.subr.bf16.mxu0 0
    %1557 = vmatpush2.bf16.xpose.msra.mxu0 0
    %1558 = vmatprep.subr.bf16.mxu0 0
    %1559 = vmatpush2.bf16.xpose.msra.mxu0 0
    %1560 = vmatprep.subr.bf16.mxu0 0
    %1561 = vmatpush2.bf16.xpose.msra.mxu0 0
    %1562 = vmatprep.mubr.bf16.mxu0 0
    %1563 = vmatmul.mubr.bf16.gmra.mxu0 %v1525
    %v1564 = vpop.f32.mrf.mxu0
    %v1565 = vadd.f32 0.0, %v1564
    %v1566 = vpop.f32.mrf.mxu0
    %v1567 = vpop.f32.mrf.mxu0
    %v1568 = vpop.f32.mrf.mxu0
    %1569 = vdwg.mxu0
    %v1571 = vsel %vm1385, %v1261, 0
    %v1574 = vsel %vm1385, %v1325, 0
    %1576 = vmatprep.subr.bf16.mxu0 0
    %1577 = vmatpush1.bf16.xpose.msra.mxu0 0
    %1578 = vmatprep.subr.bf16.mxu0 0
    %1579 = vmatpush1.bf16.xpose.msra.mxu0 0
    %1580 = vmatprep.subr.bf16.mxu0 0
    %1581 = vmatpush1.bf16.xpose.msra.mxu0 0
    %1582 = vmatprep.subr.bf16.mxu0 0
    %1583 = vmatpush1.bf16.xpose.msra.mxu0 0
    %1584 = vmatprep.subr.bf16.mxu0 0
    %1585 = vmatpush1.bf16.xpose.msra.mxu0 0
    %1586 = vmatprep.subr.bf16.mxu0 0
    %1587 = vmatpush1.bf16.xpose.msra.mxu0 0
    %1588 = vmatprep.subr.bf16.mxu0 0
    %1589 = vmatpush1.bf16.xpose.msra.mxu0 0
    %1590 = vmatprep.subr.bf16.mxu0 0
    %1591 = vmatpush1.bf16.xpose.msra.mxu0 %v1574
    %1592 = vmatprep.subr.bf16.mxu0 0
    %1593 = vmatpush2.bf16.xpose.msra.mxu0 0
    %1594 = vmatprep.subr.bf16.mxu0 0
    %1595 = vmatpush2.bf16.xpose.msra.mxu0 0
    %1596 = vmatprep.subr.bf16.mxu0 0
    %1597 = vmatpush2.bf16.xpose.msra.mxu0 0
    %1598 = vmatprep.subr.bf16.mxu0 0
    %1599 = vmatpush2.bf16.xpose.msra.mxu0 0
    %1600 = vmatprep.subr.bf16.mxu0 0
    %1601 = vmatpush2.bf16.xpose.msra.mxu0 0
    %1602 = vmatprep.subr.bf16.mxu0 0
    %1603 = vmatpush2.bf16.xpose.msra.mxu0 0
    %1604 = vmatprep.subr.bf16.mxu0 0
    %1605 = vmatpush2.bf16.xpose.msra.mxu0 0
    %1606 = vmatprep.subr.bf16.mxu0 0
    %1607 = vmatpush2.bf16.xpose.msra.mxu0 0
    %1608 = vmatprep.mubr.bf16.mxu0 0
    %1609 = vmatmul.mubr.bf16.gmra.mxu0 %v1571
    %v1610 = vpop.f32.mrf.mxu0
    %v1611 = vadd.f32 0.0, %v1610
    %v1612 = vpop.f32.mrf.mxu0
    %v1613 = vpop.f32.mrf.mxu0
    %v1614 = vpop.f32.mrf.mxu0
    %1615 = vdwg.mxu0
    %v1617 = vsel %vm1385, %v1262, 0
    %v1620 = vsel %vm1385, %v1326, 0
    %1622 = vmatprep.subr.bf16.mxu0 0
    %1623 = vmatpush1.bf16.xpose.msra.mxu0 0
    %1624 = vmatprep.subr.bf16.mxu0 0
    %1625 = vmatpush1.bf16.xpose.msra.mxu0 0
    %1626 = vmatprep.subr.bf16.mxu0 0
    %1627 = vmatpush1.bf16.xpose.msra.mxu0 0
    %1628 = vmatprep.subr.bf16.mxu0 0
    %1629 = vmatpush1.bf16.xpose.msra.mxu0 0
    %1630 = vmatprep.subr.bf16.mxu0 0
    %1631 = vmatpush1.bf16.xpose.msra.mxu0 0
    %1632 = vmatprep.subr.bf16.mxu0 0
    %1633 = vmatpush1.bf16.xpose.msra.mxu0 0
    %1634 = vmatprep.subr.bf16.mxu0 0
    %1635 = vmatpush1.bf16.xpose.msra.mxu0 0
    %1636 = vmatprep.subr.bf16.mxu0 0
    %1637 = vmatpush1.bf16.xpose.msra.mxu0 %v1620
    %1638 = vmatprep.subr.bf16.mxu0 0
    %1639 = vmatpush2.bf16.xpose.msra.mxu0 0
    %1640 = vmatprep.subr.bf16.mxu0 0
    %1641 = vmatpush2.bf16.xpose.msra.mxu0 0
    %1642 = vmatprep.subr.bf16.mxu0 0
    %1643 = vmatpush2.bf16.xpose.msra.mxu0 0
    %1644 = vmatprep.subr.bf16.mxu0 0
    %1645 = vmatpush2.bf16.xpose.msra.mxu0 0
    %1646 = vmatprep.subr.bf16.mxu0 0
    %1647 = vmatpush2.bf16.xpose.msra.mxu0 0
    %1648 = vmatprep.subr.bf16.mxu0 0
    %1649 = vmatpush2.bf16.xpose.msra.mxu0 0
    %1650 = vmatprep.subr.bf16.mxu0 0
    %1651 = vmatpush2.bf16.xpose.msra.mxu0 0
    %1652 = vmatprep.subr.bf16.mxu0 0
    %1653 = vmatpush2.bf16.xpose.msra.mxu0 0
    %1654 = vmatprep.mubr.bf16.mxu0 0
    %1655 = vmatmul.mubr.bf16.gmra.mxu0 %v1617
    %v1656 = vpop.f32.mrf.mxu0
    %v1657 = vadd.f32 0.0, %v1656
    %v1658 = vpop.f32.mrf.mxu0
    %v1659 = vpop.f32.mrf.mxu0
    %v1660 = vpop.f32.mrf.mxu0
    %1661 = vdwg.mxu0
    %v1663 = vsel %vm1385, %v1263, 0
    %v1666 = vsel %vm1385, %v1327, 0
    %1668 = vmatprep.subr.bf16.mxu0 0
    %1669 = vmatpush1.bf16.xpose.msra.mxu0 0
    %1670 = vmatprep.subr.bf16.mxu0 0
    %1671 = vmatpush1.bf16.xpose.msra.mxu0 0
    %1672 = vmatprep.subr.bf16.mxu0 0
    %1673 = vmatpush1.bf16.xpose.msra.mxu0 0
    %1674 = vmatprep.subr.bf16.mxu0 0
    %1675 = vmatpush1.bf16.xpose.msra.mxu0 0
    %1676 = vmatprep.subr.bf16.mxu0 0
    %1677 = vmatpush1.bf16.xpose.msra.mxu0 0
    %1678 = vmatprep.subr.bf16.mxu0 0
    %1679 = vmatpush1.bf16.xpose.msra.mxu0 0
    %1680 = vmatprep.subr.bf16.mxu0 0
    %1681 = vmatpush1.bf16.xpose.msra.mxu0 0
    %1682 = vmatprep.subr.bf16.mxu0 0
    %1683 = vmatpush1.bf16.xpose.msra.mxu0 %v1666
    %1684 = vmatprep.subr.bf16.mxu0 0
    %1685 = vmatpush2.bf16.xpose.msra.mxu0 0
    %1686 = vmatprep.subr.bf16.mxu0 0
    %1687 = vmatpush2.bf16.xpose.msra.mxu0 0
    %1688 = vmatprep.subr.bf16.mxu0 0
    %1689 = vmatpush2.bf16.xpose.msra.mxu0 0
    %1690 = vmatprep.subr.bf16.mxu0 0
    %1691 = vmatpush2.bf16.xpose.msra.mxu0 0
    %1692 = vmatprep.subr.bf16.mxu0 0
    %1693 = vmatpush2.bf16.xpose.msra.mxu0 0
    %1694 = vmatprep.subr.bf16.mxu0 0
    %1695 = vmatpush2.bf16.xpose.msra.mxu0 0
    %1696 = vmatprep.subr.bf16.mxu0 0
    %1697 = vmatpush2.bf16.xpose.msra.mxu0 0
    %1698 = vmatprep.subr.bf16.mxu0 0
    %1699 = vmatpush2.bf16.xpose.msra.mxu0 0
    %1700 = vmatprep.mubr.bf16.mxu0 0
    %1701 = vmatmul.mubr.bf16.gmra.mxu0 %v1663
    %v1702 = vpop.f32.mrf.mxu0
    %v1703 = vadd.f32 0.0, %v1702
    %v1704 = vpop.f32.mrf.mxu0
    %v1705 = vpop.f32.mrf.mxu0
    %v1706 = vpop.f32.mrf.mxu0
    %1707 = vdwg.mxu0
    %v1709 = vsel %vm1385, %v1264, 0
    %v1712 = vsel %vm1385, %v1328, 0
    %1714 = vmatprep.subr.bf16.mxu0 0
    %1715 = vmatpush1.bf16.xpose.msra.mxu0 0
    %1716 = vmatprep.subr.bf16.mxu0 0
    %1717 = vmatpush1.bf16.xpose.msra.mxu0 0
    %1718 = vmatprep.subr.bf16.mxu0 0
    %1719 = vmatpush1.bf16.xpose.msra.mxu0 0
    %1720 = vmatprep.subr.bf16.mxu0 0
    %1721 = vmatpush1.bf16.xpose.msra.mxu0 0
    %1722 = vmatprep.subr.bf16.mxu0 0
    %1723 = vmatpush1.bf16.xpose.msra.mxu0 0
    %1724 = vmatprep.subr.bf16.mxu0 0
    %1725 = vmatpush1.bf16.xpose.msra.mxu0 0
    %1726 = vmatprep.subr.bf16.mxu0 0
    %1727 = vmatpush1.bf16.xpose.msra.mxu0 0
    %1728 = vmatprep.subr.bf16.mxu0 0
    %1729 = vmatpush1.bf16.xpose.msra.mxu0 %v1712
    %1730 = vmatprep.subr.bf16.mxu0 0
    %1731 = vmatpush2.bf16.xpose.msra.mxu0 0
    %1732 = vmatprep.subr.bf16.mxu0 0
    %1733 = vmatpush2.bf16.xpose.msra.mxu0 0
    %1734 = vmatprep.subr.bf16.mxu0 0
    %1735 = vmatpush2.bf16.xpose.msra.mxu0 0
    %1736 = vmatprep.subr.bf16.mxu0 0
    %1737 = vmatpush2.bf16.xpose.msra.mxu0 0
    %1738 = vmatprep.subr.bf16.mxu0 0
    %1739 = vmatpush2.bf16.xpose.msra.mxu0 0
    %1740 = vmatprep.subr.bf16.mxu0 0
    %1741 = vmatpush2.bf16.xpose.msra.mxu0 0
    %1742 = vmatprep.subr.bf16.mxu0 0
    %1743 = vmatpush2.bf16.xpose.msra.mxu0 0
    %1744 = vmatprep.subr.bf16.mxu0 0
    %1745 = vmatpush2.bf16.xpose.msra.mxu0 0
    %1746 = vmatprep.mubr.bf16.mxu0 0
    %1747 = vmatmul.mubr.bf16.gmra.mxu0 %v1709
    %v1748 = vpop.f32.mrf.mxu0
    %v1749 = vadd.f32 0.0, %v1748
    %v1750 = vpop.f32.mrf.mxu0
    %v1751 = vpop.f32.mrf.mxu0
    %v1752 = vpop.f32.mrf.mxu0
    %1753 = vdwg.mxu0
    %v1755 = vsel %vm1385, %v1265, 0
    %v1758 = vsel %vm1385, %v1329, 0
    %1760 = vmatprep.subr.bf16.mxu0 0
    %1761 = vmatpush1.bf16.xpose.msra.mxu0 0
    %1762 = vmatprep.subr.bf16.mxu0 0
    %1763 = vmatpush1.bf16.xpose.msra.mxu0 0
    %1764 = vmatprep.subr.bf16.mxu0 0
    %1765 = vmatpush1.bf16.xpose.msra.mxu0 0
    %1766 = vmatprep.subr.bf16.mxu0 0
    %1767 = vmatpush1.bf16.xpose.msra.mxu0 0
    %1768 = vmatprep.subr.bf16.mxu0 0
    %1769 = vmatpush1.bf16.xpose.msra.mxu0 0
    %1770 = vmatprep.subr.bf16.mxu0 0
    %1771 = vmatpush1.bf16.xpose.msra.mxu0 0
    %1772 = vmatprep.subr.bf16.mxu0 0
    %1773 = vmatpush1.bf16.xpose.msra.mxu0 0
    %1774 = vmatprep.subr.bf16.mxu0 0
    %1775 = vmatpush1.bf16.xpose.msra.mxu0 %v1758
    %1776 = vmatprep.subr.bf16.mxu0 0
    %1777 = vmatpush2.bf16.xpose.msra.mxu0 0
    %1778 = vmatprep.subr.bf16.mxu0 0
    %1779 = vmatpush2.bf16.xpose.msra.mxu0 0
    %1780 = vmatprep.subr.bf16.mxu0 0
    %1781 = vmatpush2.bf16.xpose.msra.mxu0 0
    %1782 = vmatprep.subr.bf16.mxu0 0
    %1783 = vmatpush2.bf16.xpose.msra.mxu0 0
    %1784 = vmatprep.subr.bf16.mxu0 0
    %1785 = vmatpush2.bf16.xpose.msra.mxu0 0
    %1786 = vmatprep.subr.bf16.mxu0 0
    %1787 = vmatpush2.bf16.xpose.msra.mxu0 0
    %1788 = vmatprep.subr.bf16.mxu0 0
    %1789 = vmatpush2.bf16.xpose.msra.mxu0 0
    %1790 = vmatprep.subr.bf16.mxu0 0
    %1791 = vmatpush2.bf16.xpose.msra.mxu0 0
    %1792 = vmatprep.mubr.bf16.mxu0 0
    %1793 = vmatmul.mubr.bf16.gmra.mxu0 %v1755
    %v1794 = vpop.f32.mrf.mxu0
    %v1795 = vadd.f32 0.0, %v1794
    %v1796 = vpop.f32.mrf.mxu0
    %v1797 = vpop.f32.mrf.mxu0
    %v1798 = vpop.f32.mrf.mxu0
    %1799 = vdwg.mxu0
    %v1801 = vsel %vm1385, %v1266, 0
    %v1804 = vsel %vm1385, %v1330, 0
    %1806 = vmatprep.subr.bf16.mxu0 0
    %1807 = vmatpush1.bf16.xpose.msra.mxu0 0
    %1808 = vmatprep.subr.bf16.mxu0 0
    %1809 = vmatpush1.bf16.xpose.msra.mxu0 0
    %1810 = vmatprep.subr.bf16.mxu0 0
    %1811 = vmatpush1.bf16.xpose.msra.mxu0 0
    %1812 = vmatprep.subr.bf16.mxu0 0
    %1813 = vmatpush1.bf16.xpose.msra.mxu0 0
    %1814 = vmatprep.subr.bf16.mxu0 0
    %1815 = vmatpush1.bf16.xpose.msra.mxu0 0
    %1816 = vmatprep.subr.bf16.mxu0 0
    %1817 = vmatpush1.bf16.xpose.msra.mxu0 0
    %1818 = vmatprep.subr.bf16.mxu0 0
    %1819 = vmatpush1.bf16.xpose.msra.mxu0 0
    %1820 = vmatprep.subr.bf16.mxu0 0
    %1821 = vmatpush1.bf16.xpose.msra.mxu0 %v1804
    %1822 = vmatprep.subr.bf16.mxu0 0
    %1823 = vmatpush2.bf16.xpose.msra.mxu0 0
    %1824 = vmatprep.subr.bf16.mxu0 0
    %1825 = vmatpush2.bf16.xpose.msra.mxu0 0
    %1826 = vmatprep.subr.bf16.mxu0 0
    %1827 = vmatpush2.bf16.xpose.msra.mxu0 0
    %1828 = vmatprep.subr.bf16.mxu0 0
    %1829 = vmatpush2.bf16.xpose.msra.mxu0 0
    %1830 = vmatprep.subr.bf16.mxu0 0
    %1831 = vmatpush2.bf16.xpose.msra.mxu0 0
    %1832 = vmatprep.subr.bf16.mxu0 0
    %1833 = vmatpush2.bf16.xpose.msra.mxu0 0
    %1834 = vmatprep.subr.bf16.mxu0 0
    %1835 = vmatpush2.bf16.xpose.msra.mxu0 0
    %1836 = vmatprep.subr.bf16.mxu0 0
    %1837 = vmatpush2.bf16.xpose.msra.mxu0 0
    %1838 = vmatprep.mubr.bf16.mxu0 0
    %1839 = vmatmul.mubr.bf16.gmra.mxu0 %v1801
    %v1840 = vpop.f32.mrf.mxu0
    %v1841 = vadd.f32 0.0, %v1840
    %v1842 = vpop.f32.mrf.mxu0
    %v1843 = vpop.f32.mrf.mxu0
    %v1844 = vpop.f32.mrf.mxu0
    %1845 = vdwg.mxu0
    %v1847 = vsel %vm1385, %v1267, 0
    %v1850 = vsel %vm1385, %v1331, 0
    %1852 = vmatprep.subr.bf16.mxu0 0
    %1853 = vmatpush1.bf16.xpose.msra.mxu0 0
    %1854 = vmatprep.subr.bf16.mxu0 0
    %1855 = vmatpush1.bf16.xpose.msra.mxu0 0
    %1856 = vmatprep.subr.bf16.mxu0 0
    %1857 = vmatpush1.bf16.xpose.msra.mxu0 0
    %1858 = vmatprep.subr.bf16.mxu0 0
    %1859 = vmatpush1.bf16.xpose.msra.mxu0 0
    %1860 = vmatprep.subr.bf16.mxu0 0
    %1861 = vmatpush1.bf16.xpose.msra.mxu0 0
    %1862 = vmatprep.subr.bf16.mxu0 0
    %1863 = vmatpush1.bf16.xpose.msra.mxu0 0
    %1864 = vmatprep.subr.bf16.mxu0 0
    %1865 = vmatpush1.bf16.xpose.msra.mxu0 0
    %1866 = vmatprep.subr.bf16.mxu0 0
    %1867 = vmatpush1.bf16.xpose.msra.mxu0 %v1850
    %1868 = vmatprep.subr.bf16.mxu0 0
    %1869 = vmatpush2.bf16.xpose.msra.mxu0 0
    %1870 = vmatprep.subr.bf16.mxu0 0
    %1871 = vmatpush2.bf16.xpose.msra.mxu0 0
    %1872 = vmatprep.subr.bf16.mxu0 0
    %1873 = vmatpush2.bf16.xpose.msra.mxu0 0
    %1874 = vmatprep.subr.bf16.mxu0 0
    %1875 = vmatpush2.bf16.xpose.msra.mxu0 0
    %1876 = vmatprep.subr.bf16.mxu0 0
    %1877 = vmatpush2.bf16.xpose.msra.mxu0 0
    %1878 = vmatprep.subr.bf16.mxu0 0
    %1879 = vmatpush2.bf16.xpose.msra.mxu0 0
    %1880 = vmatprep.subr.bf16.mxu0 0
    %1881 = vmatpush2.bf16.xpose.msra.mxu0 0
    %1882 = vmatprep.subr.bf16.mxu0 0
    %1883 = vmatpush2.bf16.xpose.msra.mxu0 0
    %1884 = vmatprep.mubr.bf16.mxu0 0
    %1885 = vmatmul.mubr.bf16.gmra.mxu0 %v1847
    %v1886 = vpop.f32.mrf.mxu0
    %v1887 = vadd.f32 0.0, %v1886
    %v1888 = vpop.f32.mrf.mxu0
    %v1889 = vpop.f32.mrf.mxu0
    %v1890 = vpop.f32.mrf.mxu0
    %1891 = vdwg.mxu0
    %v1893 = vsel %vm1385, %v1268, 0
    %v1896 = vsel %vm1385, %v1332, 0
    %1898 = vmatprep.subr.bf16.mxu0 0
    %1899 = vmatpush1.bf16.xpose.msra.mxu0 0
    %1900 = vmatprep.subr.bf16.mxu0 0
    %1901 = vmatpush1.bf16.xpose.msra.mxu0 0
    %1902 = vmatprep.subr.bf16.mxu0 0
    %1903 = vmatpush1.bf16.xpose.msra.mxu0 0
    %1904 = vmatprep.subr.bf16.mxu0 0
    %1905 = vmatpush1.bf16.xpose.msra.mxu0 0
    %1906 = vmatprep.subr.bf16.mxu0 0
    %1907 = vmatpush1.bf16.xpose.msra.mxu0 0
    %1908 = vmatprep.subr.bf16.mxu0 0
    %1909 = vmatpush1.bf16.xpose.msra.mxu0 0
    %1910 = vmatprep.subr.bf16.mxu0 0
    %1911 = vmatpush1.bf16.xpose.msra.mxu0 0
    %1912 = vmatprep.subr.bf16.mxu0 0
    %1913 = vmatpush1.bf16.xpose.msra.mxu0 %v1896
    %1914 = vmatprep.subr.bf16.mxu0 0
    %1915 = vmatpush2.bf16.xpose.msra.mxu0 0
    %1916 = vmatprep.subr.bf16.mxu0 0
    %1917 = vmatpush2.bf16.xpose.msra.mxu0 0
    %1918 = vmatprep.subr.bf16.mxu0 0
    %1919 = vmatpush2.bf16.xpose.msra.mxu0 0
    %1920 = vmatprep.subr.bf16.mxu0 0
    %1921 = vmatpush2.bf16.xpose.msra.mxu0 0
    %1922 = vmatprep.subr.bf16.mxu0 0
    %1923 = vmatpush2.bf16.xpose.msra.mxu0 0
    %1924 = vmatprep.subr.bf16.mxu0 0
    %1925 = vmatpush2.bf16.xpose.msra.mxu0 0
    %1926 = vmatprep.subr.bf16.mxu0 0
    %1927 = vmatpush2.bf16.xpose.msra.mxu0 0
    %1928 = vmatprep.subr.bf16.mxu0 0
    %1929 = vmatpush2.bf16.xpose.msra.mxu0 0
    %1930 = vmatprep.mubr.bf16.mxu0 0
    %1931 = vmatmul.mubr.bf16.gmra.mxu0 %v1893
    %v1932 = vpop.f32.mrf.mxu0
    %v1933 = vadd.f32 0.0, %v1932
    %v1934 = vpop.f32.mrf.mxu0
    %v1935 = vpop.f32.mrf.mxu0
    %v1936 = vpop.f32.mrf.mxu0
    %1937 = vdwg.mxu0
    %v1939 = vsel %vm1385, %v1269, 0
    %v1942 = vsel %vm1385, %v1333, 0
    %1944 = vmatprep.subr.bf16.mxu0 0
    %1945 = vmatpush1.bf16.xpose.msra.mxu0 0
    %1946 = vmatprep.subr.bf16.mxu0 0
    %1947 = vmatpush1.bf16.xpose.msra.mxu0 0
    %1948 = vmatprep.subr.bf16.mxu0 0
    %1949 = vmatpush1.bf16.xpose.msra.mxu0 0
    %1950 = vmatprep.subr.bf16.mxu0 0
    %1951 = vmatpush1.bf16.xpose.msra.mxu0 0
    %1952 = vmatprep.subr.bf16.mxu0 0
    %1953 = vmatpush1.bf16.xpose.msra.mxu0 0
    %1954 = vmatprep.subr.bf16.mxu0 0
    %1955 = vmatpush1.bf16.xpose.msra.mxu0 0
    %1956 = vmatprep.subr.bf16.mxu0 0
    %1957 = vmatpush1.bf16.xpose.msra.mxu0 0
    %1958 = vmatprep.subr.bf16.mxu0 0
    %1959 = vmatpush1.bf16.xpose.msra.mxu0 %v1942
    %1960 = vmatprep.subr.bf16.mxu0 0
    %1961 = vmatpush2.bf16.xpose.msra.mxu0 0
    %1962 = vmatprep.subr.bf16.mxu0 0
    %1963 = vmatpush2.bf16.xpose.msra.mxu0 0
    %1964 = vmatprep.subr.bf16.mxu0 0
    %1965 = vmatpush2.bf16.xpose.msra.mxu0 0
    %1966 = vmatprep.subr.bf16.mxu0 0
    %1967 = vmatpush2.bf16.xpose.msra.mxu0 0
    %1968 = vmatprep.subr.bf16.mxu0 0
    %1969 = vmatpush2.bf16.xpose.msra.mxu0 0
    %1970 = vmatprep.subr.bf16.mxu0 0
    %1971 = vmatpush2.bf16.xpose.msra.mxu0 0
    %1972 = vmatprep.subr.bf16.mxu0 0
    %1973 = vmatpush2.bf16.xpose.msra.mxu0 0
    %1974 = vmatprep.subr.bf16.mxu0 0
    %1975 = vmatpush2.bf16.xpose.msra.mxu0 0
    %1976 = vmatprep.mubr.bf16.mxu0 0
    %1977 = vmatmul.mubr.bf16.gmra.mxu0 %v1939
    %v1978 = vpop.f32.mrf.mxu0
    %v1979 = vadd.f32 0.0, %v1978
    %v1980 = vpop.f32.mrf.mxu0
    %v1981 = vpop.f32.mrf.mxu0
    %v1982 = vpop.f32.mrf.mxu0
    %1983 = vdwg.mxu0
    %v1985 = vsel %vm1385, %v1270, 0
    %v1988 = vsel %vm1385, %v1334, 0
    %1990 = vmatprep.subr.bf16.mxu0 0
    %1991 = vmatpush1.bf16.xpose.msra.mxu0 0
    %1992 = vmatprep.subr.bf16.mxu0 0
    %1993 = vmatpush1.bf16.xpose.msra.mxu0 0
    %1994 = vmatprep.subr.bf16.mxu0 0
    %1995 = vmatpush1.bf16.xpose.msra.mxu0 0
    %1996 = vmatprep.subr.bf16.mxu0 0
    %1997 = vmatpush1.bf16.xpose.msra.mxu0 0
    %1998 = vmatprep.subr.bf16.mxu0 0
    %1999 = vmatpush1.bf16.xpose.msra.mxu0 0
    %2000 = vmatprep.subr.bf16.mxu0 0
    %2001 = vmatpush1.bf16.xpose.msra.mxu0 0
    %2002 = vmatprep.subr.bf16.mxu0 0
    %2003 = vmatpush1.bf16.xpose.msra.mxu0 0
    %2004 = vmatprep.subr.bf16.mxu0 0
    %2005 = vmatpush1.bf16.xpose.msra.mxu0 %v1988
    %2006 = vmatprep.subr.bf16.mxu0 0
    %2007 = vmatpush2.bf16.xpose.msra.mxu0 0
    %2008 = vmatprep.subr.bf16.mxu0 0
    %2009 = vmatpush2.bf16.xpose.msra.mxu0 0
    %2010 = vmatprep.subr.bf16.mxu0 0
    %2011 = vmatpush2.bf16.xpose.msra.mxu0 0
    %2012 = vmatprep.subr.bf16.mxu0 0
    %2013 = vmatpush2.bf16.xpose.msra.mxu0 0
    %2014 = vmatprep.subr.bf16.mxu0 0
    %2015 = vmatpush2.bf16.xpose.msra.mxu0 0
    %2016 = vmatprep.subr.bf16.mxu0 0
    %2017 = vmatpush2.bf16.xpose.msra.mxu0 0
    %2018 = vmatprep.subr.bf16.mxu0 0
    %2019 = vmatpush2.bf16.xpose.msra.mxu0 0
    %2020 = vmatprep.subr.bf16.mxu0 0
    %2021 = vmatpush2.bf16.xpose.msra.mxu0 0
    %2022 = vmatprep.mubr.bf16.mxu0 0
    %2023 = vmatmul.mubr.bf16.gmra.mxu0 %v1985
    %v2024 = vpop.f32.mrf.mxu0
    %v2025 = vadd.f32 0.0, %v2024
    %v2026 = vpop.f32.mrf.mxu0
    %v2027 = vpop.f32.mrf.mxu0
    %v2028 = vpop.f32.mrf.mxu0
    %2029 = vdwg.mxu0
    %v2031 = vsel %vm1385, %v1271, 0
    %v2034 = vsel %vm1385, %v1335, 0
    %2036 = vmatprep.subr.bf16.mxu0 0
    %2037 = vmatpush1.bf16.xpose.msra.mxu0 0
    %2038 = vmatprep.subr.bf16.mxu0 0
    %2039 = vmatpush1.bf16.xpose.msra.mxu0 0
    %2040 = vmatprep.subr.bf16.mxu0 0
    %2041 = vmatpush1.bf16.xpose.msra.mxu0 0
    %2042 = vmatprep.subr.bf16.mxu0 0
    %2043 = vmatpush1.bf16.xpose.msra.mxu0 0
    %2044 = vmatprep.subr.bf16.mxu0 0
    %2045 = vmatpush1.bf16.xpose.msra.mxu0 0
    %2046 = vmatprep.subr.bf16.mxu0 0
    %2047 = vmatpush1.bf16.xpose.msra.mxu0 0
    %2048 = vmatprep.subr.bf16.mxu0 0
    %2049 = vmatpush1.bf16.xpose.msra.mxu0 0
    %2050 = vmatprep.subr.bf16.mxu0 0
    %2051 = vmatpush1.bf16.xpose.msra.mxu0 %v2034
    %2052 = vmatprep.subr.bf16.mxu0 0
    %2053 = vmatpush2.bf16.xpose.msra.mxu0 0
    %2054 = vmatprep.subr.bf16.mxu0 0
    %2055 = vmatpush2.bf16.xpose.msra.mxu0 0
    %2056 = vmatprep.subr.bf16.mxu0 0
    %2057 = vmatpush2.bf16.xpose.msra.mxu0 0
    %2058 = vmatprep.subr.bf16.mxu0 0
    %2059 = vmatpush2.bf16.xpose.msra.mxu0 0
    %2060 = vmatprep.subr.bf16.mxu0 0
    %2061 = vmatpush2.bf16.xpose.msra.mxu0 0
    %2062 = vmatprep.subr.bf16.mxu0 0
    %2063 = vmatpush2.bf16.xpose.msra.mxu0 0
    %2064 = vmatprep.subr.bf16.mxu0 0
    %2065 = vmatpush2.bf16.xpose.msra.mxu0 0
    %2066 = vmatprep.subr.bf16.mxu0 0
    %2067 = vmatpush2.bf16.xpose.msra.mxu0 0
    %2068 = vmatprep.mubr.bf16.mxu0 0
    %2069 = vmatmul.mubr.bf16.gmra.mxu0 %v2031
    %v2070 = vpop.f32.mrf.mxu0
    %v2071 = vadd.f32 0.0, %v2070
    %v2072 = vpop.f32.mrf.mxu0
    %v2073 = vpop.f32.mrf.mxu0
    %v2074 = vpop.f32.mrf.mxu0
    %2075 = vdwg.mxu0
    %v2077 = vsel %vm1385, %v1272, 0
    %v2080 = vsel %vm1385, %v1336, 0
    %2082 = vmatprep.subr.bf16.mxu0 0
    %2083 = vmatpush1.bf16.xpose.msra.mxu0 0
    %2084 = vmatprep.subr.bf16.mxu0 0
    %2085 = vmatpush1.bf16.xpose.msra.mxu0 0
    %2086 = vmatprep.subr.bf16.mxu0 0
    %2087 = vmatpush1.bf16.xpose.msra.mxu0 0
    %2088 = vmatprep.subr.bf16.mxu0 0
    %2089 = vmatpush1.bf16.xpose.msra.mxu0 0
    %2090 = vmatprep.subr.bf16.mxu0 0
    %2091 = vmatpush1.bf16.xpose.msra.mxu0 0
    %2092 = vmatprep.subr.bf16.mxu0 0
    %2093 = vmatpush1.bf16.xpose.msra.mxu0 0
    %2094 = vmatprep.subr.bf16.mxu0 0
    %2095 = vmatpush1.bf16.xpose.msra.mxu0 0
    %2096 = vmatprep.subr.bf16.mxu0 0
    %2097 = vmatpush1.bf16.xpose.msra.mxu0 %v2080
    %2098 = vmatprep.subr.bf16.mxu0 0
    %2099 = vmatpush2.bf16.xpose.msra.mxu0 0
    %2100 = vmatprep.subr.bf16.mxu0 0
    %2101 = vmatpush2.bf16.xpose.msra.mxu0 0
    %2102 = vmatprep.subr.bf16.mxu0 0
    %2103 = vmatpush2.bf16.xpose.msra.mxu0 0
    %2104 = vmatprep.subr.bf16.mxu0 0
    %2105 = vmatpush2.bf16.xpose.msra.mxu0 0
    %2106 = vmatprep.subr.bf16.mxu0 0
    %2107 = vmatpush2.bf16.xpose.msra.mxu0 0
    %2108 = vmatprep.subr.bf16.mxu0 0
    %2109 = vmatpush2.bf16.xpose.msra.mxu0 0
    %2110 = vmatprep.subr.bf16.mxu0 0
    %2111 = vmatpush2.bf16.xpose.msra.mxu0 0
    %2112 = vmatprep.subr.bf16.mxu0 0
    %2113 = vmatpush2.bf16.xpose.msra.mxu0 0
    %2114 = vmatprep.mubr.bf16.mxu0 0
    %2115 = vmatmul.mubr.bf16.gmra.mxu0 %v2077
    %v2116 = vpop.f32.mrf.mxu0
    %v2117 = vadd.f32 0.0, %v2116
    %v2118 = vpop.f32.mrf.mxu0
    %v2119 = vpop.f32.mrf.mxu0
    %v2120 = vpop.f32.mrf.mxu0
    %2121 = vdwg.mxu0
    %v2123 = vsel %vm1385, %v1273, 0
    %v2126 = vsel %vm1385, %v1337, 0
    %2128 = vmatprep.subr.bf16.mxu0 0
    %2129 = vmatpush1.bf16.xpose.msra.mxu0 0
    %2130 = vmatprep.subr.bf16.mxu0 0
    %2131 = vmatpush1.bf16.xpose.msra.mxu0 0
    %2132 = vmatprep.subr.bf16.mxu0 0
    %2133 = vmatpush1.bf16.xpose.msra.mxu0 0
    %2134 = vmatprep.subr.bf16.mxu0 0
    %2135 = vmatpush1.bf16.xpose.msra.mxu0 0
    %2136 = vmatprep.subr.bf16.mxu0 0
    %2137 = vmatpush1.bf16.xpose.msra.mxu0 0
    %2138 = vmatprep.subr.bf16.mxu0 0
    %2139 = vmatpush1.bf16.xpose.msra.mxu0 0
    %2140 = vmatprep.subr.bf16.mxu0 0
    %2141 = vmatpush1.bf16.xpose.msra.mxu0 0
    %2142 = vmatprep.subr.bf16.mxu0 0
    %2143 = vmatpush1.bf16.xpose.msra.mxu0 %v2126
    %2144 = vmatprep.subr.bf16.mxu0 0
    %2145 = vmatpush2.bf16.xpose.msra.mxu0 0
    %2146 = vmatprep.subr.bf16.mxu0 0
    %2147 = vmatpush2.bf16.xpose.msra.mxu0 0
    %2148 = vmatprep.subr.bf16.mxu0 0
    %2149 = vmatpush2.bf16.xpose.msra.mxu0 0
    %2150 = vmatprep.subr.bf16.mxu0 0
    %2151 = vmatpush2.bf16.xpose.msra.mxu0 0
    %2152 = vmatprep.subr.bf16.mxu0 0
    %2153 = vmatpush2.bf16.xpose.msra.mxu0 0
    %2154 = vmatprep.subr.bf16.mxu0 0
    %2155 = vmatpush2.bf16.xpose.msra.mxu0 0
    %2156 = vmatprep.subr.bf16.mxu0 0
    %2157 = vmatpush2.bf16.xpose.msra.mxu0 0
    %2158 = vmatprep.subr.bf16.mxu0 0
    %2159 = vmatpush2.bf16.xpose.msra.mxu0 0
    %2160 = vmatprep.mubr.bf16.mxu0 0
    %2161 = vmatmul.mubr.bf16.gmra.mxu0 %v2123
    %v2162 = vpop.f32.mrf.mxu0
    %v2163 = vadd.f32 0.0, %v2162
    %v2164 = vpop.f32.mrf.mxu0
    %v2165 = vpop.f32.mrf.mxu0
    %v2166 = vpop.f32.mrf.mxu0
    %2167 = vdwg.mxu0
    %v2169 = vsel %vm1385, %v1274, 0
    %v2172 = vsel %vm1385, %v1338, 0
    %2174 = vmatprep.subr.bf16.mxu0 0
    %2175 = vmatpush1.bf16.xpose.msra.mxu0 0
    %2176 = vmatprep.subr.bf16.mxu0 0
    %2177 = vmatpush1.bf16.xpose.msra.mxu0 0
    %2178 = vmatprep.subr.bf16.mxu0 0
    %2179 = vmatpush1.bf16.xpose.msra.mxu0 0
    %2180 = vmatprep.subr.bf16.mxu0 0
    %2181 = vmatpush1.bf16.xpose.msra.mxu0 0
    %2182 = vmatprep.subr.bf16.mxu0 0
    %2183 = vmatpush1.bf16.xpose.msra.mxu0 0
    %2184 = vmatprep.subr.bf16.mxu0 0
    %2185 = vmatpush1.bf16.xpose.msra.mxu0 0
    %2186 = vmatprep.subr.bf16.mxu0 0
    %2187 = vmatpush1.bf16.xpose.msra.mxu0 0
    %2188 = vmatprep.subr.bf16.mxu0 0
    %2189 = vmatpush1.bf16.xpose.msra.mxu0 %v2172
    %2190 = vmatprep.subr.bf16.mxu0 0
    %2191 = vmatpush2.bf16.xpose.msra.mxu0 0
    %2192 = vmatprep.subr.bf16.mxu0 0
    %2193 = vmatpush2.bf16.xpose.msra.mxu0 0
    %2194 = vmatprep.subr.bf16.mxu0 0
    %2195 = vmatpush2.bf16.xpose.msra.mxu0 0
    %2196 = vmatprep.subr.bf16.mxu0 0
    %2197 = vmatpush2.bf16.xpose.msra.mxu0 0
    %2198 = vmatprep.subr.bf16.mxu0 0
    %2199 = vmatpush2.bf16.xpose.msra.mxu0 0
    %2200 = vmatprep.subr.bf16.mxu0 0
    %2201 = vmatpush2.bf16.xpose.msra.mxu0 0
    %2202 = vmatprep.subr.bf16.mxu0 0
    %2203 = vmatpush2.bf16.xpose.msra.mxu0 0
    %2204 = vmatprep.subr.bf16.mxu0 0
    %2205 = vmatpush2.bf16.xpose.msra.mxu0 0
    %2206 = vmatprep.mubr.bf16.mxu0 0
    %2207 = vmatmul.mubr.bf16.gmra.mxu0 %v2169
    %v2208 = vpop.f32.mrf.mxu0
    %v2209 = vadd.f32 0.0, %v2208
    %v2210 = vpop.f32.mrf.mxu0
    %v2211 = vpop.f32.mrf.mxu0
    %v2212 = vpop.f32.mrf.mxu0
    %2213 = vdwg.mxu0
    %v2215 = vsel %vm1385, %v1275, 0
    %v2218 = vsel %vm1385, %v1339, 0
    %2220 = vmatprep.subr.bf16.mxu0 0
    %2221 = vmatpush1.bf16.xpose.msra.mxu0 0
    %2222 = vmatprep.subr.bf16.mxu0 0
    %2223 = vmatpush1.bf16.xpose.msra.mxu0 0
    %2224 = vmatprep.subr.bf16.mxu0 0
    %2225 = vmatpush1.bf16.xpose.msra.mxu0 0
    %2226 = vmatprep.subr.bf16.mxu0 0
    %2227 = vmatpush1.bf16.xpose.msra.mxu0 0
    %2228 = vmatprep.subr.bf16.mxu0 0
    %2229 = vmatpush1.bf16.xpose.msra.mxu0 0
    %2230 = vmatprep.subr.bf16.mxu0 0
    %2231 = vmatpush1.bf16.xpose.msra.mxu0 0
    %2232 = vmatprep.subr.bf16.mxu0 0
    %2233 = vmatpush1.bf16.xpose.msra.mxu0 0
    %2234 = vmatprep.subr.bf16.mxu0 0
    %2235 = vmatpush1.bf16.xpose.msra.mxu0 %v2218
    %2236 = vmatprep.subr.bf16.mxu0 0
    %2237 = vmatpush2.bf16.xpose.msra.mxu0 0
    %2238 = vmatprep.subr.bf16.mxu0 0
    %2239 = vmatpush2.bf16.xpose.msra.mxu0 0
    %2240 = vmatprep.subr.bf16.mxu0 0
    %2241 = vmatpush2.bf16.xpose.msra.mxu0 0
    %2242 = vmatprep.subr.bf16.mxu0 0
    %2243 = vmatpush2.bf16.xpose.msra.mxu0 0
    %2244 = vmatprep.subr.bf16.mxu0 0
    %2245 = vmatpush2.bf16.xpose.msra.mxu0 0
    %2246 = vmatprep.subr.bf16.mxu0 0
    %2247 = vmatpush2.bf16.xpose.msra.mxu0 0
    %2248 = vmatprep.subr.bf16.mxu0 0
    %2249 = vmatpush2.bf16.xpose.msra.mxu0 0
    %2250 = vmatprep.subr.bf16.mxu0 0
    %2251 = vmatpush2.bf16.xpose.msra.mxu0 0
    %2252 = vmatprep.mubr.bf16.mxu0 0
    %2253 = vmatmul.mubr.bf16.gmra.mxu0 %v2215
    %v2254 = vpop.f32.mrf.mxu0
    %v2255 = vadd.f32 0.0, %v2254
    %v2256 = vpop.f32.mrf.mxu0
    %v2257 = vpop.f32.mrf.mxu0
    %v2258 = vpop.f32.mrf.mxu0
    %2259 = vdwg.mxu0
    %v2261 = vsel %vm1385, %v1276, 0
    %v2264 = vsel %vm1385, %v1340, 0
    %2266 = vmatprep.subr.bf16.mxu0 0
    %2267 = vmatpush1.bf16.xpose.msra.mxu0 0
    %2268 = vmatprep.subr.bf16.mxu0 0
    %2269 = vmatpush1.bf16.xpose.msra.mxu0 0
    %2270 = vmatprep.subr.bf16.mxu0 0
    %2271 = vmatpush1.bf16.xpose.msra.mxu0 0
    %2272 = vmatprep.subr.bf16.mxu0 0
    %2273 = vmatpush1.bf16.xpose.msra.mxu0 0
    %2274 = vmatprep.subr.bf16.mxu0 0
    %2275 = vmatpush1.bf16.xpose.msra.mxu0 0
    %2276 = vmatprep.subr.bf16.mxu0 0
    %2277 = vmatpush1.bf16.xpose.msra.mxu0 0
    %2278 = vmatprep.subr.bf16.mxu0 0
    %2279 = vmatpush1.bf16.xpose.msra.mxu0 0
    %2280 = vmatprep.subr.bf16.mxu0 0
    %2281 = vmatpush1.bf16.xpose.msra.mxu0 %v2264
    %2282 = vmatprep.subr.bf16.mxu0 0
    %2283 = vmatpush2.bf16.xpose.msra.mxu0 0
    %2284 = vmatprep.subr.bf16.mxu0 0
    %2285 = vmatpush2.bf16.xpose.msra.mxu0 0
    %2286 = vmatprep.subr.bf16.mxu0 0
    %2287 = vmatpush2.bf16.xpose.msra.mxu0 0
    %2288 = vmatprep.subr.bf16.mxu0 0
    %2289 = vmatpush2.bf16.xpose.msra.mxu0 0
    %2290 = vmatprep.subr.bf16.mxu0 0
    %2291 = vmatpush2.bf16.xpose.msra.mxu0 0
    %2292 = vmatprep.subr.bf16.mxu0 0
    %2293 = vmatpush2.bf16.xpose.msra.mxu0 0
    %2294 = vmatprep.subr.bf16.mxu0 0
    %2295 = vmatpush2.bf16.xpose.msra.mxu0 0
    %2296 = vmatprep.subr.bf16.mxu0 0
    %2297 = vmatpush2.bf16.xpose.msra.mxu0 0
    %2298 = vmatprep.mubr.bf16.mxu0 0
    %2299 = vmatmul.mubr.bf16.gmra.mxu0 %v2261
    %v2300 = vpop.f32.mrf.mxu0
    %v2301 = vadd.f32 0.0, %v2300
    %v2302 = vpop.f32.mrf.mxu0
    %v2303 = vpop.f32.mrf.mxu0
    %v2304 = vpop.f32.mrf.mxu0
    %2305 = vdwg.mxu0
    %v2307 = vsel %vm1385, %v1277, 0
    %v2310 = vsel %vm1385, %v1341, 0
    %2312 = vmatprep.subr.bf16.mxu0 0
    %2313 = vmatpush1.bf16.xpose.msra.mxu0 0
    %2314 = vmatprep.subr.bf16.mxu0 0
    %2315 = vmatpush1.bf16.xpose.msra.mxu0 0
    %2316 = vmatprep.subr.bf16.mxu0 0
    %2317 = vmatpush1.bf16.xpose.msra.mxu0 0
    %2318 = vmatprep.subr.bf16.mxu0 0
    %2319 = vmatpush1.bf16.xpose.msra.mxu0 0
    %2320 = vmatprep.subr.bf16.mxu0 0
    %2321 = vmatpush1.bf16.xpose.msra.mxu0 0
    %2322 = vmatprep.subr.bf16.mxu0 0
    %2323 = vmatpush1.bf16.xpose.msra.mxu0 0
    %2324 = vmatprep.subr.bf16.mxu0 0
    %2325 = vmatpush1.bf16.xpose.msra.mxu0 0
    %2326 = vmatprep.subr.bf16.mxu0 0
    %2327 = vmatpush1.bf16.xpose.msra.mxu0 %v2310
    %2328 = vmatprep.subr.bf16.mxu0 0
    %2329 = vmatpush2.bf16.xpose.msra.mxu0 0
    %2330 = vmatprep.subr.bf16.mxu0 0
    %2331 = vmatpush2.bf16.xpose.msra.mxu0 0
    %2332 = vmatprep.subr.bf16.mxu0 0
    %2333 = vmatpush2.bf16.xpose.msra.mxu0 0
    %2334 = vmatprep.subr.bf16.mxu0 0
    %2335 = vmatpush2.bf16.xpose.msra.mxu0 0
    %2336 = vmatprep.subr.bf16.mxu0 0
    %2337 = vmatpush2.bf16.xpose.msra.mxu0 0
    %2338 = vmatprep.subr.bf16.mxu0 0
    %2339 = vmatpush2.bf16.xpose.msra.mxu0 0
    %2340 = vmatprep.subr.bf16.mxu0 0
    %2341 = vmatpush2.bf16.xpose.msra.mxu0 0
    %2342 = vmatprep.subr.bf16.mxu0 0
    %2343 = vmatpush2.bf16.xpose.msra.mxu0 0
    %2344 = vmatprep.mubr.bf16.mxu0 0
    %2345 = vmatmul.mubr.bf16.gmra.mxu0 %v2307
    %v2346 = vpop.f32.mrf.mxu0
    %v2347 = vadd.f32 0.0, %v2346
    %v2348 = vpop.f32.mrf.mxu0
    %v2349 = vpop.f32.mrf.mxu0
    %v2350 = vpop.f32.mrf.mxu0
    %2351 = vdwg.mxu0
    %v2353 = vsel %vm1385, %v1278, 0
    %v2356 = vsel %vm1385, %v1342, 0
    %2358 = vmatprep.subr.bf16.mxu0 0
    %2359 = vmatpush1.bf16.xpose.msra.mxu0 0
    %2360 = vmatprep.subr.bf16.mxu0 0
    %2361 = vmatpush1.bf16.xpose.msra.mxu0 0
    %2362 = vmatprep.subr.bf16.mxu0 0
    %2363 = vmatpush1.bf16.xpose.msra.mxu0 0
    %2364 = vmatprep.subr.bf16.mxu0 0
    %2365 = vmatpush1.bf16.xpose.msra.mxu0 0
    %2366 = vmatprep.subr.bf16.mxu0 0
    %2367 = vmatpush1.bf16.xpose.msra.mxu0 0
    %2368 = vmatprep.subr.bf16.mxu0 0
    %2369 = vmatpush1.bf16.xpose.msra.mxu0 0
    %2370 = vmatprep.subr.bf16.mxu0 0
    %2371 = vmatpush1.bf16.xpose.msra.mxu0 0
    %2372 = vmatprep.subr.bf16.mxu0 0
    %2373 = vmatpush1.bf16.xpose.msra.mxu0 %v2356
    %2374 = vmatprep.subr.bf16.mxu0 0
    %2375 = vmatpush2.bf16.xpose.msra.mxu0 0
    %2376 = vmatprep.subr.bf16.mxu0 0
    %2377 = vmatpush2.bf16.xpose.msra.mxu0 0
    %2378 = vmatprep.subr.bf16.mxu0 0
    %2379 = vmatpush2.bf16.xpose.msra.mxu0 0
    %2380 = vmatprep.subr.bf16.mxu0 0
    %2381 = vmatpush2.bf16.xpose.msra.mxu0 0
    %2382 = vmatprep.subr.bf16.mxu0 0
    %2383 = vmatpush2.bf16.xpose.msra.mxu0 0
    %2384 = vmatprep.subr.bf16.mxu0 0
    %2385 = vmatpush2.bf16.xpose.msra.mxu0 0
    %2386 = vmatprep.subr.bf16.mxu0 0
    %2387 = vmatpush2.bf16.xpose.msra.mxu0 0
    %2388 = vmatprep.subr.bf16.mxu0 0
    %2389 = vmatpush2.bf16.xpose.msra.mxu0 0
    %2390 = vmatprep.mubr.bf16.mxu0 0
    %2391 = vmatmul.mubr.bf16.gmra.mxu0 %v2353
    %v2392 = vpop.f32.mrf.mxu0
    %v2393 = vadd.f32 0.0, %v2392
    %v2394 = vpop.f32.mrf.mxu0
    %v2395 = vpop.f32.mrf.mxu0
    %v2396 = vpop.f32.mrf.mxu0
    %2397 = vdwg.mxu0
    %v2399 = vsel %vm1385, %v1279, 0
    %v2402 = vsel %vm1385, %v1343, 0
    %2404 = vmatprep.subr.bf16.mxu0 0
    %2405 = vmatpush1.bf16.xpose.msra.mxu0 0
    %2406 = vmatprep.subr.bf16.mxu0 0
    %2407 = vmatpush1.bf16.xpose.msra.mxu0 0
    %2408 = vmatprep.subr.bf16.mxu0 0
    %2409 = vmatpush1.bf16.xpose.msra.mxu0 0
    %2410 = vmatprep.subr.bf16.mxu0 0
    %2411 = vmatpush1.bf16.xpose.msra.mxu0 0
    %2412 = vmatprep.subr.bf16.mxu0 0
    %2413 = vmatpush1.bf16.xpose.msra.mxu0 0
    %2414 = vmatprep.subr.bf16.mxu0 0
    %2415 = vmatpush1.bf16.xpose.msra.mxu0 0
    %2416 = vmatprep.subr.bf16.mxu0 0
    %2417 = vmatpush1.bf16.xpose.msra.mxu0 0
    %2418 = vmatprep.subr.bf16.mxu0 0
    %2419 = vmatpush1.bf16.xpose.msra.mxu0 %v2402
    %2420 = vmatprep.subr.bf16.mxu0 0
    %2421 = vmatpush2.bf16.xpose.msra.mxu0 0
    %2422 = vmatprep.subr.bf16.mxu0 0
    %2423 = vmatpush2.bf16.xpose.msra.mxu0 0
    %2424 = vmatprep.subr.bf16.mxu0 0
    %2425 = vmatpush2.bf16.xpose.msra.mxu0 0
    %2426 = vmatprep.subr.bf16.mxu0 0
    %2427 = vmatpush2.bf16.xpose.msra.mxu0 0
    %2428 = vmatprep.subr.bf16.mxu0 0
    %2429 = vmatpush2.bf16.xpose.msra.mxu0 0
    %2430 = vmatprep.subr.bf16.mxu0 0
    %2431 = vmatpush2.bf16.xpose.msra.mxu0 0
    %2432 = vmatprep.subr.bf16.mxu0 0
    %2433 = vmatpush2.bf16.xpose.msra.mxu0 0
    %2434 = vmatprep.subr.bf16.mxu0 0
    %2435 = vmatpush2.bf16.xpose.msra.mxu0 0
    %2436 = vmatprep.mubr.bf16.mxu0 0
    %2437 = vmatmul.mubr.bf16.gmra.mxu0 %v2399
    %v2438 = vpop.f32.mrf.mxu0
    %v2439 = vadd.f32 0.0, %v2438
    %v2440 = vpop.f32.mrf.mxu0
    %v2441 = vpop.f32.mrf.mxu0
    %v2442 = vpop.f32.mrf.mxu0
    %2443 = vdwg.mxu0
    %v2445 = vsel %vm1385, %v1280, 0
    %v2448 = vsel %vm1385, %v1344, 0
    %2450 = vmatprep.subr.bf16.mxu0 0
    %2451 = vmatpush1.bf16.xpose.msra.mxu0 0
    %2452 = vmatprep.subr.bf16.mxu0 0
    %2453 = vmatpush1.bf16.xpose.msra.mxu0 0
    %2454 = vmatprep.subr.bf16.mxu0 0
    %2455 = vmatpush1.bf16.xpose.msra.mxu0 0
    %2456 = vmatprep.subr.bf16.mxu0 0
    %2457 = vmatpush1.bf16.xpose.msra.mxu0 0
    %2458 = vmatprep.subr.bf16.mxu0 0
    %2459 = vmatpush1.bf16.xpose.msra.mxu0 0
    %2460 = vmatprep.subr.bf16.mxu0 0
    %2461 = vmatpush1.bf16.xpose.msra.mxu0 0
    %2462 = vmatprep.subr.bf16.mxu0 0
    %2463 = vmatpush1.bf16.xpose.msra.mxu0 0
    %2464 = vmatprep.subr.bf16.mxu0 0
    %2465 = vmatpush1.bf16.xpose.msra.mxu0 %v2448
    %2466 = vmatprep.subr.bf16.mxu0 0
    %2467 = vmatpush2.bf16.xpose.msra.mxu0 0
    %2468 = vmatprep.subr.bf16.mxu0 0
    %2469 = vmatpush2.bf16.xpose.msra.mxu0 0
    %2470 = vmatprep.subr.bf16.mxu0 0
    %2471 = vmatpush2.bf16.xpose.msra.mxu0 0
    %2472 = vmatprep.subr.bf16.mxu0 0
    %2473 = vmatpush2.bf16.xpose.msra.mxu0 0
    %2474 = vmatprep.subr.bf16.mxu0 0
    %2475 = vmatpush2.bf16.xpose.msra.mxu0 0
    %2476 = vmatprep.subr.bf16.mxu0 0
    %2477 = vmatpush2.bf16.xpose.msra.mxu0 0
    %2478 = vmatprep.subr.bf16.mxu0 0
    %2479 = vmatpush2.bf16.xpose.msra.mxu0 0
    %2480 = vmatprep.subr.bf16.mxu0 0
    %2481 = vmatpush2.bf16.xpose.msra.mxu0 0
    %2482 = vmatprep.mubr.bf16.mxu0 0
    %2483 = vmatmul.mubr.bf16.gmra.mxu0 %v2445
    %v2484 = vpop.f32.mrf.mxu0
    %v2485 = vadd.f32 0.0, %v2484
    %v2486 = vpop.f32.mrf.mxu0
    %v2487 = vpop.f32.mrf.mxu0
    %v2488 = vpop.f32.mrf.mxu0
    %2489 = vdwg.mxu0
    %v2491 = vsel %vm1385, %v1281, 0
    %v2494 = vsel %vm1385, %v1345, 0
    %2496 = vmatprep.subr.bf16.mxu0 0
    %2497 = vmatpush1.bf16.xpose.msra.mxu0 0
    %2498 = vmatprep.subr.bf16.mxu0 0
    %2499 = vmatpush1.bf16.xpose.msra.mxu0 0
    %2500 = vmatprep.subr.bf16.mxu0 0
    %2501 = vmatpush1.bf16.xpose.msra.mxu0 0
    %2502 = vmatprep.subr.bf16.mxu0 0
    %2503 = vmatpush1.bf16.xpose.msra.mxu0 0
    %2504 = vmatprep.subr.bf16.mxu0 0
    %2505 = vmatpush1.bf16.xpose.msra.mxu0 0
    %2506 = vmatprep.subr.bf16.mxu0 0
    %2507 = vmatpush1.bf16.xpose.msra.mxu0 0
    %2508 = vmatprep.subr.bf16.mxu0 0
    %2509 = vmatpush1.bf16.xpose.msra.mxu0 0
    %2510 = vmatprep.subr.bf16.mxu0 0
    %2511 = vmatpush1.bf16.xpose.msra.mxu0 %v2494
    %2512 = vmatprep.subr.bf16.mxu0 0
    %2513 = vmatpush2.bf16.xpose.msra.mxu0 0
    %2514 = vmatprep.subr.bf16.mxu0 0
    %2515 = vmatpush2.bf16.xpose.msra.mxu0 0
    %2516 = vmatprep.subr.bf16.mxu0 0
    %2517 = vmatpush2.bf16.xpose.msra.mxu0 0
    %2518 = vmatprep.subr.bf16.mxu0 0
    %2519 = vmatpush2.bf16.xpose.msra.mxu0 0
    %2520 = vmatprep.subr.bf16.mxu0 0
    %2521 = vmatpush2.bf16.xpose.msra.mxu0 0
    %2522 = vmatprep.subr.bf16.mxu0 0
    %2523 = vmatpush2.bf16.xpose.msra.mxu0 0
    %2524 = vmatprep.subr.bf16.mxu0 0
    %2525 = vmatpush2.bf16.xpose.msra.mxu0 0
    %2526 = vmatprep.subr.bf16.mxu0 0
    %2527 = vmatpush2.bf16.xpose.msra.mxu0 0
    %2528 = vmatprep.mubr.bf16.mxu0 0
    %2529 = vmatmul.mubr.bf16.gmra.mxu0 %v2491
    %v2530 = vpop.f32.mrf.mxu0
    %v2531 = vadd.f32 0.0, %v2530
    %v2532 = vpop.f32.mrf.mxu0
    %v2533 = vpop.f32.mrf.mxu0
    %v2534 = vpop.f32.mrf.mxu0
    %2535 = vdwg.mxu0
    %v2537 = vsel %vm1385, %v1282, 0
    %v2540 = vsel %vm1385, %v1346, 0
    %2542 = vmatprep.subr.bf16.mxu0 0
    %2543 = vmatpush1.bf16.xpose.msra.mxu0 0
    %2544 = vmatprep.subr.bf16.mxu0 0
    %2545 = vmatpush1.bf16.xpose.msra.mxu0 0
    %2546 = vmatprep.subr.bf16.mxu0 0
    %2547 = vmatpush1.bf16.xpose.msra.mxu0 0
    %2548 = vmatprep.subr.bf16.mxu0 0
    %2549 = vmatpush1.bf16.xpose.msra.mxu0 0
    %2550 = vmatprep.subr.bf16.mxu0 0
    %2551 = vmatpush1.bf16.xpose.msra.mxu0 0
    %2552 = vmatprep.subr.bf16.mxu0 0
    %2553 = vmatpush1.bf16.xpose.msra.mxu0 0
    %2554 = vmatprep.subr.bf16.mxu0 0
    %2555 = vmatpush1.bf16.xpose.msra.mxu0 0
    %2556 = vmatprep.subr.bf16.mxu0 0
    %2557 = vmatpush1.bf16.xpose.msra.mxu0 %v2540
    %2558 = vmatprep.subr.bf16.mxu0 0
    %2559 = vmatpush2.bf16.xpose.msra.mxu0 0
    %2560 = vmatprep.subr.bf16.mxu0 0
    %2561 = vmatpush2.bf16.xpose.msra.mxu0 0
    %2562 = vmatprep.subr.bf16.mxu0 0
    %2563 = vmatpush2.bf16.xpose.msra.mxu0 0
    %2564 = vmatprep.subr.bf16.mxu0 0
    %2565 = vmatpush2.bf16.xpose.msra.mxu0 0
    %2566 = vmatprep.subr.bf16.mxu0 0
    %2567 = vmatpush2.bf16.xpose.msra.mxu0 0
    %2568 = vmatprep.subr.bf16.mxu0 0
    %2569 = vmatpush2.bf16.xpose.msra.mxu0 0
    %2570 = vmatprep.subr.bf16.mxu0 0
    %2571 = vmatpush2.bf16.xpose.msra.mxu0 0
    %2572 = vmatprep.subr.bf16.mxu0 0
    %2573 = vmatpush2.bf16.xpose.msra.mxu0 0
    %2574 = vmatprep.mubr.bf16.mxu0 0
    %2575 = vmatmul.mubr.bf16.gmra.mxu0 %v2537
    %v2576 = vpop.f32.mrf.mxu0
    %v2577 = vadd.f32 0.0, %v2576
    %v2578 = vpop.f32.mrf.mxu0
    %v2579 = vpop.f32.mrf.mxu0
    %v2580 = vpop.f32.mrf.mxu0
    %2581 = vdwg.mxu0
    %v2583 = vsel %vm1385, %v1283, 0
    %v2586 = vsel %vm1385, %v1347, 0
    %2588 = vmatprep.subr.bf16.mxu0 0
    %2589 = vmatpush1.bf16.xpose.msra.mxu0 0
    %2590 = vmatprep.subr.bf16.mxu0 0
    %2591 = vmatpush1.bf16.xpose.msra.mxu0 0
    %2592 = vmatprep.subr.bf16.mxu0 0
    %2593 = vmatpush1.bf16.xpose.msra.mxu0 0
    %2594 = vmatprep.subr.bf16.mxu0 0
    %2595 = vmatpush1.bf16.xpose.msra.mxu0 0
    %2596 = vmatprep.subr.bf16.mxu0 0
    %2597 = vmatpush1.bf16.xpose.msra.mxu0 0
    %2598 = vmatprep.subr.bf16.mxu0 0
    %2599 = vmatpush1.bf16.xpose.msra.mxu0 0
    %2600 = vmatprep.subr.bf16.mxu0 0
    %2601 = vmatpush1.bf16.xpose.msra.mxu0 0
    %2602 = vmatprep.subr.bf16.mxu0 0
    %2603 = vmatpush1.bf16.xpose.msra.mxu0 %v2586
    %2604 = vmatprep.subr.bf16.mxu0 0
    %2605 = vmatpush2.bf16.xpose.msra.mxu0 0
    %2606 = vmatprep.subr.bf16.mxu0 0
    %2607 = vmatpush2.bf16.xpose.msra.mxu0 0
    %2608 = vmatprep.subr.bf16.mxu0 0
    %2609 = vmatpush2.bf16.xpose.msra.mxu0 0
    %2610 = vmatprep.subr.bf16.mxu0 0
    %2611 = vmatpush2.bf16.xpose.msra.mxu0 0
    %2612 = vmatprep.subr.bf16.mxu0 0
    %2613 = vmatpush2.bf16.xpose.msra.mxu0 0
    %2614 = vmatprep.subr.bf16.mxu0 0
    %2615 = vmatpush2.bf16.xpose.msra.mxu0 0
    %2616 = vmatprep.subr.bf16.mxu0 0
    %2617 = vmatpush2.bf16.xpose.msra.mxu0 0
    %2618 = vmatprep.subr.bf16.mxu0 0
    %2619 = vmatpush2.bf16.xpose.msra.mxu0 0
    %2620 = vmatprep.mubr.bf16.mxu0 0
    %2621 = vmatmul.mubr.bf16.gmra.mxu0 %v2583
    %v2622 = vpop.f32.mrf.mxu0
    %v2623 = vadd.f32 0.0, %v2622
    %v2624 = vpop.f32.mrf.mxu0
    %v2625 = vpop.f32.mrf.mxu0
    %v2626 = vpop.f32.mrf.mxu0
    %2627 = vdwg.mxu0
    %v2629 = vsel %vm1385, %v1284, 0
    %v2632 = vsel %vm1385, %v1348, 0
    %2634 = vmatprep.subr.bf16.mxu0 0
    %2635 = vmatpush1.bf16.xpose.msra.mxu0 0
    %2636 = vmatprep.subr.bf16.mxu0 0
    %2637 = vmatpush1.bf16.xpose.msra.mxu0 0
    %2638 = vmatprep.subr.bf16.mxu0 0
    %2639 = vmatpush1.bf16.xpose.msra.mxu0 0
    %2640 = vmatprep.subr.bf16.mxu0 0
    %2641 = vmatpush1.bf16.xpose.msra.mxu0 0
    %2642 = vmatprep.subr.bf16.mxu0 0
    %2643 = vmatpush1.bf16.xpose.msra.mxu0 0
    %2644 = vmatprep.subr.bf16.mxu0 0
    %2645 = vmatpush1.bf16.xpose.msra.mxu0 0
    %2646 = vmatprep.subr.bf16.mxu0 0
    %2647 = vmatpush1.bf16.xpose.msra.mxu0 0
    %2648 = vmatprep.subr.bf16.mxu0 0
    %2649 = vmatpush1.bf16.xpose.msra.mxu0 %v2632
    %2650 = vmatprep.subr.bf16.mxu0 0
    %2651 = vmatpush2.bf16.xpose.msra.mxu0 0
    %2652 = vmatprep.subr.bf16.mxu0 0
    %2653 = vmatpush2.bf16.xpose.msra.mxu0 0
    %2654 = vmatprep.subr.bf16.mxu0 0
    %2655 = vmatpush2.bf16.xpose.msra.mxu0 0
    %2656 = vmatprep.subr.bf16.mxu0 0
    %2657 = vmatpush2.bf16.xpose.msra.mxu0 0
    %2658 = vmatprep.subr.bf16.mxu0 0
    %2659 = vmatpush2.bf16.xpose.msra.mxu0 0
    %2660 = vmatprep.subr.bf16.mxu0 0
    %2661 = vmatpush2.bf16.xpose.msra.mxu0 0
    %2662 = vmatprep.subr.bf16.mxu0 0
    %2663 = vmatpush2.bf16.xpose.msra.mxu0 0
    %2664 = vmatprep.subr.bf16.mxu0 0
    %2665 = vmatpush2.bf16.xpose.msra.mxu0 0
    %2666 = vmatprep.mubr.bf16.mxu0 0
    %2667 = vmatmul.mubr.bf16.gmra.mxu0 %v2629
    %v2668 = vpop.f32.mrf.mxu0
    %v2669 = vadd.f32 0.0, %v2668
    %v2670 = vpop.f32.mrf.mxu0
    %v2671 = vpop.f32.mrf.mxu0
    %v2672 = vpop.f32.mrf.mxu0
    %2673 = vdwg.mxu0
    %v2675 = vsel %vm1385, %v1285, 0
    %v2678 = vsel %vm1385, %v1349, 0
    %2680 = vmatprep.subr.bf16.mxu0 0
    %2681 = vmatpush1.bf16.xpose.msra.mxu0 0
    %2682 = vmatprep.subr.bf16.mxu0 0
    %2683 = vmatpush1.bf16.xpose.msra.mxu0 0
    %2684 = vmatprep.subr.bf16.mxu0 0
    %2685 = vmatpush1.bf16.xpose.msra.mxu0 0
    %2686 = vmatprep.subr.bf16.mxu0 0
    %2687 = vmatpush1.bf16.xpose.msra.mxu0 0
    %2688 = vmatprep.subr.bf16.mxu0 0
    %2689 = vmatpush1.bf16.xpose.msra.mxu0 0
    %2690 = vmatprep.subr.bf16.mxu0 0
    %2691 = vmatpush1.bf16.xpose.msra.mxu0 0
    %2692 = vmatprep.subr.bf16.mxu0 0
    %2693 = vmatpush1.bf16.xpose.msra.mxu0 0
    %2694 = vmatprep.subr.bf16.mxu0 0
    %2695 = vmatpush1.bf16.xpose.msra.mxu0 %v2678
    %2696 = vmatprep.subr.bf16.mxu0 0
    %2697 = vmatpush2.bf16.xpose.msra.mxu0 0
    %2698 = vmatprep.subr.bf16.mxu0 0
    %2699 = vmatpush2.bf16.xpose.msra.mxu0 0
    %2700 = vmatprep.subr.bf16.mxu0 0
    %2701 = vmatpush2.bf16.xpose.msra.mxu0 0
    %2702 = vmatprep.subr.bf16.mxu0 0
    %2703 = vmatpush2.bf16.xpose.msra.mxu0 0
    %2704 = vmatprep.subr.bf16.mxu0 0
    %2705 = vmatpush2.bf16.xpose.msra.mxu0 0
    %2706 = vmatprep.subr.bf16.mxu0 0
    %2707 = vmatpush2.bf16.xpose.msra.mxu0 0
    %2708 = vmatprep.subr.bf16.mxu0 0
    %2709 = vmatpush2.bf16.xpose.msra.mxu0 0
    %2710 = vmatprep.subr.bf16.mxu0 0
    %2711 = vmatpush2.bf16.xpose.msra.mxu0 0
    %2712 = vmatprep.mubr.bf16.mxu0 0
    %2713 = vmatmul.mubr.bf16.gmra.mxu0 %v2675
    %v2714 = vpop.f32.mrf.mxu0
    %v2715 = vadd.f32 0.0, %v2714
    %v2716 = vpop.f32.mrf.mxu0
    %v2717 = vpop.f32.mrf.mxu0
    %v2718 = vpop.f32.mrf.mxu0
    %2719 = vdwg.mxu0
    %v2721 = vsel %vm1385, %v1286, 0
    %v2724 = vsel %vm1385, %v1350, 0
    %2726 = vmatprep.subr.bf16.mxu0 0
    %2727 = vmatpush1.bf16.xpose.msra.mxu0 0
    %2728 = vmatprep.subr.bf16.mxu0 0
    %2729 = vmatpush1.bf16.xpose.msra.mxu0 0
    %2730 = vmatprep.subr.bf16.mxu0 0
    %2731 = vmatpush1.bf16.xpose.msra.mxu0 0
    %2732 = vmatprep.subr.bf16.mxu0 0
    %2733 = vmatpush1.bf16.xpose.msra.mxu0 0
    %2734 = vmatprep.subr.bf16.mxu0 0
    %2735 = vmatpush1.bf16.xpose.msra.mxu0 0
    %2736 = vmatprep.subr.bf16.mxu0 0
    %2737 = vmatpush1.bf16.xpose.msra.mxu0 0
    %2738 = vmatprep.subr.bf16.mxu0 0
    %2739 = vmatpush1.bf16.xpose.msra.mxu0 0
    %2740 = vmatprep.subr.bf16.mxu0 0
    %2741 = vmatpush1.bf16.xpose.msra.mxu0 %v2724
    %2742 = vmatprep.subr.bf16.mxu0 0
    %2743 = vmatpush2.bf16.xpose.msra.mxu0 0
    %2744 = vmatprep.subr.bf16.mxu0 0
    %2745 = vmatpush2.bf16.xpose.msra.mxu0 0
    %2746 = vmatprep.subr.bf16.mxu0 0
    %2747 = vmatpush2.bf16.xpose.msra.mxu0 0
    %2748 = vmatprep.subr.bf16.mxu0 0
    %2749 = vmatpush2.bf16.xpose.msra.mxu0 0
    %2750 = vmatprep.subr.bf16.mxu0 0
    %2751 = vmatpush2.bf16.xpose.msra.mxu0 0
    %2752 = vmatprep.subr.bf16.mxu0 0
    %2753 = vmatpush2.bf16.xpose.msra.mxu0 0
    %2754 = vmatprep.subr.bf16.mxu0 0
    %2755 = vmatpush2.bf16.xpose.msra.mxu0 0
    %2756 = vmatprep.subr.bf16.mxu0 0
    %2757 = vmatpush2.bf16.xpose.msra.mxu0 0
    %2758 = vmatprep.mubr.bf16.mxu0 0
    %2759 = vmatmul.mubr.bf16.gmra.mxu0 %v2721
    %v2760 = vpop.f32.mrf.mxu0
    %v2761 = vadd.f32 0.0, %v2760
    %v2762 = vpop.f32.mrf.mxu0
    %v2763 = vpop.f32.mrf.mxu0
    %v2764 = vpop.f32.mrf.mxu0
    %2765 = vdwg.mxu0
    %v2767 = vsel %vm1385, %v1287, 0
    %v2770 = vsel %vm1385, %v1351, 0
    %2772 = vmatprep.subr.bf16.mxu0 0
    %2773 = vmatpush1.bf16.xpose.msra.mxu0 0
    %2774 = vmatprep.subr.bf16.mxu0 0
    %2775 = vmatpush1.bf16.xpose.msra.mxu0 0
    %2776 = vmatprep.subr.bf16.mxu0 0
    %2777 = vmatpush1.bf16.xpose.msra.mxu0 0
    %2778 = vmatprep.subr.bf16.mxu0 0
    %2779 = vmatpush1.bf16.xpose.msra.mxu0 0
    %2780 = vmatprep.subr.bf16.mxu0 0
    %2781 = vmatpush1.bf16.xpose.msra.mxu0 0
    %2782 = vmatprep.subr.bf16.mxu0 0
    %2783 = vmatpush1.bf16.xpose.msra.mxu0 0
    %2784 = vmatprep.subr.bf16.mxu0 0
    %2785 = vmatpush1.bf16.xpose.msra.mxu0 0
    %2786 = vmatprep.subr.bf16.mxu0 0
    %2787 = vmatpush1.bf16.xpose.msra.mxu0 %v2770
    %2788 = vmatprep.subr.bf16.mxu0 0
    %2789 = vmatpush2.bf16.xpose.msra.mxu0 0
    %2790 = vmatprep.subr.bf16.mxu0 0
    %2791 = vmatpush2.bf16.xpose.msra.mxu0 0
    %2792 = vmatprep.subr.bf16.mxu0 0
    %2793 = vmatpush2.bf16.xpose.msra.mxu0 0
    %2794 = vmatprep.subr.bf16.mxu0 0
    %2795 = vmatpush2.bf16.xpose.msra.mxu0 0
    %2796 = vmatprep.subr.bf16.mxu0 0
    %2797 = vmatpush2.bf16.xpose.msra.mxu0 0
    %2798 = vmatprep.subr.bf16.mxu0 0
    %2799 = vmatpush2.bf16.xpose.msra.mxu0 0
    %2800 = vmatprep.subr.bf16.mxu0 0
    %2801 = vmatpush2.bf16.xpose.msra.mxu0 0
    %2802 = vmatprep.subr.bf16.mxu0 0
    %2803 = vmatpush2.bf16.xpose.msra.mxu0 0
    %2804 = vmatprep.mubr.bf16.mxu0 0
    %2805 = vmatmul.mubr.bf16.gmra.mxu0 %v2767
    %v2806 = vpop.f32.mrf.mxu0
    %v2807 = vadd.f32 0.0, %v2806
    %v2808 = vpop.f32.mrf.mxu0
    %v2809 = vpop.f32.mrf.mxu0
    %v2810 = vpop.f32.mrf.mxu0
    %2811 = vdwg.mxu0
    %v2813 = vsel %vm1385, %v1288, 0
    %v2816 = vsel %vm1385, %v1352, 0
    %2818 = vmatprep.subr.bf16.mxu0 0
    %2819 = vmatpush1.bf16.xpose.msra.mxu0 0
    %2820 = vmatprep.subr.bf16.mxu0 0
    %2821 = vmatpush1.bf16.xpose.msra.mxu0 0
    %2822 = vmatprep.subr.bf16.mxu0 0
    %2823 = vmatpush1.bf16.xpose.msra.mxu0 0
    %2824 = vmatprep.subr.bf16.mxu0 0
    %2825 = vmatpush1.bf16.xpose.msra.mxu0 0
    %2826 = vmatprep.subr.bf16.mxu0 0
    %2827 = vmatpush1.bf16.xpose.msra.mxu0 0
    %2828 = vmatprep.subr.bf16.mxu0 0
    %2829 = vmatpush1.bf16.xpose.msra.mxu0 0
    %2830 = vmatprep.subr.bf16.mxu0 0
    %2831 = vmatpush1.bf16.xpose.msra.mxu0 0
    %2832 = vmatprep.subr.bf16.mxu0 0
    %2833 = vmatpush1.bf16.xpose.msra.mxu0 %v2816
    %2834 = vmatprep.subr.bf16.mxu0 0
    %2835 = vmatpush2.bf16.xpose.msra.mxu0 0
    %2836 = vmatprep.subr.bf16.mxu0 0
    %2837 = vmatpush2.bf16.xpose.msra.mxu0 0
    %2838 = vmatprep.subr.bf16.mxu0 0
    %2839 = vmatpush2.bf16.xpose.msra.mxu0 0
    %2840 = vmatprep.subr.bf16.mxu0 0
    %2841 = vmatpush2.bf16.xpose.msra.mxu0 0
    %2842 = vmatprep.subr.bf16.mxu0 0
    %2843 = vmatpush2.bf16.xpose.msra.mxu0 0
    %2844 = vmatprep.subr.bf16.mxu0 0
    %2845 = vmatpush2.bf16.xpose.msra.mxu0 0
    %2846 = vmatprep.subr.bf16.mxu0 0
    %2847 = vmatpush2.bf16.xpose.msra.mxu0 0
    %2848 = vmatprep.subr.bf16.mxu0 0
    %2849 = vmatpush2.bf16.xpose.msra.mxu0 0
    %2850 = vmatprep.mubr.bf16.mxu0 0
    %2851 = vmatmul.mubr.bf16.gmra.mxu0 %v2813
    %v2852 = vpop.f32.mrf.mxu0
    %v2853 = vadd.f32 0.0, %v2852
    %v2854 = vpop.f32.mrf.mxu0
    %v2855 = vpop.f32.mrf.mxu0
    %v2856 = vpop.f32.mrf.mxu0
    %2857 = vdwg.mxu0
    %v2859 = vsel %vm1385, %v1289, 0
    %v2862 = vsel %vm1385, %v1353, 0
    %2864 = vmatprep.subr.bf16.mxu0 0
    %2865 = vmatpush1.bf16.xpose.msra.mxu0 0
    %2866 = vmatprep.subr.bf16.mxu0 0
    %2867 = vmatpush1.bf16.xpose.msra.mxu0 0
    %2868 = vmatprep.subr.bf16.mxu0 0
    %2869 = vmatpush1.bf16.xpose.msra.mxu0 0
    %2870 = vmatprep.subr.bf16.mxu0 0
    %2871 = vmatpush1.bf16.xpose.msra.mxu0 0
    %2872 = vmatprep.subr.bf16.mxu0 0
    %2873 = vmatpush1.bf16.xpose.msra.mxu0 0
    %2874 = vmatprep.subr.bf16.mxu0 0
    %2875 = vmatpush1.bf16.xpose.msra.mxu0 0
    %2876 = vmatprep.subr.bf16.mxu0 0
    %2877 = vmatpush1.bf16.xpose.msra.mxu0 0
    %2878 = vmatprep.subr.bf16.mxu0 0
    %2879 = vmatpush1.bf16.xpose.msra.mxu0 %v2862
    %2880 = vmatprep.subr.bf16.mxu0 0
    %2881 = vmatpush2.bf16.xpose.msra.mxu0 0
    %2882 = vmatprep.subr.bf16.mxu0 0
    %2883 = vmatpush2.bf16.xpose.msra.mxu0 0
    %2884 = vmatprep.subr.bf16.mxu0 0
    %2885 = vmatpush2.bf16.xpose.msra.mxu0 0
    %2886 = vmatprep.subr.bf16.mxu0 0
    %2887 = vmatpush2.bf16.xpose.msra.mxu0 0
    %2888 = vmatprep.subr.bf16.mxu0 0
    %2889 = vmatpush2.bf16.xpose.msra.mxu0 0
    %2890 = vmatprep.subr.bf16.mxu0 0
    %2891 = vmatpush2.bf16.xpose.msra.mxu0 0
    %2892 = vmatprep.subr.bf16.mxu0 0
    %2893 = vmatpush2.bf16.xpose.msra.mxu0 0
    %2894 = vmatprep.subr.bf16.mxu0 0
    %2895 = vmatpush2.bf16.xpose.msra.mxu0 0
    %2896 = vmatprep.mubr.bf16.mxu0 0
    %2897 = vmatmul.mubr.bf16.gmra.mxu0 %v2859
    %v2898 = vpop.f32.mrf.mxu0
    %v2899 = vadd.f32 0.0, %v2898
    %v2900 = vpop.f32.mrf.mxu0
    %v2901 = vpop.f32.mrf.mxu0
    %v2902 = vpop.f32.mrf.mxu0
    %2903 = vdwg.mxu0
    %v2905 = vsel %vm1385, %v1290, 0
    %v2908 = vsel %vm1385, %v1354, 0
    %2910 = vmatprep.subr.bf16.mxu0 0
    %2911 = vmatpush1.bf16.xpose.msra.mxu0 0
    %2912 = vmatprep.subr.bf16.mxu0 0
    %2913 = vmatpush1.bf16.xpose.msra.mxu0 0
    %2914 = vmatprep.subr.bf16.mxu0 0
    %2915 = vmatpush1.bf16.xpose.msra.mxu0 0
    %2916 = vmatprep.subr.bf16.mxu0 0
    %2917 = vmatpush1.bf16.xpose.msra.mxu0 0
    %2918 = vmatprep.subr.bf16.mxu0 0
    %2919 = vmatpush1.bf16.xpose.msra.mxu0 0
    %2920 = vmatprep.subr.bf16.mxu0 0
    %2921 = vmatpush1.bf16.xpose.msra.mxu0 0
    %2922 = vmatprep.subr.bf16.mxu0 0
    %2923 = vmatpush1.bf16.xpose.msra.mxu0 0
    %2924 = vmatprep.subr.bf16.mxu0 0
    %2925 = vmatpush1.bf16.xpose.msra.mxu0 %v2908
    %2926 = vmatprep.subr.bf16.mxu0 0
    %2927 = vmatpush2.bf16.xpose.msra.mxu0 0
    %2928 = vmatprep.subr.bf16.mxu0 0
    %2929 = vmatpush2.bf16.xpose.msra.mxu0 0
    %2930 = vmatprep.subr.bf16.mxu0 0
    %2931 = vmatpush2.bf16.xpose.msra.mxu0 0
    %2932 = vmatprep.subr.bf16.mxu0 0
    %2933 = vmatpush2.bf16.xpose.msra.mxu0 0
    %2934 = vmatprep.subr.bf16.mxu0 0
    %2935 = vmatpush2.bf16.xpose.msra.mxu0 0
    %2936 = vmatprep.subr.bf16.mxu0 0
    %2937 = vmatpush2.bf16.xpose.msra.mxu0 0
    %2938 = vmatprep.subr.bf16.mxu0 0
    %2939 = vmatpush2.bf16.xpose.msra.mxu0 0
    %2940 = vmatprep.subr.bf16.mxu0 0
    %2941 = vmatpush2.bf16.xpose.msra.mxu0 0
    %2942 = vmatprep.mubr.bf16.mxu0 0
    %2943 = vmatmul.mubr.bf16.gmra.mxu0 %v2905
    %v2944 = vpop.f32.mrf.mxu0
    %v2945 = vadd.f32 0.0, %v2944
    %v2946 = vpop.f32.mrf.mxu0
    %v2947 = vpop.f32.mrf.mxu0
    %v2948 = vpop.f32.mrf.mxu0
    %2949 = vdwg.mxu0
    %v2951 = vsel %vm1385, %v1291, 0
    %v2954 = vsel %vm1385, %v1355, 0
    %2956 = vmatprep.subr.bf16.mxu0 0
    %2957 = vmatpush1.bf16.xpose.msra.mxu0 0
    %2958 = vmatprep.subr.bf16.mxu0 0
    %2959 = vmatpush1.bf16.xpose.msra.mxu0 0
    %2960 = vmatprep.subr.bf16.mxu0 0
    %2961 = vmatpush1.bf16.xpose.msra.mxu0 0
    %2962 = vmatprep.subr.bf16.mxu0 0
    %2963 = vmatpush1.bf16.xpose.msra.mxu0 0
    %2964 = vmatprep.subr.bf16.mxu0 0
    %2965 = vmatpush1.bf16.xpose.msra.mxu0 0
    %2966 = vmatprep.subr.bf16.mxu0 0
    %2967 = vmatpush1.bf16.xpose.msra.mxu0 0
    %2968 = vmatprep.subr.bf16.mxu0 0
    %2969 = vmatpush1.bf16.xpose.msra.mxu0 0
    %2970 = vmatprep.subr.bf16.mxu0 0
    %2971 = vmatpush1.bf16.xpose.msra.mxu0 %v2954
    %2972 = vmatprep.subr.bf16.mxu0 0
    %2973 = vmatpush2.bf16.xpose.msra.mxu0 0
    %2974 = vmatprep.subr.bf16.mxu0 0
    %2975 = vmatpush2.bf16.xpose.msra.mxu0 0
    %2976 = vmatprep.subr.bf16.mxu0 0
    %2977 = vmatpush2.bf16.xpose.msra.mxu0 0
    %2978 = vmatprep.subr.bf16.mxu0 0
    %2979 = vmatpush2.bf16.xpose.msra.mxu0 0
    %2980 = vmatprep.subr.bf16.mxu0 0
    %2981 = vmatpush2.bf16.xpose.msra.mxu0 0
    %2982 = vmatprep.subr.bf16.mxu0 0
    %2983 = vmatpush2.bf16.xpose.msra.mxu0 0
    %2984 = vmatprep.subr.bf16.mxu0 0
    %2985 = vmatpush2.bf16.xpose.msra.mxu0 0
    %2986 = vmatprep.subr.bf16.mxu0 0
    %2987 = vmatpush2.bf16.xpose.msra.mxu0 0
    %2988 = vmatprep.mubr.bf16.mxu0 0
    %2989 = vmatmul.mubr.bf16.gmra.mxu0 %v2951
    %v2990 = vpop.f32.mrf.mxu0
    %v2991 = vadd.f32 0.0, %v2990
    %v2992 = vpop.f32.mrf.mxu0
    %v2993 = vpop.f32.mrf.mxu0
    %v2994 = vpop.f32.mrf.mxu0
    %2995 = vdwg.mxu0
    %v2997 = vsel %vm1385, %v1292, 0
    %v3000 = vsel %vm1385, %v1356, 0
    %3002 = vmatprep.subr.bf16.mxu0 0
    %3003 = vmatpush1.bf16.xpose.msra.mxu0 0
    %3004 = vmatprep.subr.bf16.mxu0 0
    %3005 = vmatpush1.bf16.xpose.msra.mxu0 0
    %3006 = vmatprep.subr.bf16.mxu0 0
    %3007 = vmatpush1.bf16.xpose.msra.mxu0 0
    %3008 = vmatprep.subr.bf16.mxu0 0
    %3009 = vmatpush1.bf16.xpose.msra.mxu0 0
    %3010 = vmatprep.subr.bf16.mxu0 0
    %3011 = vmatpush1.bf16.xpose.msra.mxu0 0
    %3012 = vmatprep.subr.bf16.mxu0 0
    %3013 = vmatpush1.bf16.xpose.msra.mxu0 0
    %3014 = vmatprep.subr.bf16.mxu0 0
    %3015 = vmatpush1.bf16.xpose.msra.mxu0 0
    %3016 = vmatprep.subr.bf16.mxu0 0
    %3017 = vmatpush1.bf16.xpose.msra.mxu0 %v3000
    %3018 = vmatprep.subr.bf16.mxu0 0
    %3019 = vmatpush2.bf16.xpose.msra.mxu0 0
    %3020 = vmatprep.subr.bf16.mxu0 0
    %3021 = vmatpush2.bf16.xpose.msra.mxu0 0
    %3022 = vmatprep.subr.bf16.mxu0 0
    %3023 = vmatpush2.bf16.xpose.msra.mxu0 0
    %3024 = vmatprep.subr.bf16.mxu0 0
    %3025 = vmatpush2.bf16.xpose.msra.mxu0 0
    %3026 = vmatprep.subr.bf16.mxu0 0
    %3027 = vmatpush2.bf16.xpose.msra.mxu0 0
    %3028 = vmatprep.subr.bf16.mxu0 0
    %3029 = vmatpush2.bf16.xpose.msra.mxu0 0
    %3030 = vmatprep.subr.bf16.mxu0 0
    %3031 = vmatpush2.bf16.xpose.msra.mxu0 0
    %3032 = vmatprep.subr.bf16.mxu0 0
    %3033 = vmatpush2.bf16.xpose.msra.mxu0 0
    %3034 = vmatprep.mubr.bf16.mxu0 0
    %3035 = vmatmul.mubr.bf16.gmra.mxu0 %v2997
    %v3036 = vpop.f32.mrf.mxu0
    %v3037 = vadd.f32 0.0, %v3036
    %v3038 = vpop.f32.mrf.mxu0
    %v3039 = vpop.f32.mrf.mxu0
    %v3040 = vpop.f32.mrf.mxu0
    %3041 = vdwg.mxu0
    %v3043 = vsel %vm1385, %v1293, 0
    %v3046 = vsel %vm1385, %v1357, 0
    %3048 = vmatprep.subr.bf16.mxu0 0
    %3049 = vmatpush1.bf16.xpose.msra.mxu0 0
    %3050 = vmatprep.subr.bf16.mxu0 0
    %3051 = vmatpush1.bf16.xpose.msra.mxu0 0
    %3052 = vmatprep.subr.bf16.mxu0 0
    %3053 = vmatpush1.bf16.xpose.msra.mxu0 0
    %3054 = vmatprep.subr.bf16.mxu0 0
    %3055 = vmatpush1.bf16.xpose.msra.mxu0 0
    %3056 = vmatprep.subr.bf16.mxu0 0
    %3057 = vmatpush1.bf16.xpose.msra.mxu0 0
    %3058 = vmatprep.subr.bf16.mxu0 0
    %3059 = vmatpush1.bf16.xpose.msra.mxu0 0
    %3060 = vmatprep.subr.bf16.mxu0 0
    %3061 = vmatpush1.bf16.xpose.msra.mxu0 0
    %3062 = vmatprep.subr.bf16.mxu0 0
    %3063 = vmatpush1.bf16.xpose.msra.mxu0 %v3046
    %3064 = vmatprep.subr.bf16.mxu0 0
    %3065 = vmatpush2.bf16.xpose.msra.mxu0 0
    %3066 = vmatprep.subr.bf16.mxu0 0
    %3067 = vmatpush2.bf16.xpose.msra.mxu0 0
    %3068 = vmatprep.subr.bf16.mxu0 0
    %3069 = vmatpush2.bf16.xpose.msra.mxu0 0
    %3070 = vmatprep.subr.bf16.mxu0 0
    %3071 = vmatpush2.bf16.xpose.msra.mxu0 0
    %3072 = vmatprep.subr.bf16.mxu0 0
    %3073 = vmatpush2.bf16.xpose.msra.mxu0 0
    %3074 = vmatprep.subr.bf16.mxu0 0
    %3075 = vmatpush2.bf16.xpose.msra.mxu0 0
    %3076 = vmatprep.subr.bf16.mxu0 0
    %3077 = vmatpush2.bf16.xpose.msra.mxu0 0
    %3078 = vmatprep.subr.bf16.mxu0 0
    %3079 = vmatpush2.bf16.xpose.msra.mxu0 0
    %3080 = vmatprep.mubr.bf16.mxu0 0
    %3081 = vmatmul.mubr.bf16.gmra.mxu0 %v3043
    %v3082 = vpop.f32.mrf.mxu0
    %v3083 = vadd.f32 0.0, %v3082
    %v3084 = vpop.f32.mrf.mxu0
    %v3085 = vpop.f32.mrf.mxu0
    %v3086 = vpop.f32.mrf.mxu0
    %3087 = vdwg.mxu0
    %v3089 = vsel %vm1385, %v1294, 0
    %v3092 = vsel %vm1385, %v1358, 0
    %3094 = vmatprep.subr.bf16.mxu0 0
    %3095 = vmatpush1.bf16.xpose.msra.mxu0 0
    %3096 = vmatprep.subr.bf16.mxu0 0
    %3097 = vmatpush1.bf16.xpose.msra.mxu0 0
    %3098 = vmatprep.subr.bf16.mxu0 0
    %3099 = vmatpush1.bf16.xpose.msra.mxu0 0
    %3100 = vmatprep.subr.bf16.mxu0 0
    %3101 = vmatpush1.bf16.xpose.msra.mxu0 0
    %3102 = vmatprep.subr.bf16.mxu0 0
    %3103 = vmatpush1.bf16.xpose.msra.mxu0 0
    %3104 = vmatprep.subr.bf16.mxu0 0
    %3105 = vmatpush1.bf16.xpose.msra.mxu0 0
    %3106 = vmatprep.subr.bf16.mxu0 0
    %3107 = vmatpush1.bf16.xpose.msra.mxu0 0
    %3108 = vmatprep.subr.bf16.mxu0 0
    %3109 = vmatpush1.bf16.xpose.msra.mxu0 %v3092
    %3110 = vmatprep.subr.bf16.mxu0 0
    %3111 = vmatpush2.bf16.xpose.msra.mxu0 0
    %3112 = vmatprep.subr.bf16.mxu0 0
    %3113 = vmatpush2.bf16.xpose.msra.mxu0 0
    %3114 = vmatprep.subr.bf16.mxu0 0
    %3115 = vmatpush2.bf16.xpose.msra.mxu0 0
    %3116 = vmatprep.subr.bf16.mxu0 0
    %3117 = vmatpush2.bf16.xpose.msra.mxu0 0
    %3118 = vmatprep.subr.bf16.mxu0 0
    %3119 = vmatpush2.bf16.xpose.msra.mxu0 0
    %3120 = vmatprep.subr.bf16.mxu0 0
    %3121 = vmatpush2.bf16.xpose.msra.mxu0 0
    %3122 = vmatprep.subr.bf16.mxu0 0
    %3123 = vmatpush2.bf16.xpose.msra.mxu0 0
    %3124 = vmatprep.subr.bf16.mxu0 0
    %3125 = vmatpush2.bf16.xpose.msra.mxu0 0
    %3126 = vmatprep.mubr.bf16.mxu0 0
    %3127 = vmatmul.mubr.bf16.gmra.mxu0 %v3089
    %v3128 = vpop.f32.mrf.mxu0
    %v3129 = vadd.f32 0.0, %v3128
    %v3130 = vpop.f32.mrf.mxu0
    %v3131 = vpop.f32.mrf.mxu0
    %v3132 = vpop.f32.mrf.mxu0
    %3133 = vdwg.mxu0
    %v3135 = vsel %vm1385, %v1295, 0
    %v3138 = vsel %vm1385, %v1359, 0
    %3140 = vmatprep.subr.bf16.mxu0 0
    %3141 = vmatpush1.bf16.xpose.msra.mxu0 0
    %3142 = vmatprep.subr.bf16.mxu0 0
    %3143 = vmatpush1.bf16.xpose.msra.mxu0 0
    %3144 = vmatprep.subr.bf16.mxu0 0
    %3145 = vmatpush1.bf16.xpose.msra.mxu0 0
    %3146 = vmatprep.subr.bf16.mxu0 0
    %3147 = vmatpush1.bf16.xpose.msra.mxu0 0
    %3148 = vmatprep.subr.bf16.mxu0 0
    %3149 = vmatpush1.bf16.xpose.msra.mxu0 0
    %3150 = vmatprep.subr.bf16.mxu0 0
    %3151 = vmatpush1.bf16.xpose.msra.mxu0 0
    %3152 = vmatprep.subr.bf16.mxu0 0
    %3153 = vmatpush1.bf16.xpose.msra.mxu0 0
    %3154 = vmatprep.subr.bf16.mxu0 0
    %3155 = vmatpush1.bf16.xpose.msra.mxu0 %v3138
    %3156 = vmatprep.subr.bf16.mxu0 0
    %3157 = vmatpush2.bf16.xpose.msra.mxu0 0
    %3158 = vmatprep.subr.bf16.mxu0 0
    %3159 = vmatpush2.bf16.xpose.msra.mxu0 0
    %3160 = vmatprep.subr.bf16.mxu0 0
    %3161 = vmatpush2.bf16.xpose.msra.mxu0 0
    %3162 = vmatprep.subr.bf16.mxu0 0
    %3163 = vmatpush2.bf16.xpose.msra.mxu0 0
    %3164 = vmatprep.subr.bf16.mxu0 0
    %3165 = vmatpush2.bf16.xpose.msra.mxu0 0
    %3166 = vmatprep.subr.bf16.mxu0 0
    %3167 = vmatpush2.bf16.xpose.msra.mxu0 0
    %3168 = vmatprep.subr.bf16.mxu0 0
    %3169 = vmatpush2.bf16.xpose.msra.mxu0 0
    %3170 = vmatprep.subr.bf16.mxu0 0
    %3171 = vmatpush2.bf16.xpose.msra.mxu0 0
    %3172 = vmatprep.mubr.bf16.mxu0 0
    %3173 = vmatmul.mubr.bf16.gmra.mxu0 %v3135
    %v3174 = vpop.f32.mrf.mxu0
    %v3175 = vadd.f32 0.0, %v3174
    %v3176 = vpop.f32.mrf.mxu0
    %v3177 = vpop.f32.mrf.mxu0
    %v3178 = vpop.f32.mrf.mxu0
    %3179 = vdwg.mxu0
    %v3181 = vsel %vm1385, %v1296, 0
    %v3184 = vsel %vm1385, %v1360, 0
    %3186 = vmatprep.subr.bf16.mxu0 0
    %3187 = vmatpush1.bf16.xpose.msra.mxu0 0
    %3188 = vmatprep.subr.bf16.mxu0 0
    %3189 = vmatpush1.bf16.xpose.msra.mxu0 0
    %3190 = vmatprep.subr.bf16.mxu0 0
    %3191 = vmatpush1.bf16.xpose.msra.mxu0 0
    %3192 = vmatprep.subr.bf16.mxu0 0
    %3193 = vmatpush1.bf16.xpose.msra.mxu0 0
    %3194 = vmatprep.subr.bf16.mxu0 0
    %3195 = vmatpush1.bf16.xpose.msra.mxu0 0
    %3196 = vmatprep.subr.bf16.mxu0 0
    %3197 = vmatpush1.bf16.xpose.msra.mxu0 0
    %3198 = vmatprep.subr.bf16.mxu0 0
    %3199 = vmatpush1.bf16.xpose.msra.mxu0 0
    %3200 = vmatprep.subr.bf16.mxu0 0
    %3201 = vmatpush1.bf16.xpose.msra.mxu0 %v3184
    %3202 = vmatprep.subr.bf16.mxu0 0
    %3203 = vmatpush2.bf16.xpose.msra.mxu0 0
    %3204 = vmatprep.subr.bf16.mxu0 0
    %3205 = vmatpush2.bf16.xpose.msra.mxu0 0
    %3206 = vmatprep.subr.bf16.mxu0 0
    %3207 = vmatpush2.bf16.xpose.msra.mxu0 0
    %3208 = vmatprep.subr.bf16.mxu0 0
    %3209 = vmatpush2.bf16.xpose.msra.mxu0 0
    %3210 = vmatprep.subr.bf16.mxu0 0
    %3211 = vmatpush2.bf16.xpose.msra.mxu0 0
    %3212 = vmatprep.subr.bf16.mxu0 0
    %3213 = vmatpush2.bf16.xpose.msra.mxu0 0
    %3214 = vmatprep.subr.bf16.mxu0 0
    %3215 = vmatpush2.bf16.xpose.msra.mxu0 0
    %3216 = vmatprep.subr.bf16.mxu0 0
    %3217 = vmatpush2.bf16.xpose.msra.mxu0 0
    %3218 = vmatprep.mubr.bf16.mxu0 0
    %3219 = vmatmul.mubr.bf16.gmra.mxu0 %v3181
    %v3220 = vpop.f32.mrf.mxu0
    %v3221 = vadd.f32 0.0, %v3220
    %v3222 = vpop.f32.mrf.mxu0
    %v3223 = vpop.f32.mrf.mxu0
    %v3224 = vpop.f32.mrf.mxu0
    %3225 = vdwg.mxu0
    %v3227 = vsel %vm1385, %v1297, 0
    %v3230 = vsel %vm1385, %v1361, 0
    %3232 = vmatprep.subr.bf16.mxu0 0
    %3233 = vmatpush1.bf16.xpose.msra.mxu0 0
    %3234 = vmatprep.subr.bf16.mxu0 0
    %3235 = vmatpush1.bf16.xpose.msra.mxu0 0
    %3236 = vmatprep.subr.bf16.mxu0 0
    %3237 = vmatpush1.bf16.xpose.msra.mxu0 0
    %3238 = vmatprep.subr.bf16.mxu0 0
    %3239 = vmatpush1.bf16.xpose.msra.mxu0 0
    %3240 = vmatprep.subr.bf16.mxu0 0
    %3241 = vmatpush1.bf16.xpose.msra.mxu0 0
    %3242 = vmatprep.subr.bf16.mxu0 0
    %3243 = vmatpush1.bf16.xpose.msra.mxu0 0
    %3244 = vmatprep.subr.bf16.mxu0 0
    %3245 = vmatpush1.bf16.xpose.msra.mxu0 0
    %3246 = vmatprep.subr.bf16.mxu0 0
    %3247 = vmatpush1.bf16.xpose.msra.mxu0 %v3230
    %3248 = vmatprep.subr.bf16.mxu0 0
    %3249 = vmatpush2.bf16.xpose.msra.mxu0 0
    %3250 = vmatprep.subr.bf16.mxu0 0
    %3251 = vmatpush2.bf16.xpose.msra.mxu0 0
    %3252 = vmatprep.subr.bf16.mxu0 0
    %3253 = vmatpush2.bf16.xpose.msra.mxu0 0
    %3254 = vmatprep.subr.bf16.mxu0 0
    %3255 = vmatpush2.bf16.xpose.msra.mxu0 0
    %3256 = vmatprep.subr.bf16.mxu0 0
    %3257 = vmatpush2.bf16.xpose.msra.mxu0 0
    %3258 = vmatprep.subr.bf16.mxu0 0
    %3259 = vmatpush2.bf16.xpose.msra.mxu0 0
    %3260 = vmatprep.subr.bf16.mxu0 0
    %3261 = vmatpush2.bf16.xpose.msra.mxu0 0
    %3262 = vmatprep.subr.bf16.mxu0 0
    %3263 = vmatpush2.bf16.xpose.msra.mxu0 0
    %3264 = vmatprep.mubr.bf16.mxu0 0
    %3265 = vmatmul.mubr.bf16.gmra.mxu0 %v3227
    %v3266 = vpop.f32.mrf.mxu0
    %v3267 = vadd.f32 0.0, %v3266
    %v3268 = vpop.f32.mrf.mxu0
    %v3269 = vpop.f32.mrf.mxu0
    %v3270 = vpop.f32.mrf.mxu0
    %3271 = vdwg.mxu0
    %v3273 = vsel %vm1385, %v1298, 0
    %v3276 = vsel %vm1385, %v1362, 0
    %3278 = vmatprep.subr.bf16.mxu0 0
    %3279 = vmatpush1.bf16.xpose.msra.mxu0 0
    %3280 = vmatprep.subr.bf16.mxu0 0
    %3281 = vmatpush1.bf16.xpose.msra.mxu0 0
    %3282 = vmatprep.subr.bf16.mxu0 0
    %3283 = vmatpush1.bf16.xpose.msra.mxu0 0
    %3284 = vmatprep.subr.bf16.mxu0 0
    %3285 = vmatpush1.bf16.xpose.msra.mxu0 0
    %3286 = vmatprep.subr.bf16.mxu0 0
    %3287 = vmatpush1.bf16.xpose.msra.mxu0 0
    %3288 = vmatprep.subr.bf16.mxu0 0
    %3289 = vmatpush1.bf16.xpose.msra.mxu0 0
    %3290 = vmatprep.subr.bf16.mxu0 0
    %3291 = vmatpush1.bf16.xpose.msra.mxu0 0
    %3292 = vmatprep.subr.bf16.mxu0 0
    %3293 = vmatpush1.bf16.xpose.msra.mxu0 %v3276
    %3294 = vmatprep.subr.bf16.mxu0 0
    %3295 = vmatpush2.bf16.xpose.msra.mxu0 0
    %3296 = vmatprep.subr.bf16.mxu0 0
    %3297 = vmatpush2.bf16.xpose.msra.mxu0 0
    %3298 = vmatprep.subr.bf16.mxu0 0
    %3299 = vmatpush2.bf16.xpose.msra.mxu0 0
    %3300 = vmatprep.subr.bf16.mxu0 0
    %3301 = vmatpush2.bf16.xpose.msra.mxu0 0
    %3302 = vmatprep.subr.bf16.mxu0 0
    %3303 = vmatpush2.bf16.xpose.msra.mxu0 0
    %3304 = vmatprep.subr.bf16.mxu0 0
    %3305 = vmatpush2.bf16.xpose.msra.mxu0 0
    %3306 = vmatprep.subr.bf16.mxu0 0
    %3307 = vmatpush2.bf16.xpose.msra.mxu0 0
    %3308 = vmatprep.subr.bf16.mxu0 0
    %3309 = vmatpush2.bf16.xpose.msra.mxu0 0
    %3310 = vmatprep.mubr.bf16.mxu0 0
    %3311 = vmatmul.mubr.bf16.gmra.mxu0 %v3273
    %v3312 = vpop.f32.mrf.mxu0
    %v3313 = vadd.f32 0.0, %v3312
    %v3314 = vpop.f32.mrf.mxu0
    %v3315 = vpop.f32.mrf.mxu0
    %v3316 = vpop.f32.mrf.mxu0
    %3317 = vdwg.mxu0
    %v3319 = vsel %vm1385, %v1299, 0
    %v3322 = vsel %vm1385, %v1363, 0
    %3324 = vmatprep.subr.bf16.mxu0 0
    %3325 = vmatpush1.bf16.xpose.msra.mxu0 0
    %3326 = vmatprep.subr.bf16.mxu0 0
    %3327 = vmatpush1.bf16.xpose.msra.mxu0 0
    %3328 = vmatprep.subr.bf16.mxu0 0
    %3329 = vmatpush1.bf16.xpose.msra.mxu0 0
    %3330 = vmatprep.subr.bf16.mxu0 0
    %3331 = vmatpush1.bf16.xpose.msra.mxu0 0
    %3332 = vmatprep.subr.bf16.mxu0 0
    %3333 = vmatpush1.bf16.xpose.msra.mxu0 0
    %3334 = vmatprep.subr.bf16.mxu0 0
    %3335 = vmatpush1.bf16.xpose.msra.mxu0 0
    %3336 = vmatprep.subr.bf16.mxu0 0
    %3337 = vmatpush1.bf16.xpose.msra.mxu0 0
    %3338 = vmatprep.subr.bf16.mxu0 0
    %3339 = vmatpush1.bf16.xpose.msra.mxu0 %v3322
    %3340 = vmatprep.subr.bf16.mxu0 0
    %3341 = vmatpush2.bf16.xpose.msra.mxu0 0
    %3342 = vmatprep.subr.bf16.mxu0 0
    %3343 = vmatpush2.bf16.xpose.msra.mxu0 0
    %3344 = vmatprep.subr.bf16.mxu0 0
    %3345 = vmatpush2.bf16.xpose.msra.mxu0 0
    %3346 = vmatprep.subr.bf16.mxu0 0
    %3347 = vmatpush2.bf16.xpose.msra.mxu0 0
    %3348 = vmatprep.subr.bf16.mxu0 0
    %3349 = vmatpush2.bf16.xpose.msra.mxu0 0
    %3350 = vmatprep.subr.bf16.mxu0 0
    %3351 = vmatpush2.bf16.xpose.msra.mxu0 0
    %3352 = vmatprep.subr.bf16.mxu0 0
    %3353 = vmatpush2.bf16.xpose.msra.mxu0 0
    %3354 = vmatprep.subr.bf16.mxu0 0
    %3355 = vmatpush2.bf16.xpose.msra.mxu0 0
    %3356 = vmatprep.mubr.bf16.mxu0 0
    %3357 = vmatmul.mubr.bf16.gmra.mxu0 %v3319
    %v3358 = vpop.f32.mrf.mxu0
    %v3359 = vadd.f32 0.0, %v3358
    %v3360 = vpop.f32.mrf.mxu0
    %v3361 = vpop.f32.mrf.mxu0
    %v3362 = vpop.f32.mrf.mxu0
    %3363 = vdwg.mxu0
    %v3365 = vsel %vm1385, %v1300, 0
    %v3368 = vsel %vm1385, %v1364, 0
    %3370 = vmatprep.subr.bf16.mxu0 0
    %3371 = vmatpush1.bf16.xpose.msra.mxu0 0
    %3372 = vmatprep.subr.bf16.mxu0 0
    %3373 = vmatpush1.bf16.xpose.msra.mxu0 0
    %3374 = vmatprep.subr.bf16.mxu0 0
    %3375 = vmatpush1.bf16.xpose.msra.mxu0 0
    %3376 = vmatprep.subr.bf16.mxu0 0
    %3377 = vmatpush1.bf16.xpose.msra.mxu0 0
    %3378 = vmatprep.subr.bf16.mxu0 0
    %3379 = vmatpush1.bf16.xpose.msra.mxu0 0
    %3380 = vmatprep.subr.bf16.mxu0 0
    %3381 = vmatpush1.bf16.xpose.msra.mxu0 0
    %3382 = vmatprep.subr.bf16.mxu0 0
    %3383 = vmatpush1.bf16.xpose.msra.mxu0 0
    %3384 = vmatprep.subr.bf16.mxu0 0
    %3385 = vmatpush1.bf16.xpose.msra.mxu0 %v3368
    %3386 = vmatprep.subr.bf16.mxu0 0
    %3387 = vmatpush2.bf16.xpose.msra.mxu0 0
    %3388 = vmatprep.subr.bf16.mxu0 0
    %3389 = vmatpush2.bf16.xpose.msra.mxu0 0
    %3390 = vmatprep.subr.bf16.mxu0 0
    %3391 = vmatpush2.bf16.xpose.msra.mxu0 0
    %3392 = vmatprep.subr.bf16.mxu0 0
    %3393 = vmatpush2.bf16.xpose.msra.mxu0 0
    %3394 = vmatprep.subr.bf16.mxu0 0
    %3395 = vmatpush2.bf16.xpose.msra.mxu0 0
    %3396 = vmatprep.subr.bf16.mxu0 0
    %3397 = vmatpush2.bf16.xpose.msra.mxu0 0
    %3398 = vmatprep.subr.bf16.mxu0 0
    %3399 = vmatpush2.bf16.xpose.msra.mxu0 0
    %3400 = vmatprep.subr.bf16.mxu0 0
    %3401 = vmatpush2.bf16.xpose.msra.mxu0 0
    %3402 = vmatprep.mubr.bf16.mxu0 0
    %3403 = vmatmul.mubr.bf16.gmra.mxu0 %v3365
    %v3404 = vpop.f32.mrf.mxu0
    %v3405 = vadd.f32 0.0, %v3404
    %v3406 = vpop.f32.mrf.mxu0
    %v3407 = vpop.f32.mrf.mxu0
    %v3408 = vpop.f32.mrf.mxu0
    %3409 = vdwg.mxu0
    %v3411 = vsel %vm1385, %v1301, 0
    %v3414 = vsel %vm1385, %v1365, 0
    %3416 = vmatprep.subr.bf16.mxu0 0
    %3417 = vmatpush1.bf16.xpose.msra.mxu0 0
    %3418 = vmatprep.subr.bf16.mxu0 0
    %3419 = vmatpush1.bf16.xpose.msra.mxu0 0
    %3420 = vmatprep.subr.bf16.mxu0 0
    %3421 = vmatpush1.bf16.xpose.msra.mxu0 0
    %3422 = vmatprep.subr.bf16.mxu0 0
    %3423 = vmatpush1.bf16.xpose.msra.mxu0 0
    %3424 = vmatprep.subr.bf16.mxu0 0
    %3425 = vmatpush1.bf16.xpose.msra.mxu0 0
    %3426 = vmatprep.subr.bf16.mxu0 0
    %3427 = vmatpush1.bf16.xpose.msra.mxu0 0
    %3428 = vmatprep.subr.bf16.mxu0 0
    %3429 = vmatpush1.bf16.xpose.msra.mxu0 0
    %3430 = vmatprep.subr.bf16.mxu0 0
    %3431 = vmatpush1.bf16.xpose.msra.mxu0 %v3414
    %3432 = vmatprep.subr.bf16.mxu0 0
    %3433 = vmatpush2.bf16.xpose.msra.mxu0 0
    %3434 = vmatprep.subr.bf16.mxu0 0
    %3435 = vmatpush2.bf16.xpose.msra.mxu0 0
    %3436 = vmatprep.subr.bf16.mxu0 0
    %3437 = vmatpush2.bf16.xpose.msra.mxu0 0
    %3438 = vmatprep.subr.bf16.mxu0 0
    %3439 = vmatpush2.bf16.xpose.msra.mxu0 0
    %3440 = vmatprep.subr.bf16.mxu0 0
    %3441 = vmatpush2.bf16.xpose.msra.mxu0 0
    %3442 = vmatprep.subr.bf16.mxu0 0
    %3443 = vmatpush2.bf16.xpose.msra.mxu0 0
    %3444 = vmatprep.subr.bf16.mxu0 0
    %3445 = vmatpush2.bf16.xpose.msra.mxu0 0
    %3446 = vmatprep.subr.bf16.mxu0 0
    %3447 = vmatpush2.bf16.xpose.msra.mxu0 0
    %3448 = vmatprep.mubr.bf16.mxu0 0
    %3449 = vmatmul.mubr.bf16.gmra.mxu0 %v3411
    %v3450 = vpop.f32.mrf.mxu0
    %v3451 = vadd.f32 0.0, %v3450
    %v3452 = vpop.f32.mrf.mxu0
    %v3453 = vpop.f32.mrf.mxu0
    %v3454 = vpop.f32.mrf.mxu0
    %3455 = vdwg.mxu0
    %v3457 = vsel %vm1385, %v1302, 0
    %v3460 = vsel %vm1385, %v1366, 0
    %3462 = vmatprep.subr.bf16.mxu0 0
    %3463 = vmatpush1.bf16.xpose.msra.mxu0 0
    %3464 = vmatprep.subr.bf16.mxu0 0
    %3465 = vmatpush1.bf16.xpose.msra.mxu0 0
    %3466 = vmatprep.subr.bf16.mxu0 0
    %3467 = vmatpush1.bf16.xpose.msra.mxu0 0
    %3468 = vmatprep.subr.bf16.mxu0 0
    %3469 = vmatpush1.bf16.xpose.msra.mxu0 0
    %3470 = vmatprep.subr.bf16.mxu0 0
    %3471 = vmatpush1.bf16.xpose.msra.mxu0 0
    %3472 = vmatprep.subr.bf16.mxu0 0
    %3473 = vmatpush1.bf16.xpose.msra.mxu0 0
    %3474 = vmatprep.subr.bf16.mxu0 0
    %3475 = vmatpush1.bf16.xpose.msra.mxu0 0
    %3476 = vmatprep.subr.bf16.mxu0 0
    %3477 = vmatpush1.bf16.xpose.msra.mxu0 %v3460
    %3478 = vmatprep.subr.bf16.mxu0 0
    %3479 = vmatpush2.bf16.xpose.msra.mxu0 0
    %3480 = vmatprep.subr.bf16.mxu0 0
    %3481 = vmatpush2.bf16.xpose.msra.mxu0 0
    %3482 = vmatprep.subr.bf16.mxu0 0
    %3483 = vmatpush2.bf16.xpose.msra.mxu0 0
    %3484 = vmatprep.subr.bf16.mxu0 0
    %3485 = vmatpush2.bf16.xpose.msra.mxu0 0
    %3486 = vmatprep.subr.bf16.mxu0 0
    %3487 = vmatpush2.bf16.xpose.msra.mxu0 0
    %3488 = vmatprep.subr.bf16.mxu0 0
    %3489 = vmatpush2.bf16.xpose.msra.mxu0 0
    %3490 = vmatprep.subr.bf16.mxu0 0
    %3491 = vmatpush2.bf16.xpose.msra.mxu0 0
    %3492 = vmatprep.subr.bf16.mxu0 0
    %3493 = vmatpush2.bf16.xpose.msra.mxu0 0
    %3494 = vmatprep.mubr.bf16.mxu0 0
    %3495 = vmatmul.mubr.bf16.gmra.mxu0 %v3457
    %v3496 = vpop.f32.mrf.mxu0
    %v3497 = vadd.f32 0.0, %v3496
    %v3498 = vpop.f32.mrf.mxu0
    %v3499 = vpop.f32.mrf.mxu0
    %v3500 = vpop.f32.mrf.mxu0
    %3501 = vdwg.mxu0
    %v3503 = vsel %vm1385, %v1303, 0
    %v3506 = vsel %vm1385, %v1367, 0
    %3508 = vmatprep.subr.bf16.mxu0 0
    %3509 = vmatpush1.bf16.xpose.msra.mxu0 0
    %3510 = vmatprep.subr.bf16.mxu0 0
    %3511 = vmatpush1.bf16.xpose.msra.mxu0 0
    %3512 = vmatprep.subr.bf16.mxu0 0
    %3513 = vmatpush1.bf16.xpose.msra.mxu0 0
    %3514 = vmatprep.subr.bf16.mxu0 0
    %3515 = vmatpush1.bf16.xpose.msra.mxu0 0
    %3516 = vmatprep.subr.bf16.mxu0 0
    %3517 = vmatpush1.bf16.xpose.msra.mxu0 0
    %3518 = vmatprep.subr.bf16.mxu0 0
    %3519 = vmatpush1.bf16.xpose.msra.mxu0 0
    %3520 = vmatprep.subr.bf16.mxu0 0
    %3521 = vmatpush1.bf16.xpose.msra.mxu0 0
    %3522 = vmatprep.subr.bf16.mxu0 0
    %3523 = vmatpush1.bf16.xpose.msra.mxu0 %v3506
    %3524 = vmatprep.subr.bf16.mxu0 0
    %3525 = vmatpush2.bf16.xpose.msra.mxu0 0
    %3526 = vmatprep.subr.bf16.mxu0 0
    %3527 = vmatpush2.bf16.xpose.msra.mxu0 0
    %3528 = vmatprep.subr.bf16.mxu0 0
    %3529 = vmatpush2.bf16.xpose.msra.mxu0 0
    %3530 = vmatprep.subr.bf16.mxu0 0
    %3531 = vmatpush2.bf16.xpose.msra.mxu0 0
    %3532 = vmatprep.subr.bf16.mxu0 0
    %3533 = vmatpush2.bf16.xpose.msra.mxu0 0
    %3534 = vmatprep.subr.bf16.mxu0 0
    %3535 = vmatpush2.bf16.xpose.msra.mxu0 0
    %3536 = vmatprep.subr.bf16.mxu0 0
    %3537 = vmatpush2.bf16.xpose.msra.mxu0 0
    %3538 = vmatprep.subr.bf16.mxu0 0
    %3539 = vmatpush2.bf16.xpose.msra.mxu0 0
    %3540 = vmatprep.mubr.bf16.mxu0 0
    %3541 = vmatmul.mubr.bf16.gmra.mxu0 %v3503
    %v3542 = vpop.f32.mrf.mxu0
    %v3543 = vadd.f32 0.0, %v3542
    %v3544 = vpop.f32.mrf.mxu0
    %v3545 = vpop.f32.mrf.mxu0
    %v3546 = vpop.f32.mrf.mxu0
    %3547 = vdwg.mxu0
    %v3549 = vsel %vm1385, %v1304, 0
    %v3552 = vsel %vm1385, %v1368, 0
    %3554 = vmatprep.subr.bf16.mxu0 0
    %3555 = vmatpush1.bf16.xpose.msra.mxu0 0
    %3556 = vmatprep.subr.bf16.mxu0 0
    %3557 = vmatpush1.bf16.xpose.msra.mxu0 0
    %3558 = vmatprep.subr.bf16.mxu0 0
    %3559 = vmatpush1.bf16.xpose.msra.mxu0 0
    %3560 = vmatprep.subr.bf16.mxu0 0
    %3561 = vmatpush1.bf16.xpose.msra.mxu0 0
    %3562 = vmatprep.subr.bf16.mxu0 0
    %3563 = vmatpush1.bf16.xpose.msra.mxu0 0
    %3564 = vmatprep.subr.bf16.mxu0 0
    %3565 = vmatpush1.bf16.xpose.msra.mxu0 0
    %3566 = vmatprep.subr.bf16.mxu0 0
    %3567 = vmatpush1.bf16.xpose.msra.mxu0 0
    %3568 = vmatprep.subr.bf16.mxu0 0
    %3569 = vmatpush1.bf16.xpose.msra.mxu0 %v3552
    %3570 = vmatprep.subr.bf16.mxu0 0
    %3571 = vmatpush2.bf16.xpose.msra.mxu0 0
    %3572 = vmatprep.subr.bf16.mxu0 0
    %3573 = vmatpush2.bf16.xpose.msra.mxu0 0
    %3574 = vmatprep.subr.bf16.mxu0 0
    %3575 = vmatpush2.bf16.xpose.msra.mxu0 0
    %3576 = vmatprep.subr.bf16.mxu0 0
    %3577 = vmatpush2.bf16.xpose.msra.mxu0 0
    %3578 = vmatprep.subr.bf16.mxu0 0
    %3579 = vmatpush2.bf16.xpose.msra.mxu0 0
    %3580 = vmatprep.subr.bf16.mxu0 0
    %3581 = vmatpush2.bf16.xpose.msra.mxu0 0
    %3582 = vmatprep.subr.bf16.mxu0 0
    %3583 = vmatpush2.bf16.xpose.msra.mxu0 0
    %3584 = vmatprep.subr.bf16.mxu0 0
    %3585 = vmatpush2.bf16.xpose.msra.mxu0 0
    %3586 = vmatprep.mubr.bf16.mxu0 0
    %3587 = vmatmul.mubr.bf16.gmra.mxu0 %v3549
    %v3588 = vpop.f32.mrf.mxu0
    %v3589 = vadd.f32 0.0, %v3588
    %v3590 = vpop.f32.mrf.mxu0
    %v3591 = vpop.f32.mrf.mxu0
    %v3592 = vpop.f32.mrf.mxu0
    %3593 = vdwg.mxu0
    %v3595 = vsel %vm1385, %v1305, 0
    %v3598 = vsel %vm1385, %v1369, 0
    %3600 = vmatprep.subr.bf16.mxu0 0
    %3601 = vmatpush1.bf16.xpose.msra.mxu0 0
    %3602 = vmatprep.subr.bf16.mxu0 0
    %3603 = vmatpush1.bf16.xpose.msra.mxu0 0
    %3604 = vmatprep.subr.bf16.mxu0 0
    %3605 = vmatpush1.bf16.xpose.msra.mxu0 0
    %3606 = vmatprep.subr.bf16.mxu0 0
    %3607 = vmatpush1.bf16.xpose.msra.mxu0 0
    %3608 = vmatprep.subr.bf16.mxu0 0
    %3609 = vmatpush1.bf16.xpose.msra.mxu0 0
    %3610 = vmatprep.subr.bf16.mxu0 0
    %3611 = vmatpush1.bf16.xpose.msra.mxu0 0
    %3612 = vmatprep.subr.bf16.mxu0 0
    %3613 = vmatpush1.bf16.xpose.msra.mxu0 0
    %3614 = vmatprep.subr.bf16.mxu0 0
    %3615 = vmatpush1.bf16.xpose.msra.mxu0 %v3598
    %3616 = vmatprep.subr.bf16.mxu0 0
    %3617 = vmatpush2.bf16.xpose.msra.mxu0 0
    %3618 = vmatprep.subr.bf16.mxu0 0
    %3619 = vmatpush2.bf16.xpose.msra.mxu0 0
    %3620 = vmatprep.subr.bf16.mxu0 0
    %3621 = vmatpush2.bf16.xpose.msra.mxu0 0
    %3622 = vmatprep.subr.bf16.mxu0 0
    %3623 = vmatpush2.bf16.xpose.msra.mxu0 0
    %3624 = vmatprep.subr.bf16.mxu0 0
    %3625 = vmatpush2.bf16.xpose.msra.mxu0 0
    %3626 = vmatprep.subr.bf16.mxu0 0
    %3627 = vmatpush2.bf16.xpose.msra.mxu0 0
    %3628 = vmatprep.subr.bf16.mxu0 0
    %3629 = vmatpush2.bf16.xpose.msra.mxu0 0
    %3630 = vmatprep.subr.bf16.mxu0 0
    %3631 = vmatpush2.bf16.xpose.msra.mxu0 0
    %3632 = vmatprep.mubr.bf16.mxu0 0
    %3633 = vmatmul.mubr.bf16.gmra.mxu0 %v3595
    %v3634 = vpop.f32.mrf.mxu0
    %v3635 = vadd.f32 0.0, %v3634
    %v3636 = vpop.f32.mrf.mxu0
    %v3637 = vpop.f32.mrf.mxu0
    %v3638 = vpop.f32.mrf.mxu0
    %3639 = vdwg.mxu0
    %v3641 = vsel %vm1385, %v1306, 0
    %v3644 = vsel %vm1385, %v1370, 0
    %3646 = vmatprep.subr.bf16.mxu0 0
    %3647 = vmatpush1.bf16.xpose.msra.mxu0 0
    %3648 = vmatprep.subr.bf16.mxu0 0
    %3649 = vmatpush1.bf16.xpose.msra.mxu0 0
    %3650 = vmatprep.subr.bf16.mxu0 0
    %3651 = vmatpush1.bf16.xpose.msra.mxu0 0
    %3652 = vmatprep.subr.bf16.mxu0 0
    %3653 = vmatpush1.bf16.xpose.msra.mxu0 0
    %3654 = vmatprep.subr.bf16.mxu0 0
    %3655 = vmatpush1.bf16.xpose.msra.mxu0 0
    %3656 = vmatprep.subr.bf16.mxu0 0
    %3657 = vmatpush1.bf16.xpose.msra.mxu0 0
    %3658 = vmatprep.subr.bf16.mxu0 0
    %3659 = vmatpush1.bf16.xpose.msra.mxu0 0
    %3660 = vmatprep.subr.bf16.mxu0 0
    %3661 = vmatpush1.bf16.xpose.msra.mxu0 %v3644
    %3662 = vmatprep.subr.bf16.mxu0 0
    %3663 = vmatpush2.bf16.xpose.msra.mxu0 0
    %3664 = vmatprep.subr.bf16.mxu0 0
    %3665 = vmatpush2.bf16.xpose.msra.mxu0 0
    %3666 = vmatprep.subr.bf16.mxu0 0
    %3667 = vmatpush2.bf16.xpose.msra.mxu0 0
    %3668 = vmatprep.subr.bf16.mxu0 0
    %3669 = vmatpush2.bf16.xpose.msra.mxu0 0
    %3670 = vmatprep.subr.bf16.mxu0 0
    %3671 = vmatpush2.bf16.xpose.msra.mxu0 0
    %3672 = vmatprep.subr.bf16.mxu0 0
    %3673 = vmatpush2.bf16.xpose.msra.mxu0 0
    %3674 = vmatprep.subr.bf16.mxu0 0
    %3675 = vmatpush2.bf16.xpose.msra.mxu0 0
    %3676 = vmatprep.subr.bf16.mxu0 0
    %3677 = vmatpush2.bf16.xpose.msra.mxu0 0
    %3678 = vmatprep.mubr.bf16.mxu0 0
    %3679 = vmatmul.mubr.bf16.gmra.mxu0 %v3641
    %v3680 = vpop.f32.mrf.mxu0
    %v3681 = vadd.f32 0.0, %v3680
    %v3682 = vpop.f32.mrf.mxu0
    %v3683 = vpop.f32.mrf.mxu0
    %v3684 = vpop.f32.mrf.mxu0
    %3685 = vdwg.mxu0
    %v3687 = vsel %vm1385, %v1307, 0
    %v3690 = vsel %vm1385, %v1371, 0
    %3692 = vmatprep.subr.bf16.mxu0 0
    %3693 = vmatpush1.bf16.xpose.msra.mxu0 0
    %3694 = vmatprep.subr.bf16.mxu0 0
    %3695 = vmatpush1.bf16.xpose.msra.mxu0 0
    %3696 = vmatprep.subr.bf16.mxu0 0
    %3697 = vmatpush1.bf16.xpose.msra.mxu0 0
    %3698 = vmatprep.subr.bf16.mxu0 0
    %3699 = vmatpush1.bf16.xpose.msra.mxu0 0
    %3700 = vmatprep.subr.bf16.mxu0 0
    %3701 = vmatpush1.bf16.xpose.msra.mxu0 0
    %3702 = vmatprep.subr.bf16.mxu0 0
    %3703 = vmatpush1.bf16.xpose.msra.mxu0 0
    %3704 = vmatprep.subr.bf16.mxu0 0
    %3705 = vmatpush1.bf16.xpose.msra.mxu0 0
    %3706 = vmatprep.subr.bf16.mxu0 0
    %3707 = vmatpush1.bf16.xpose.msra.mxu0 %v3690
    %3708 = vmatprep.subr.bf16.mxu0 0
    %3709 = vmatpush2.bf16.xpose.msra.mxu0 0
    %3710 = vmatprep.subr.bf16.mxu0 0
    %3711 = vmatpush2.bf16.xpose.msra.mxu0 0
    %3712 = vmatprep.subr.bf16.mxu0 0
    %3713 = vmatpush2.bf16.xpose.msra.mxu0 0
    %3714 = vmatprep.subr.bf16.mxu0 0
    %3715 = vmatpush2.bf16.xpose.msra.mxu0 0
    %3716 = vmatprep.subr.bf16.mxu0 0
    %3717 = vmatpush2.bf16.xpose.msra.mxu0 0
    %3718 = vmatprep.subr.bf16.mxu0 0
    %3719 = vmatpush2.bf16.xpose.msra.mxu0 0
    %3720 = vmatprep.subr.bf16.mxu0 0
    %3721 = vmatpush2.bf16.xpose.msra.mxu0 0
    %3722 = vmatprep.subr.bf16.mxu0 0
    %3723 = vmatpush2.bf16.xpose.msra.mxu0 0
    %3724 = vmatprep.mubr.bf16.mxu0 0
    %3725 = vmatmul.mubr.bf16.gmra.mxu0 %v3687
    %v3726 = vpop.f32.mrf.mxu0
    %v3727 = vadd.f32 0.0, %v3726
    %v3728 = vpop.f32.mrf.mxu0
    %v3729 = vpop.f32.mrf.mxu0
    %v3730 = vpop.f32.mrf.mxu0
    %3731 = vdwg.mxu0
    %v3733 = vsel %vm1385, %v1308, 0
    %v3736 = vsel %vm1385, %v1372, 0
    %3738 = vmatprep.subr.bf16.mxu0 0
    %3739 = vmatpush1.bf16.xpose.msra.mxu0 0
    %3740 = vmatprep.subr.bf16.mxu0 0
    %3741 = vmatpush1.bf16.xpose.msra.mxu0 0
    %3742 = vmatprep.subr.bf16.mxu0 0
    %3743 = vmatpush1.bf16.xpose.msra.mxu0 0
    %3744 = vmatprep.subr.bf16.mxu0 0
    %3745 = vmatpush1.bf16.xpose.msra.mxu0 0
    %3746 = vmatprep.subr.bf16.mxu0 0
    %3747 = vmatpush1.bf16.xpose.msra.mxu0 0
    %3748 = vmatprep.subr.bf16.mxu0 0
    %3749 = vmatpush1.bf16.xpose.msra.mxu0 0
    %3750 = vmatprep.subr.bf16.mxu0 0
    %3751 = vmatpush1.bf16.xpose.msra.mxu0 0
    %3752 = vmatprep.subr.bf16.mxu0 0
    %3753 = vmatpush1.bf16.xpose.msra.mxu0 %v3736
    %3754 = vmatprep.subr.bf16.mxu0 0
    %3755 = vmatpush2.bf16.xpose.msra.mxu0 0
    %3756 = vmatprep.subr.bf16.mxu0 0
    %3757 = vmatpush2.bf16.xpose.msra.mxu0 0
    %3758 = vmatprep.subr.bf16.mxu0 0
    %3759 = vmatpush2.bf16.xpose.msra.mxu0 0
    %3760 = vmatprep.subr.bf16.mxu0 0
    %3761 = vmatpush2.bf16.xpose.msra.mxu0 0
    %3762 = vmatprep.subr.bf16.mxu0 0
    %3763 = vmatpush2.bf16.xpose.msra.mxu0 0
    %3764 = vmatprep.subr.bf16.mxu0 0
    %3765 = vmatpush2.bf16.xpose.msra.mxu0 0
    %3766 = vmatprep.subr.bf16.mxu0 0
    %3767 = vmatpush2.bf16.xpose.msra.mxu0 0
    %3768 = vmatprep.subr.bf16.mxu0 0
    %3769 = vmatpush2.bf16.xpose.msra.mxu0 0
    %3770 = vmatprep.mubr.bf16.mxu0 0
    %3771 = vmatmul.mubr.bf16.gmra.mxu0 %v3733
    %v3772 = vpop.f32.mrf.mxu0
    %v3773 = vadd.f32 0.0, %v3772
    %v3774 = vpop.f32.mrf.mxu0
    %v3775 = vpop.f32.mrf.mxu0
    %v3776 = vpop.f32.mrf.mxu0
    %3777 = vdwg.mxu0
    %v3779 = vsel %vm1385, %v1309, 0
    %v3782 = vsel %vm1385, %v1373, 0
    %3784 = vmatprep.subr.bf16.mxu0 0
    %3785 = vmatpush1.bf16.xpose.msra.mxu0 0
    %3786 = vmatprep.subr.bf16.mxu0 0
    %3787 = vmatpush1.bf16.xpose.msra.mxu0 0
    %3788 = vmatprep.subr.bf16.mxu0 0
    %3789 = vmatpush1.bf16.xpose.msra.mxu0 0
    %3790 = vmatprep.subr.bf16.mxu0 0
    %3791 = vmatpush1.bf16.xpose.msra.mxu0 0
    %3792 = vmatprep.subr.bf16.mxu0 0
    %3793 = vmatpush1.bf16.xpose.msra.mxu0 0
    %3794 = vmatprep.subr.bf16.mxu0 0
    %3795 = vmatpush1.bf16.xpose.msra.mxu0 0
    %3796 = vmatprep.subr.bf16.mxu0 0
    %3797 = vmatpush1.bf16.xpose.msra.mxu0 0
    %3798 = vmatprep.subr.bf16.mxu0 0
    %3799 = vmatpush1.bf16.xpose.msra.mxu0 %v3782
    %3800 = vmatprep.subr.bf16.mxu0 0
    %3801 = vmatpush2.bf16.xpose.msra.mxu0 0
    %3802 = vmatprep.subr.bf16.mxu0 0
    %3803 = vmatpush2.bf16.xpose.msra.mxu0 0
    %3804 = vmatprep.subr.bf16.mxu0 0
    %3805 = vmatpush2.bf16.xpose.msra.mxu0 0
    %3806 = vmatprep.subr.bf16.mxu0 0
    %3807 = vmatpush2.bf16.xpose.msra.mxu0 0
    %3808 = vmatprep.subr.bf16.mxu0 0
    %3809 = vmatpush2.bf16.xpose.msra.mxu0 0
    %3810 = vmatprep.subr.bf16.mxu0 0
    %3811 = vmatpush2.bf16.xpose.msra.mxu0 0
    %3812 = vmatprep.subr.bf16.mxu0 0
    %3813 = vmatpush2.bf16.xpose.msra.mxu0 0
    %3814 = vmatprep.subr.bf16.mxu0 0
    %3815 = vmatpush2.bf16.xpose.msra.mxu0 0
    %3816 = vmatprep.mubr.bf16.mxu0 0
    %3817 = vmatmul.mubr.bf16.gmra.mxu0 %v3779
    %v3818 = vpop.f32.mrf.mxu0
    %v3819 = vadd.f32 0.0, %v3818
    %v3820 = vpop.f32.mrf.mxu0
    %v3821 = vpop.f32.mrf.mxu0
    %v3822 = vpop.f32.mrf.mxu0
    %3823 = vdwg.mxu0
    %v3825 = vsel %vm1385, %v1310, 0
    %v3828 = vsel %vm1385, %v1374, 0
    %3830 = vmatprep.subr.bf16.mxu0 0
    %3831 = vmatpush1.bf16.xpose.msra.mxu0 0
    %3832 = vmatprep.subr.bf16.mxu0 0
    %3833 = vmatpush1.bf16.xpose.msra.mxu0 0
    %3834 = vmatprep.subr.bf16.mxu0 0
    %3835 = vmatpush1.bf16.xpose.msra.mxu0 0
    %3836 = vmatprep.subr.bf16.mxu0 0
    %3837 = vmatpush1.bf16.xpose.msra.mxu0 0
    %3838 = vmatprep.subr.bf16.mxu0 0
    %3839 = vmatpush1.bf16.xpose.msra.mxu0 0
    %3840 = vmatprep.subr.bf16.mxu0 0
    %3841 = vmatpush1.bf16.xpose.msra.mxu0 0
    %3842 = vmatprep.subr.bf16.mxu0 0
    %3843 = vmatpush1.bf16.xpose.msra.mxu0 0
    %3844 = vmatprep.subr.bf16.mxu0 0
    %3845 = vmatpush1.bf16.xpose.msra.mxu0 %v3828
    %3846 = vmatprep.subr.bf16.mxu0 0
    %3847 = vmatpush2.bf16.xpose.msra.mxu0 0
    %3848 = vmatprep.subr.bf16.mxu0 0
    %3849 = vmatpush2.bf16.xpose.msra.mxu0 0
    %3850 = vmatprep.subr.bf16.mxu0 0
    %3851 = vmatpush2.bf16.xpose.msra.mxu0 0
    %3852 = vmatprep.subr.bf16.mxu0 0
    %3853 = vmatpush2.bf16.xpose.msra.mxu0 0
    %3854 = vmatprep.subr.bf16.mxu0 0
    %3855 = vmatpush2.bf16.xpose.msra.mxu0 0
    %3856 = vmatprep.subr.bf16.mxu0 0
    %3857 = vmatpush2.bf16.xpose.msra.mxu0 0
    %3858 = vmatprep.subr.bf16.mxu0 0
    %3859 = vmatpush2.bf16.xpose.msra.mxu0 0
    %3860 = vmatprep.subr.bf16.mxu0 0
    %3861 = vmatpush2.bf16.xpose.msra.mxu0 0
    %3862 = vmatprep.mubr.bf16.mxu0 0
    %3863 = vmatmul.mubr.bf16.gmra.mxu0 %v3825
    %v3864 = vpop.f32.mrf.mxu0
    %v3865 = vadd.f32 0.0, %v3864
    %v3866 = vpop.f32.mrf.mxu0
    %v3867 = vpop.f32.mrf.mxu0
    %v3868 = vpop.f32.mrf.mxu0
    %3869 = vdwg.mxu0
    %v3871 = vsel %vm1385, %v1311, 0
    %v3874 = vsel %vm1385, %v1375, 0
    %3876 = vmatprep.subr.bf16.mxu0 0
    %3877 = vmatpush1.bf16.xpose.msra.mxu0 0
    %3878 = vmatprep.subr.bf16.mxu0 0
    %3879 = vmatpush1.bf16.xpose.msra.mxu0 0
    %3880 = vmatprep.subr.bf16.mxu0 0
    %3881 = vmatpush1.bf16.xpose.msra.mxu0 0
    %3882 = vmatprep.subr.bf16.mxu0 0
    %3883 = vmatpush1.bf16.xpose.msra.mxu0 0
    %3884 = vmatprep.subr.bf16.mxu0 0
    %3885 = vmatpush1.bf16.xpose.msra.mxu0 0
    %3886 = vmatprep.subr.bf16.mxu0 0
    %3887 = vmatpush1.bf16.xpose.msra.mxu0 0
    %3888 = vmatprep.subr.bf16.mxu0 0
    %3889 = vmatpush1.bf16.xpose.msra.mxu0 0
    %3890 = vmatprep.subr.bf16.mxu0 0
    %3891 = vmatpush1.bf16.xpose.msra.mxu0 %v3874
    %3892 = vmatprep.subr.bf16.mxu0 0
    %3893 = vmatpush2.bf16.xpose.msra.mxu0 0
    %3894 = vmatprep.subr.bf16.mxu0 0
    %3895 = vmatpush2.bf16.xpose.msra.mxu0 0
    %3896 = vmatprep.subr.bf16.mxu0 0
    %3897 = vmatpush2.bf16.xpose.msra.mxu0 0
    %3898 = vmatprep.subr.bf16.mxu0 0
    %3899 = vmatpush2.bf16.xpose.msra.mxu0 0
    %3900 = vmatprep.subr.bf16.mxu0 0
    %3901 = vmatpush2.bf16.xpose.msra.mxu0 0
    %3902 = vmatprep.subr.bf16.mxu0 0
    %3903 = vmatpush2.bf16.xpose.msra.mxu0 0
    %3904 = vmatprep.subr.bf16.mxu0 0
    %3905 = vmatpush2.bf16.xpose.msra.mxu0 0
    %3906 = vmatprep.subr.bf16.mxu0 0
    %3907 = vmatpush2.bf16.xpose.msra.mxu0 0
    %3908 = vmatprep.mubr.bf16.mxu0 0
    %3909 = vmatmul.mubr.bf16.gmra.mxu0 %v3871
    %v3910 = vpop.f32.mrf.mxu0
    %v3911 = vadd.f32 0.0, %v3910
    %v3912 = vpop.f32.mrf.mxu0
    %v3913 = vpop.f32.mrf.mxu0
    %v3914 = vpop.f32.mrf.mxu0
    %3915 = vdwg.mxu0
    %v3917 = vsel %vm1385, %v1312, 0
    %v3920 = vsel %vm1385, %v1376, 0
    %3922 = vmatprep.subr.bf16.mxu0 0
    %3923 = vmatpush1.bf16.xpose.msra.mxu0 0
    %3924 = vmatprep.subr.bf16.mxu0 0
    %3925 = vmatpush1.bf16.xpose.msra.mxu0 0
    %3926 = vmatprep.subr.bf16.mxu0 0
    %3927 = vmatpush1.bf16.xpose.msra.mxu0 0
    %3928 = vmatprep.subr.bf16.mxu0 0
    %3929 = vmatpush1.bf16.xpose.msra.mxu0 0
    %3930 = vmatprep.subr.bf16.mxu0 0
    %3931 = vmatpush1.bf16.xpose.msra.mxu0 0
    %3932 = vmatprep.subr.bf16.mxu0 0
    %3933 = vmatpush1.bf16.xpose.msra.mxu0 0
    %3934 = vmatprep.subr.bf16.mxu0 0
    %3935 = vmatpush1.bf16.xpose.msra.mxu0 0
    %3936 = vmatprep.subr.bf16.mxu0 0
    %3937 = vmatpush1.bf16.xpose.msra.mxu0 %v3920
    %3938 = vmatprep.subr.bf16.mxu0 0
    %3939 = vmatpush2.bf16.xpose.msra.mxu0 0
    %3940 = vmatprep.subr.bf16.mxu0 0
    %3941 = vmatpush2.bf16.xpose.msra.mxu0 0
    %3942 = vmatprep.subr.bf16.mxu0 0
    %3943 = vmatpush2.bf16.xpose.msra.mxu0 0
    %3944 = vmatprep.subr.bf16.mxu0 0
    %3945 = vmatpush2.bf16.xpose.msra.mxu0 0
    %3946 = vmatprep.subr.bf16.mxu0 0
    %3947 = vmatpush2.bf16.xpose.msra.mxu0 0
    %3948 = vmatprep.subr.bf16.mxu0 0
    %3949 = vmatpush2.bf16.xpose.msra.mxu0 0
    %3950 = vmatprep.subr.bf16.mxu0 0
    %3951 = vmatpush2.bf16.xpose.msra.mxu0 0
    %3952 = vmatprep.subr.bf16.mxu0 0
    %3953 = vmatpush2.bf16.xpose.msra.mxu0 0
    %3954 = vmatprep.mubr.bf16.mxu0 0
    %3955 = vmatmul.mubr.bf16.gmra.mxu0 %v3917
    %v3956 = vpop.f32.mrf.mxu0
    %v3957 = vadd.f32 0.0, %v3956
    %v3958 = vpop.f32.mrf.mxu0
    %v3959 = vpop.f32.mrf.mxu0
    %v3960 = vpop.f32.mrf.mxu0
    %3961 = vdwg.mxu0
    %v3963 = vsel %vm1385, %v1313, 0
    %v3966 = vsel %vm1385, %v1377, 0
    %3968 = vmatprep.subr.bf16.mxu0 0
    %3969 = vmatpush1.bf16.xpose.msra.mxu0 0
    %3970 = vmatprep.subr.bf16.mxu0 0
    %3971 = vmatpush1.bf16.xpose.msra.mxu0 0
    %3972 = vmatprep.subr.bf16.mxu0 0
    %3973 = vmatpush1.bf16.xpose.msra.mxu0 0
    %3974 = vmatprep.subr.bf16.mxu0 0
    %3975 = vmatpush1.bf16.xpose.msra.mxu0 0
    %3976 = vmatprep.subr.bf16.mxu0 0
    %3977 = vmatpush1.bf16.xpose.msra.mxu0 0
    %3978 = vmatprep.subr.bf16.mxu0 0
    %3979 = vmatpush1.bf16.xpose.msra.mxu0 0
    %3980 = vmatprep.subr.bf16.mxu0 0
    %3981 = vmatpush1.bf16.xpose.msra.mxu0 0
    %3982 = vmatprep.subr.bf16.mxu0 0
    %3983 = vmatpush1.bf16.xpose.msra.mxu0 %v3966
    %3984 = vmatprep.subr.bf16.mxu0 0
    %3985 = vmatpush2.bf16.xpose.msra.mxu0 0
    %3986 = vmatprep.subr.bf16.mxu0 0
    %3987 = vmatpush2.bf16.xpose.msra.mxu0 0
    %3988 = vmatprep.subr.bf16.mxu0 0
    %3989 = vmatpush2.bf16.xpose.msra.mxu0 0
    %3990 = vmatprep.subr.bf16.mxu0 0
    %3991 = vmatpush2.bf16.xpose.msra.mxu0 0
    %3992 = vmatprep.subr.bf16.mxu0 0
    %3993 = vmatpush2.bf16.xpose.msra.mxu0 0
    %3994 = vmatprep.subr.bf16.mxu0 0
    %3995 = vmatpush2.bf16.xpose.msra.mxu0 0
    %3996 = vmatprep.subr.bf16.mxu0 0
    %3997 = vmatpush2.bf16.xpose.msra.mxu0 0
    %3998 = vmatprep.subr.bf16.mxu0 0
    %3999 = vmatpush2.bf16.xpose.msra.mxu0 0
    %4000 = vmatprep.mubr.bf16.mxu0 0
    %4001 = vmatmul.mubr.bf16.gmra.mxu0 %v3963
    %v4002 = vpop.f32.mrf.mxu0
    %v4003 = vadd.f32 0.0, %v4002
    %v4004 = vpop.f32.mrf.mxu0
    %v4005 = vpop.f32.mrf.mxu0
    %v4006 = vpop.f32.mrf.mxu0
    %4007 = vdwg.mxu0
    %v4009 = vsel %vm1385, %v1314, 0
    %v4012 = vsel %vm1385, %v1378, 0
    %4014 = vmatprep.subr.bf16.mxu0 0
    %4015 = vmatpush1.bf16.xpose.msra.mxu0 0
    %4016 = vmatprep.subr.bf16.mxu0 0
    %4017 = vmatpush1.bf16.xpose.msra.mxu0 0
    %4018 = vmatprep.subr.bf16.mxu0 0
    %4019 = vmatpush1.bf16.xpose.msra.mxu0 0
    %4020 = vmatprep.subr.bf16.mxu0 0
    %4021 = vmatpush1.bf16.xpose.msra.mxu0 0
    %4022 = vmatprep.subr.bf16.mxu0 0
    %4023 = vmatpush1.bf16.xpose.msra.mxu0 0
    %4024 = vmatprep.subr.bf16.mxu0 0
    %4025 = vmatpush1.bf16.xpose.msra.mxu0 0
    %4026 = vmatprep.subr.bf16.mxu0 0
    %4027 = vmatpush1.bf16.xpose.msra.mxu0 0
    %4028 = vmatprep.subr.bf16.mxu0 0
    %4029 = vmatpush1.bf16.xpose.msra.mxu0 %v4012
    %4030 = vmatprep.subr.bf16.mxu0 0
    %4031 = vmatpush2.bf16.xpose.msra.mxu0 0
    %4032 = vmatprep.subr.bf16.mxu0 0
    %4033 = vmatpush2.bf16.xpose.msra.mxu0 0
    %4034 = vmatprep.subr.bf16.mxu0 0
    %4035 = vmatpush2.bf16.xpose.msra.mxu0 0
    %4036 = vmatprep.subr.bf16.mxu0 0
    %4037 = vmatpush2.bf16.xpose.msra.mxu0 0
    %4038 = vmatprep.subr.bf16.mxu0 0
    %4039 = vmatpush2.bf16.xpose.msra.mxu0 0
    %4040 = vmatprep.subr.bf16.mxu0 0
    %4041 = vmatpush2.bf16.xpose.msra.mxu0 0
    %4042 = vmatprep.subr.bf16.mxu0 0
    %4043 = vmatpush2.bf16.xpose.msra.mxu0 0
    %4044 = vmatprep.subr.bf16.mxu0 0
    %4045 = vmatpush2.bf16.xpose.msra.mxu0 0
    %4046 = vmatprep.mubr.bf16.mxu0 0
    %4047 = vmatmul.mubr.bf16.gmra.mxu0 %v4009
    %v4048 = vpop.f32.mrf.mxu0
    %v4049 = vadd.f32 0.0, %v4048
    %v4050 = vpop.f32.mrf.mxu0
    %v4051 = vpop.f32.mrf.mxu0
    %v4052 = vpop.f32.mrf.mxu0
    %4053 = vdwg.mxu0
    %v4055 = vsel %vm1385, %v1315, 0
    %v4058 = vsel %vm1385, %v1379, 0
    %4060 = vmatprep.subr.bf16.mxu0 0
    %4061 = vmatpush1.bf16.xpose.msra.mxu0 0
    %4062 = vmatprep.subr.bf16.mxu0 0
    %4063 = vmatpush1.bf16.xpose.msra.mxu0 0
    %4064 = vmatprep.subr.bf16.mxu0 0
    %4065 = vmatpush1.bf16.xpose.msra.mxu0 0
    %4066 = vmatprep.subr.bf16.mxu0 0
    %4067 = vmatpush1.bf16.xpose.msra.mxu0 0
    %4068 = vmatprep.subr.bf16.mxu0 0
    %4069 = vmatpush1.bf16.xpose.msra.mxu0 0
    %4070 = vmatprep.subr.bf16.mxu0 0
    %4071 = vmatpush1.bf16.xpose.msra.mxu0 0
    %4072 = vmatprep.subr.bf16.mxu0 0
    %4073 = vmatpush1.bf16.xpose.msra.mxu0 0
    %4074 = vmatprep.subr.bf16.mxu0 0
    %4075 = vmatpush1.bf16.xpose.msra.mxu0 %v4058
    %4076 = vmatprep.subr.bf16.mxu0 0
    %4077 = vmatpush2.bf16.xpose.msra.mxu0 0
    %4078 = vmatprep.subr.bf16.mxu0 0
    %4079 = vmatpush2.bf16.xpose.msra.mxu0 0
    %4080 = vmatprep.subr.bf16.mxu0 0
    %4081 = vmatpush2.bf16.xpose.msra.mxu0 0
    %4082 = vmatprep.subr.bf16.mxu0 0
    %4083 = vmatpush2.bf16.xpose.msra.mxu0 0
    %4084 = vmatprep.subr.bf16.mxu0 0
    %4085 = vmatpush2.bf16.xpose.msra.mxu0 0
    %4086 = vmatprep.subr.bf16.mxu0 0
    %4087 = vmatpush2.bf16.xpose.msra.mxu0 0
    %4088 = vmatprep.subr.bf16.mxu0 0
    %4089 = vmatpush2.bf16.xpose.msra.mxu0 0
    %4090 = vmatprep.subr.bf16.mxu0 0
    %4091 = vmatpush2.bf16.xpose.msra.mxu0 0
    %4092 = vmatprep.mubr.bf16.mxu0 0
    %4093 = vmatmul.mubr.bf16.gmra.mxu0 %v4055
    %v4094 = vpop.f32.mrf.mxu0
    %v4095 = vadd.f32 0.0, %v4094
    %v4096 = vpop.f32.mrf.mxu0
    %v4097 = vpop.f32.mrf.mxu0
    %v4098 = vpop.f32.mrf.mxu0
    %4099 = vdwg.mxu0
    %v4101 = vsel %vm1385, %v1316, 0
    %v4104 = vsel %vm1385, %v1380, 0
    %4106 = vmatprep.subr.bf16.mxu0 0
    %4107 = vmatpush1.bf16.xpose.msra.mxu0 0
    %4108 = vmatprep.subr.bf16.mxu0 0
    %4109 = vmatpush1.bf16.xpose.msra.mxu0 0
    %4110 = vmatprep.subr.bf16.mxu0 0
    %4111 = vmatpush1.bf16.xpose.msra.mxu0 0
    %4112 = vmatprep.subr.bf16.mxu0 0
    %4113 = vmatpush1.bf16.xpose.msra.mxu0 0
    %4114 = vmatprep.subr.bf16.mxu0 0
    %4115 = vmatpush1.bf16.xpose.msra.mxu0 0
    %4116 = vmatprep.subr.bf16.mxu0 0
    %4117 = vmatpush1.bf16.xpose.msra.mxu0 0
    %4118 = vmatprep.subr.bf16.mxu0 0
    %4119 = vmatpush1.bf16.xpose.msra.mxu0 0
    %4120 = vmatprep.subr.bf16.mxu0 0
    %4121 = vmatpush1.bf16.xpose.msra.mxu0 %v4104
    %4122 = vmatprep.subr.bf16.mxu0 0
    %4123 = vmatpush2.bf16.xpose.msra.mxu0 0
    %4124 = vmatprep.subr.bf16.mxu0 0
    %4125 = vmatpush2.bf16.xpose.msra.mxu0 0
    %4126 = vmatprep.subr.bf16.mxu0 0
    %4127 = vmatpush2.bf16.xpose.msra.mxu0 0
    %4128 = vmatprep.subr.bf16.mxu0 0
    %4129 = vmatpush2.bf16.xpose.msra.mxu0 0
    %4130 = vmatprep.subr.bf16.mxu0 0
    %4131 = vmatpush2.bf16.xpose.msra.mxu0 0
    %4132 = vmatprep.subr.bf16.mxu0 0
    %4133 = vmatpush2.bf16.xpose.msra.mxu0 0
    %4134 = vmatprep.subr.bf16.mxu0 0
    %4135 = vmatpush2.bf16.xpose.msra.mxu0 0
    %4136 = vmatprep.subr.bf16.mxu0 0
    %4137 = vmatpush2.bf16.xpose.msra.mxu0 0
    %4138 = vmatprep.mubr.bf16.mxu0 0
    %4139 = vmatmul.mubr.bf16.gmra.mxu0 %v4101
    %v4140 = vpop.f32.mrf.mxu0
    %v4141 = vadd.f32 0.0, %v4140
    %v4142 = vpop.f32.mrf.mxu0
    %v4143 = vpop.f32.mrf.mxu0
    %v4144 = vpop.f32.mrf.mxu0
    %4145 = vdwg.mxu0
    %v4147 = vsel %vm1385, %v1317, 0
    %v4150 = vsel %vm1385, %v1381, 0
    %4152 = vmatprep.subr.bf16.mxu0 0
    %4153 = vmatpush1.bf16.xpose.msra.mxu0 0
    %4154 = vmatprep.subr.bf16.mxu0 0
    %4155 = vmatpush1.bf16.xpose.msra.mxu0 0
    %4156 = vmatprep.subr.bf16.mxu0 0
    %4157 = vmatpush1.bf16.xpose.msra.mxu0 0
    %4158 = vmatprep.subr.bf16.mxu0 0
    %4159 = vmatpush1.bf16.xpose.msra.mxu0 0
    %4160 = vmatprep.subr.bf16.mxu0 0
    %4161 = vmatpush1.bf16.xpose.msra.mxu0 0
    %4162 = vmatprep.subr.bf16.mxu0 0
    %4163 = vmatpush1.bf16.xpose.msra.mxu0 0
    %4164 = vmatprep.subr.bf16.mxu0 0
    %4165 = vmatpush1.bf16.xpose.msra.mxu0 0
    %4166 = vmatprep.subr.bf16.mxu0 0
    %4167 = vmatpush1.bf16.xpose.msra.mxu0 %v4150
    %4168 = vmatprep.subr.bf16.mxu0 0
    %4169 = vmatpush2.bf16.xpose.msra.mxu0 0
    %4170 = vmatprep.subr.bf16.mxu0 0
    %4171 = vmatpush2.bf16.xpose.msra.mxu0 0
    %4172 = vmatprep.subr.bf16.mxu0 0
    %4173 = vmatpush2.bf16.xpose.msra.mxu0 0
    %4174 = vmatprep.subr.bf16.mxu0 0
    %4175 = vmatpush2.bf16.xpose.msra.mxu0 0
    %4176 = vmatprep.subr.bf16.mxu0 0
    %4177 = vmatpush2.bf16.xpose.msra.mxu0 0
    %4178 = vmatprep.subr.bf16.mxu0 0
    %4179 = vmatpush2.bf16.xpose.msra.mxu0 0
    %4180 = vmatprep.subr.bf16.mxu0 0
    %4181 = vmatpush2.bf16.xpose.msra.mxu0 0
    %4182 = vmatprep.subr.bf16.mxu0 0
    %4183 = vmatpush2.bf16.xpose.msra.mxu0 0
    %4184 = vmatprep.mubr.bf16.mxu0 0
    %4185 = vmatmul.mubr.bf16.gmra.mxu0 %v4147
    %v4186 = vpop.f32.mrf.mxu0
    %v4187 = vadd.f32 0.0, %v4186
    %v4188 = vpop.f32.mrf.mxu0
    %v4189 = vpop.f32.mrf.mxu0
    %v4190 = vpop.f32.mrf.mxu0
    %4191 = vdwg.mxu0
    %v4193 = vsel %vm1385, %v1318, 0
    %v4196 = vsel %vm1385, %v1382, 0
    %4198 = vmatprep.subr.bf16.mxu0 0
    %4199 = vmatpush1.bf16.xpose.msra.mxu0 0
    %4200 = vmatprep.subr.bf16.mxu0 0
    %4201 = vmatpush1.bf16.xpose.msra.mxu0 0
    %4202 = vmatprep.subr.bf16.mxu0 0
    %4203 = vmatpush1.bf16.xpose.msra.mxu0 0
    %4204 = vmatprep.subr.bf16.mxu0 0
    %4205 = vmatpush1.bf16.xpose.msra.mxu0 0
    %4206 = vmatprep.subr.bf16.mxu0 0
    %4207 = vmatpush1.bf16.xpose.msra.mxu0 0
    %4208 = vmatprep.subr.bf16.mxu0 0
    %4209 = vmatpush1.bf16.xpose.msra.mxu0 0
    %4210 = vmatprep.subr.bf16.mxu0 0
    %4211 = vmatpush1.bf16.xpose.msra.mxu0 0
    %4212 = vmatprep.subr.bf16.mxu0 0
    %4213 = vmatpush1.bf16.xpose.msra.mxu0 %v4196
    %4214 = vmatprep.subr.bf16.mxu0 0
    %4215 = vmatpush2.bf16.xpose.msra.mxu0 0
    %4216 = vmatprep.subr.bf16.mxu0 0
    %4217 = vmatpush2.bf16.xpose.msra.mxu0 0
    %4218 = vmatprep.subr.bf16.mxu0 0
    %4219 = vmatpush2.bf16.xpose.msra.mxu0 0
    %4220 = vmatprep.subr.bf16.mxu0 0
    %4221 = vmatpush2.bf16.xpose.msra.mxu0 0
    %4222 = vmatprep.subr.bf16.mxu0 0
    %4223 = vmatpush2.bf16.xpose.msra.mxu0 0
    %4224 = vmatprep.subr.bf16.mxu0 0
    %4225 = vmatpush2.bf16.xpose.msra.mxu0 0
    %4226 = vmatprep.subr.bf16.mxu0 0
    %4227 = vmatpush2.bf16.xpose.msra.mxu0 0
    %4228 = vmatprep.subr.bf16.mxu0 0
    %4229 = vmatpush2.bf16.xpose.msra.mxu0 0
    %4230 = vmatprep.mubr.bf16.mxu0 0
    %4231 = vmatmul.mubr.bf16.gmra.mxu0 %v4193
    %v4232 = vpop.f32.mrf.mxu0
    %v4233 = vadd.f32 0.0, %v4232
    %v4234 = vpop.f32.mrf.mxu0
    %v4235 = vpop.f32.mrf.mxu0
    %v4236 = vpop.f32.mrf.mxu0
    %4237 = vdwg.mxu0
    %v4239 = vsel %vm1385, %v1319, 0
    %v4242 = vsel %vm1385, %v1383, 0
    %4244 = vmatprep.subr.bf16.mxu0 0
    %4245 = vmatpush1.bf16.xpose.msra.mxu0 0
    %4246 = vmatprep.subr.bf16.mxu0 0
    %4247 = vmatpush1.bf16.xpose.msra.mxu0 0
    %4248 = vmatprep.subr.bf16.mxu0 0
    %4249 = vmatpush1.bf16.xpose.msra.mxu0 0
    %4250 = vmatprep.subr.bf16.mxu0 0
    %4251 = vmatpush1.bf16.xpose.msra.mxu0 0
    %4252 = vmatprep.subr.bf16.mxu0 0
    %4253 = vmatpush1.bf16.xpose.msra.mxu0 0
    %4254 = vmatprep.subr.bf16.mxu0 0
    %4255 = vmatpush1.bf16.xpose.msra.mxu0 0
    %4256 = vmatprep.subr.bf16.mxu0 0
    %4257 = vmatpush1.bf16.xpose.msra.mxu0 0
    %4258 = vmatprep.subr.bf16.mxu0 0
    %4259 = vmatpush1.bf16.xpose.msra.mxu0 %v4242
    %4260 = vmatprep.subr.bf16.mxu0 0
    %4261 = vmatpush2.bf16.xpose.msra.mxu0 0
    %4262 = vmatprep.subr.bf16.mxu0 0
    %4263 = vmatpush2.bf16.xpose.msra.mxu0 0
    %4264 = vmatprep.subr.bf16.mxu0 0
    %4265 = vmatpush2.bf16.xpose.msra.mxu0 0
    %4266 = vmatprep.subr.bf16.mxu0 0
    %4267 = vmatpush2.bf16.xpose.msra.mxu0 0
    %4268 = vmatprep.subr.bf16.mxu0 0
    %4269 = vmatpush2.bf16.xpose.msra.mxu0 0
    %4270 = vmatprep.subr.bf16.mxu0 0
    %4271 = vmatpush2.bf16.xpose.msra.mxu0 0
    %4272 = vmatprep.subr.bf16.mxu0 0
    %4273 = vmatpush2.bf16.xpose.msra.mxu0 0
    %4274 = vmatprep.subr.bf16.mxu0 0
    %4275 = vmatpush2.bf16.xpose.msra.mxu0 0
    %4276 = vmatprep.mubr.bf16.mxu0 0
    %4277 = vmatmul.mubr.bf16.gmra.mxu0 %v4239
    %v4278 = vpop.f32.mrf.mxu0
    %v4279 = vadd.f32 0.0, %v4278
    %v4280 = vpop.f32.mrf.mxu0
    %v4281 = vpop.f32.mrf.mxu0
    %v4282 = vpop.f32.mrf.mxu0
    %4283 = vdwg.mxu0
    %v4285 = vsel %vm1385, %v1320, 0
    %v4288 = vsel %vm1385, %v1384, 0
    %4290 = vmatprep.subr.bf16.mxu0 0
    %4291 = vmatpush1.bf16.xpose.msra.mxu0 0
    %4292 = vmatprep.subr.bf16.mxu0 0
    %4293 = vmatpush1.bf16.xpose.msra.mxu0 0
    %4294 = vmatprep.subr.bf16.mxu0 0
    %4295 = vmatpush1.bf16.xpose.msra.mxu0 0
    %4296 = vmatprep.subr.bf16.mxu0 0
    %4297 = vmatpush1.bf16.xpose.msra.mxu0 0
    %4298 = vmatprep.subr.bf16.mxu0 0
    %4299 = vmatpush1.bf16.xpose.msra.mxu0 0
    %4300 = vmatprep.subr.bf16.mxu0 0
    %4301 = vmatpush1.bf16.xpose.msra.mxu0 0
    %4302 = vmatprep.subr.bf16.mxu0 0
    %4303 = vmatpush1.bf16.xpose.msra.mxu0 0
    %4304 = vmatprep.subr.bf16.mxu0 0
    %4305 = vmatpush1.bf16.xpose.msra.mxu0 %v4288
    %4306 = vmatprep.subr.bf16.mxu0 0
    %4307 = vmatpush2.bf16.xpose.msra.mxu0 0
    %4308 = vmatprep.subr.bf16.mxu0 0
    %4309 = vmatpush2.bf16.xpose.msra.mxu0 0
    %4310 = vmatprep.subr.bf16.mxu0 0
    %4311 = vmatpush2.bf16.xpose.msra.mxu0 0
    %4312 = vmatprep.subr.bf16.mxu0 0
    %4313 = vmatpush2.bf16.xpose.msra.mxu0 0
    %4314 = vmatprep.subr.bf16.mxu0 0
    %4315 = vmatpush2.bf16.xpose.msra.mxu0 0
    %4316 = vmatprep.subr.bf16.mxu0 0
    %4317 = vmatpush2.bf16.xpose.msra.mxu0 0
    %4318 = vmatprep.subr.bf16.mxu0 0
    %4319 = vmatpush2.bf16.xpose.msra.mxu0 0
    %4320 = vmatprep.subr.bf16.mxu0 0
    %4321 = vmatpush2.bf16.xpose.msra.mxu0 0
    %4322 = vmatprep.mubr.bf16.mxu0 0
    %4323 = vmatmul.mubr.bf16.gmra.mxu0 %v4285
    %v4324 = vpop.f32.mrf.mxu0
    %v4325 = vadd.f32 0.0, %v4324
    %v4326 = vpop.f32.mrf.mxu0
    %v4327 = vpop.f32.mrf.mxu0
    %v4328 = vpop.f32.mrf.mxu0
    %4329 = vdwg.mxu0
    %v4330 = vmul.f32 %v1427, 0.17677669
    %v4331 = vmul.f32 %v1473, 0.17677669
    %v4332 = vmul.f32 %v1519, 0.17677669
    %v4333 = vmul.f32 %v1565, 0.17677669
    %v4334 = vmul.f32 %v1611, 0.17677669
    %v4335 = vmul.f32 %v1657, 0.17677669
    %v4336 = vmul.f32 %v1703, 0.17677669
    %v4337 = vmul.f32 %v1749, 0.17677669
    %v4338 = vmul.f32 %v1795, 0.17677669
    %v4339 = vmul.f32 %v1841, 0.17677669
    %v4340 = vmul.f32 %v1887, 0.17677669
    %v4341 = vmul.f32 %v1933, 0.17677669
    %v4342 = vmul.f32 %v1979, 0.17677669
    %v4343 = vmul.f32 %v2025, 0.17677669
    %v4344 = vmul.f32 %v2071, 0.17677669
    %v4345 = vmul.f32 %v2117, 0.17677669
    %v4346 = vmul.f32 %v2163, 0.17677669
    %v4347 = vmul.f32 %v2209, 0.17677669
    %v4348 = vmul.f32 %v2255, 0.17677669
    %v4349 = vmul.f32 %v2301, 0.17677669
    %v4350 = vmul.f32 %v2347, 0.17677669
    %v4351 = vmul.f32 %v2393, 0.17677669
    %v4352 = vmul.f32 %v2439, 0.17677669
    %v4353 = vmul.f32 %v2485, 0.17677669
    %v4354 = vmul.f32 %v2531, 0.17677669
    %v4355 = vmul.f32 %v2577, 0.17677669
    %v4356 = vmul.f32 %v2623, 0.17677669
    %v4357 = vmul.f32 %v2669, 0.17677669
    %v4358 = vmul.f32 %v2715, 0.17677669
    %v4359 = vmul.f32 %v2761, 0.17677669
    %v4360 = vmul.f32 %v2807, 0.17677669
    %v4361 = vmul.f32 %v2853, 0.17677669
    %v4362 = vmul.f32 %v2899, 0.17677669
    %v4363 = vmul.f32 %v2945, 0.17677669
    %v4364 = vmul.f32 %v2991, 0.17677669
    %v4365 = vmul.f32 %v3037, 0.17677669
    %v4366 = vmul.f32 %v3083, 0.17677669
    %v4367 = vmul.f32 %v3129, 0.17677669
    %v4368 = vmul.f32 %v3175, 0.17677669
    %v4369 = vmul.f32 %v3221, 0.17677669
    %v4370 = vmul.f32 %v3267, 0.17677669
    %v4371 = vmul.f32 %v3313, 0.17677669
    %v4372 = vmul.f32 %v3359, 0.17677669
    %v4373 = vmul.f32 %v3405, 0.17677669
    %v4374 = vmul.f32 %v3451, 0.17677669
    %v4375 = vmul.f32 %v3497, 0.17677669
    %v4376 = vmul.f32 %v3543, 0.17677669
    %v4377 = vmul.f32 %v3589, 0.17677669
    %v4378 = vmul.f32 %v3635, 0.17677669
    %v4379 = vmul.f32 %v3681, 0.17677669
    %v4380 = vmul.f32 %v3727, 0.17677669
    %v4381 = vmul.f32 %v3773, 0.17677669
    %v4382 = vmul.f32 %v3819, 0.17677669
    %v4383 = vmul.f32 %v3865, 0.17677669
    %v4384 = vmul.f32 %v3911, 0.17677669
    %v4385 = vmul.f32 %v3957, 0.17677669
    %v4386 = vmul.f32 %v4003, 0.17677669
    %v4387 = vmul.f32 %v4049, 0.17677669
    %v4388 = vmul.f32 %v4095, 0.17677669
    %v4389 = vmul.f32 %v4141, 0.17677669
    %v4390 = vmul.f32 %v4187, 0.17677669
    %v4391 = vmul.f32 %v4233, 0.17677669
    %v4392 = vmul.f32 %v4279, 0.17677669
    %v4393 = vmul.f32 %v4325, 0.17677669
    %v4394 = vsel %vm281, %v4330, -inf
    %4395 = vmax.xlane.f32.xlu0 %v4394
    %v4396 = vpop.xlane.xlu0 %4395
    %v4397 = vsel %vm281, %v4331, -inf
    %4398 = vmax.xlane.f32.xlu0 %v4397
    %v4399 = vpop.xlane.xlu0 %4398
    %v4400 = vsel %vm281, %v4332, -inf
    %4401 = vmax.xlane.f32.xlu0 %v4400
    %v4402 = vpop.xlane.xlu0 %4401
    %v4403 = vsel %vm281, %v4333, -inf
    %4404 = vmax.xlane.f32.xlu0 %v4403
    %v4405 = vpop.xlane.xlu0 %4404
    %v4406 = vsel %vm281, %v4334, -inf
    %4407 = vmax.xlane.f32.xlu0 %v4406
    %v4408 = vpop.xlane.xlu0 %4407
    %v4409 = vsel %vm281, %v4335, -inf
    %4410 = vmax.xlane.f32.xlu0 %v4409
    %v4411 = vpop.xlane.xlu0 %4410
    %v4412 = vsel %vm281, %v4336, -inf
    %4413 = vmax.xlane.f32.xlu0 %v4412
    %v4414 = vpop.xlane.xlu0 %4413
    %v4415 = vsel %vm281, %v4337, -inf
    %4416 = vmax.xlane.f32.xlu0 %v4415
    %v4417 = vpop.xlane.xlu0 %4416
    %v4418 = vsel %vm281, %v4338, -inf
    %4419 = vmax.xlane.f32.xlu0 %v4418
    %v4420 = vpop.xlane.xlu0 %4419
    %v4421 = vsel %vm281, %v4339, -inf
    %4422 = vmax.xlane.f32.xlu0 %v4421
    %v4423 = vpop.xlane.xlu0 %4422
    %v4424 = vsel %vm281, %v4340, -inf
    %4425 = vmax.xlane.f32.xlu0 %v4424
    %v4426 = vpop.xlane.xlu0 %4425
    %v4427 = vsel %vm281, %v4341, -inf
    %4428 = vmax.xlane.f32.xlu0 %v4427
    %v4429 = vpop.xlane.xlu0 %4428
    %v4430 = vsel %vm281, %v4342, -inf
    %4431 = vmax.xlane.f32.xlu0 %v4430
    %v4432 = vpop.xlane.xlu0 %4431
    %v4433 = vsel %vm281, %v4343, -inf
    %4434 = vmax.xlane.f32.xlu0 %v4433
    %v4435 = vpop.xlane.xlu0 %4434
    %v4436 = vsel %vm281, %v4344, -inf
    %4437 = vmax.xlane.f32.xlu0 %v4436
    %v4438 = vpop.xlane.xlu0 %4437
    %v4439 = vsel %vm281, %v4345, -inf
    %4440 = vmax.xlane.f32.xlu0 %v4439
    %v4441 = vpop.xlane.xlu0 %4440
    %v4442 = vsel %vm281, %v4346, -inf
    %4443 = vmax.xlane.f32.xlu0 %v4442
    %v4444 = vpop.xlane.xlu0 %4443
    %v4445 = vsel %vm281, %v4347, -inf
    %4446 = vmax.xlane.f32.xlu0 %v4445
    %v4447 = vpop.xlane.xlu0 %4446
    %v4448 = vsel %vm281, %v4348, -inf
    %4449 = vmax.xlane.f32.xlu0 %v4448
    %v4450 = vpop.xlane.xlu0 %4449
    %v4451 = vsel %vm281, %v4349, -inf
    %4452 = vmax.xlane.f32.xlu0 %v4451
    %v4453 = vpop.xlane.xlu0 %4452
    %v4454 = vsel %vm281, %v4350, -inf
    %4455 = vmax.xlane.f32.xlu0 %v4454
    %v4456 = vpop.xlane.xlu0 %4455
    %v4457 = vsel %vm281, %v4351, -inf
    %4458 = vmax.xlane.f32.xlu0 %v4457
    %v4459 = vpop.xlane.xlu0 %4458
    %v4460 = vsel %vm281, %v4352, -inf
    %4461 = vmax.xlane.f32.xlu0 %v4460
    %v4462 = vpop.xlane.xlu0 %4461
    %v4463 = vsel %vm281, %v4353, -inf
    %4464 = vmax.xlane.f32.xlu0 %v4463
    %v4465 = vpop.xlane.xlu0 %4464
    %v4466 = vsel %vm281, %v4354, -inf
    %4467 = vmax.xlane.f32.xlu0 %v4466
    %v4468 = vpop.xlane.xlu0 %4467
    %v4469 = vsel %vm281, %v4355, -inf
    %4470 = vmax.xlane.f32.xlu0 %v4469
    %v4471 = vpop.xlane.xlu0 %4470
    %v4472 = vsel %vm281, %v4356, -inf
    %4473 = vmax.xlane.f32.xlu0 %v4472
    %v4474 = vpop.xlane.xlu0 %4473
    %v4475 = vsel %vm281, %v4357, -inf
    %4476 = vmax.xlane.f32.xlu0 %v4475
    %v4477 = vpop.xlane.xlu0 %4476
    %v4478 = vsel %vm281, %v4358, -inf
    %4479 = vmax.xlane.f32.xlu0 %v4478
    %v4480 = vpop.xlane.xlu0 %4479
    %v4481 = vsel %vm281, %v4359, -inf
    %4482 = vmax.xlane.f32.xlu0 %v4481
    %v4483 = vpop.xlane.xlu0 %4482
    %v4484 = vsel %vm281, %v4360, -inf
    %4485 = vmax.xlane.f32.xlu0 %v4484
    %v4486 = vpop.xlane.xlu0 %4485
    %v4487 = vsel %vm281, %v4361, -inf
    %4488 = vmax.xlane.f32.xlu0 %v4487
    %v4489 = vpop.xlane.xlu0 %4488
    %v4490 = vsel %vm281, %v4362, -inf
    %4491 = vmax.xlane.f32.xlu0 %v4490
    %v4492 = vpop.xlane.xlu0 %4491
    %v4493 = vsel %vm281, %v4363, -inf
    %4494 = vmax.xlane.f32.xlu0 %v4493
    %v4495 = vpop.xlane.xlu0 %4494
    %v4496 = vsel %vm281, %v4364, -inf
    %4497 = vmax.xlane.f32.xlu0 %v4496
    %v4498 = vpop.xlane.xlu0 %4497
    %v4499 = vsel %vm281, %v4365, -inf
    %4500 = vmax.xlane.f32.xlu0 %v4499
    %v4501 = vpop.xlane.xlu0 %4500
    %v4502 = vsel %vm281, %v4366, -inf
    %4503 = vmax.xlane.f32.xlu0 %v4502
    %v4504 = vpop.xlane.xlu0 %4503
    %v4505 = vsel %vm281, %v4367, -inf
    %4506 = vmax.xlane.f32.xlu0 %v4505
    %v4507 = vpop.xlane.xlu0 %4506
    %v4508 = vsel %vm281, %v4368, -inf
    %4509 = vmax.xlane.f32.xlu0 %v4508
    %v4510 = vpop.xlane.xlu0 %4509
    %v4511 = vsel %vm281, %v4369, -inf
    %4512 = vmax.xlane.f32.xlu0 %v4511
    %v4513 = vpop.xlane.xlu0 %4512
    %v4514 = vsel %vm281, %v4370, -inf
    %4515 = vmax.xlane.f32.xlu0 %v4514
    %v4516 = vpop.xlane.xlu0 %4515
    %v4517 = vsel %vm281, %v4371, -inf
    %4518 = vmax.xlane.f32.xlu0 %v4517
    %v4519 = vpop.xlane.xlu0 %4518
    %v4520 = vsel %vm281, %v4372, -inf
    %4521 = vmax.xlane.f32.xlu0 %v4520
    %v4522 = vpop.xlane.xlu0 %4521
    %v4523 = vsel %vm281, %v4373, -inf
    %4524 = vmax.xlane.f32.xlu0 %v4523
    %v4525 = vpop.xlane.xlu0 %4524
    %v4526 = vsel %vm281, %v4374, -inf
    %4527 = vmax.xlane.f32.xlu0 %v4526
    %v4528 = vpop.xlane.xlu0 %4527
    %v4529 = vsel %vm281, %v4375, -inf
    %4530 = vmax.xlane.f32.xlu0 %v4529
    %v4531 = vpop.xlane.xlu0 %4530
    %v4532 = vsel %vm281, %v4376, -inf
    %4533 = vmax.xlane.f32.xlu0 %v4532
    %v4534 = vpop.xlane.xlu0 %4533
    %v4535 = vsel %vm281, %v4377, -inf
    %4536 = vmax.xlane.f32.xlu0 %v4535
    %v4537 = vpop.xlane.xlu0 %4536
    %v4538 = vsel %vm281, %v4378, -inf
    %4539 = vmax.xlane.f32.xlu0 %v4538
    %v4540 = vpop.xlane.xlu0 %4539
    %v4541 = vsel %vm281, %v4379, -inf
    %4542 = vmax.xlane.f32.xlu0 %v4541
    %v4543 = vpop.xlane.xlu0 %4542
    %v4544 = vsel %vm281, %v4380, -inf
    %4545 = vmax.xlane.f32.xlu0 %v4544
    %v4546 = vpop.xlane.xlu0 %4545
    %v4547 = vsel %vm281, %v4381, -inf
    %4548 = vmax.xlane.f32.xlu0 %v4547
    %v4549 = vpop.xlane.xlu0 %4548
    %v4550 = vsel %vm281, %v4382, -inf
    %4551 = vmax.xlane.f32.xlu0 %v4550
    %v4552 = vpop.xlane.xlu0 %4551
    %v4553 = vsel %vm281, %v4383, -inf
    %4554 = vmax.xlane.f32.xlu0 %v4553
    %v4555 = vpop.xlane.xlu0 %4554
    %v4556 = vsel %vm281, %v4384, -inf
    %4557 = vmax.xlane.f32.xlu0 %v4556
    %v4558 = vpop.xlane.xlu0 %4557
    %v4559 = vsel %vm281, %v4385, -inf
    %4560 = vmax.xlane.f32.xlu0 %v4559
    %v4561 = vpop.xlane.xlu0 %4560
    %v4562 = vsel %vm281, %v4386, -inf
    %4563 = vmax.xlane.f32.xlu0 %v4562
    %v4564 = vpop.xlane.xlu0 %4563
    %v4565 = vsel %vm281, %v4387, -inf
    %4566 = vmax.xlane.f32.xlu0 %v4565
    %v4567 = vpop.xlane.xlu0 %4566
    %v4568 = vsel %vm281, %v4388, -inf
    %4569 = vmax.xlane.f32.xlu0 %v4568
    %v4570 = vpop.xlane.xlu0 %4569
    %v4571 = vsel %vm281, %v4389, -inf
    %4572 = vmax.xlane.f32.xlu0 %v4571
    %v4573 = vpop.xlane.xlu0 %4572
    %v4574 = vsel %vm281, %v4390, -inf
    %4575 = vmax.xlane.f32.xlu0 %v4574
    %v4576 = vpop.xlane.xlu0 %4575
    %v4577 = vsel %vm281, %v4391, -inf
    %4578 = vmax.xlane.f32.xlu0 %v4577
    %v4579 = vpop.xlane.xlu0 %4578
    %v4580 = vsel %vm281, %v4392, -inf
    %4581 = vmax.xlane.f32.xlu0 %v4580
    %v4582 = vpop.xlane.xlu0 %4581
    %v4583 = vsel %vm281, %v4393, -inf
    %4584 = vmax.xlane.f32.xlu0 %v4583
    %v4585 = vpop.xlane.xlu0 %4584
    %v4586 = vsub.f32 %v4330, %v4396
    %v4587 = vsub.f32 %v4331, %v4399
    %v4588 = vsub.f32 %v4332, %v4402
    %v4589 = vsub.f32 %v4333, %v4405
    %v4590 = vsub.f32 %v4334, %v4408
    %v4591 = vsub.f32 %v4335, %v4411
    %v4592 = vsub.f32 %v4336, %v4414
    %v4593 = vsub.f32 %v4337, %v4417
    %v4594 = vsub.f32 %v4338, %v4420
    %v4595 = vsub.f32 %v4339, %v4423
    %v4596 = vsub.f32 %v4340, %v4426
    %v4597 = vsub.f32 %v4341, %v4429
    %v4598 = vsub.f32 %v4342, %v4432
    %v4599 = vsub.f32 %v4343, %v4435
    %v4600 = vsub.f32 %v4344, %v4438
    %v4601 = vsub.f32 %v4345, %v4441
    %v4602 = vsub.f32 %v4346, %v4444
    %v4603 = vsub.f32 %v4347, %v4447
    %v4604 = vsub.f32 %v4348, %v4450
    %v4605 = vsub.f32 %v4349, %v4453
    %v4606 = vsub.f32 %v4350, %v4456
    %v4607 = vsub.f32 %v4351, %v4459
    %v4608 = vsub.f32 %v4352, %v4462
    %v4609 = vsub.f32 %v4353, %v4465
    %v4610 = vsub.f32 %v4354, %v4468
    %v4611 = vsub.f32 %v4355, %v4471
    %v4612 = vsub.f32 %v4356, %v4474
    %v4613 = vsub.f32 %v4357, %v4477
    %v4614 = vsub.f32 %v4358, %v4480
    %v4615 = vsub.f32 %v4359, %v4483
    %v4616 = vsub.f32 %v4360, %v4486
    %v4617 = vsub.f32 %v4361, %v4489
    %v4618 = vsub.f32 %v4362, %v4492
    %v4619 = vsub.f32 %v4363, %v4495
    %v4620 = vsub.f32 %v4364, %v4498
    %v4621 = vsub.f32 %v4365, %v4501
    %v4622 = vsub.f32 %v4366, %v4504
    %v4623 = vsub.f32 %v4367, %v4507
    %v4624 = vsub.f32 %v4368, %v4510
    %v4625 = vsub.f32 %v4369, %v4513
    %v4626 = vsub.f32 %v4370, %v4516
    %v4627 = vsub.f32 %v4371, %v4519
    %v4628 = vsub.f32 %v4372, %v4522
    %v4629 = vsub.f32 %v4373, %v4525
    %v4630 = vsub.f32 %v4374, %v4528
    %v4631 = vsub.f32 %v4375, %v4531
    %v4632 = vsub.f32 %v4376, %v4534
    %v4633 = vsub.f32 %v4377, %v4537
    %v4634 = vsub.f32 %v4378, %v4540
    %v4635 = vsub.f32 %v4379, %v4543
    %v4636 = vsub.f32 %v4380, %v4546
    %v4637 = vsub.f32 %v4381, %v4549
    %v4638 = vsub.f32 %v4382, %v4552
    %v4639 = vsub.f32 %v4383, %v4555
    %v4640 = vsub.f32 %v4384, %v4558
    %v4641 = vsub.f32 %v4385, %v4561
    %v4642 = vsub.f32 %v4386, %v4564
    %v4643 = vsub.f32 %v4387, %v4567
    %v4644 = vsub.f32 %v4388, %v4570
    %v4645 = vsub.f32 %v4389, %v4573
    %v4646 = vsub.f32 %v4390, %v4576
    %v4647 = vsub.f32 %v4391, %v4579
    %v4648 = vsub.f32 %v4392, %v4582
    %v4649 = vsub.f32 %v4393, %v4585
    %v4650 = vmul.f32 %v4586, 1.442695
    %v4651 = vpow.pop %v4650
    %v4652 = vmul.f32 %v4587, 1.442695
    %v4653 = vpow.pop %v4652
    %v4654 = vmul.f32 %v4588, 1.442695
    %v4655 = vpow.pop %v4654
    %v4656 = vmul.f32 %v4589, 1.442695
    %v4657 = vpow.pop %v4656
    %v4658 = vmul.f32 %v4590, 1.442695
    %v4659 = vpow.pop %v4658
    %v4660 = vmul.f32 %v4591, 1.442695
    %v4661 = vpow.pop %v4660
    %v4662 = vmul.f32 %v4592, 1.442695
    %v4663 = vpow.pop %v4662
    %v4664 = vmul.f32 %v4593, 1.442695
    %v4665 = vpow.pop %v4664
    %v4666 = vmul.f32 %v4594, 1.442695
    %v4667 = vpow.pop %v4666
    %v4668 = vmul.f32 %v4595, 1.442695
    %v4669 = vpow.pop %v4668
    %v4670 = vmul.f32 %v4596, 1.442695
    %v4671 = vpow.pop %v4670
    %v4672 = vmul.f32 %v4597, 1.442695
    %v4673 = vpow.pop %v4672
    %v4674 = vmul.f32 %v4598, 1.442695
    %v4675 = vpow.pop %v4674
    %v4676 = vmul.f32 %v4599, 1.442695
    %v4677 = vpow.pop %v4676
    %v4678 = vmul.f32 %v4600, 1.442695
    %v4679 = vpow.pop %v4678
    %v4680 = vmul.f32 %v4601, 1.442695
    %v4681 = vpow.pop %v4680
    %v4682 = vmul.f32 %v4602, 1.442695
    %v4683 = vpow.pop %v4682
    %v4684 = vmul.f32 %v4603, 1.442695
    %v4685 = vpow.pop %v4684
    %v4686 = vmul.f32 %v4604, 1.442695
    %v4687 = vpow.pop %v4686
    %v4688 = vmul.f32 %v4605, 1.442695
    %v4689 = vpow.pop %v4688
    %v4690 = vmul.f32 %v4606, 1.442695
    %v4691 = vpow.pop %v4690
    %v4692 = vmul.f32 %v4607, 1.442695
    %v4693 = vpow.pop %v4692
    %v4694 = vmul.f32 %v4608, 1.442695
    %v4695 = vpow.pop %v4694
    %v4696 = vmul.f32 %v4609, 1.442695
    %v4697 = vpow.pop %v4696
    %v4698 = vmul.f32 %v4610, 1.442695
    %v4699 = vpow.pop %v4698
    %v4700 = vmul.f32 %v4611, 1.442695
    %v4701 = vpow.pop %v4700
    %v4702 = vmul.f32 %v4612, 1.442695
    %v4703 = vpow.pop %v4702
    %v4704 = vmul.f32 %v4613, 1.442695
    %v4705 = vpow.pop %v4704
    %v4706 = vmul.f32 %v4614, 1.442695
    %v4707 = vpow.pop %v4706
    %v4708 = vmul.f32 %v4615, 1.442695
    %v4709 = vpow.pop %v4708
    %v4710 = vmul.f32 %v4616, 1.442695
    %v4711 = vpow.pop %v4710
    %v4712 = vmul.f32 %v4617, 1.442695
    %v4713 = vpow.pop %v4712
    %v4714 = vmul.f32 %v4618, 1.442695
    %v4715 = vpow.pop %v4714
    %v4716 = vmul.f32 %v4619, 1.442695
    %v4717 = vpow.pop %v4716
    %v4718 = vmul.f32 %v4620, 1.442695
    %v4719 = vpow.pop %v4718
    %v4720 = vmul.f32 %v4621, 1.442695
    %v4721 = vpow.pop %v4720
    %v4722 = vmul.f32 %v4622, 1.442695
    %v4723 = vpow.pop %v4722
    %v4724 = vmul.f32 %v4623, 1.442695
    %v4725 = vpow.pop %v4724
    %v4726 = vmul.f32 %v4624, 1.442695
    %v4727 = vpow.pop %v4726
    %v4728 = vmul.f32 %v4625, 1.442695
    %v4729 = vpow.pop %v4728
    %v4730 = vmul.f32 %v4626, 1.442695
    %v4731 = vpow.pop %v4730
    %v4732 = vmul.f32 %v4627, 1.442695
    %v4733 = vpow.pop %v4732
    %v4734 = vmul.f32 %v4628, 1.442695
    %v4735 = vpow.pop %v4734
    %v4736 = vmul.f32 %v4629, 1.442695
    %v4737 = vpow.pop %v4736
    %v4738 = vmul.f32 %v4630, 1.442695
    %v4739 = vpow.pop %v4738
    %v4740 = vmul.f32 %v4631, 1.442695
    %v4741 = vpow.pop %v4740
    %v4742 = vmul.f32 %v4632, 1.442695
    %v4743 = vpow.pop %v4742
    %v4744 = vmul.f32 %v4633, 1.442695
    %v4745 = vpow.pop %v4744
    %v4746 = vmul.f32 %v4634, 1.442695
    %v4747 = vpow.pop %v4746
    %v4748 = vmul.f32 %v4635, 1.442695
    %v4749 = vpow.pop %v4748
    %v4750 = vmul.f32 %v4636, 1.442695
    %v4751 = vpow.pop %v4750
    %v4752 = vmul.f32 %v4637, 1.442695
    %v4753 = vpow.pop %v4752
    %v4754 = vmul.f32 %v4638, 1.442695
    %v4755 = vpow.pop %v4754
    %v4756 = vmul.f32 %v4639, 1.442695
    %v4757 = vpow.pop %v4756
    %v4758 = vmul.f32 %v4640, 1.442695
    %v4759 = vpow.pop %v4758
    %v4760 = vmul.f32 %v4641, 1.442695
    %v4761 = vpow.pop %v4760
    %v4762 = vmul.f32 %v4642, 1.442695
    %v4763 = vpow.pop %v4762
    %v4764 = vmul.f32 %v4643, 1.442695
    %v4765 = vpow.pop %v4764
    %v4766 = vmul.f32 %v4644, 1.442695
    %v4767 = vpow.pop %v4766
    %v4768 = vmul.f32 %v4645, 1.442695
    %v4769 = vpow.pop %v4768
    %v4770 = vmul.f32 %v4646, 1.442695
    %v4771 = vpow.pop %v4770
    %v4772 = vmul.f32 %v4647, 1.442695
    %v4773 = vpow.pop %v4772
    %v4774 = vmul.f32 %v4648, 1.442695
    %v4775 = vpow.pop %v4774
    %v4776 = vmul.f32 %v4649, 1.442695
    %v4777 = vpow.pop %v4776
    %v4778 = vsel %vm281, %v4651, 0.0
    %4779 = vadd.xlane.f32.xlu0 %v4778
    %v4780 = vpop.xlane.xlu0 %4779
    %v4781 = vsel %vm281, %v4653, 0.0
    %4782 = vadd.xlane.f32.xlu0 %v4781
    %v4783 = vpop.xlane.xlu0 %4782
    %v4784 = vsel %vm281, %v4655, 0.0
    %4785 = vadd.xlane.f32.xlu0 %v4784
    %v4786 = vpop.xlane.xlu0 %4785
    %v4787 = vsel %vm281, %v4657, 0.0
    %4788 = vadd.xlane.f32.xlu0 %v4787
    %v4789 = vpop.xlane.xlu0 %4788
    %v4790 = vsel %vm281, %v4659, 0.0
    %4791 = vadd.xlane.f32.xlu0 %v4790
    %v4792 = vpop.xlane.xlu0 %4791
    %v4793 = vsel %vm281, %v4661, 0.0
    %4794 = vadd.xlane.f32.xlu0 %v4793
    %v4795 = vpop.xlane.xlu0 %4794
    %v4796 = vsel %vm281, %v4663, 0.0
    %4797 = vadd.xlane.f32.xlu0 %v4796
    %v4798 = vpop.xlane.xlu0 %4797
    %v4799 = vsel %vm281, %v4665, 0.0
    %4800 = vadd.xlane.f32.xlu0 %v4799
    %v4801 = vpop.xlane.xlu0 %4800
    %v4802 = vsel %vm281, %v4667, 0.0
    %4803 = vadd.xlane.f32.xlu0 %v4802
    %v4804 = vpop.xlane.xlu0 %4803
    %v4805 = vsel %vm281, %v4669, 0.0
    %4806 = vadd.xlane.f32.xlu0 %v4805
    %v4807 = vpop.xlane.xlu0 %4806
    %v4808 = vsel %vm281, %v4671, 0.0
    %4809 = vadd.xlane.f32.xlu0 %v4808
    %v4810 = vpop.xlane.xlu0 %4809
    %v4811 = vsel %vm281, %v4673, 0.0
    %4812 = vadd.xlane.f32.xlu0 %v4811
    %v4813 = vpop.xlane.xlu0 %4812
    %v4814 = vsel %vm281, %v4675, 0.0
    %4815 = vadd.xlane.f32.xlu0 %v4814
    %v4816 = vpop.xlane.xlu0 %4815
    %v4817 = vsel %vm281, %v4677, 0.0
    %4818 = vadd.xlane.f32.xlu0 %v4817
    %v4819 = vpop.xlane.xlu0 %4818
    %v4820 = vsel %vm281, %v4679, 0.0
    %4821 = vadd.xlane.f32.xlu0 %v4820
    %v4822 = vpop.xlane.xlu0 %4821
    %v4823 = vsel %vm281, %v4681, 0.0
    %4824 = vadd.xlane.f32.xlu0 %v4823
    %v4825 = vpop.xlane.xlu0 %4824
    %v4826 = vsel %vm281, %v4683, 0.0
    %4827 = vadd.xlane.f32.xlu0 %v4826
    %v4828 = vpop.xlane.xlu0 %4827
    %v4829 = vsel %vm281, %v4685, 0.0
    %4830 = vadd.xlane.f32.xlu0 %v4829
    %v4831 = vpop.xlane.xlu0 %4830
    %v4832 = vsel %vm281, %v4687, 0.0
    %4833 = vadd.xlane.f32.xlu0 %v4832
    %v4834 = vpop.xlane.xlu0 %4833
    %v4835 = vsel %vm281, %v4689, 0.0
    %4836 = vadd.xlane.f32.xlu0 %v4835
    %v4837 = vpop.xlane.xlu0 %4836
    %v4838 = vsel %vm281, %v4691, 0.0
    %4839 = vadd.xlane.f32.xlu0 %v4838
    %v4840 = vpop.xlane.xlu0 %4839
    %v4841 = vsel %vm281, %v4693, 0.0
    %4842 = vadd.xlane.f32.xlu0 %v4841
    %v4843 = vpop.xlane.xlu0 %4842
    %v4844 = vsel %vm281, %v4695, 0.0
    %4845 = vadd.xlane.f32.xlu0 %v4844
    %v4846 = vpop.xlane.xlu0 %4845
    %v4847 = vsel %vm281, %v4697, 0.0
    %4848 = vadd.xlane.f32.xlu0 %v4847
    %v4849 = vpop.xlane.xlu0 %4848
    %v4850 = vsel %vm281, %v4699, 0.0
    %4851 = vadd.xlane.f32.xlu0 %v4850
    %v4852 = vpop.xlane.xlu0 %4851
    %v4853 = vsel %vm281, %v4701, 0.0
    %4854 = vadd.xlane.f32.xlu0 %v4853
    %v4855 = vpop.xlane.xlu0 %4854
    %v4856 = vsel %vm281, %v4703, 0.0
    %4857 = vadd.xlane.f32.xlu0 %v4856
    %v4858 = vpop.xlane.xlu0 %4857
    %v4859 = vsel %vm281, %v4705, 0.0
    %4860 = vadd.xlane.f32.xlu0 %v4859
    %v4861 = vpop.xlane.xlu0 %4860
    %v4862 = vsel %vm281, %v4707, 0.0
    %4863 = vadd.xlane.f32.xlu0 %v4862
    %v4864 = vpop.xlane.xlu0 %4863
    %v4865 = vsel %vm281, %v4709, 0.0
    %4866 = vadd.xlane.f32.xlu0 %v4865
    %v4867 = vpop.xlane.xlu0 %4866
    %v4868 = vsel %vm281, %v4711, 0.0
    %4869 = vadd.xlane.f32.xlu0 %v4868
    %v4870 = vpop.xlane.xlu0 %4869
    %v4871 = vsel %vm281, %v4713, 0.0
    %4872 = vadd.xlane.f32.xlu0 %v4871
    %v4873 = vpop.xlane.xlu0 %4872
    %v4874 = vsel %vm281, %v4715, 0.0
    %4875 = vadd.xlane.f32.xlu0 %v4874
    %v4876 = vpop.xlane.xlu0 %4875
    %v4877 = vsel %vm281, %v4717, 0.0
    %4878 = vadd.xlane.f32.xlu0 %v4877
    %v4879 = vpop.xlane.xlu0 %4878
    %v4880 = vsel %vm281, %v4719, 0.0
    %4881 = vadd.xlane.f32.xlu0 %v4880
    %v4882 = vpop.xlane.xlu0 %4881
    %v4883 = vsel %vm281, %v4721, 0.0
    %4884 = vadd.xlane.f32.xlu0 %v4883
    %v4885 = vpop.xlane.xlu0 %4884
    %v4886 = vsel %vm281, %v4723, 0.0
    %4887 = vadd.xlane.f32.xlu0 %v4886
    %v4888 = vpop.xlane.xlu0 %4887
    %v4889 = vsel %vm281, %v4725, 0.0
    %4890 = vadd.xlane.f32.xlu0 %v4889
    %v4891 = vpop.xlane.xlu0 %4890
    %v4892 = vsel %vm281, %v4727, 0.0
    %4893 = vadd.xlane.f32.xlu0 %v4892
    %v4894 = vpop.xlane.xlu0 %4893
    %v4895 = vsel %vm281, %v4729, 0.0
    %4896 = vadd.xlane.f32.xlu0 %v4895
    %v4897 = vpop.xlane.xlu0 %4896
    %v4898 = vsel %vm281, %v4731, 0.0
    %4899 = vadd.xlane.f32.xlu0 %v4898
    %v4900 = vpop.xlane.xlu0 %4899
    %v4901 = vsel %vm281, %v4733, 0.0
    %4902 = vadd.xlane.f32.xlu0 %v4901
    %v4903 = vpop.xlane.xlu0 %4902
    %v4904 = vsel %vm281, %v4735, 0.0
    %4905 = vadd.xlane.f32.xlu0 %v4904
    %v4906 = vpop.xlane.xlu0 %4905
    %v4907 = vsel %vm281, %v4737, 0.0
    %4908 = vadd.xlane.f32.xlu0 %v4907
    %v4909 = vpop.xlane.xlu0 %4908
    %v4910 = vsel %vm281, %v4739, 0.0
    %4911 = vadd.xlane.f32.xlu0 %v4910
    %v4912 = vpop.xlane.xlu0 %4911
    %v4913 = vsel %vm281, %v4741, 0.0
    %4914 = vadd.xlane.f32.xlu0 %v4913
    %v4915 = vpop.xlane.xlu0 %4914
    %v4916 = vsel %vm281, %v4743, 0.0
    %4917 = vadd.xlane.f32.xlu0 %v4916
    %v4918 = vpop.xlane.xlu0 %4917
    %v4919 = vsel %vm281, %v4745, 0.0
    %4920 = vadd.xlane.f32.xlu0 %v4919
    %v4921 = vpop.xlane.xlu0 %4920
    %v4922 = vsel %vm281, %v4747, 0.0
    %4923 = vadd.xlane.f32.xlu0 %v4922
    %v4924 = vpop.xlane.xlu0 %4923
    %v4925 = vsel %vm281, %v4749, 0.0
    %4926 = vadd.xlane.f32.xlu0 %v4925
    %v4927 = vpop.xlane.xlu0 %4926
    %v4928 = vsel %vm281, %v4751, 0.0
    %4929 = vadd.xlane.f32.xlu0 %v4928
    %v4930 = vpop.xlane.xlu0 %4929
    %v4931 = vsel %vm281, %v4753, 0.0
    %4932 = vadd.xlane.f32.xlu0 %v4931
    %v4933 = vpop.xlane.xlu0 %4932
    %v4934 = vsel %vm281, %v4755, 0.0
    %4935 = vadd.xlane.f32.xlu0 %v4934
    %v4936 = vpop.xlane.xlu0 %4935
    %v4937 = vsel %vm281, %v4757, 0.0
    %4938 = vadd.xlane.f32.xlu0 %v4937
    %v4939 = vpop.xlane.xlu0 %4938
    %v4940 = vsel %vm281, %v4759, 0.0
    %4941 = vadd.xlane.f32.xlu0 %v4940
    %v4942 = vpop.xlane.xlu0 %4941
    %v4943 = vsel %vm281, %v4761, 0.0
    %4944 = vadd.xlane.f32.xlu0 %v4943
    %v4945 = vpop.xlane.xlu0 %4944
    %v4946 = vsel %vm281, %v4763, 0.0
    %4947 = vadd.xlane.f32.xlu0 %v4946
    %v4948 = vpop.xlane.xlu0 %4947
    %v4949 = vsel %vm281, %v4765, 0.0
    %4950 = vadd.xlane.f32.xlu0 %v4949
    %v4951 = vpop.xlane.xlu0 %4950
    %v4952 = vsel %vm281, %v4767, 0.0
    %4953 = vadd.xlane.f32.xlu0 %v4952
    %v4954 = vpop.xlane.xlu0 %4953
    %v4955 = vsel %vm281, %v4769, 0.0
    %4956 = vadd.xlane.f32.xlu0 %v4955
    %v4957 = vpop.xlane.xlu0 %4956
    %v4958 = vsel %vm281, %v4771, 0.0
    %4959 = vadd.xlane.f32.xlu0 %v4958
    %v4960 = vpop.xlane.xlu0 %4959
    %v4961 = vsel %vm281, %v4773, 0.0
    %4962 = vadd.xlane.f32.xlu0 %v4961
    %v4963 = vpop.xlane.xlu0 %4962
    %v4964 = vsel %vm281, %v4775, 0.0
    %4965 = vadd.xlane.f32.xlu0 %v4964
    %v4966 = vpop.xlane.xlu0 %4965
    %v4967 = vsel %vm281, %v4777, 0.0
    %4968 = vadd.xlane.f32.xlu0 %v4967
    %v4969 = vpop.xlane.xlu0 %4968
    %v4970 = vrcp.pop %v4780
    %v4971 = vrcp.pop %v4783
    %v4972 = vrcp.pop %v4786
    %v4973 = vrcp.pop %v4789
    %v4974 = vrcp.pop %v4792
    %v4975 = vrcp.pop %v4795
    %v4976 = vrcp.pop %v4798
    %v4977 = vrcp.pop %v4801
    %v4978 = vrcp.pop %v4804
    %v4979 = vrcp.pop %v4807
    %v4980 = vrcp.pop %v4810
    %v4981 = vrcp.pop %v4813
    %v4982 = vrcp.pop %v4816
    %v4983 = vrcp.pop %v4819
    %v4984 = vrcp.pop %v4822
    %v4985 = vrcp.pop %v4825
    %v4986 = vrcp.pop %v4828
    %v4987 = vrcp.pop %v4831
    %v4988 = vrcp.pop %v4834
    %v4989 = vrcp.pop %v4837
    %v4990 = vrcp.pop %v4840
    %v4991 = vrcp.pop %v4843
    %v4992 = vrcp.pop %v4846
    %v4993 = vrcp.pop %v4849
    %v4994 = vrcp.pop %v4852
    %v4995 = vrcp.pop %v4855
    %v4996 = vrcp.pop %v4858
    %v4997 = vrcp.pop %v4861
    %v4998 = vrcp.pop %v4864
    %v4999 = vrcp.pop %v4867
    %v5000 = vrcp.pop %v4870
    %v5001 = vrcp.pop %v4873
    %v5002 = vrcp.pop %v4876
    %v5003 = vrcp.pop %v4879
    %v5004 = vrcp.pop %v4882
    %v5005 = vrcp.pop %v4885
    %v5006 = vrcp.pop %v4888
    %v5007 = vrcp.pop %v4891
    %v5008 = vrcp.pop %v4894
    %v5009 = vrcp.pop %v4897
    %v5010 = vrcp.pop %v4900
    %v5011 = vrcp.pop %v4903
    %v5012 = vrcp.pop %v4906
    %v5013 = vrcp.pop %v4909
    %v5014 = vrcp.pop %v4912
    %v5015 = vrcp.pop %v4915
    %v5016 = vrcp.pop %v4918
    %v5017 = vrcp.pop %v4921
    %v5018 = vrcp.pop %v4924
    %v5019 = vrcp.pop %v4927
    %v5020 = vrcp.pop %v4930
    %v5021 = vrcp.pop %v4933
    %v5022 = vrcp.pop %v4936
    %v5023 = vrcp.pop %v4939
    %v5024 = vrcp.pop %v4942
    %v5025 = vrcp.pop %v4945
    %v5026 = vrcp.pop %v4948
    %v5027 = vrcp.pop %v4951
    %v5028 = vrcp.pop %v4954
    %v5029 = vrcp.pop %v4957
    %v5030 = vrcp.pop %v4960
    %v5031 = vrcp.pop %v4963
    %v5032 = vrcp.pop %v4966
    %v5033 = vrcp.pop %v4969
    %v5034 = vmul.f32 %v4651, %v4970
    %v5035 = vmul.f32 %v4653, %v4971
    %v5036 = vmul.f32 %v4655, %v4972
    %v5037 = vmul.f32 %v4657, %v4973
    %v5038 = vmul.f32 %v4659, %v4974
    %v5039 = vmul.f32 %v4661, %v4975
    %v5040 = vmul.f32 %v4663, %v4976
    %v5041 = vmul.f32 %v4665, %v4977
    %v5042 = vmul.f32 %v4667, %v4978
    %v5043 = vmul.f32 %v4669, %v4979
    %v5044 = vmul.f32 %v4671, %v4980
    %v5045 = vmul.f32 %v4673, %v4981
    %v5046 = vmul.f32 %v4675, %v4982
    %v5047 = vmul.f32 %v4677, %v4983
    %v5048 = vmul.f32 %v4679, %v4984
    %v5049 = vmul.f32 %v4681, %v4985
    %v5050 = vmul.f32 %v4683, %v4986
    %v5051 = vmul.f32 %v4685, %v4987
    %v5052 = vmul.f32 %v4687, %v4988
    %v5053 = vmul.f32 %v4689, %v4989
    %v5054 = vmul.f32 %v4691, %v4990
    %v5055 = vmul.f32 %v4693, %v4991
    %v5056 = vmul.f32 %v4695, %v4992
    %v5057 = vmul.f32 %v4697, %v4993
    %v5058 = vmul.f32 %v4699, %v4994
    %v5059 = vmul.f32 %v4701, %v4995
    %v5060 = vmul.f32 %v4703, %v4996
    %v5061 = vmul.f32 %v4705, %v4997
    %v5062 = vmul.f32 %v4707, %v4998
    %v5063 = vmul.f32 %v4709, %v4999
    %v5064 = vmul.f32 %v4711, %v5000
    %v5065 = vmul.f32 %v4713, %v5001
    %v5066 = vmul.f32 %v4715, %v5002
    %v5067 = vmul.f32 %v4717, %v5003
    %v5068 = vmul.f32 %v4719, %v5004
    %v5069 = vmul.f32 %v4721, %v5005
    %v5070 = vmul.f32 %v4723, %v5006
    %v5071 = vmul.f32 %v4725, %v5007
    %v5072 = vmul.f32 %v4727, %v5008
    %v5073 = vmul.f32 %v4729, %v5009
    %v5074 = vmul.f32 %v4731, %v5010
    %v5075 = vmul.f32 %v4733, %v5011
    %v5076 = vmul.f32 %v4735, %v5012
    %v5077 = vmul.f32 %v4737, %v5013
    %v5078 = vmul.f32 %v4739, %v5014
    %v5079 = vmul.f32 %v4741, %v5015
    %v5080 = vmul.f32 %v4743, %v5016
    %v5081 = vmul.f32 %v4745, %v5017
    %v5082 = vmul.f32 %v4747, %v5018
    %v5083 = vmul.f32 %v4749, %v5019
    %v5084 = vmul.f32 %v4751, %v5020
    %v5085 = vmul.f32 %v4753, %v5021
    %v5086 = vmul.f32 %v4755, %v5022
    %v5087 = vmul.f32 %v4757, %v5023
    %v5088 = vmul.f32 %v4759, %v5024
    %v5089 = vmul.f32 %v4761, %v5025
    %v5090 = vmul.f32 %v4763, %v5026
    %v5091 = vmul.f32 %v4765, %v5027
    %v5092 = vmul.f32 %v4767, %v5028
    %v5093 = vmul.f32 %v4769, %v5029
    %v5094 = vmul.f32 %v4771, %v5030
    %v5095 = vmul.f32 %v4773, %v5031
    %v5096 = vmul.f32 %v4775, %v5032
    %v5097 = vmul.f32 %v4777, %v5033
    %v5098 = vsel %vm281, %v5034, 0.0
    %v5099 = vrot.slane %v5098, 4
    %v5100 = vadd.f32 %v5098, %v5099
    %v5101 = vrot.slane %v5100, 2
    %v5102 = vadd.f32 %v5100, %v5101
    %v5103 = vrot.slane %v5102, 1
    %v5104 = vadd.f32 %v5102, %v5103
    %v5105 = vsel %vm281, %v5035, 0.0
    %v5106 = vrot.slane %v5105, 4
    %v5107 = vadd.f32 %v5105, %v5106
    %v5108 = vrot.slane %v5107, 2
    %v5109 = vadd.f32 %v5107, %v5108
    %v5110 = vrot.slane %v5109, 1
    %v5111 = vadd.f32 %v5109, %v5110
    %v5112 = vsel %vm281, %v5036, 0.0
    %v5113 = vrot.slane %v5112, 4
    %v5114 = vadd.f32 %v5112, %v5113
    %v5115 = vrot.slane %v5114, 2
    %v5116 = vadd.f32 %v5114, %v5115
    %v5117 = vrot.slane %v5116, 1
    %v5118 = vadd.f32 %v5116, %v5117
    %v5119 = vsel %vm281, %v5037, 0.0
    %v5120 = vrot.slane %v5119, 4
    %v5121 = vadd.f32 %v5119, %v5120
    %v5122 = vrot.slane %v5121, 2
    %v5123 = vadd.f32 %v5121, %v5122
    %v5124 = vrot.slane %v5123, 1
    %v5125 = vadd.f32 %v5123, %v5124
    %v5126 = vsel %vm281, %v5038, 0.0
    %v5127 = vrot.slane %v5126, 4
    %v5128 = vadd.f32 %v5126, %v5127
    %v5129 = vrot.slane %v5128, 2
    %v5130 = vadd.f32 %v5128, %v5129
    %v5131 = vrot.slane %v5130, 1
    %v5132 = vadd.f32 %v5130, %v5131
    %v5133 = vsel %vm281, %v5039, 0.0
    %v5134 = vrot.slane %v5133, 4
    %v5135 = vadd.f32 %v5133, %v5134
    %v5136 = vrot.slane %v5135, 2
    %v5137 = vadd.f32 %v5135, %v5136
    %v5138 = vrot.slane %v5137, 1
    %v5139 = vadd.f32 %v5137, %v5138
    %v5140 = vsel %vm281, %v5040, 0.0
    %v5141 = vrot.slane %v5140, 4
    %v5142 = vadd.f32 %v5140, %v5141
    %v5143 = vrot.slane %v5142, 2
    %v5144 = vadd.f32 %v5142, %v5143
    %v5145 = vrot.slane %v5144, 1
    %v5146 = vadd.f32 %v5144, %v5145
    %v5147 = vsel %vm281, %v5041, 0.0
    %v5148 = vrot.slane %v5147, 4
    %v5149 = vadd.f32 %v5147, %v5148
    %v5150 = vrot.slane %v5149, 2
    %v5151 = vadd.f32 %v5149, %v5150
    %v5152 = vrot.slane %v5151, 1
    %v5153 = vadd.f32 %v5151, %v5152
    %v5154 = vsel %vm281, %v5042, 0.0
    %v5155 = vrot.slane %v5154, 4
    %v5156 = vadd.f32 %v5154, %v5155
    %v5157 = vrot.slane %v5156, 2
    %v5158 = vadd.f32 %v5156, %v5157
    %v5159 = vrot.slane %v5158, 1
    %v5160 = vadd.f32 %v5158, %v5159
    %v5161 = vsel %vm281, %v5043, 0.0
    %v5162 = vrot.slane %v5161, 4
    %v5163 = vadd.f32 %v5161, %v5162
    %v5164 = vrot.slane %v5163, 2
    %v5165 = vadd.f32 %v5163, %v5164
    %v5166 = vrot.slane %v5165, 1
    %v5167 = vadd.f32 %v5165, %v5166
    %v5168 = vsel %vm281, %v5044, 0.0
    %v5169 = vrot.slane %v5168, 4
    %v5170 = vadd.f32 %v5168, %v5169
    %v5171 = vrot.slane %v5170, 2
    %v5172 = vadd.f32 %v5170, %v5171
    %v5173 = vrot.slane %v5172, 1
    %v5174 = vadd.f32 %v5172, %v5173
    %v5175 = vsel %vm281, %v5045, 0.0
    %v5176 = vrot.slane %v5175, 4
    %v5177 = vadd.f32 %v5175, %v5176
    %v5178 = vrot.slane %v5177, 2
    %v5179 = vadd.f32 %v5177, %v5178
    %v5180 = vrot.slane %v5179, 1
    %v5181 = vadd.f32 %v5179, %v5180
    %v5182 = vsel %vm281, %v5046, 0.0
    %v5183 = vrot.slane %v5182, 4
    %v5184 = vadd.f32 %v5182, %v5183
    %v5185 = vrot.slane %v5184, 2
    %v5186 = vadd.f32 %v5184, %v5185
    %v5187 = vrot.slane %v5186, 1
    %v5188 = vadd.f32 %v5186, %v5187
    %v5189 = vsel %vm281, %v5047, 0.0
    %v5190 = vrot.slane %v5189, 4
    %v5191 = vadd.f32 %v5189, %v5190
    %v5192 = vrot.slane %v5191, 2
    %v5193 = vadd.f32 %v5191, %v5192
    %v5194 = vrot.slane %v5193, 1
    %v5195 = vadd.f32 %v5193, %v5194
    %v5196 = vsel %vm281, %v5048, 0.0
    %v5197 = vrot.slane %v5196, 4
    %v5198 = vadd.f32 %v5196, %v5197
    %v5199 = vrot.slane %v5198, 2
    %v5200 = vadd.f32 %v5198, %v5199
    %v5201 = vrot.slane %v5200, 1
    %v5202 = vadd.f32 %v5200, %v5201
    %v5203 = vsel %vm281, %v5049, 0.0
    %v5204 = vrot.slane %v5203, 4
    %v5205 = vadd.f32 %v5203, %v5204
    %v5206 = vrot.slane %v5205, 2
    %v5207 = vadd.f32 %v5205, %v5206
    %v5208 = vrot.slane %v5207, 1
    %v5209 = vadd.f32 %v5207, %v5208
    %v5210 = vsel %vm281, %v5050, 0.0
    %v5211 = vrot.slane %v5210, 4
    %v5212 = vadd.f32 %v5210, %v5211
    %v5213 = vrot.slane %v5212, 2
    %v5214 = vadd.f32 %v5212, %v5213
    %v5215 = vrot.slane %v5214, 1
    %v5216 = vadd.f32 %v5214, %v5215
    %v5217 = vsel %vm281, %v5051, 0.0
    %v5218 = vrot.slane %v5217, 4
    %v5219 = vadd.f32 %v5217, %v5218
    %v5220 = vrot.slane %v5219, 2
    %v5221 = vadd.f32 %v5219, %v5220
    %v5222 = vrot.slane %v5221, 1
    %v5223 = vadd.f32 %v5221, %v5222
    %v5224 = vsel %vm281, %v5052, 0.0
    %v5225 = vrot.slane %v5224, 4
    %v5226 = vadd.f32 %v5224, %v5225
    %v5227 = vrot.slane %v5226, 2
    %v5228 = vadd.f32 %v5226, %v5227
    %v5229 = vrot.slane %v5228, 1
    %v5230 = vadd.f32 %v5228, %v5229
    %v5231 = vsel %vm281, %v5053, 0.0
    %v5232 = vrot.slane %v5231, 4
    %v5233 = vadd.f32 %v5231, %v5232
    %v5234 = vrot.slane %v5233, 2
    %v5235 = vadd.f32 %v5233, %v5234
    %v5236 = vrot.slane %v5235, 1
    %v5237 = vadd.f32 %v5235, %v5236
    %v5238 = vsel %vm281, %v5054, 0.0
    %v5239 = vrot.slane %v5238, 4
    %v5240 = vadd.f32 %v5238, %v5239
    %v5241 = vrot.slane %v5240, 2
    %v5242 = vadd.f32 %v5240, %v5241
    %v5243 = vrot.slane %v5242, 1
    %v5244 = vadd.f32 %v5242, %v5243
    %v5245 = vsel %vm281, %v5055, 0.0
    %v5246 = vrot.slane %v5245, 4
    %v5247 = vadd.f32 %v5245, %v5246
    %v5248 = vrot.slane %v5247, 2
    %v5249 = vadd.f32 %v5247, %v5248
    %v5250 = vrot.slane %v5249, 1
    %v5251 = vadd.f32 %v5249, %v5250
    %v5252 = vsel %vm281, %v5056, 0.0
    %v5253 = vrot.slane %v5252, 4
    %v5254 = vadd.f32 %v5252, %v5253
    %v5255 = vrot.slane %v5254, 2
    %v5256 = vadd.f32 %v5254, %v5255
    %v5257 = vrot.slane %v5256, 1
    %v5258 = vadd.f32 %v5256, %v5257
    %v5259 = vsel %vm281, %v5057, 0.0
    %v5260 = vrot.slane %v5259, 4
    %v5261 = vadd.f32 %v5259, %v5260
    %v5262 = vrot.slane %v5261, 2
    %v5263 = vadd.f32 %v5261, %v5262
    %v5264 = vrot.slane %v5263, 1
    %v5265 = vadd.f32 %v5263, %v5264
    %v5266 = vsel %vm281, %v5058, 0.0
    %v5267 = vrot.slane %v5266, 4
    %v5268 = vadd.f32 %v5266, %v5267
    %v5269 = vrot.slane %v5268, 2
    %v5270 = vadd.f32 %v5268, %v5269
    %v5271 = vrot.slane %v5270, 1
    %v5272 = vadd.f32 %v5270, %v5271
    %v5273 = vsel %vm281, %v5059, 0.0
    %v5274 = vrot.slane %v5273, 4
    %v5275 = vadd.f32 %v5273, %v5274
    %v5276 = vrot.slane %v5275, 2
    %v5277 = vadd.f32 %v5275, %v5276
    %v5278 = vrot.slane %v5277, 1
    %v5279 = vadd.f32 %v5277, %v5278
    %v5280 = vsel %vm281, %v5060, 0.0
    %v5281 = vrot.slane %v5280, 4
    %v5282 = vadd.f32 %v5280, %v5281
    %v5283 = vrot.slane %v5282, 2
    %v5284 = vadd.f32 %v5282, %v5283
    %v5285 = vrot.slane %v5284, 1
    %v5286 = vadd.f32 %v5284, %v5285
    %v5287 = vsel %vm281, %v5061, 0.0
    %v5288 = vrot.slane %v5287, 4
    %v5289 = vadd.f32 %v5287, %v5288
    %v5290 = vrot.slane %v5289, 2
    %v5291 = vadd.f32 %v5289, %v5290
    %v5292 = vrot.slane %v5291, 1
    %v5293 = vadd.f32 %v5291, %v5292
    %v5294 = vsel %vm281, %v5062, 0.0
    %v5295 = vrot.slane %v5294, 4
    %v5296 = vadd.f32 %v5294, %v5295
    %v5297 = vrot.slane %v5296, 2
    %v5298 = vadd.f32 %v5296, %v5297
    %v5299 = vrot.slane %v5298, 1
    %v5300 = vadd.f32 %v5298, %v5299
    %v5301 = vsel %vm281, %v5063, 0.0
    %v5302 = vrot.slane %v5301, 4
    %v5303 = vadd.f32 %v5301, %v5302
    %v5304 = vrot.slane %v5303, 2
    %v5305 = vadd.f32 %v5303, %v5304
    %v5306 = vrot.slane %v5305, 1
    %v5307 = vadd.f32 %v5305, %v5306
    %v5308 = vsel %vm281, %v5064, 0.0
    %v5309 = vrot.slane %v5308, 4
    %v5310 = vadd.f32 %v5308, %v5309
    %v5311 = vrot.slane %v5310, 2
    %v5312 = vadd.f32 %v5310, %v5311
    %v5313 = vrot.slane %v5312, 1
    %v5314 = vadd.f32 %v5312, %v5313
    %v5315 = vsel %vm281, %v5065, 0.0
    %v5316 = vrot.slane %v5315, 4
    %v5317 = vadd.f32 %v5315, %v5316
    %v5318 = vrot.slane %v5317, 2
    %v5319 = vadd.f32 %v5317, %v5318
    %v5320 = vrot.slane %v5319, 1
    %v5321 = vadd.f32 %v5319, %v5320
    %v5322 = vsel %vm281, %v5066, 0.0
    %v5323 = vrot.slane %v5322, 4
    %v5324 = vadd.f32 %v5322, %v5323
    %v5325 = vrot.slane %v5324, 2
    %v5326 = vadd.f32 %v5324, %v5325
    %v5327 = vrot.slane %v5326, 1
    %v5328 = vadd.f32 %v5326, %v5327
    %v5329 = vsel %vm281, %v5067, 0.0
    %v5330 = vrot.slane %v5329, 4
    %v5331 = vadd.f32 %v5329, %v5330
    %v5332 = vrot.slane %v5331, 2
    %v5333 = vadd.f32 %v5331, %v5332
    %v5334 = vrot.slane %v5333, 1
    %v5335 = vadd.f32 %v5333, %v5334
    %v5336 = vsel %vm281, %v5068, 0.0
    %v5337 = vrot.slane %v5336, 4
    %v5338 = vadd.f32 %v5336, %v5337
    %v5339 = vrot.slane %v5338, 2
    %v5340 = vadd.f32 %v5338, %v5339
    %v5341 = vrot.slane %v5340, 1
    %v5342 = vadd.f32 %v5340, %v5341
    %v5343 = vsel %vm281, %v5069, 0.0
    %v5344 = vrot.slane %v5343, 4
    %v5345 = vadd.f32 %v5343, %v5344
    %v5346 = vrot.slane %v5345, 2
    %v5347 = vadd.f32 %v5345, %v5346
    %v5348 = vrot.slane %v5347, 1
    %v5349 = vadd.f32 %v5347, %v5348
    %v5350 = vsel %vm281, %v5070, 0.0
    %v5351 = vrot.slane %v5350, 4
    %v5352 = vadd.f32 %v5350, %v5351
    %v5353 = vrot.slane %v5352, 2
    %v5354 = vadd.f32 %v5352, %v5353
    %v5355 = vrot.slane %v5354, 1
    %v5356 = vadd.f32 %v5354, %v5355
    %v5357 = vsel %vm281, %v5071, 0.0
    %v5358 = vrot.slane %v5357, 4
    %v5359 = vadd.f32 %v5357, %v5358
    %v5360 = vrot.slane %v5359, 2
    %v5361 = vadd.f32 %v5359, %v5360
    %v5362 = vrot.slane %v5361, 1
    %v5363 = vadd.f32 %v5361, %v5362
    %v5364 = vsel %vm281, %v5072, 0.0
    %v5365 = vrot.slane %v5364, 4
    %v5366 = vadd.f32 %v5364, %v5365
    %v5367 = vrot.slane %v5366, 2
    %v5368 = vadd.f32 %v5366, %v5367
    %v5369 = vrot.slane %v5368, 1
    %v5370 = vadd.f32 %v5368, %v5369
    %v5371 = vsel %vm281, %v5073, 0.0
    %v5372 = vrot.slane %v5371, 4
    %v5373 = vadd.f32 %v5371, %v5372
    %v5374 = vrot.slane %v5373, 2
    %v5375 = vadd.f32 %v5373, %v5374
    %v5376 = vrot.slane %v5375, 1
    %v5377 = vadd.f32 %v5375, %v5376
    %v5378 = vsel %vm281, %v5074, 0.0
    %v5379 = vrot.slane %v5378, 4
    %v5380 = vadd.f32 %v5378, %v5379
    %v5381 = vrot.slane %v5380, 2
    %v5382 = vadd.f32 %v5380, %v5381
    %v5383 = vrot.slane %v5382, 1
    %v5384 = vadd.f32 %v5382, %v5383
    %v5385 = vsel %vm281, %v5075, 0.0
    %v5386 = vrot.slane %v5385, 4
    %v5387 = vadd.f32 %v5385, %v5386
    %v5388 = vrot.slane %v5387, 2
    %v5389 = vadd.f32 %v5387, %v5388
    %v5390 = vrot.slane %v5389, 1
    %v5391 = vadd.f32 %v5389, %v5390
    %v5392 = vsel %vm281, %v5076, 0.0
    %v5393 = vrot.slane %v5392, 4
    %v5394 = vadd.f32 %v5392, %v5393
    %v5395 = vrot.slane %v5394, 2
    %v5396 = vadd.f32 %v5394, %v5395
    %v5397 = vrot.slane %v5396, 1
    %v5398 = vadd.f32 %v5396, %v5397
    %v5399 = vsel %vm281, %v5077, 0.0
    %v5400 = vrot.slane %v5399, 4
    %v5401 = vadd.f32 %v5399, %v5400
    %v5402 = vrot.slane %v5401, 2
    %v5403 = vadd.f32 %v5401, %v5402
    %v5404 = vrot.slane %v5403, 1
    %v5405 = vadd.f32 %v5403, %v5404
    %v5406 = vsel %vm281, %v5078, 0.0
    %v5407 = vrot.slane %v5406, 4
    %v5408 = vadd.f32 %v5406, %v5407
    %v5409 = vrot.slane %v5408, 2
    %v5410 = vadd.f32 %v5408, %v5409
    %v5411 = vrot.slane %v5410, 1
    %v5412 = vadd.f32 %v5410, %v5411
    %v5413 = vsel %vm281, %v5079, 0.0
    %v5414 = vrot.slane %v5413, 4
    %v5415 = vadd.f32 %v5413, %v5414
    %v5416 = vrot.slane %v5415, 2
    %v5417 = vadd.f32 %v5415, %v5416
    %v5418 = vrot.slane %v5417, 1
    %v5419 = vadd.f32 %v5417, %v5418
    %v5420 = vsel %vm281, %v5080, 0.0
    %v5421 = vrot.slane %v5420, 4
    %v5422 = vadd.f32 %v5420, %v5421
    %v5423 = vrot.slane %v5422, 2
    %v5424 = vadd.f32 %v5422, %v5423
    %v5425 = vrot.slane %v5424, 1
    %v5426 = vadd.f32 %v5424, %v5425
    %v5427 = vsel %vm281, %v5081, 0.0
    %v5428 = vrot.slane %v5427, 4
    %v5429 = vadd.f32 %v5427, %v5428
    %v5430 = vrot.slane %v5429, 2
    %v5431 = vadd.f32 %v5429, %v5430
    %v5432 = vrot.slane %v5431, 1
    %v5433 = vadd.f32 %v5431, %v5432
    %v5434 = vsel %vm281, %v5082, 0.0
    %v5435 = vrot.slane %v5434, 4
    %v5436 = vadd.f32 %v5434, %v5435
    %v5437 = vrot.slane %v5436, 2
    %v5438 = vadd.f32 %v5436, %v5437
    %v5439 = vrot.slane %v5438, 1
    %v5440 = vadd.f32 %v5438, %v5439
    %v5441 = vsel %vm281, %v5083, 0.0
    %v5442 = vrot.slane %v5441, 4
    %v5443 = vadd.f32 %v5441, %v5442
    %v5444 = vrot.slane %v5443, 2
    %v5445 = vadd.f32 %v5443, %v5444
    %v5446 = vrot.slane %v5445, 1
    %v5447 = vadd.f32 %v5445, %v5446
    %v5448 = vsel %vm281, %v5084, 0.0
    %v5449 = vrot.slane %v5448, 4
    %v5450 = vadd.f32 %v5448, %v5449
    %v5451 = vrot.slane %v5450, 2
    %v5452 = vadd.f32 %v5450, %v5451
    %v5453 = vrot.slane %v5452, 1
    %v5454 = vadd.f32 %v5452, %v5453
    %v5455 = vsel %vm281, %v5085, 0.0
    %v5456 = vrot.slane %v5455, 4
    %v5457 = vadd.f32 %v5455, %v5456
    %v5458 = vrot.slane %v5457, 2
    %v5459 = vadd.f32 %v5457, %v5458
    %v5460 = vrot.slane %v5459, 1
    %v5461 = vadd.f32 %v5459, %v5460
    %v5462 = vsel %vm281, %v5086, 0.0
    %v5463 = vrot.slane %v5462, 4
    %v5464 = vadd.f32 %v5462, %v5463
    %v5465 = vrot.slane %v5464, 2
    %v5466 = vadd.f32 %v5464, %v5465
    %v5467 = vrot.slane %v5466, 1
    %v5468 = vadd.f32 %v5466, %v5467
    %v5469 = vsel %vm281, %v5087, 0.0
    %v5470 = vrot.slane %v5469, 4
    %v5471 = vadd.f32 %v5469, %v5470
    %v5472 = vrot.slane %v5471, 2
    %v5473 = vadd.f32 %v5471, %v5472
    %v5474 = vrot.slane %v5473, 1
    %v5475 = vadd.f32 %v5473, %v5474
    %v5476 = vsel %vm281, %v5088, 0.0
    %v5477 = vrot.slane %v5476, 4
    %v5478 = vadd.f32 %v5476, %v5477
    %v5479 = vrot.slane %v5478, 2
    %v5480 = vadd.f32 %v5478, %v5479
    %v5481 = vrot.slane %v5480, 1
    %v5482 = vadd.f32 %v5480, %v5481
    %v5483 = vsel %vm281, %v5089, 0.0
    %v5484 = vrot.slane %v5483, 4
    %v5485 = vadd.f32 %v5483, %v5484
    %v5486 = vrot.slane %v5485, 2
    %v5487 = vadd.f32 %v5485, %v5486
    %v5488 = vrot.slane %v5487, 1
    %v5489 = vadd.f32 %v5487, %v5488
    %v5490 = vsel %vm281, %v5090, 0.0
    %v5491 = vrot.slane %v5490, 4
    %v5492 = vadd.f32 %v5490, %v5491
    %v5493 = vrot.slane %v5492, 2
    %v5494 = vadd.f32 %v5492, %v5493
    %v5495 = vrot.slane %v5494, 1
    %v5496 = vadd.f32 %v5494, %v5495
    %v5497 = vsel %vm281, %v5091, 0.0
    %v5498 = vrot.slane %v5497, 4
    %v5499 = vadd.f32 %v5497, %v5498
    %v5500 = vrot.slane %v5499, 2
    %v5501 = vadd.f32 %v5499, %v5500
    %v5502 = vrot.slane %v5501, 1
    %v5503 = vadd.f32 %v5501, %v5502
    %v5504 = vsel %vm281, %v5092, 0.0
    %v5505 = vrot.slane %v5504, 4
    %v5506 = vadd.f32 %v5504, %v5505
    %v5507 = vrot.slane %v5506, 2
    %v5508 = vadd.f32 %v5506, %v5507
    %v5509 = vrot.slane %v5508, 1
    %v5510 = vadd.f32 %v5508, %v5509
    %v5511 = vsel %vm281, %v5093, 0.0
    %v5512 = vrot.slane %v5511, 4
    %v5513 = vadd.f32 %v5511, %v5512
    %v5514 = vrot.slane %v5513, 2
    %v5515 = vadd.f32 %v5513, %v5514
    %v5516 = vrot.slane %v5515, 1
    %v5517 = vadd.f32 %v5515, %v5516
    %v5518 = vsel %vm281, %v5094, 0.0
    %v5519 = vrot.slane %v5518, 4
    %v5520 = vadd.f32 %v5518, %v5519
    %v5521 = vrot.slane %v5520, 2
    %v5522 = vadd.f32 %v5520, %v5521
    %v5523 = vrot.slane %v5522, 1
    %v5524 = vadd.f32 %v5522, %v5523
    %v5525 = vsel %vm281, %v5095, 0.0
    %v5526 = vrot.slane %v5525, 4
    %v5527 = vadd.f32 %v5525, %v5526
    %v5528 = vrot.slane %v5527, 2
    %v5529 = vadd.f32 %v5527, %v5528
    %v5530 = vrot.slane %v5529, 1
    %v5531 = vadd.f32 %v5529, %v5530
    %v5532 = vsel %vm281, %v5096, 0.0
    %v5533 = vrot.slane %v5532, 4
    %v5534 = vadd.f32 %v5532, %v5533
    %v5535 = vrot.slane %v5534, 2
    %v5536 = vadd.f32 %v5534, %v5535
    %v5537 = vrot.slane %v5536, 1
    %v5538 = vadd.f32 %v5536, %v5537
    %v5539 = vsel %vm281, %v5097, 0.0
    %v5540 = vrot.slane %v5539, 4
    %v5541 = vadd.f32 %v5539, %v5540
    %v5542 = vrot.slane %v5541, 2
    %v5543 = vadd.f32 %v5541, %v5542
    %v5544 = vrot.slane %v5543, 1
    %v5545 = vadd.f32 %v5543, %v5544
    %v5546 = vrcp.pop 8.0
    %v5547 = vmul.f32 %v5104, %v5546
    %v5548 = vmul.f32 %v5111, %v5546
    %v5549 = vmul.f32 %v5118, %v5546
    %v5550 = vmul.f32 %v5125, %v5546
    %v5551 = vmul.f32 %v5132, %v5546
    %v5552 = vmul.f32 %v5139, %v5546
    %v5553 = vmul.f32 %v5146, %v5546
    %v5554 = vmul.f32 %v5153, %v5546
    %v5555 = vmul.f32 %v5160, %v5546
    %v5556 = vmul.f32 %v5167, %v5546
    %v5557 = vmul.f32 %v5174, %v5546
    %v5558 = vmul.f32 %v5181, %v5546
    %v5559 = vmul.f32 %v5188, %v5546
    %v5560 = vmul.f32 %v5195, %v5546
    %v5561 = vmul.f32 %v5202, %v5546
    %v5562 = vmul.f32 %v5209, %v5546
    %v5563 = vmul.f32 %v5216, %v5546
    %v5564 = vmul.f32 %v5223, %v5546
    %v5565 = vmul.f32 %v5230, %v5546
    %v5566 = vmul.f32 %v5237, %v5546
    %v5567 = vmul.f32 %v5244, %v5546
    %v5568 = vmul.f32 %v5251, %v5546
    %v5569 = vmul.f32 %v5258, %v5546
    %v5570 = vmul.f32 %v5265, %v5546
    %v5571 = vmul.f32 %v5272, %v5546
    %v5572 = vmul.f32 %v5279, %v5546
    %v5573 = vmul.f32 %v5286, %v5546
    %v5574 = vmul.f32 %v5293, %v5546
    %v5575 = vmul.f32 %v5300, %v5546
    %v5576 = vmul.f32 %v5307, %v5546
    %v5577 = vmul.f32 %v5314, %v5546
    %v5578 = vmul.f32 %v5321, %v5546
    %v5579 = vmul.f32 %v5328, %v5546
    %v5580 = vmul.f32 %v5335, %v5546
    %v5581 = vmul.f32 %v5342, %v5546
    %v5582 = vmul.f32 %v5349, %v5546
    %v5583 = vmul.f32 %v5356, %v5546
    %v5584 = vmul.f32 %v5363, %v5546
    %v5585 = vmul.f32 %v5370, %v5546
    %v5586 = vmul.f32 %v5377, %v5546
    %v5587 = vmul.f32 %v5384, %v5546
    %v5588 = vmul.f32 %v5391, %v5546
    %v5589 = vmul.f32 %v5398, %v5546
    %v5590 = vmul.f32 %v5405, %v5546
    %v5591 = vmul.f32 %v5412, %v5546
    %v5592 = vmul.f32 %v5419, %v5546
    %v5593 = vmul.f32 %v5426, %v5546
    %v5594 = vmul.f32 %v5433, %v5546
    %v5595 = vmul.f32 %v5440, %v5546
    %v5596 = vmul.f32 %v5447, %v5546
    %v5597 = vmul.f32 %v5454, %v5546
    %v5598 = vmul.f32 %v5461, %v5546
    %v5599 = vmul.f32 %v5468, %v5546
    %v5600 = vmul.f32 %v5475, %v5546
    %v5601 = vmul.f32 %v5482, %v5546
    %v5602 = vmul.f32 %v5489, %v5546
    %v5603 = vmul.f32 %v5496, %v5546
    %v5604 = vmul.f32 %v5503, %v5546
    %v5605 = vmul.f32 %v5510, %v5546
    %v5606 = vmul.f32 %v5517, %v5546
    %v5607 = vmul.f32 %v5524, %v5546
    %v5608 = vmul.f32 %v5531, %v5546
    %v5609 = vmul.f32 %v5538, %v5546
    %v5610 = vmul.f32 %v5545, %v5546
    %5612 = vbcast.lane.b32.xlu0 %v5547, 256
    %v5613 = vpop.permute.xlu0 %5612
    %5615 = vbcast.lane.b32.xlu0 %v5548, 256
    %v5616 = vpop.permute.xlu0 %5615
    %5618 = vbcast.lane.b32.xlu0 %v5549, 256
    %v5619 = vpop.permute.xlu0 %5618
    %5621 = vbcast.lane.b32.xlu0 %v5550, 256
    %v5622 = vpop.permute.xlu0 %5621
    %5624 = vbcast.lane.b32.xlu0 %v5551, 256
    %v5625 = vpop.permute.xlu0 %5624
    %5627 = vbcast.lane.b32.xlu0 %v5552, 256
    %v5628 = vpop.permute.xlu0 %5627
    %5630 = vbcast.lane.b32.xlu0 %v5553, 256
    %v5631 = vpop.permute.xlu0 %5630
    %5633 = vbcast.lane.b32.xlu0 %v5554, 256
    %v5634 = vpop.permute.xlu0 %5633
    %5636 = vbcast.lane.b32.xlu0 %v5555, 256
    %v5637 = vpop.permute.xlu0 %5636
    %5639 = vbcast.lane.b32.xlu0 %v5556, 256
    %v5640 = vpop.permute.xlu0 %5639
    %5642 = vbcast.lane.b32.xlu0 %v5557, 256
    %v5643 = vpop.permute.xlu0 %5642
    %5645 = vbcast.lane.b32.xlu0 %v5558, 256
    %v5646 = vpop.permute.xlu0 %5645
    %5648 = vbcast.lane.b32.xlu0 %v5559, 256
    %v5649 = vpop.permute.xlu0 %5648
    %5651 = vbcast.lane.b32.xlu0 %v5560, 256
    %v5652 = vpop.permute.xlu0 %5651
    %5654 = vbcast.lane.b32.xlu0 %v5561, 256
    %v5655 = vpop.permute.xlu0 %5654
    %5657 = vbcast.lane.b32.xlu0 %v5562, 256
    %v5658 = vpop.permute.xlu0 %5657
    %5660 = vbcast.lane.b32.xlu0 %v5563, 256
    %v5661 = vpop.permute.xlu0 %5660
    %5663 = vbcast.lane.b32.xlu0 %v5564, 256
    %v5664 = vpop.permute.xlu0 %5663
    %5666 = vbcast.lane.b32.xlu0 %v5565, 256
    %v5667 = vpop.permute.xlu0 %5666
    %5669 = vbcast.lane.b32.xlu0 %v5566, 256
    %v5670 = vpop.permute.xlu0 %5669
    %5672 = vbcast.lane.b32.xlu0 %v5567, 256
    %v5673 = vpop.permute.xlu0 %5672
    %5675 = vbcast.lane.b32.xlu0 %v5568, 256
    %v5676 = vpop.permute.xlu0 %5675
    %5678 = vbcast.lane.b32.xlu0 %v5569, 256
    %v5679 = vpop.permute.xlu0 %5678
    %5681 = vbcast.lane.b32.xlu0 %v5570, 256
    %v5682 = vpop.permute.xlu0 %5681
    %5684 = vbcast.lane.b32.xlu0 %v5571, 256
    %v5685 = vpop.permute.xlu0 %5684
    %5687 = vbcast.lane.b32.xlu0 %v5572, 256
    %v5688 = vpop.permute.xlu0 %5687
    %5690 = vbcast.lane.b32.xlu0 %v5573, 256
    %v5691 = vpop.permute.xlu0 %5690
    %5693 = vbcast.lane.b32.xlu0 %v5574, 256
    %v5694 = vpop.permute.xlu0 %5693
    %5696 = vbcast.lane.b32.xlu0 %v5575, 256
    %v5697 = vpop.permute.xlu0 %5696
    %5699 = vbcast.lane.b32.xlu0 %v5576, 256
    %v5700 = vpop.permute.xlu0 %5699
    %5702 = vbcast.lane.b32.xlu0 %v5577, 256
    %v5703 = vpop.permute.xlu0 %5702
    %5705 = vbcast.lane.b32.xlu0 %v5578, 256
    %v5706 = vpop.permute.xlu0 %5705
    %5708 = vbcast.lane.b32.xlu0 %v5579, 256
    %v5709 = vpop.permute.xlu0 %5708
    %5711 = vbcast.lane.b32.xlu0 %v5580, 256
    %v5712 = vpop.permute.xlu0 %5711
    %5714 = vbcast.lane.b32.xlu0 %v5581, 256
    %v5715 = vpop.permute.xlu0 %5714
    %5717 = vbcast.lane.b32.xlu0 %v5582, 256
    %v5718 = vpop.permute.xlu0 %5717
    %5720 = vbcast.lane.b32.xlu0 %v5583, 256
    %v5721 = vpop.permute.xlu0 %5720
    %5723 = vbcast.lane.b32.xlu0 %v5584, 256
    %v5724 = vpop.permute.xlu0 %5723
    %5726 = vbcast.lane.b32.xlu0 %v5585, 256
    %v5727 = vpop.permute.xlu0 %5726
    %5729 = vbcast.lane.b32.xlu0 %v5586, 256
    %v5730 = vpop.permute.xlu0 %5729
    %5732 = vbcast.lane.b32.xlu0 %v5587, 256
    %v5733 = vpop.permute.xlu0 %5732
    %5735 = vbcast.lane.b32.xlu0 %v5588, 256
    %v5736 = vpop.permute.xlu0 %5735
    %5738 = vbcast.lane.b32.xlu0 %v5589, 256
    %v5739 = vpop.permute.xlu0 %5738
    %5741 = vbcast.lane.b32.xlu0 %v5590, 256
    %v5742 = vpop.permute.xlu0 %5741
    %5744 = vbcast.lane.b32.xlu0 %v5591, 256
    %v5745 = vpop.permute.xlu0 %5744
    %5747 = vbcast.lane.b32.xlu0 %v5592, 256
    %v5748 = vpop.permute.xlu0 %5747
    %5750 = vbcast.lane.b32.xlu0 %v5593, 256
    %v5751 = vpop.permute.xlu0 %5750
    %5753 = vbcast.lane.b32.xlu0 %v5594, 256
    %v5754 = vpop.permute.xlu0 %5753
    %5756 = vbcast.lane.b32.xlu0 %v5595, 256
    %v5757 = vpop.permute.xlu0 %5756
    %5759 = vbcast.lane.b32.xlu0 %v5596, 256
    %v5760 = vpop.permute.xlu0 %5759
    %5762 = vbcast.lane.b32.xlu0 %v5597, 256
    %v5763 = vpop.permute.xlu0 %5762
    %5765 = vbcast.lane.b32.xlu0 %v5598, 256
    %v5766 = vpop.permute.xlu0 %5765
    %5768 = vbcast.lane.b32.xlu0 %v5599, 256
    %v5769 = vpop.permute.xlu0 %5768
    %5771 = vbcast.lane.b32.xlu0 %v5600, 256
    %v5772 = vpop.permute.xlu0 %5771
    %5774 = vbcast.lane.b32.xlu0 %v5601, 256
    %v5775 = vpop.permute.xlu0 %5774
    %5777 = vbcast.lane.b32.xlu0 %v5602, 256
    %v5778 = vpop.permute.xlu0 %5777
    %5780 = vbcast.lane.b32.xlu0 %v5603, 256
    %v5781 = vpop.permute.xlu0 %5780
    %5783 = vbcast.lane.b32.xlu0 %v5604, 256
    %v5784 = vpop.permute.xlu0 %5783
    %5786 = vbcast.lane.b32.xlu0 %v5605, 256
    %v5787 = vpop.permute.xlu0 %5786
    %5789 = vbcast.lane.b32.xlu0 %v5606, 256
    %v5790 = vpop.permute.xlu0 %5789
    %5792 = vbcast.lane.b32.xlu0 %v5607, 256
    %v5793 = vpop.permute.xlu0 %5792
    %5795 = vbcast.lane.b32.xlu0 %v5608, 256
    %v5796 = vpop.permute.xlu0 %5795
    %5798 = vbcast.lane.b32.xlu0 %v5609, 256
    %v5799 = vpop.permute.xlu0 %5798
    %5801 = vbcast.lane.b32.xlu0 %v5610, 256
    %v5802 = vpop.permute.xlu0 %5801
    %v5803 = vmul.f32 %v5613, %v1003
    %v5804 = vmul.f32 %v5616, %v1006
    %v5805 = vmul.f32 %v5619, %v1011
    %v5806 = vmul.f32 %v5622, %v1014
    %v5807 = vmul.f32 %v5625, %v1019
    %v5808 = vmul.f32 %v5628, %v1022
    %v5809 = vmul.f32 %v5631, %v1027
    %v5810 = vmul.f32 %v5634, %v1030
    %v5811 = vmul.f32 %v5637, %v1035
    %v5812 = vmul.f32 %v5640, %v1038
    %v5813 = vmul.f32 %v5643, %v1043
    %v5814 = vmul.f32 %v5646, %v1046
    %v5815 = vmul.f32 %v5649, %v1051
    %v5816 = vmul.f32 %v5652, %v1054
    %v5817 = vmul.f32 %v5655, %v1059
    %v5818 = vmul.f32 %v5658, %v1062
    %v5819 = vmul.f32 %v5661, %v1067
    %v5820 = vmul.f32 %v5664, %v1070
    %v5821 = vmul.f32 %v5667, %v1075
    %v5822 = vmul.f32 %v5670, %v1078
    %v5823 = vmul.f32 %v5673, %v1083
    %v5824 = vmul.f32 %v5676, %v1086
    %v5825 = vmul.f32 %v5679, %v1091
    %v5826 = vmul.f32 %v5682, %v1094
    %v5827 = vmul.f32 %v5685, %v1099
    %v5828 = vmul.f32 %v5688, %v1102
    %v5829 = vmul.f32 %v5691, %v1107
    %v5830 = vmul.f32 %v5694, %v1110
    %v5831 = vmul.f32 %v5697, %v1115
    %v5832 = vmul.f32 %v5700, %v1118
    %v5833 = vmul.f32 %v5703, %v1123
    %v5834 = vmul.f32 %v5706, %v1126
    %v5835 = vmul.f32 %v5709, %v1131
    %v5836 = vmul.f32 %v5712, %v1134
    %v5837 = vmul.f32 %v5715, %v1139
    %v5838 = vmul.f32 %v5718, %v1142
    %v5839 = vmul.f32 %v5721, %v1147
    %v5840 = vmul.f32 %v5724, %v1150
    %v5841 = vmul.f32 %v5727, %v1155
    %v5842 = vmul.f32 %v5730, %v1158
    %v5843 = vmul.f32 %v5733, %v1163
    %v5844 = vmul.f32 %v5736, %v1166
    %v5845 = vmul.f32 %v5739, %v1171
    %v5846 = vmul.f32 %v5742, %v1174
    %v5847 = vmul.f32 %v5745, %v1179
    %v5848 = vmul.f32 %v5748, %v1182
    %v5849 = vmul.f32 %v5751, %v1187
    %v5850 = vmul.f32 %v5754, %v1190
    %v5851 = vmul.f32 %v5757, %v1195
    %v5852 = vmul.f32 %v5760, %v1198
    %v5853 = vmul.f32 %v5763, %v1203
    %v5854 = vmul.f32 %v5766, %v1206
    %v5855 = vmul.f32 %v5769, %v1211
    %v5856 = vmul.f32 %v5772, %v1214
    %v5857 = vmul.f32 %v5775, %v1219
    %v5858 = vmul.f32 %v5778, %v1222
    %v5859 = vmul.f32 %v5781, %v1227
    %v5860 = vmul.f32 %v5784, %v1230
    %v5861 = vmul.f32 %v5787, %v1235
    %v5862 = vmul.f32 %v5790, %v1238
    %v5863 = vmul.f32 %v5793, %v1243
    %v5864 = vmul.f32 %v5796, %v1246
    %v5865 = vmul.f32 %v5799, %v1251
    %v5866 = vmul.f32 %v5802, %v1254
    %v5867 = vsel %vm1385, %v5803, 0.0
    %v5868 = vrot.slane %v5867, 4
    %v5869 = vadd.f32 %v5867, %v5868
    %v5870 = vrot.slane %v5869, 2
    %v5871 = vadd.f32 %v5869, %v5870
    %v5872 = vrot.slane %v5871, 1
    %v5873 = vadd.f32 %v5871, %v5872
    %v5874 = vsel %vm1385, %v5804, 0.0
    %v5875 = vrot.slane %v5874, 4
    %v5876 = vadd.f32 %v5874, %v5875
    %v5877 = vrot.slane %v5876, 2
    %v5878 = vadd.f32 %v5876, %v5877
    %v5879 = vrot.slane %v5878, 1
    %v5880 = vadd.f32 %v5878, %v5879
    %v5881 = vsel %vm1385, %v5805, 0.0
    %v5882 = vrot.slane %v5881, 4
    %v5883 = vadd.f32 %v5881, %v5882
    %v5884 = vrot.slane %v5883, 2
    %v5885 = vadd.f32 %v5883, %v5884
    %v5886 = vrot.slane %v5885, 1
    %v5887 = vadd.f32 %v5885, %v5886
    %v5888 = vsel %vm1385, %v5806, 0.0
    %v5889 = vrot.slane %v5888, 4
    %v5890 = vadd.f32 %v5888, %v5889
    %v5891 = vrot.slane %v5890, 2
    %v5892 = vadd.f32 %v5890, %v5891
    %v5893 = vrot.slane %v5892, 1
    %v5894 = vadd.f32 %v5892, %v5893
    %v5895 = vsel %vm1385, %v5807, 0.0
    %v5896 = vrot.slane %v5895, 4
    %v5897 = vadd.f32 %v5895, %v5896
    %v5898 = vrot.slane %v5897, 2
    %v5899 = vadd.f32 %v5897, %v5898
    %v5900 = vrot.slane %v5899, 1
    %v5901 = vadd.f32 %v5899, %v5900
    %v5902 = vsel %vm1385, %v5808, 0.0
    %v5903 = vrot.slane %v5902, 4
    %v5904 = vadd.f32 %v5902, %v5903
    %v5905 = vrot.slane %v5904, 2
    %v5906 = vadd.f32 %v5904, %v5905
    %v5907 = vrot.slane %v5906, 1
    %v5908 = vadd.f32 %v5906, %v5907
    %v5909 = vsel %vm1385, %v5809, 0.0
    %v5910 = vrot.slane %v5909, 4
    %v5911 = vadd.f32 %v5909, %v5910
    %v5912 = vrot.slane %v5911, 2
    %v5913 = vadd.f32 %v5911, %v5912
    %v5914 = vrot.slane %v5913, 1
    %v5915 = vadd.f32 %v5913, %v5914
    %v5916 = vsel %vm1385, %v5810, 0.0
    %v5917 = vrot.slane %v5916, 4
    %v5918 = vadd.f32 %v5916, %v5917
    %v5919 = vrot.slane %v5918, 2
    %v5920 = vadd.f32 %v5918, %v5919
    %v5921 = vrot.slane %v5920, 1
    %v5922 = vadd.f32 %v5920, %v5921
    %v5923 = vsel %vm1385, %v5811, 0.0
    %v5924 = vrot.slane %v5923, 4
    %v5925 = vadd.f32 %v5923, %v5924
    %v5926 = vrot.slane %v5925, 2
    %v5927 = vadd.f32 %v5925, %v5926
    %v5928 = vrot.slane %v5927, 1
    %v5929 = vadd.f32 %v5927, %v5928
    %v5930 = vsel %vm1385, %v5812, 0.0
    %v5931 = vrot.slane %v5930, 4
    %v5932 = vadd.f32 %v5930, %v5931
    %v5933 = vrot.slane %v5932, 2
    %v5934 = vadd.f32 %v5932, %v5933
    %v5935 = vrot.slane %v5934, 1
    %v5936 = vadd.f32 %v5934, %v5935
    %v5937 = vsel %vm1385, %v5813, 0.0
    %v5938 = vrot.slane %v5937, 4
    %v5939 = vadd.f32 %v5937, %v5938
    %v5940 = vrot.slane %v5939, 2
    %v5941 = vadd.f32 %v5939, %v5940
    %v5942 = vrot.slane %v5941, 1
    %v5943 = vadd.f32 %v5941, %v5942
    %v5944 = vsel %vm1385, %v5814, 0.0
    %v5945 = vrot.slane %v5944, 4
    %v5946 = vadd.f32 %v5944, %v5945
    %v5947 = vrot.slane %v5946, 2
    %v5948 = vadd.f32 %v5946, %v5947
    %v5949 = vrot.slane %v5948, 1
    %v5950 = vadd.f32 %v5948, %v5949
    %v5951 = vsel %vm1385, %v5815, 0.0
    %v5952 = vrot.slane %v5951, 4
    %v5953 = vadd.f32 %v5951, %v5952
    %v5954 = vrot.slane %v5953, 2
    %v5955 = vadd.f32 %v5953, %v5954
    %v5956 = vrot.slane %v5955, 1
    %v5957 = vadd.f32 %v5955, %v5956
    %v5958 = vsel %vm1385, %v5816, 0.0
    %v5959 = vrot.slane %v5958, 4
    %v5960 = vadd.f32 %v5958, %v5959
    %v5961 = vrot.slane %v5960, 2
    %v5962 = vadd.f32 %v5960, %v5961
    %v5963 = vrot.slane %v5962, 1
    %v5964 = vadd.f32 %v5962, %v5963
    %v5965 = vsel %vm1385, %v5817, 0.0
    %v5966 = vrot.slane %v5965, 4
    %v5967 = vadd.f32 %v5965, %v5966
    %v5968 = vrot.slane %v5967, 2
    %v5969 = vadd.f32 %v5967, %v5968
    %v5970 = vrot.slane %v5969, 1
    %v5971 = vadd.f32 %v5969, %v5970
    %v5972 = vsel %vm1385, %v5818, 0.0
    %v5973 = vrot.slane %v5972, 4
    %v5974 = vadd.f32 %v5972, %v5973
    %v5975 = vrot.slane %v5974, 2
    %v5976 = vadd.f32 %v5974, %v5975
    %v5977 = vrot.slane %v5976, 1
    %v5978 = vadd.f32 %v5976, %v5977
    %v5979 = vsel %vm1385, %v5819, 0.0
    %v5980 = vrot.slane %v5979, 4
    %v5981 = vadd.f32 %v5979, %v5980
    %v5982 = vrot.slane %v5981, 2
    %v5983 = vadd.f32 %v5981, %v5982
    %v5984 = vrot.slane %v5983, 1
    %v5985 = vadd.f32 %v5983, %v5984
    %v5986 = vsel %vm1385, %v5820, 0.0
    %v5987 = vrot.slane %v5986, 4
    %v5988 = vadd.f32 %v5986, %v5987
    %v5989 = vrot.slane %v5988, 2
    %v5990 = vadd.f32 %v5988, %v5989
    %v5991 = vrot.slane %v5990, 1
    %v5992 = vadd.f32 %v5990, %v5991
    %v5993 = vsel %vm1385, %v5821, 0.0
    %v5994 = vrot.slane %v5993, 4
    %v5995 = vadd.f32 %v5993, %v5994
    %v5996 = vrot.slane %v5995, 2
    %v5997 = vadd.f32 %v5995, %v5996
    %v5998 = vrot.slane %v5997, 1
    %v5999 = vadd.f32 %v5997, %v5998
    %v6000 = vsel %vm1385, %v5822, 0.0
    %v6001 = vrot.slane %v6000, 4
    %v6002 = vadd.f32 %v6000, %v6001
    %v6003 = vrot.slane %v6002, 2
    %v6004 = vadd.f32 %v6002, %v6003
    %v6005 = vrot.slane %v6004, 1
    %v6006 = vadd.f32 %v6004, %v6005
    %v6007 = vsel %vm1385, %v5823, 0.0
    %v6008 = vrot.slane %v6007, 4
    %v6009 = vadd.f32 %v6007, %v6008
    %v6010 = vrot.slane %v6009, 2
    %v6011 = vadd.f32 %v6009, %v6010
    %v6012 = vrot.slane %v6011, 1
    %v6013 = vadd.f32 %v6011, %v6012
    %v6014 = vsel %vm1385, %v5824, 0.0
    %v6015 = vrot.slane %v6014, 4
    %v6016 = vadd.f32 %v6014, %v6015
    %v6017 = vrot.slane %v6016, 2
    %v6018 = vadd.f32 %v6016, %v6017
    %v6019 = vrot.slane %v6018, 1
    %v6020 = vadd.f32 %v6018, %v6019
    %v6021 = vsel %vm1385, %v5825, 0.0
    %v6022 = vrot.slane %v6021, 4
    %v6023 = vadd.f32 %v6021, %v6022
    %v6024 = vrot.slane %v6023, 2
    %v6025 = vadd.f32 %v6023, %v6024
    %v6026 = vrot.slane %v6025, 1
    %v6027 = vadd.f32 %v6025, %v6026
    %v6028 = vsel %vm1385, %v5826, 0.0
    %v6029 = vrot.slane %v6028, 4
    %v6030 = vadd.f32 %v6028, %v6029
    %v6031 = vrot.slane %v6030, 2
    %v6032 = vadd.f32 %v6030, %v6031
    %v6033 = vrot.slane %v6032, 1
    %v6034 = vadd.f32 %v6032, %v6033
    %v6035 = vsel %vm1385, %v5827, 0.0
    %v6036 = vrot.slane %v6035, 4
    %v6037 = vadd.f32 %v6035, %v6036
    %v6038 = vrot.slane %v6037, 2
    %v6039 = vadd.f32 %v6037, %v6038
    %v6040 = vrot.slane %v6039, 1
    %v6041 = vadd.f32 %v6039, %v6040
    %v6042 = vsel %vm1385, %v5828, 0.0
    %v6043 = vrot.slane %v6042, 4
    %v6044 = vadd.f32 %v6042, %v6043
    %v6045 = vrot.slane %v6044, 2
    %v6046 = vadd.f32 %v6044, %v6045
    %v6047 = vrot.slane %v6046, 1
    %v6048 = vadd.f32 %v6046, %v6047
    %v6049 = vsel %vm1385, %v5829, 0.0
    %v6050 = vrot.slane %v6049, 4
    %v6051 = vadd.f32 %v6049, %v6050
    %v6052 = vrot.slane %v6051, 2
    %v6053 = vadd.f32 %v6051, %v6052
    %v6054 = vrot.slane %v6053, 1
    %v6055 = vadd.f32 %v6053, %v6054
    %v6056 = vsel %vm1385, %v5830, 0.0
    %v6057 = vrot.slane %v6056, 4
    %v6058 = vadd.f32 %v6056, %v6057
    %v6059 = vrot.slane %v6058, 2
    %v6060 = vadd.f32 %v6058, %v6059
    %v6061 = vrot.slane %v6060, 1
    %v6062 = vadd.f32 %v6060, %v6061
    %v6063 = vsel %vm1385, %v5831, 0.0
    %v6064 = vrot.slane %v6063, 4
    %v6065 = vadd.f32 %v6063, %v6064
    %v6066 = vrot.slane %v6065, 2
    %v6067 = vadd.f32 %v6065, %v6066
    %v6068 = vrot.slane %v6067, 1
    %v6069 = vadd.f32 %v6067, %v6068
    %v6070 = vsel %vm1385, %v5832, 0.0
    %v6071 = vrot.slane %v6070, 4
    %v6072 = vadd.f32 %v6070, %v6071
    %v6073 = vrot.slane %v6072, 2
    %v6074 = vadd.f32 %v6072, %v6073
    %v6075 = vrot.slane %v6074, 1
    %v6076 = vadd.f32 %v6074, %v6075
    %v6077 = vsel %vm1385, %v5833, 0.0
    %v6078 = vrot.slane %v6077, 4
    %v6079 = vadd.f32 %v6077, %v6078
    %v6080 = vrot.slane %v6079, 2
    %v6081 = vadd.f32 %v6079, %v6080
    %v6082 = vrot.slane %v6081, 1
    %v6083 = vadd.f32 %v6081, %v6082
    %v6084 = vsel %vm1385, %v5834, 0.0
    %v6085 = vrot.slane %v6084, 4
    %v6086 = vadd.f32 %v6084, %v6085
    %v6087 = vrot.slane %v6086, 2
    %v6088 = vadd.f32 %v6086, %v6087
    %v6089 = vrot.slane %v6088, 1
    %v6090 = vadd.f32 %v6088, %v6089
    %v6091 = vsel %vm1385, %v5835, 0.0
    %v6092 = vrot.slane %v6091, 4
    %v6093 = vadd.f32 %v6091, %v6092
    %v6094 = vrot.slane %v6093, 2
    %v6095 = vadd.f32 %v6093, %v6094
    %v6096 = vrot.slane %v6095, 1
    %v6097 = vadd.f32 %v6095, %v6096
    %v6098 = vsel %vm1385, %v5836, 0.0
    %v6099 = vrot.slane %v6098, 4
    %v6100 = vadd.f32 %v6098, %v6099
    %v6101 = vrot.slane %v6100, 2
    %v6102 = vadd.f32 %v6100, %v6101
    %v6103 = vrot.slane %v6102, 1
    %v6104 = vadd.f32 %v6102, %v6103
    %v6105 = vsel %vm1385, %v5837, 0.0
    %v6106 = vrot.slane %v6105, 4
    %v6107 = vadd.f32 %v6105, %v6106
    %v6108 = vrot.slane %v6107, 2
    %v6109 = vadd.f32 %v6107, %v6108
    %v6110 = vrot.slane %v6109, 1
    %v6111 = vadd.f32 %v6109, %v6110
    %v6112 = vsel %vm1385, %v5838, 0.0
    %v6113 = vrot.slane %v6112, 4
    %v6114 = vadd.f32 %v6112, %v6113
    %v6115 = vrot.slane %v6114, 2
    %v6116 = vadd.f32 %v6114, %v6115
    %v6117 = vrot.slane %v6116, 1
    %v6118 = vadd.f32 %v6116, %v6117
    %v6119 = vsel %vm1385, %v5839, 0.0
    %v6120 = vrot.slane %v6119, 4
    %v6121 = vadd.f32 %v6119, %v6120
    %v6122 = vrot.slane %v6121, 2
    %v6123 = vadd.f32 %v6121, %v6122
    %v6124 = vrot.slane %v6123, 1
    %v6125 = vadd.f32 %v6123, %v6124
    %v6126 = vsel %vm1385, %v5840, 0.0
    %v6127 = vrot.slane %v6126, 4
    %v6128 = vadd.f32 %v6126, %v6127
    %v6129 = vrot.slane %v6128, 2
    %v6130 = vadd.f32 %v6128, %v6129
    %v6131 = vrot.slane %v6130, 1
    %v6132 = vadd.f32 %v6130, %v6131
    %v6133 = vsel %vm1385, %v5841, 0.0
    %v6134 = vrot.slane %v6133, 4
    %v6135 = vadd.f32 %v6133, %v6134
    %v6136 = vrot.slane %v6135, 2
    %v6137 = vadd.f32 %v6135, %v6136
    %v6138 = vrot.slane %v6137, 1
    %v6139 = vadd.f32 %v6137, %v6138
    %v6140 = vsel %vm1385, %v5842, 0.0
    %v6141 = vrot.slane %v6140, 4
    %v6142 = vadd.f32 %v6140, %v6141
    %v6143 = vrot.slane %v6142, 2
    %v6144 = vadd.f32 %v6142, %v6143
    %v6145 = vrot.slane %v6144, 1
    %v6146 = vadd.f32 %v6144, %v6145
    %v6147 = vsel %vm1385, %v5843, 0.0
    %v6148 = vrot.slane %v6147, 4
    %v6149 = vadd.f32 %v6147, %v6148
    %v6150 = vrot.slane %v6149, 2
    %v6151 = vadd.f32 %v6149, %v6150
    %v6152 = vrot.slane %v6151, 1
    %v6153 = vadd.f32 %v6151, %v6152
    %v6154 = vsel %vm1385, %v5844, 0.0
    %v6155 = vrot.slane %v6154, 4
    %v6156 = vadd.f32 %v6154, %v6155
    %v6157 = vrot.slane %v6156, 2
    %v6158 = vadd.f32 %v6156, %v6157
    %v6159 = vrot.slane %v6158, 1
    %v6160 = vadd.f32 %v6158, %v6159
    %v6161 = vsel %vm1385, %v5845, 0.0
    %v6162 = vrot.slane %v6161, 4
    %v6163 = vadd.f32 %v6161, %v6162
    %v6164 = vrot.slane %v6163, 2
    %v6165 = vadd.f32 %v6163, %v6164
    %v6166 = vrot.slane %v6165, 1
    %v6167 = vadd.f32 %v6165, %v6166
    %v6168 = vsel %vm1385, %v5846, 0.0
    %v6169 = vrot.slane %v6168, 4
    %v6170 = vadd.f32 %v6168, %v6169
    %v6171 = vrot.slane %v6170, 2
    %v6172 = vadd.f32 %v6170, %v6171
    %v6173 = vrot.slane %v6172, 1
    %v6174 = vadd.f32 %v6172, %v6173
    %v6175 = vsel %vm1385, %v5847, 0.0
    %v6176 = vrot.slane %v6175, 4
    %v6177 = vadd.f32 %v6175, %v6176
    %v6178 = vrot.slane %v6177, 2
    %v6179 = vadd.f32 %v6177, %v6178
    %v6180 = vrot.slane %v6179, 1
    %v6181 = vadd.f32 %v6179, %v6180
    %v6182 = vsel %vm1385, %v5848, 0.0
    %v6183 = vrot.slane %v6182, 4
    %v6184 = vadd.f32 %v6182, %v6183
    %v6185 = vrot.slane %v6184, 2
    %v6186 = vadd.f32 %v6184, %v6185
    %v6187 = vrot.slane %v6186, 1
    %v6188 = vadd.f32 %v6186, %v6187
    %v6189 = vsel %vm1385, %v5849, 0.0
    %v6190 = vrot.slane %v6189, 4
    %v6191 = vadd.f32 %v6189, %v6190
    %v6192 = vrot.slane %v6191, 2
    %v6193 = vadd.f32 %v6191, %v6192
    %v6194 = vrot.slane %v6193, 1
    %v6195 = vadd.f32 %v6193, %v6194
    %v6196 = vsel %vm1385, %v5850, 0.0
    %v6197 = vrot.slane %v6196, 4
    %v6198 = vadd.f32 %v6196, %v6197
    %v6199 = vrot.slane %v6198, 2
    %v6200 = vadd.f32 %v6198, %v6199
    %v6201 = vrot.slane %v6200, 1
    %v6202 = vadd.f32 %v6200, %v6201
    %v6203 = vsel %vm1385, %v5851, 0.0
    %v6204 = vrot.slane %v6203, 4
    %v6205 = vadd.f32 %v6203, %v6204
    %v6206 = vrot.slane %v6205, 2
    %v6207 = vadd.f32 %v6205, %v6206
    %v6208 = vrot.slane %v6207, 1
    %v6209 = vadd.f32 %v6207, %v6208
    %v6210 = vsel %vm1385, %v5852, 0.0
    %v6211 = vrot.slane %v6210, 4
    %v6212 = vadd.f32 %v6210, %v6211
    %v6213 = vrot.slane %v6212, 2
    %v6214 = vadd.f32 %v6212, %v6213
    %v6215 = vrot.slane %v6214, 1
    %v6216 = vadd.f32 %v6214, %v6215
    %v6217 = vsel %vm1385, %v5853, 0.0
    %v6218 = vrot.slane %v6217, 4
    %v6219 = vadd.f32 %v6217, %v6218
    %v6220 = vrot.slane %v6219, 2
    %v6221 = vadd.f32 %v6219, %v6220
    %v6222 = vrot.slane %v6221, 1
    %v6223 = vadd.f32 %v6221, %v6222
    %v6224 = vsel %vm1385, %v5854, 0.0
    %v6225 = vrot.slane %v6224, 4
    %v6226 = vadd.f32 %v6224, %v6225
    %v6227 = vrot.slane %v6226, 2
    %v6228 = vadd.f32 %v6226, %v6227
    %v6229 = vrot.slane %v6228, 1
    %v6230 = vadd.f32 %v6228, %v6229
    %v6231 = vsel %vm1385, %v5855, 0.0
    %v6232 = vrot.slane %v6231, 4
    %v6233 = vadd.f32 %v6231, %v6232
    %v6234 = vrot.slane %v6233, 2
    %v6235 = vadd.f32 %v6233, %v6234
    %v6236 = vrot.slane %v6235, 1
    %v6237 = vadd.f32 %v6235, %v6236
    %v6238 = vsel %vm1385, %v5856, 0.0
    %v6239 = vrot.slane %v6238, 4
    %v6240 = vadd.f32 %v6238, %v6239
    %v6241 = vrot.slane %v6240, 2
    %v6242 = vadd.f32 %v6240, %v6241
    %v6243 = vrot.slane %v6242, 1
    %v6244 = vadd.f32 %v6242, %v6243
    %v6245 = vsel %vm1385, %v5857, 0.0
    %v6246 = vrot.slane %v6245, 4
    %v6247 = vadd.f32 %v6245, %v6246
    %v6248 = vrot.slane %v6247, 2
    %v6249 = vadd.f32 %v6247, %v6248
    %v6250 = vrot.slane %v6249, 1
    %v6251 = vadd.f32 %v6249, %v6250
    %v6252 = vsel %vm1385, %v5858, 0.0
    %v6253 = vrot.slane %v6252, 4
    %v6254 = vadd.f32 %v6252, %v6253
    %v6255 = vrot.slane %v6254, 2
    %v6256 = vadd.f32 %v6254, %v6255
    %v6257 = vrot.slane %v6256, 1
    %v6258 = vadd.f32 %v6256, %v6257
    %v6259 = vsel %vm1385, %v5859, 0.0
    %v6260 = vrot.slane %v6259, 4
    %v6261 = vadd.f32 %v6259, %v6260
    %v6262 = vrot.slane %v6261, 2
    %v6263 = vadd.f32 %v6261, %v6262
    %v6264 = vrot.slane %v6263, 1
    %v6265 = vadd.f32 %v6263, %v6264
    %v6266 = vsel %vm1385, %v5860, 0.0
    %v6267 = vrot.slane %v6266, 4
    %v6268 = vadd.f32 %v6266, %v6267
    %v6269 = vrot.slane %v6268, 2
    %v6270 = vadd.f32 %v6268, %v6269
    %v6271 = vrot.slane %v6270, 1
    %v6272 = vadd.f32 %v6270, %v6271
    %v6273 = vsel %vm1385, %v5861, 0.0
    %v6274 = vrot.slane %v6273, 4
    %v6275 = vadd.f32 %v6273, %v6274
    %v6276 = vrot.slane %v6275, 2
    %v6277 = vadd.f32 %v6275, %v6276
    %v6278 = vrot.slane %v6277, 1
    %v6279 = vadd.f32 %v6277, %v6278
    %v6280 = vsel %vm1385, %v5862, 0.0
    %v6281 = vrot.slane %v6280, 4
    %v6282 = vadd.f32 %v6280, %v6281
    %v6283 = vrot.slane %v6282, 2
    %v6284 = vadd.f32 %v6282, %v6283
    %v6285 = vrot.slane %v6284, 1
    %v6286 = vadd.f32 %v6284, %v6285
    %v6287 = vsel %vm1385, %v5863, 0.0
    %v6288 = vrot.slane %v6287, 4
    %v6289 = vadd.f32 %v6287, %v6288
    %v6290 = vrot.slane %v6289, 2
    %v6291 = vadd.f32 %v6289, %v6290
    %v6292 = vrot.slane %v6291, 1
    %v6293 = vadd.f32 %v6291, %v6292
    %v6294 = vsel %vm1385, %v5864, 0.0
    %v6295 = vrot.slane %v6294, 4
    %v6296 = vadd.f32 %v6294, %v6295
    %v6297 = vrot.slane %v6296, 2
    %v6298 = vadd.f32 %v6296, %v6297
    %v6299 = vrot.slane %v6298, 1
    %v6300 = vadd.f32 %v6298, %v6299
    %v6301 = vsel %vm1385, %v5865, 0.0
    %v6302 = vrot.slane %v6301, 4
    %v6303 = vadd.f32 %v6301, %v6302
    %v6304 = vrot.slane %v6303, 2
    %v6305 = vadd.f32 %v6303, %v6304
    %v6306 = vrot.slane %v6305, 1
    %v6307 = vadd.f32 %v6305, %v6306
    %v6308 = vsel %vm1385, %v5866, 0.0
    %v6309 = vrot.slane %v6308, 4
    %v6310 = vadd.f32 %v6308, %v6309
    %v6311 = vrot.slane %v6310, 2
    %v6312 = vadd.f32 %v6310, %v6311
    %v6313 = vrot.slane %v6312, 1
    %v6314 = vadd.f32 %v6312, %v6313
    %v6315 = vld [vmem:[%s7] sm:$0x7]
    %v6324 = vunpack.c.l.b16 %v104
    %v6325 = vunpack.c.l.b16 %v105
    %v6326 = vunpack.c.l.b16 %v106
    %v6327 = vunpack.c.l.b16 %v107
    %v6328 = vunpack.c.l.b16 %v108
    %v6329 = vunpack.c.l.b16 %v109
    %v6330 = vunpack.c.l.b16 %v110
    %v6331 = vunpack.c.l.b16 %v111
    %v6332 = vpack.c.b16 %v6325, %v6324
    %v6333 = vpack.c.b16 %v6327, %v6326
    %v6334 = vpack.c.b16 %v6329, %v6328
    %v6335 = vpack.c.b16 %v6331, %v6330
    %vm6336 = vcmask 48128
    %v6338 = vsel %vm6336, %v6332, 0
    %v6341 = vsel %vm6336, %v6333, 0
    %v6344 = vsel %vm6336, %v6334, 0
    %v6347 = vsel %vm6336, %v6335, 0
    %vm6349 = vcmask 1042432
    %v6351 = vsel %vm6349, %v6315, 0
    %6353 = vmatprep.subr.bf16.mxu0 0
    %6354 = vmatpush1.bf16.msra.mxu0 0
    %6355 = vmatprep.subr.bf16.mxu0 0
    %6356 = vmatpush1.bf16.msra.mxu0 0
    %6357 = vmatprep.subr.bf16.mxu0 0
    %6358 = vmatpush1.bf16.msra.mxu0 0
    %6359 = vmatprep.subr.bf16.mxu0 0
    %6360 = vmatpush1.bf16.msra.mxu0 0
    %6361 = vmatprep.subr.bf16.mxu0 0
    %6362 = vmatpush1.bf16.msra.mxu0 0
    %6363 = vmatprep.subr.bf16.mxu0 0
    %6364 = vmatpush1.bf16.msra.mxu0 0
    %6365 = vmatprep.subr.bf16.mxu0 0
    %6366 = vmatpush1.bf16.msra.mxu0 0
    %6367 = vmatprep.subr.bf16.mxu0 0
    %6368 = vmatpush1.bf16.msra.mxu0 %v6351
    %6369 = vmatprep.subr.bf16.mxu0 0
    %6370 = vmatpush2.bf16.msra.mxu0 0
    %6371 = vmatprep.subr.bf16.mxu0 0
    %6372 = vmatpush2.bf16.msra.mxu0 0
    %6373 = vmatprep.subr.bf16.mxu0 0
    %6374 = vmatpush2.bf16.msra.mxu0 0
    %6375 = vmatprep.subr.bf16.mxu0 0
    %6376 = vmatpush2.bf16.msra.mxu0 0
    %6377 = vmatprep.subr.bf16.mxu0 0
    %6378 = vmatpush2.bf16.msra.mxu0 0
    %6379 = vmatprep.subr.bf16.mxu0 0
    %6380 = vmatpush2.bf16.msra.mxu0 0
    %6381 = vmatprep.subr.bf16.mxu0 0
    %6382 = vmatpush2.bf16.msra.mxu0 0
    %6383 = vmatprep.subr.bf16.mxu0 0
    %6384 = vmatpush2.bf16.msra.mxu0 0
    %6385 = vmatprep.mubr.bf16.mxu0 0
    %6386 = vmatmul.mubr.bf16.gmra.mxu0 %v6338
    %v6387 = vpop.f32.mrf.mxu0
    %v6388 = vadd.f32 0.0, %v6387
    %v6389 = vpop.f32.mrf.mxu0
    %v6390 = vpop.f32.mrf.mxu0
    %v6391 = vadd.f32 0.0, %v6390
    %v6392 = vpop.f32.mrf.mxu0
    %6393 = vmatprep.mubr.bf16.mxu0 0
    %6394 = vmatmul.mubr.bf16.gmra.mxu0 %v6341
    %v6395 = vpop.f32.mrf.mxu0
    %v6396 = vadd.f32 0.0, %v6395
    %v6397 = vpop.f32.mrf.mxu0
    %v6398 = vpop.f32.mrf.mxu0
    %v6399 = vadd.f32 0.0, %v6398
    %v6400 = vpop.f32.mrf.mxu0
    %6401 = vmatprep.mubr.bf16.mxu0 0
    %6402 = vmatmul.mubr.bf16.gmra.mxu0 %v6344
    %v6403 = vpop.f32.mrf.mxu0
    %v6404 = vadd.f32 0.0, %v6403
    %v6405 = vpop.f32.mrf.mxu0
    %v6406 = vpop.f32.mrf.mxu0
    %v6407 = vadd.f32 0.0, %v6406
    %v6408 = vpop.f32.mrf.mxu0
    %6409 = vmatprep.mubr.bf16.mxu0 0
    %6410 = vmatmul.mubr.bf16.gmra.mxu0 %v6347
    %v6411 = vpop.f32.mrf.mxu0
    %v6412 = vadd.f32 0.0, %v6411
    %v6413 = vpop.f32.mrf.mxu0
    %v6414 = vpop.f32.mrf.mxu0
    %v6415 = vadd.f32 0.0, %v6414
    %v6416 = vpop.f32.mrf.mxu0
    %6417 = vdwg.mxu0
    %v6418 = vld [vmem:[%s8] sm:$0x1]
    %v6420 = vlaneseq
    %v6421 = vshrl.u32 %v6420, 7
    %v6422 = vsub.s32 0, %v6421
    %v6423 = vrot.slane %v6418, %v6422
    %v6425 = vmul.f32 %v6388, %v6423
    %v6426 = vmul.f32 %v6391, %v6423
    %v6427 = vmul.f32 %v6396, %v6423
    %v6428 = vmul.f32 %v6399, %v6423
    %v6429 = vmul.f32 %v6404, %v6423
    %v6430 = vmul.f32 %v6407, %v6423
    %v6431 = vmul.f32 %v6412, %v6423
    %v6432 = vmul.f32 %v6415, %v6423
    %v6433 = vsel %vm1385, %v6425, 0.0
    %6434 = vadd.xlane.f32.xlu0 %v6433
    %v6435 = vpop.xlane.xlu0 %6434
    %v6436 = vsel %vm1385, %v6426, 0.0
    %6437 = vadd.xlane.f32.xlu0 %v6436
    %v6438 = vpop.xlane.xlu0 %6437
    %v6439 = vsel %vm1385, %v6427, 0.0
    %6440 = vadd.xlane.f32.xlu0 %v6439
    %v6441 = vpop.xlane.xlu0 %6440
    %v6442 = vsel %vm1385, %v6428, 0.0
    %6443 = vadd.xlane.f32.xlu0 %v6442
    %v6444 = vpop.xlane.xlu0 %6443
    %v6445 = vsel %vm1385, %v6429, 0.0
    %6446 = vadd.xlane.f32.xlu0 %v6445
    %v6447 = vpop.xlane.xlu0 %6446
    %v6448 = vsel %vm1385, %v6430, 0.0
    %6449 = vadd.xlane.f32.xlu0 %v6448
    %v6450 = vpop.xlane.xlu0 %6449
    %v6451 = vsel %vm1385, %v6431, 0.0
    %6452 = vadd.xlane.f32.xlu0 %v6451
    %v6453 = vpop.xlane.xlu0 %6452
    %v6454 = vsel %vm1385, %v6432, 0.0
    %6455 = vadd.xlane.f32.xlu0 %v6454
    %v6456 = vpop.xlane.xlu0 %6455
    %vm6457 = vcmp.ge.f32.partialorder %v6435, 0.0
    %vm6458 = vcmp.ge.f32.partialorder %v6438, 0.0
    %vm6459 = vcmp.ge.f32.partialorder %v6441, 0.0
    %vm6460 = vcmp.ge.f32.partialorder %v6444, 0.0
    %vm6461 = vcmp.ge.f32.partialorder %v6447, 0.0
    %vm6462 = vcmp.ge.f32.partialorder %v6450, 0.0
    %vm6463 = vcmp.ge.f32.partialorder %v6453, 0.0
    %vm6464 = vcmp.ge.f32.partialorder %v6456, 0.0
    %v6465 = vmul.f32 %v6435, 0.2
    %v6466 = vmul.f32 %v6438, 0.2
    %v6467 = vmul.f32 %v6441, 0.2
    %v6468 = vmul.f32 %v6444, 0.2
    %v6469 = vmul.f32 %v6447, 0.2
    %v6470 = vmul.f32 %v6450, 0.2
    %v6471 = vmul.f32 %v6453, 0.2
    %v6472 = vmul.f32 %v6456, 0.2
    %v6473 = vsel %vm6457, %v6435, %v6465
    %v6474 = vsel %vm6458, %v6438, %v6466
    %v6475 = vsel %vm6459, %v6441, %v6467
    %v6476 = vsel %vm6460, %v6444, %v6468
    %v6477 = vsel %vm6461, %v6447, %v6469
    %v6478 = vsel %vm6462, %v6450, %v6470
    %v6479 = vsel %vm6463, %v6453, %v6471
    %v6480 = vsel %vm6464, %v6456, %v6472
    %v6481 = vlaneseq
    %v6482 = vand.u32 %v6481, 127
    %6483 = vset.pattern.permute.xlu0 0
    %6484 = vperm.xlu0 %6483, %v112
    %v6485 = vpop.permute.xlu0 %6484
    %6486 = vset.pattern.permute.xlu0 0
    %6487 = vperm.xlu0 %6486, %v113
    %v6488 = vpop.permute.xlu0 %6487
    %6489 = vset.pattern.permute.xlu0 0
    %6490 = vperm.xlu0 %6489, %v114
    %v6491 = vpop.permute.xlu0 %6490
    %6492 = vset.pattern.permute.xlu0 0
    %6493 = vperm.xlu0 %6492, %v115
    %v6494 = vpop.permute.xlu0 %6493
    %6495 = vset.pattern.permute.xlu0 0
    %6496 = vperm.xlu0 %6495, %v116
    %v6497 = vpop.permute.xlu0 %6496
    %6498 = vset.pattern.permute.xlu0 0
    %6499 = vperm.xlu0 %6498, %v117
    %v6500 = vpop.permute.xlu0 %6499
    %6501 = vset.pattern.permute.xlu0 0
    %6502 = vperm.xlu0 %6501, %v118
    %v6503 = vpop.permute.xlu0 %6502
    %6504 = vset.pattern.permute.xlu0 0
    %6505 = vperm.xlu0 %6504, %v119
    %v6506 = vpop.permute.xlu0 %6505
    %vm6507 = vcmp.eq.s32.totalorder %v6485, %v6482
    %vm6508 = vcmp.eq.s32.totalorder %v6488, %v6482
    %vm6509 = vcmp.eq.s32.totalorder %v6491, %v6482
    %vm6510 = vcmp.eq.s32.totalorder %v6494, %v6482
    %vm6511 = vcmp.eq.s32.totalorder %v6497, %v6482
    %vm6512 = vcmp.eq.s32.totalorder %v6500, %v6482
    %vm6513 = vcmp.eq.s32.totalorder %v6503, %v6482
    %vm6514 = vcmp.eq.s32.totalorder %v6506, %v6482
    %v6515 = vsel %vm6507, %v6473, -1e+30
    %v6516 = vsel %vm6508, %v6474, -1e+30
    %v6517 = vsel %vm6509, %v6475, -1e+30
    %v6518 = vsel %vm6510, %v6476, -1e+30
    %v6519 = vsel %vm6511, %v6477, -1e+30
    %v6520 = vsel %vm6512, %v6478, -1e+30
    %v6521 = vsel %vm6513, %v6479, -1e+30
    %v6522 = vsel %vm6514, %v6480, -1e+30
    %vm6523 = vcmask 130048
    %v6524 = vsel %vm6523, %v6515, -inf
    %v6525 = vsel %vm6523, %v6516, -inf
    %v6526 = vsel %vm6523, %v6517, -inf
    %v6527 = vsel %vm6523, %v6518, -inf
    %v6528 = vsel %vm6523, %v6519, -inf
    %v6529 = vmax.f32 %v6524, %v6528
    %v6530 = vsel %vm6523, %v6520, -inf
    %v6531 = vmax.f32 %v6525, %v6530
    %v6532 = vsel %vm6523, %v6521, -inf
    %v6533 = vmax.f32 %v6526, %v6532
    %v6534 = vsel %vm6523, %v6522, -inf
    %v6535 = vmax.f32 %v6527, %v6534
    %v6536 = vmax.f32 %v6529, %v6531
    %v6537 = vmax.f32 %v6533, %v6535
    %v6538 = vmax.f32 %v6536, %v6537
    %v6539 = vrot.slane %v6538, 4
    %v6540 = vmax.f32 %v6538, %v6539
    %v6541 = vrot.slane %v6540, 2
    %v6542 = vmax.f32 %v6540, %v6541
    %v6543 = vrot.slane %v6542, 1
    %v6544 = vmax.f32 %v6542, %v6543
    %v6545 = vsel %vm6507, %v6544, -1e+30
    %v6546 = vsel %vm6508, %v6544, -1e+30
    %v6547 = vsel %vm6509, %v6544, -1e+30
    %v6548 = vsel %vm6510, %v6544, -1e+30
    %v6549 = vsel %vm6511, %v6544, -1e+30
    %v6550 = vsel %vm6512, %v6544, -1e+30
    %v6551 = vsel %vm6513, %v6544, -1e+30
    %v6552 = vsel %vm6514, %v6544, -1e+30
    %v6553 = vsel %vm6523, %v6545, -inf
    %6554 = vmax.xlane.f32.xlu0 %v6553
    %v6555 = vpop.xlane.xlu0 %6554
    %v6556 = vsel %vm6523, %v6546, -inf
    %6557 = vmax.xlane.f32.xlu0 %v6556
    %v6558 = vpop.xlane.xlu0 %6557
    %v6559 = vsel %vm6523, %v6547, -inf
    %6560 = vmax.xlane.f32.xlu0 %v6559
    %v6561 = vpop.xlane.xlu0 %6560
    %v6562 = vsel %vm6523, %v6548, -inf
    %6563 = vmax.xlane.f32.xlu0 %v6562
    %v6564 = vpop.xlane.xlu0 %6563
    %v6565 = vsel %vm6523, %v6549, -inf
    %6566 = vmax.xlane.f32.xlu0 %v6565
    %v6567 = vpop.xlane.xlu0 %6566
    %v6568 = vsel %vm6523, %v6550, -inf
    %6569 = vmax.xlane.f32.xlu0 %v6568
    %v6570 = vpop.xlane.xlu0 %6569
    %v6571 = vsel %vm6523, %v6551, -inf
    %6572 = vmax.xlane.f32.xlu0 %v6571
    %v6573 = vpop.xlane.xlu0 %6572
    %v6574 = vsel %vm6523, %v6552, -inf
    %6575 = vmax.xlane.f32.xlu0 %v6574
    %v6576 = vpop.xlane.xlu0 %6575
    %v6577 = vsub.f32 %v6473, %v6555
    %v6578 = vsub.f32 %v6474, %v6558
    %v6579 = vsub.f32 %v6475, %v6561
    %v6580 = vsub.f32 %v6476, %v6564
    %v6581 = vsub.f32 %v6477, %v6567
    %v6582 = vsub.f32 %v6478, %v6570
    %v6583 = vsub.f32 %v6479, %v6573
    %v6584 = vsub.f32 %v6480, %v6576
    %v6585 = vmul.f32 %v6577, 1.442695
    %v6586 = vpow.pop %v6585
    %v6587 = vmul.f32 %v6578, 1.442695
    %v6588 = vpow.pop %v6587
    %v6589 = vmul.f32 %v6579, 1.442695
    %v6590 = vpow.pop %v6589
    %v6591 = vmul.f32 %v6580, 1.442695
    %v6592 = vpow.pop %v6591
    %v6593 = vmul.f32 %v6581, 1.442695
    %v6594 = vpow.pop %v6593
    %v6595 = vmul.f32 %v6582, 1.442695
    %v6596 = vpow.pop %v6595
    %v6597 = vmul.f32 %v6583, 1.442695
    %v6598 = vpow.pop %v6597
    %v6599 = vmul.f32 %v6584, 1.442695
    %v6600 = vpow.pop %v6599
    %v6601 = vsel %vm6507, %v6586, 0.0
    %v6602 = vsel %vm6508, %v6588, 0.0
    %v6603 = vsel %vm6509, %v6590, 0.0
    %v6604 = vsel %vm6510, %v6592, 0.0
    %v6605 = vsel %vm6511, %v6594, 0.0
    %v6606 = vsel %vm6512, %v6596, 0.0
    %v6607 = vsel %vm6513, %v6598, 0.0
    %v6608 = vsel %vm6514, %v6600, 0.0
    %v6609 = vsel %vm6523, %v6601, 0.0
    %v6610 = vsel %vm6523, %v6602, 0.0
    %v6611 = vadd.f32 %v6609, %v6610
    %v6612 = vsel %vm6523, %v6603, 0.0
    %v6613 = vadd.f32 %v6611, %v6612
    %v6614 = vsel %vm6523, %v6604, 0.0
    %v6615 = vadd.f32 %v6613, %v6614
    %v6616 = vsel %vm6523, %v6605, 0.0
    %v6617 = vadd.f32 %v6615, %v6616
    %v6618 = vsel %vm6523, %v6606, 0.0
    %v6619 = vadd.f32 %v6617, %v6618
    %v6620 = vsel %vm6523, %v6607, 0.0
    %v6621 = vadd.f32 %v6619, %v6620
    %v6622 = vsel %vm6523, %v6608, 0.0
    %v6623 = vadd.f32 %v6621, %v6622
    %v6624 = vrot.slane %v6623, 4
    %v6625 = vadd.f32 %v6623, %v6624
    %v6626 = vrot.slane %v6625, 2
    %v6627 = vadd.f32 %v6625, %v6626
    %v6628 = vrot.slane %v6627, 1
    %v6629 = vadd.f32 %v6627, %v6628
    %v6630 = vsel %vm6507, %v6629, 0.0
    %v6631 = vsel %vm6508, %v6629, 0.0
    %v6632 = vsel %vm6509, %v6629, 0.0
    %v6633 = vsel %vm6510, %v6629, 0.0
    %v6634 = vsel %vm6511, %v6629, 0.0
    %v6635 = vsel %vm6512, %v6629, 0.0
    %v6636 = vsel %vm6513, %v6629, 0.0
    %v6637 = vsel %vm6514, %v6629, 0.0
    %v6638 = vsel %vm6523, %v6630, 0.0
    %6639 = vadd.xlane.f32.xlu0 %v6638
    %v6640 = vpop.xlane.xlu0 %6639
    %v6641 = vsel %vm6523, %v6631, 0.0
    %6642 = vadd.xlane.f32.xlu0 %v6641
    %v6643 = vpop.xlane.xlu0 %6642
    %v6644 = vsel %vm6523, %v6632, 0.0
    %6645 = vadd.xlane.f32.xlu0 %v6644
    %v6646 = vpop.xlane.xlu0 %6645
    %v6647 = vsel %vm6523, %v6633, 0.0
    %6648 = vadd.xlane.f32.xlu0 %v6647
    %v6649 = vpop.xlane.xlu0 %6648
    %v6650 = vsel %vm6523, %v6634, 0.0
    %6651 = vadd.xlane.f32.xlu0 %v6650
    %v6652 = vpop.xlane.xlu0 %6651
    %v6653 = vsel %vm6523, %v6635, 0.0
    %6654 = vadd.xlane.f32.xlu0 %v6653
    %v6655 = vpop.xlane.xlu0 %6654
    %v6656 = vsel %vm6523, %v6636, 0.0
    %6657 = vadd.xlane.f32.xlu0 %v6656
    %v6658 = vpop.xlane.xlu0 %6657
    %v6659 = vsel %vm6523, %v6637, 0.0
    %6660 = vadd.xlane.f32.xlu0 %v6659
    %v6661 = vpop.xlane.xlu0 %6660
    %v6662 = vrcp.pop %v6640
    %v6663 = vrcp.pop %v6643
    %v6664 = vrcp.pop %v6646
    %v6665 = vrcp.pop %v6649
    %v6666 = vrcp.pop %v6652
    %v6667 = vrcp.pop %v6655
    %v6668 = vrcp.pop %v6658
    %v6669 = vrcp.pop %v6661
    %v6670 = vmul.f32 %v6586, %v6662
    %v6671 = vmul.f32 %v6588, %v6663
    %v6672 = vmul.f32 %v6590, %v6664
    %v6673 = vmul.f32 %v6592, %v6665
    %v6674 = vmul.f32 %v6594, %v6666
    %v6675 = vmul.f32 %v6596, %v6667
    %v6676 = vmul.f32 %v6598, %v6668
    %v6677 = vmul.f32 %v6600, %v6669
    %v6678 = vmul.f32 %v6670, %v6388
    %v6679 = vmul.f32 %v6671, %v6391
    %v6680 = vmul.f32 %v6672, %v6396
    %v6681 = vmul.f32 %v6673, %v6399
    %v6682 = vmul.f32 %v6674, %v6404
    %v6683 = vmul.f32 %v6675, %v6407
    %v6684 = vmul.f32 %v6676, %v6412
    %v6685 = vmul.f32 %v6677, %v6415
    %v6694 = vrot.slane %v6678, 1
    %v6695 = vrot.slane %v6678, 2
    %v6696 = vrot.slane %v6678, 3
    %v6697 = vrot.slane %v6678, 4
    %v6698 = vrot.slane %v6678, 5
    %v6699 = vrot.slane %v6678, 6
    %v6700 = vrot.slane %v6678, 7
    %v6701 = vrot.slane %v6679, 1
    %v6702 = vrot.slane %v6679, 2
    %v6703 = vrot.slane %v6679, 3
    %v6704 = vrot.slane %v6679, 4
    %v6705 = vrot.slane %v6679, 5
    %v6706 = vrot.slane %v6679, 6
    %v6707 = vrot.slane %v6679, 7
    %v6708 = vrot.slane %v6680, 1
    %v6709 = vrot.slane %v6680, 2
    %v6710 = vrot.slane %v6680, 3
    %v6711 = vrot.slane %v6680, 4
    %v6712 = vrot.slane %v6680, 5
    %v6713 = vrot.slane %v6680, 6
    %v6714 = vrot.slane %v6680, 7
    %v6715 = vrot.slane %v6681, 1
    %v6716 = vrot.slane %v6681, 2
    %v6717 = vrot.slane %v6681, 3
    %v6718 = vrot.slane %v6681, 4
    %v6719 = vrot.slane %v6681, 5
    %v6720 = vrot.slane %v6681, 6
    %v6721 = vrot.slane %v6681, 7
    %v6722 = vrot.slane %v6682, 1
    %v6723 = vrot.slane %v6682, 2
    %v6724 = vrot.slane %v6682, 3
    %v6725 = vrot.slane %v6682, 4
    %v6726 = vrot.slane %v6682, 5
    %v6727 = vrot.slane %v6682, 6
    %v6728 = vrot.slane %v6682, 7
    %v6729 = vrot.slane %v6683, 1
    %v6730 = vrot.slane %v6683, 2
    %v6731 = vrot.slane %v6683, 3
    %v6732 = vrot.slane %v6683, 4
    %v6733 = vrot.slane %v6683, 5
    %v6734 = vrot.slane %v6683, 6
    %v6735 = vrot.slane %v6683, 7
    %v6736 = vrot.slane %v6684, 1
    %v6737 = vrot.slane %v6684, 2
    %v6738 = vrot.slane %v6684, 3
    %v6739 = vrot.slane %v6684, 4
    %v6740 = vrot.slane %v6684, 5
    %v6741 = vrot.slane %v6684, 6
    %v6742 = vrot.slane %v6684, 7
    %v6743 = vrot.slane %v6685, 1
    %v6744 = vrot.slane %v6685, 2
    %v6745 = vrot.slane %v6685, 3
    %v6746 = vrot.slane %v6685, 4
    %v6747 = vrot.slane %v6685, 5
    %v6748 = vrot.slane %v6685, 6
    %v6749 = vrot.slane %v6685, 7
    %v6814 = vadd.f32 %v5873, %v6678
    %v6815 = vadd.f32 %v5880, %v6694
    %v6816 = vadd.f32 %v5887, %v6695
    %v6817 = vadd.f32 %v5894, %v6696
    %v6818 = vadd.f32 %v5901, %v6697
    %v6819 = vadd.f32 %v5908, %v6698
    %v6820 = vadd.f32 %v5915, %v6699
    %v6821 = vadd.f32 %v5922, %v6700
    %v6822 = vadd.f32 %v5929, %v6679
    %v6823 = vadd.f32 %v5936, %v6701
    %v6824 = vadd.f32 %v5943, %v6702
    %v6825 = vadd.f32 %v5950, %v6703
    %v6826 = vadd.f32 %v5957, %v6704
    %v6827 = vadd.f32 %v5964, %v6705
    %v6828 = vadd.f32 %v5971, %v6706
    %v6829 = vadd.f32 %v5978, %v6707
    %v6830 = vadd.f32 %v5985, %v6680
    %v6831 = vadd.f32 %v5992, %v6708
    %v6832 = vadd.f32 %v5999, %v6709
    %v6833 = vadd.f32 %v6006, %v6710
    %v6834 = vadd.f32 %v6013, %v6711
    %v6835 = vadd.f32 %v6020, %v6712
    %v6836 = vadd.f32 %v6027, %v6713
    %v6837 = vadd.f32 %v6034, %v6714
    %v6838 = vadd.f32 %v6041, %v6681
    %v6839 = vadd.f32 %v6048, %v6715
    %v6840 = vadd.f32 %v6055, %v6716
    %v6841 = vadd.f32 %v6062, %v6717
    %v6842 = vadd.f32 %v6069, %v6718
    %v6843 = vadd.f32 %v6076, %v6719
    %v6844 = vadd.f32 %v6083, %v6720
    %v6845 = vadd.f32 %v6090, %v6721
    %v6846 = vadd.f32 %v6097, %v6682
    %v6847 = vadd.f32 %v6104, %v6722
    %v6848 = vadd.f32 %v6111, %v6723
    %v6849 = vadd.f32 %v6118, %v6724
    %v6850 = vadd.f32 %v6125, %v6725
    %v6851 = vadd.f32 %v6132, %v6726
    %v6852 = vadd.f32 %v6139, %v6727
    %v6853 = vadd.f32 %v6146, %v6728
    %v6854 = vadd.f32 %v6153, %v6683
    %v6855 = vadd.f32 %v6160, %v6729
    %v6856 = vadd.f32 %v6167, %v6730
    %v6857 = vadd.f32 %v6174, %v6731
    %v6858 = vadd.f32 %v6181, %v6732
    %v6859 = vadd.f32 %v6188, %v6733
    %v6860 = vadd.f32 %v6195, %v6734
    %v6861 = vadd.f32 %v6202, %v6735
    %v6862 = vadd.f32 %v6209, %v6684
    %v6863 = vadd.f32 %v6216, %v6736
    %v6864 = vadd.f32 %v6223, %v6737
    %v6865 = vadd.f32 %v6230, %v6738
    %v6866 = vadd.f32 %v6237, %v6739
    %v6867 = vadd.f32 %v6244, %v6740
    %v6868 = vadd.f32 %v6251, %v6741
    %v6869 = vadd.f32 %v6258, %v6742
    %v6870 = vadd.f32 %v6265, %v6685
    %v6871 = vadd.f32 %v6272, %v6743
    %v6872 = vadd.f32 %v6279, %v6744
    %v6873 = vadd.f32 %v6286, %v6745
    %v6874 = vadd.f32 %v6293, %v6746
    %v6875 = vadd.f32 %v6300, %v6747
    %v6876 = vadd.f32 %v6307, %v6748
    %v6877 = vadd.f32 %v6314, %v6749
    %v6878 = vtanh.pop %v6814
    %v6879 = vtanh.pop %v6815
    %v6880 = vtanh.pop %v6816
    %v6881 = vtanh.pop %v6817
    %v6882 = vtanh.pop %v6818
    %v6883 = vtanh.pop %v6819
    %v6884 = vtanh.pop %v6820
    %v6885 = vtanh.pop %v6821
    %v6886 = vtanh.pop %v6822
    %v6887 = vtanh.pop %v6823
    %v6888 = vtanh.pop %v6824
    %v6889 = vtanh.pop %v6825
    %v6890 = vtanh.pop %v6826
    %v6891 = vtanh.pop %v6827
    %v6892 = vtanh.pop %v6828
    %v6893 = vtanh.pop %v6829
    %v6894 = vtanh.pop %v6830
    %v6895 = vtanh.pop %v6831
    %v6896 = vtanh.pop %v6832
    %v6897 = vtanh.pop %v6833
    %v6898 = vtanh.pop %v6834
    %v6899 = vtanh.pop %v6835
    %v6900 = vtanh.pop %v6836
    %v6901 = vtanh.pop %v6837
    %v6902 = vtanh.pop %v6838
    %v6903 = vtanh.pop %v6839
    %v6904 = vtanh.pop %v6840
    %v6905 = vtanh.pop %v6841
    %v6906 = vtanh.pop %v6842
    %v6907 = vtanh.pop %v6843
    %v6908 = vtanh.pop %v6844
    %v6909 = vtanh.pop %v6845
    %v6910 = vtanh.pop %v6846
    %v6911 = vtanh.pop %v6847
    %v6912 = vtanh.pop %v6848
    %v6913 = vtanh.pop %v6849
    %v6914 = vtanh.pop %v6850
    %v6915 = vtanh.pop %v6851
    %v6916 = vtanh.pop %v6852
    %v6917 = vtanh.pop %v6853
    %v6918 = vtanh.pop %v6854
    %v6919 = vtanh.pop %v6855
    %v6920 = vtanh.pop %v6856
    %v6921 = vtanh.pop %v6857
    %v6922 = vtanh.pop %v6858
    %v6923 = vtanh.pop %v6859
    %v6924 = vtanh.pop %v6860
    %v6925 = vtanh.pop %v6861
    %v6926 = vtanh.pop %v6862
    %v6927 = vtanh.pop %v6863
    %v6928 = vtanh.pop %v6864
    %v6929 = vtanh.pop %v6865
    %v6930 = vtanh.pop %v6866
    %v6931 = vtanh.pop %v6867
    %v6932 = vtanh.pop %v6868
    %v6933 = vtanh.pop %v6869
    %v6934 = vtanh.pop %v6870
    %v6935 = vtanh.pop %v6871
    %v6936 = vtanh.pop %v6872
    %v6937 = vtanh.pop %v6873
    %v6938 = vtanh.pop %v6874
    %v6939 = vtanh.pop %v6875
    %v6940 = vtanh.pop %v6876
    %v6941 = vtanh.pop %v6877
    %v6942 = vld [vmem:[%s3] sm:$0xf]
    %v6943 = vld [vmem:[%s3 + $0x4] sm:$0xf]
    %v6944 = vpack.c.bf16 %v6878, %v6878
    %v6945 = vpack.c.bf16 %v6879, %v6879
    %v6946 = vpack.c.bf16 %v6880, %v6880
    %v6947 = vpack.c.bf16 %v6881, %v6881
    %v6948 = vpack.c.bf16 %v6882, %v6882
    %v6949 = vpack.c.bf16 %v6883, %v6883
    %v6950 = vpack.c.bf16 %v6884, %v6884
    %v6951 = vpack.c.bf16 %v6885, %v6885
    %v6952 = vpack.c.bf16 %v6886, %v6886
    %v6953 = vpack.c.bf16 %v6887, %v6887
    %v6954 = vpack.c.bf16 %v6888, %v6888
    %v6955 = vpack.c.bf16 %v6889, %v6889
    %v6956 = vpack.c.bf16 %v6890, %v6890
    %v6957 = vpack.c.bf16 %v6891, %v6891
    %v6958 = vpack.c.bf16 %v6892, %v6892
    %v6959 = vpack.c.bf16 %v6893, %v6893
    %v6960 = vpack.c.bf16 %v6894, %v6894
    %v6961 = vpack.c.bf16 %v6895, %v6895
    %v6962 = vpack.c.bf16 %v6896, %v6896
    %v6963 = vpack.c.bf16 %v6897, %v6897
    %v6964 = vpack.c.bf16 %v6898, %v6898
    %v6965 = vpack.c.bf16 %v6899, %v6899
    %v6966 = vpack.c.bf16 %v6900, %v6900
    %v6967 = vpack.c.bf16 %v6901, %v6901
    %v6968 = vpack.c.bf16 %v6902, %v6902
    %v6969 = vpack.c.bf16 %v6903, %v6903
    %v6970 = vpack.c.bf16 %v6904, %v6904
    %v6971 = vpack.c.bf16 %v6905, %v6905
    %v6972 = vpack.c.bf16 %v6906, %v6906
    %v6973 = vpack.c.bf16 %v6907, %v6907
    %v6974 = vpack.c.bf16 %v6908, %v6908
    %v6975 = vpack.c.bf16 %v6909, %v6909
    %v6976 = vpack.c.bf16 %v6910, %v6910
    %v6977 = vpack.c.bf16 %v6911, %v6911
    %v6978 = vpack.c.bf16 %v6912, %v6912
    %v6979 = vpack.c.bf16 %v6913, %v6913
    %v6980 = vpack.c.bf16 %v6914, %v6914
    %v6981 = vpack.c.bf16 %v6915, %v6915
    %v6982 = vpack.c.bf16 %v6916, %v6916
    %v6983 = vpack.c.bf16 %v6917, %v6917
    %v6984 = vpack.c.bf16 %v6918, %v6918
    %v6985 = vpack.c.bf16 %v6919, %v6919
    %v6986 = vpack.c.bf16 %v6920, %v6920
    %v6987 = vpack.c.bf16 %v6921, %v6921
    %v6988 = vpack.c.bf16 %v6922, %v6922
    %v6989 = vpack.c.bf16 %v6923, %v6923
    %v6990 = vpack.c.bf16 %v6924, %v6924
    %v6991 = vpack.c.bf16 %v6925, %v6925
    %v6992 = vpack.c.bf16 %v6926, %v6926
    %v6993 = vpack.c.bf16 %v6927, %v6927
    %v6994 = vpack.c.bf16 %v6928, %v6928
    %v6995 = vpack.c.bf16 %v6929, %v6929
    %v6996 = vpack.c.bf16 %v6930, %v6930
    %v6997 = vpack.c.bf16 %v6931, %v6931
    %v6998 = vpack.c.bf16 %v6932, %v6932
    %v6999 = vpack.c.bf16 %v6933, %v6933
    %v7000 = vpack.c.bf16 %v6934, %v6934
    %v7001 = vpack.c.bf16 %v6935, %v6935
    %v7002 = vpack.c.bf16 %v6936, %v6936
    %v7003 = vpack.c.bf16 %v6937, %v6937
    %v7004 = vpack.c.bf16 %v6938, %v6938
    %v7005 = vpack.c.bf16 %v6939, %v6939
    %v7006 = vpack.c.bf16 %v6940, %v6940
    %v7007 = vpack.c.bf16 %v6941, %v6941
    %v7010 = vunpack.c.l.b16 %v6942
    %v7011 = vunpack.c.l.b16 %v6943
    %v7012 = vpack.c.b16 %v7011, %v7010
    %v7077 = vunpack.c.l.b16 %v6944
    %v7078 = vunpack.c.l.b16 %v6945
    %v7079 = vunpack.c.l.b16 %v6946
    %v7080 = vunpack.c.l.b16 %v6947
    %v7081 = vunpack.c.l.b16 %v6948
    %v7082 = vunpack.c.l.b16 %v6949
    %v7083 = vunpack.c.l.b16 %v6950
    %v7084 = vunpack.c.l.b16 %v6951
    %v7085 = vunpack.c.l.b16 %v6952
    %v7086 = vunpack.c.l.b16 %v6953
    %v7087 = vunpack.c.l.b16 %v6954
    %v7088 = vunpack.c.l.b16 %v6955
    %v7089 = vunpack.c.l.b16 %v6956
    %v7090 = vunpack.c.l.b16 %v6957
    %v7091 = vunpack.c.l.b16 %v6958
    %v7092 = vunpack.c.l.b16 %v6959
    %v7093 = vunpack.c.l.b16 %v6960
    %v7094 = vunpack.c.l.b16 %v6961
    %v7095 = vunpack.c.l.b16 %v6962
    %v7096 = vunpack.c.l.b16 %v6963
    %v7097 = vunpack.c.l.b16 %v6964
    %v7098 = vunpack.c.l.b16 %v6965
    %v7099 = vunpack.c.l.b16 %v6966
    %v7100 = vunpack.c.l.b16 %v6967
    %v7101 = vunpack.c.l.b16 %v6968
    %v7102 = vunpack.c.l.b16 %v6969
    %v7103 = vunpack.c.l.b16 %v6970
    %v7104 = vunpack.c.l.b16 %v6971
    %v7105 = vunpack.c.l.b16 %v6972
    %v7106 = vunpack.c.l.b16 %v6973
    %v7107 = vunpack.c.l.b16 %v6974
    %v7108 = vunpack.c.l.b16 %v6975
    %v7109 = vunpack.c.l.b16 %v6976
    %v7110 = vunpack.c.l.b16 %v6977
    %v7111 = vunpack.c.l.b16 %v6978
    %v7112 = vunpack.c.l.b16 %v6979
    %v7113 = vunpack.c.l.b16 %v6980
    %v7114 = vunpack.c.l.b16 %v6981
    %v7115 = vunpack.c.l.b16 %v6982
    %v7116 = vunpack.c.l.b16 %v6983
    %v7117 = vunpack.c.l.b16 %v6984
    %v7118 = vunpack.c.l.b16 %v6985
    %v7119 = vunpack.c.l.b16 %v6986
    %v7120 = vunpack.c.l.b16 %v6987
    %v7121 = vunpack.c.l.b16 %v6988
    %v7122 = vunpack.c.l.b16 %v6989
    %v7123 = vunpack.c.l.b16 %v6990
    %v7124 = vunpack.c.l.b16 %v6991
    %v7125 = vunpack.c.l.b16 %v6992
    %v7126 = vunpack.c.l.b16 %v6993
    %v7127 = vunpack.c.l.b16 %v6994
    %v7128 = vunpack.c.l.b16 %v6995
    %v7129 = vunpack.c.l.b16 %v6996
    %v7130 = vunpack.c.l.b16 %v6997
    %v7131 = vunpack.c.l.b16 %v6998
    %v7132 = vunpack.c.l.b16 %v6999
    %v7133 = vunpack.c.l.b16 %v7000
    %v7134 = vunpack.c.l.b16 %v7001
    %v7135 = vunpack.c.l.b16 %v7002
    %v7136 = vunpack.c.l.b16 %v7003
    %v7137 = vunpack.c.l.b16 %v7004
    %v7138 = vunpack.c.l.b16 %v7005
    %v7139 = vunpack.c.l.b16 %v7006
    %v7140 = vunpack.c.l.b16 %v7007
    %v7141 = vrot.slane %v7078, 7
    %vm7142 = vcmask 1041409
    %v7143 = vsel %vm7142, %v7141, %v7077
    %v7144 = vrot.slane %v7079, 6
    %vm7145 = vcmask 1042434
    %v7146 = vsel %vm7145, %v7144, %v7143
    %v7147 = vrot.slane %v7080, 5
    %vm7148 = vcmask 1043459
    %v7149 = vsel %vm7148, %v7147, %v7146
    %v7150 = vrot.slane %v7081, 4
    %vm7151 = vcmask 1044484
    %v7152 = vsel %vm7151, %v7150, %v7149
    %v7153 = vrot.slane %v7082, 3
    %vm7154 = vcmask 1045509
    %v7155 = vsel %vm7154, %v7153, %v7152
    %v7156 = vrot.slane %v7083, 2
    %vm7157 = vcmask 1046534
    %v7158 = vsel %vm7157, %v7156, %v7155
    %v7159 = vrot.slane %v7084, 1
    %vm7160 = vcmask 1047559
    %v7161 = vsel %vm7160, %v7159, %v7158
    %v7162 = vrot.slane %v7086, 7
    %v7163 = vsel %vm7142, %v7162, %v7085
    %v7164 = vrot.slane %v7087, 6
    %v7165 = vsel %vm7145, %v7164, %v7163
    %v7166 = vrot.slane %v7088, 5
    %v7167 = vsel %vm7148, %v7166, %v7165
    %v7168 = vrot.slane %v7089, 4
    %v7169 = vsel %vm7151, %v7168, %v7167
    %v7170 = vrot.slane %v7090, 3
    %v7171 = vsel %vm7154, %v7170, %v7169
    %v7172 = vrot.slane %v7091, 2
    %v7173 = vsel %vm7157, %v7172, %v7171
    %v7174 = vrot.slane %v7092, 1
    %v7175 = vsel %vm7160, %v7174, %v7173
    %v7176 = vrot.slane %v7094, 7
    %v7177 = vsel %vm7142, %v7176, %v7093
    %v7178 = vrot.slane %v7095, 6
    %v7179 = vsel %vm7145, %v7178, %v7177
    %v7180 = vrot.slane %v7096, 5
    %v7181 = vsel %vm7148, %v7180, %v7179
    %v7182 = vrot.slane %v7097, 4
    %v7183 = vsel %vm7151, %v7182, %v7181
    %v7184 = vrot.slane %v7098, 3
    %v7185 = vsel %vm7154, %v7184, %v7183
    %v7186 = vrot.slane %v7099, 2
    %v7187 = vsel %vm7157, %v7186, %v7185
    %v7188 = vrot.slane %v7100, 1
    %v7189 = vsel %vm7160, %v7188, %v7187
    %v7190 = vrot.slane %v7102, 7
    %v7191 = vsel %vm7142, %v7190, %v7101
    %v7192 = vrot.slane %v7103, 6
    %v7193 = vsel %vm7145, %v7192, %v7191
    %v7194 = vrot.slane %v7104, 5
    %v7195 = vsel %vm7148, %v7194, %v7193
    %v7196 = vrot.slane %v7105, 4
    %v7197 = vsel %vm7151, %v7196, %v7195
    %v7198 = vrot.slane %v7106, 3
    %v7199 = vsel %vm7154, %v7198, %v7197
    %v7200 = vrot.slane %v7107, 2
    %v7201 = vsel %vm7157, %v7200, %v7199
    %v7202 = vrot.slane %v7108, 1
    %v7203 = vsel %vm7160, %v7202, %v7201
    %v7204 = vrot.slane %v7110, 7
    %v7205 = vsel %vm7142, %v7204, %v7109
    %v7206 = vrot.slane %v7111, 6
    %v7207 = vsel %vm7145, %v7206, %v7205
    %v7208 = vrot.slane %v7112, 5
    %v7209 = vsel %vm7148, %v7208, %v7207
    %v7210 = vrot.slane %v7113, 4
    %v7211 = vsel %vm7151, %v7210, %v7209
    %v7212 = vrot.slane %v7114, 3
    %v7213 = vsel %vm7154, %v7212, %v7211
    %v7214 = vrot.slane %v7115, 2
    %v7215 = vsel %vm7157, %v7214, %v7213
    %v7216 = vrot.slane %v7116, 1
    %v7217 = vsel %vm7160, %v7216, %v7215
    %v7218 = vrot.slane %v7118, 7
    %v7219 = vsel %vm7142, %v7218, %v7117
    %v7220 = vrot.slane %v7119, 6
    %v7221 = vsel %vm7145, %v7220, %v7219
    %v7222 = vrot.slane %v7120, 5
    %v7223 = vsel %vm7148, %v7222, %v7221
    %v7224 = vrot.slane %v7121, 4
    %v7225 = vsel %vm7151, %v7224, %v7223
    %v7226 = vrot.slane %v7122, 3
    %v7227 = vsel %vm7154, %v7226, %v7225
    %v7228 = vrot.slane %v7123, 2
    %v7229 = vsel %vm7157, %v7228, %v7227
    %v7230 = vrot.slane %v7124, 1
    %v7231 = vsel %vm7160, %v7230, %v7229
    %v7232 = vrot.slane %v7126, 7
    %v7233 = vsel %vm7142, %v7232, %v7125
    %v7234 = vrot.slane %v7127, 6
    %v7235 = vsel %vm7145, %v7234, %v7233
    %v7236 = vrot.slane %v7128, 5
    %v7237 = vsel %vm7148, %v7236, %v7235
    %v7238 = vrot.slane %v7129, 4
    %v7239 = vsel %vm7151, %v7238, %v7237
    %v7240 = vrot.slane %v7130, 3
    %v7241 = vsel %vm7154, %v7240, %v7239
    %v7242 = vrot.slane %v7131, 2
    %v7243 = vsel %vm7157, %v7242, %v7241
    %v7244 = vrot.slane %v7132, 1
    %v7245 = vsel %vm7160, %v7244, %v7243
    %v7246 = vrot.slane %v7134, 7
    %v7247 = vsel %vm7142, %v7246, %v7133
    %v7248 = vrot.slane %v7135, 6
    %v7249 = vsel %vm7145, %v7248, %v7247
    %v7250 = vrot.slane %v7136, 5
    %v7251 = vsel %vm7148, %v7250, %v7249
    %v7252 = vrot.slane %v7137, 4
    %v7253 = vsel %vm7151, %v7252, %v7251
    %v7254 = vrot.slane %v7138, 3
    %v7255 = vsel %vm7154, %v7254, %v7253
    %v7256 = vrot.slane %v7139, 2
    %v7257 = vsel %vm7157, %v7256, %v7255
    %v7258 = vrot.slane %v7140, 1
    %v7259 = vsel %vm7160, %v7258, %v7257
    %v7260 = vpack.c.b16 %v7175, %v7161
    %v7261 = vpack.c.b16 %v7203, %v7189
    %v7262 = vpack.c.b16 %v7231, %v7217
    %v7263 = vpack.c.b16 %v7259, %v7245
    %vm7268 = vcmask 523264
    %v7270 = vsel %vm7268, %v7012, 0
    %7272 = vmatprep.subr.bf16.mxu0 0
    %7273 = vmatpush1.bf16.msra.mxu0 0
    %7274 = vmatprep.subr.bf16.mxu0 0
    %7275 = vmatpush1.bf16.msra.mxu0 0
    %7276 = vmatprep.subr.bf16.mxu0 0
    %7277 = vmatpush1.bf16.msra.mxu0 0
    %7278 = vmatprep.subr.bf16.mxu0 0
    %7279 = vmatpush1.bf16.msra.mxu0 0
    %7280 = vmatprep.subr.bf16.mxu0 0
    %7281 = vmatpush1.bf16.msra.mxu0 %v7263
    %7282 = vmatprep.subr.bf16.mxu0 0
    %7283 = vmatpush1.bf16.msra.mxu0 %v7262
    %7284 = vmatprep.subr.bf16.mxu0 0
    %7285 = vmatpush1.bf16.msra.mxu0 %v7261
    %7286 = vmatprep.subr.bf16.mxu0 0
    %7287 = vmatpush1.bf16.msra.mxu0 %v7260
    %7288 = vmatprep.subr.bf16.mxu0 0
    %7289 = vmatpush2.bf16.msra.mxu0 0
    %7290 = vmatprep.subr.bf16.mxu0 0
    %7291 = vmatpush2.bf16.msra.mxu0 0
    %7292 = vmatprep.subr.bf16.mxu0 0
    %7293 = vmatpush2.bf16.msra.mxu0 0
    %7294 = vmatprep.subr.bf16.mxu0 0
    %7295 = vmatpush2.bf16.msra.mxu0 0
    %7296 = vmatprep.subr.bf16.mxu0 0
    %7297 = vmatpush2.bf16.msra.mxu0 0
    %7298 = vmatprep.subr.bf16.mxu0 0
    %7299 = vmatpush2.bf16.msra.mxu0 0
    %7300 = vmatprep.subr.bf16.mxu0 0
    %7301 = vmatpush2.bf16.msra.mxu0 0
    %7302 = vmatprep.subr.bf16.mxu0 0
    %7303 = vmatpush2.bf16.msra.mxu0 0
    %7304 = vmatprep.mubr.bf16.mxu0 0
    %7305 = vmatmul.mubr.bf16.gmra.mxu0 %v7270
    %v7306 = vpop.f32.mrf.mxu0
    %v7307 = vadd.f32 0.0, %v7306
    %v7308 = vpop.f32.mrf.mxu0
    %v7309 = vpop.f32.mrf.mxu0
    %v7310 = vadd.f32 0.0, %v7309
    %v7311 = vpop.f32.mrf.mxu0
    %7312 = vdwg.mxu0
    %v7313 = vpack.c.bf16 %v7310, %v7307
    %v7314 = vld [vmem:[%s9] sm:$0xf]
    %v7315 = vld [vmem:[%s9 + $0x4] sm:$0xf]
    %v7316 = vld [vmem:[%s9 + $0x8] sm:$0xf]
    %v7317 = vld [vmem:[%s9 + $0xc] sm:$0xf]
    %v7322 = vunpack.c.l.b16 %v7314
    %v7323 = vunpack.c.l.b16 %v7315
    %v7324 = vunpack.c.l.b16 %v7316
    %v7325 = vunpack.c.l.b16 %v7317
    %v7326 = vpack.c.b16 %v7323, %v7322
    %v7327 = vpack.c.b16 %v7325, %v7324
    %v7331 = vsel %vm1385, %v7313, 0
    %7333 = vmatprep.subr.bf16.mxu0 0
    %7334 = vmatpush1.bf16.msra.mxu0 0
    %7335 = vmatprep.subr.bf16.mxu0 0
    %7336 = vmatpush1.bf16.msra.mxu0 0
    %7337 = vmatprep.subr.bf16.mxu0 0
    %7338 = vmatpush1.bf16.msra.mxu0 0
    %7339 = vmatprep.subr.bf16.mxu0 0
    %7340 = vmatpush1.bf16.msra.mxu0 0
    %7341 = vmatprep.subr.bf16.mxu0 0
    %7342 = vmatpush1.bf16.msra.mxu0 0
    %7343 = vmatprep.subr.bf16.mxu0 0
    %7344 = vmatpush1.bf16.msra.mxu0 0
    %7345 = vmatprep.subr.bf16.mxu0 0
    %7346 = vmatpush1.bf16.msra.mxu0 %v7327
    %7347 = vmatprep.subr.bf16.mxu0 0
    %7348 = vmatpush1.bf16.msra.mxu0 %v7326
    %7349 = vmatprep.subr.bf16.mxu0 0
    %7350 = vmatpush2.bf16.msra.mxu0 0
    %7351 = vmatprep.subr.bf16.mxu0 0
    %7352 = vmatpush2.bf16.msra.mxu0 0
    %7353 = vmatprep.subr.bf16.mxu0 0
    %7354 = vmatpush2.bf16.msra.mxu0 0
    %7355 = vmatprep.subr.bf16.mxu0 0
    %7356 = vmatpush2.bf16.msra.mxu0 0
    %7357 = vmatprep.subr.bf16.mxu0 0
    %7358 = vmatpush2.bf16.msra.mxu0 0
    %7359 = vmatprep.subr.bf16.mxu0 0
    %7360 = vmatpush2.bf16.msra.mxu0 0
    %7361 = vmatprep.subr.bf16.mxu0 0
    %7362 = vmatpush2.bf16.msra.mxu0 0
    %7363 = vmatprep.subr.bf16.mxu0 0
    %7364 = vmatpush2.bf16.msra.mxu0 0
    %7365 = vmatprep.mubr.bf16.mxu0 0
    %7366 = vmatmul.mubr.bf16.gmra.mxu0 %v7331
    %v7367 = vpop.f32.mrf.mxu0
    %v7368 = vadd.f32 0.0, %v7367
    %v7369 = vpop.f32.mrf.mxu0
    %v7370 = vpop.f32.mrf.mxu0
    %v7371 = vadd.f32 0.0, %v7370
    %v7372 = vpop.f32.mrf.mxu0
    %7373 = vdwg.mxu0
    %vm7374 = vcmp.ge.f32.partialorder %v7368, 0.0
    %vm7375 = vcmp.ge.f32.partialorder %v7371, 0.0
    %v7376 = vmul.f32 %v7368, 0.2
    %v7377 = vmul.f32 %v7371, 0.2
    %v7378 = vsel %vm7374, %v7368, %v7376
    %v7379 = vsel %vm7375, %v7371, %v7377
    %v7380 = vpack.c.bf16 %v7379, %v7378
    %v7381 = vld [vmem:[%s10] sm:$0xf]
    %v7382 = vld [vmem:[%s10 + $0x4] sm:$0xf]
    %v7383 = vld [vmem:[%s10 + $0x8] sm:$0xf]
    %v7384 = vld [vmem:[%s10 + $0xc] sm:$0xf]
    %v7389 = vunpack.c.l.b16 %v7381
    %v7390 = vunpack.c.l.b16 %v7382
    %v7391 = vunpack.c.l.b16 %v7383
    %v7392 = vunpack.c.l.b16 %v7384
    %v7393 = vpack.c.b16 %v7390, %v7389
    %v7394 = vpack.c.b16 %v7392, %v7391
    %v7398 = vsel %vm1385, %v7380, 0
    %7400 = vmatprep.subr.bf16.mxu0 0
    %7401 = vmatpush1.bf16.msra.mxu0 0
    %7402 = vmatprep.subr.bf16.mxu0 0
    %7403 = vmatpush1.bf16.msra.mxu0 0
    %7404 = vmatprep.subr.bf16.mxu0 0
    %7405 = vmatpush1.bf16.msra.mxu0 0
    %7406 = vmatprep.subr.bf16.mxu0 0
    %7407 = vmatpush1.bf16.msra.mxu0 0
    %7408 = vmatprep.subr.bf16.mxu0 0
    %7409 = vmatpush1.bf16.msra.mxu0 0
    %7410 = vmatprep.subr.bf16.mxu0 0
    %7411 = vmatpush1.bf16.msra.mxu0 0
    %7412 = vmatprep.subr.bf16.mxu0 0
    %7413 = vmatpush1.bf16.msra.mxu0 %v7394
    %7414 = vmatprep.subr.bf16.mxu0 0
    %7415 = vmatpush1.bf16.msra.mxu0 %v7393
    %7416 = vmatprep.subr.bf16.mxu0 0
    %7417 = vmatpush2.bf16.msra.mxu0 0
    %7418 = vmatprep.subr.bf16.mxu0 0
    %7419 = vmatpush2.bf16.msra.mxu0 0
    %7420 = vmatprep.subr.bf16.mxu0 0
    %7421 = vmatpush2.bf16.msra.mxu0 0
    %7422 = vmatprep.subr.bf16.mxu0 0
    %7423 = vmatpush2.bf16.msra.mxu0 0
    %7424 = vmatprep.subr.bf16.mxu0 0
    %7425 = vmatpush2.bf16.msra.mxu0 0
    %7426 = vmatprep.subr.bf16.mxu0 0
    %7427 = vmatpush2.bf16.msra.mxu0 0
    %7428 = vmatprep.subr.bf16.mxu0 0
    %7429 = vmatpush2.bf16.msra.mxu0 0
    %7430 = vmatprep.subr.bf16.mxu0 0
    %7431 = vmatpush2.bf16.msra.mxu0 0
    %7432 = vmatprep.mubr.bf16.mxu0 0
    %7433 = vmatmul.mubr.bf16.gmra.mxu0 %v7398
    %v7434 = vpop.f32.mrf.mxu0
    %v7435 = vadd.f32 0.0, %v7434
    %v7436 = vpop.f32.mrf.mxu0
    %v7437 = vpop.f32.mrf.mxu0
    %v7438 = vadd.f32 0.0, %v7437
    %v7439 = vpop.f32.mrf.mxu0
    %7440 = vdwg.mxu0
    %7441 = vst [vmem:[#allocation2] sm:$0xff] %v7435
    %7442 = vst [vmem:[#allocation2 + $0x8] sm:$0xff] %v7438
    // Predicated region
    $region46: #{tpu_custom_call.1} parent=1 // pred_check
      _
    $region47: #{tpu_custom_call.1} parent=1 // pred_check_branch
      %7444 = sbr.rel (0) target = $region49
    $region48: #{tpu_custom_call.1} parent=1 // pred_region
      %s7446 = ssub.s32 256, 256
      %7447 = vsyncadd [#allocation3], %s7446
      %s7448 = sshll.u32 [#allocation2], 4
      %s7449 = int_to_ptr.vmem [resolvable:$true] %s7448
      %7454 = dma.vmem_to_hbm [thread:$0]  %s7449, 256, %s11, [#allocation3], 128, 128, 8
    $region49: #{tpu_custom_call.1} parent=1 // pred_fallthru
      _
    // Predicated region
    $region50: #{tpu_custom_call.1} parent=1 // pred_check
      _
    $region51: #{tpu_custom_call.1} parent=1 // pred_check_branch
      %7456 = sbr.rel (0) target = $region53
    $region52: #{tpu_custom_call.1} parent=1 // pred_region
      %7457 = dma.done [#allocation3], 256
    $region53: #{tpu_custom_call.1} parent=1 // pred_fallthru
      _
    %7458 = vsyncpa [#allocation3], 1

</llo_original>
